<compile_context>
chip_gen: v7x
topology: tpu7x:2x2x1
jax: 0.10.0
libtpu: 0.0.40
codegen_flags: <defaults>
</compile_context>

<pallas_src>
import functools

import jax
import jax.numpy as jnp
import numpy as np
from jax.experimental import pallas as pl
from jax.experimental.pallas import tpu as pltpu

BATCH_NORM_EPSILON = 1e-5
LANE = 128


def _round_up(n, m=LANE):
    return ((n + m - 1) // m) * m


def _pick_row_band(H, W, target_m=128):
    """Rows per band for the phase-A matmul (band M-extent = rows * W)."""
    rb = max(1, min(H, max(1, target_m // W)))
    # Prefer a band whose M-extent is a multiple of 8 (sublane aligned slices).
    for cand in range(rb, H + 1):
        if (cand * W) % 8 == 0:
            return cand
    return rb


# ----------------------------- Pallas kernel -------------------------------

def _bottleneck_kernel(x_ref, wA_ref, sA_ref, bA_ref,
                       w2_ref, s2_ref, b2_ref,
                       w3_ref, s3_ref, b3_ref,
                       o_ref, h1pad_ref, patch_ref, sc_ref,
                       *, H, W, c_exp, c_mid, rows_a, m_band):
    """Full bottleneck block for one image, entirely in VMEM.

    x_ref     : (1, H*W, Cin_p)          bf16 input activations
    wA_ref    : (Cin_p, c_exp + c_mid)   bf16  [projection_w | conv1_w]
    sA/bA     : (1, c_exp + c_mid)       f32   folded BN scale/bias (proj|bn1)
    w2_ref    : (9*c_mid, c_mid)         bf16  3x3 conv taps packed (kh,kw,ci)
    s2/b2     : (1, c_mid)               f32   folded BN2
    w3_ref    : (c_mid, c_exp)           bf16  last 1x1 conv
    s3/b3     : (1, c_exp)               f32   folded BN3
    o_ref     : (1, H*W, c_exp)          bf16 output
    h1pad_ref : (H+2, W+2, c_mid)        bf16 VMEM zero-halo scratch for 3x3
    patch_ref : (H*W, 9*c_mid)           bf16 VMEM im2col patch scratch
    sc_ref    : (H*W, c_exp)             bf16 VMEM BN'd shortcut scratch
    """
    M = H * W

    # ---- zero only the 1-pixel halo border (interior fully rewritten) ------
    zero_row = jnp.zeros((1, W + 2, c_mid), jnp.bfloat16)
    zero_col = jnp.zeros((H, 1, c_mid), jnp.bfloat16)
    h1pad_ref[0:1, :, :] = zero_row
    h1pad_ref[H + 1:H + 2, :, :] = zero_row
    h1pad_ref[1:H + 1, 0:1, :] = zero_col
    h1pad_ref[1:H + 1, W + 1:W + 2, :] = zero_col

    # ---- phase A: fused [projection shortcut | conv1], banded over rows ----
    sA = sA_ref[...]
    bA = bA_ref[...]
    for r0 in range(0, H, rows_a):
        rr = min(rows_a, H - r0)
        m0 = r0 * W
        tm = rr * W
        xb = x_ref[0, m0:m0 + tm, :]                              # (tm, Cin_p)
        yA = jnp.dot(xb, wA_ref[...], preferred_element_type=jnp.float32)
        yA = yA * sA + bA                                         # folded BN
        # BN'd shortcut (no ReLU) -> deliberate spill to VMEM scratch.
        sc_ref[m0:m0 + tm, :] = yA[:, :c_exp].astype(jnp.bfloat16)
        # conv1 branch: BN + ReLU, straight into the halo interior (bf16).
        h1 = jnp.maximum(yA[:, c_exp:], 0.0).astype(jnp.bfloat16)
        h1pad_ref[1 + r0:1 + r0 + rr, 1:W + 1, :] = h1.reshape(rr, W, c_mid)

    # ---- phase B: build the (M, 9*c_mid) im2col patch from the halo --------
    for kh in range(3):
        for kw in range(3):
            t = kh * 3 + kw
            win = h1pad_ref[kh:kh + H, kw:kw + W, :].reshape(M, c_mid)
            patch_ref[:, t * c_mid:(t + 1) * c_mid] = win

    # ---- phase C: 3x3 conv as ONE K-deep matmul + BN/ReLU, last 1x1 conv ---
    # + BN + residual add + final ReLU, banded over M.
    s2 = s2_ref[...]
    b2 = b2_ref[...]
    s3 = s3_ref[...]
    b3 = b3_ref[...]
    for m0 in range(0, M, m_band):
        tm = min(m_band, M - m0)
        pb = patch_ref[m0:m0 + tm, :]                             # (tm, 9*c_mid)
        h2 = jnp.dot(pb, w2_ref[...], preferred_element_type=jnp.float32)
        h2 = jnp.maximum(h2 * s2 + b2, 0.0).astype(jnp.bfloat16)  # BN + ReLU
        y3 = jnp.dot(h2, w3_ref[...], preferred_element_type=jnp.float32)
        sc = sc_ref[m0:m0 + tm, :].astype(jnp.float32)
        out = jnp.maximum(y3 * s3 + b3 + sc, 0.0)
        o_ref[0, m0:m0 + tm, :] = out.astype(o_ref.dtype)


# ------------------------------ JAX glue ------------------------------------

def bn_fold(gamma, beta, mean, var, eps=BATCH_NORM_EPSILON):
    scale = gamma / jnp.sqrt(var + eps)
    return scale, beta - mean * scale


def bottleneck_block(x_nchw, params, stride=1):
    """F.relu(Projection(x) + net(x)) with sk_ratio=0, use_projection=True."""
    assert stride == 1, "fused Pallas path implements stride=1"
    # TODO(synk): stride>1 and sk_ratio>0 (SelectiveKernel) paths not implemented.
    N, Cin, H, W = x_nchw.shape
    p = params
    oc = p["w1"].shape[1]
    cexp = 4 * oc
    cin_p = _round_up(Cin)
    c_mid = _round_up(oc)
    c_exp = _round_up(cexp)
    M = H * W

    # NOTE: when chaining blocks, keep activations in padded NHWC bf16 between
    # blocks and drop this transpose/pad/cast + the post-kernel slice/transpose
    # (they re-stream the full tensor through HBM). Kept here only so the
    # standalone test consumes/produces NCHW f32 like the PyTorch module.
    x = jnp.transpose(x_nchw, (0, 2, 3, 1))
    x = jnp.pad(x, ((0, 0), (0, 0), (0, 0), (0, cin_p - Cin)))
    x = x.reshape(N, M, cin_p).astype(jnp.bfloat16)

    # ---- fold BN stats, zero-pad and pack weights ---------------------------
    def pad2(w, r, c):
        return jnp.pad(w, ((0, r - w.shape[0]), (0, c - w.shape[1])))

    def pad_sb(scale, bias, c):
        s = jnp.pad(scale, (0, c - scale.shape[0]), constant_values=1.0)
        b = jnp.pad(bias, (0, c - bias.shape[0]))
        return (s.reshape(1, c).astype(jnp.float32),
                b.reshape(1, c).astype(jnp.float32))

    s_sc, b_sc = bn_fold(*p["proj_bn"])
    s1, b1 = bn_fold(*p["bn1"])
    s2, b2 = bn_fold(*p["bn2"])
    s3, b3 = bn_fold(*p["bn3"])

    # fused [projection | conv1] weight + affine
    wA = jnp.concatenate([pad2(p["proj_w"], cin_p, c_exp),
                          pad2(p["w1"], cin_p, c_mid)],
                         axis=1).astype(jnp.bfloat16)
    sA_sc, bA_sc = pad_sb(s_sc, b_sc, c_exp)
    sA_1, bA_1 = pad_sb(s1, b1, c_mid)
    sA = jnp.concatenate([sA_sc, sA_1], axis=1)
    bA = jnp.concatenate([bA_sc, bA_1], axis=1)

    # 3x3 conv taps: rows ordered (kh, kw, ci); pad per tap and pack to
    # (9*c_mid, c_mid) so the 9 taps become ONE K-deep MXU matmul.
    w2 = p["w2"].reshape(9, oc, oc)
    w2 = jnp.pad(w2, ((0, 0), (0, c_mid - oc), (0, c_mid - oc)))
    w2p = w2.reshape(9 * c_mid, c_mid).astype(jnp.bfloat16)
    s2p, b2p = pad_sb(s2, b2, c_mid)

    # last 1x1
    w3 = pad2(p["w3"], c_mid, c_exp).astype(jnp.bfloat16)
    s3p, b3p = pad_sb(s3, b3, c_exp)

    # M-tiling: keep per-dot accumulators vreg-resident at real ResNet sizes
    # (and exercise the multi-band path even at the toy shapes).
    rows_a = _pick_row_band(H, W, target_m=128)
    m_band = min(M, 128)

    kern = functools.partial(_bottleneck_kernel, H=H, W=W,
                             c_exp=c_exp, c_mid=c_mid,
                             rows_a=rows_a, m_band=m_band)
    # TODO(synk): add a second "parallel" grid axis (row-bands or c_exp split)
    # so v7x's two TensorCores stay busy when N == 1.
    out = pl.pallas_call(
        kern,
        out_shape=jax.ShapeDtypeStruct((N, M, c_exp), jnp.bfloat16),
        grid_spec=pltpu.PrefetchScalarGridSpec(
            num_scalar_prefetch=0,
            grid=(N,),
            in_specs=[
                pl.BlockSpec((1, M, cin_p), lambda b: (b, 0, 0)),
                pl.BlockSpec((cin_p, c_exp + c_mid), lambda b: (0, 0)),
                pl.BlockSpec((1, c_exp + c_mid), lambda b: (0, 0)),
                pl.BlockSpec((1, c_exp + c_mid), lambda b: (0, 0)),
                pl.BlockSpec((9 * c_mid, c_mid), lambda b: (0, 0)),
                pl.BlockSpec((1, c_mid), lambda b: (0, 0)),
                pl.BlockSpec((1, c_mid), lambda b: (0, 0)),
                pl.BlockSpec((c_mid, c_exp), lambda b: (0, 0)),
                pl.BlockSpec((1, c_exp), lambda b: (0, 0)),
                pl.BlockSpec((1, c_exp), lambda b: (0, 0)),
            ],
            out_specs=pl.BlockSpec((1, M, c_exp), lambda b: (b, 0, 0)),
            scratch_shapes=[
                pltpu.VMEM((H + 2, W + 2, c_mid), jnp.bfloat16),  # zero-halo h1
                pltpu.VMEM((M, 9 * c_mid), jnp.bfloat16),         # im2col patch
                pltpu.VMEM((M, c_exp), jnp.bfloat16),             # BN'd shortcut
            ],
        ),
        compiler_params=pltpu.CompilerParams(
            dimension_semantics=("parallel",),
            # Stay well under v7x's 64 MiB physical VMEM (headroom for the
            # compiler's own scratch / double buffering).
            vmem_limit_bytes=48 * 1024 * 1024,
        ),
    )(x, wA, sA, bA, w2p, s2p, b2p, w3, s3p, b3p)

    out = out[:, :, :cexp].astype(jnp.float32).reshape(N, H, W, cexp)
    return jnp.transpose(out, (0, 3, 1, 2))  # NHWC -> NCHW


# ------------------------ pure-JAX reference check --------------------------

def _ref_conv(x_nchw, w_mat, kh, kw, stride):
    Cin = x_nchw.shape[1]
    Cout = w_mat.shape[1]
    w = jnp.transpose(w_mat.reshape(kh, kw, Cin, Cout), (3, 2, 0, 1))  # OIHW
    pad = (kh - 1) // 2
    return jax.lax.conv_general_dilated(
        x_nchw, w, (stride, stride), ((pad, pad), (pad, pad)),
        dimension_numbers=("NCHW", "OIHW", "NCHW"))


def _ref_bn(x, gamma, beta, mean, var):
    s = gamma / jnp.sqrt(var + BATCH_NORM_EPSILON)
    b = beta - mean * s
    return x * s[None, :, None, None] + b[None, :, None, None]


def bottleneck_block_reference(x_nchw, p, stride=1):
    sc = _ref_bn(_ref_conv(x_nchw, p["proj_w"], 1, 1, stride), *p["proj_bn"])
    h = jax.nn.relu(_ref_bn(_ref_conv(x_nchw, p["w1"], 1, 1, 1), *p["bn1"]))
    h = jax.nn.relu(_ref_bn(_ref_conv(h, p["w2"], 3, 3, stride), *p["bn2"]))
    h = _ref_bn(_ref_conv(h, p["w3"], 1, 1, 1), *p["bn3"])
    return jax.nn.relu(sc + h)


# --------------------------- parameter init ----------------------------------

def make_params(key, in_channels, out_channels):
    oc, ex = out_channels, 4 * out_channels
    ks = jax.random.split(key, 8)

    def w(k, fan_in, fan_out):
        return 0.1 * jax.random.normal(k, (fan_in, fan_out), jnp.float32)

    def bn(k, c):
        k1, k2, k3, k4 = jax.random.split(k, 4)
        gamma = 1.0 + 0.1 * jax.random.normal(k1, (c,), jnp.float32)
        beta = 0.1 * jax.random.normal(k2, (c,), jnp.float32)
        mean = 0.1 * jax.random.normal(k3, (c,), jnp.float32)
        var = 1.0 + 0.1 * jax.random.uniform(k4, (c,), jnp.float32)
        return (gamma, beta, mean, var)

    return {
        "proj_w": w(ks[0], in_channels, ex),        # 1x1 conv (Cin, 4*oc)
        "proj_bn": bn(ks[1], ex),
        "w1": w(ks[2], in_channels, oc),            # 1x1 conv (Cin, oc)
        "bn1": bn(ks[3], oc),
        "w2": w(ks[4], 9 * oc, oc),                 # 3x3 conv, rows (kh,kw,ci)
        "bn2": bn(ks[5], oc),
        "w3": w(ks[6], oc, ex),                     # 1x1 conv (oc, 4*oc)
        "bn3": bn(ks[7], ex),
    }


# --------------------------------- main ---------------------------------------

if __name__ == "__main__":
    key = jax.random.PRNGKey(0)
    kx, kp = jax.random.split(key)

    N, Cin, H, W = 2, 8, 16, 16
    out_channels = 4        # block output channels = 4 * out_channels = 16
    stride = 1

    x = jax.random.normal(kx, (N, Cin, H, W), jnp.float32)
    params = make_params(kp, Cin, out_channels)

    out = bottleneck_block(x, params, stride=stride)
    out = jax.block_until_ready(out)

    ref = jax.block_until_ready(bottleneck_block_reference(x, params, stride=stride))

    assert out.shape == (N, 4 * out_channels, H, W), out.shape
    # bf16 MXU inputs / bf16 output => loosened tolerance vs full-f32 reference
    np.testing.assert_allclose(np.asarray(out), np.asarray(ref),
                               rtol=3e-2, atol=3e-2)

    print("KERNEL_OK")
</pallas_src>

<mosaic_0001>
module attributes {stable_mosaic.version = 11 : i64} {
  func.func @_bottleneck_kernel(%arg0: i32, %arg1: memref<1x256x128xbf16, #tpu.memory_space<vmem>>, %arg2: memref<128x256xbf16, #tpu.memory_space<vmem>>, %arg3: memref<1x256xf32, #tpu.memory_space<vmem>>, %arg4: memref<1x256xf32, #tpu.memory_space<vmem>>, %arg5: memref<1152x128xbf16, #tpu.memory_space<vmem>>, %arg6: memref<1x128xf32, #tpu.memory_space<vmem>>, %arg7: memref<1x128xf32, #tpu.memory_space<vmem>>, %arg8: memref<128x128xbf16, #tpu.memory_space<vmem>>, %arg9: memref<1x128xf32, #tpu.memory_space<vmem>>, %arg10: memref<1x128xf32, #tpu.memory_space<vmem>>, %arg11: memref<1x256x128xbf16, #tpu.memory_space<vmem>>, %arg12: memref<18x18x128xbf16, #tpu.memory_space<vmem>>, %arg13: memref<256x1152xbf16, #tpu.memory_space<vmem>>, %arg14: memref<256x128xbf16, #tpu.memory_space<vmem>>) attributes {dimension_semantics = [#tpu.dimension_semantics<parallel>], iteration_bounds = array<i64: 2>, scalar_prefetch = 0 : i64, scratch_operands = 3 : i64, tpu.core_type = #tpu.core_type<tc>, window_params = [{transform_indices = @transform_0, window_bounds = array<i64: 1, 256, 128>}, {pipeline_mode = #tpu.pipeline_mode<synchronous>, transform_indices = @transform_1, window_bounds = array<i64: 128, 256>}, {pipeline_mode = #tpu.pipeline_mode<synchronous>, transform_indices = @transform_2, window_bounds = array<i64: 1, 256>}, {pipeline_mode = #tpu.pipeline_mode<synchronous>, transform_indices = @transform_3, window_bounds = array<i64: 1, 256>}, {pipeline_mode = #tpu.pipeline_mode<synchronous>, transform_indices = @transform_4, window_bounds = array<i64: 1152, 128>}, {pipeline_mode = #tpu.pipeline_mode<synchronous>, transform_indices = @transform_5, window_bounds = array<i64: 1, 128>}, {pipeline_mode = #tpu.pipeline_mode<synchronous>, transform_indices = @transform_6, window_bounds = array<i64: 1, 128>}, {pipeline_mode = #tpu.pipeline_mode<synchronous>, transform_indices = @transform_7, window_bounds = array<i64: 128, 128>}, {pipeline_mode = #tpu.pipeline_mode<synchronous>, transform_indices = @transform_8, window_bounds = array<i64: 1, 128>}, {pipeline_mode = #tpu.pipeline_mode<synchronous>, transform_indices = @transform_9, window_bounds = array<i64: 1, 128>}, {transform_indices = @transform_10, window_bounds = array<i64: 1, 256, 128>}]} {
    %cst = arith.constant 0.000000e+00 : bf16
    %0 = vector.broadcast %cst : bf16 to vector<1x18x128xbf16>
    %cst_0 = arith.constant 0.000000e+00 : bf16
    %1 = vector.broadcast %cst_0 : bf16 to vector<16x1x128xbf16>
    %c0 = arith.constant 0 : index
    %c0_1 = arith.constant 0 : index
    %c0_2 = arith.constant 0 : index
    %2 = vector.load %arg12[%c0, %c0_1, %c0_2] : memref<18x18x128xbf16, #tpu.memory_space<vmem>>, vector<1x18x128xbf16>
    tpu.vector_store %arg12[%c0, %c0_1, %c0_2], %0 {strides = array<i32>} : memref<18x18x128xbf16, #tpu.memory_space<vmem>>, vector<1x18x128xbf16>,
    %c17 = arith.constant 17 : index
    %c0_3 = arith.constant 0 : index
    %c0_4 = arith.constant 0 : index
    %3 = vector.load %arg12[%c17, %c0_3, %c0_4] : memref<18x18x128xbf16, #tpu.memory_space<vmem>>, vector<1x18x128xbf16>
    tpu.vector_store %arg12[%c17, %c0_3, %c0_4], %0 {strides = array<i32>} : memref<18x18x128xbf16, #tpu.memory_space<vmem>>, vector<1x18x128xbf16>,
    %c1 = arith.constant 1 : index
    %c0_5 = arith.constant 0 : index
    %c0_6 = arith.constant 0 : index
    %4 = vector.load %arg12[%c1, %c0_5, %c0_6] : memref<18x18x128xbf16, #tpu.memory_space<vmem>>, vector<16x1x128xbf16>
    tpu.vector_store %arg12[%c1, %c0_5, %c0_6], %1 {strides = array<i32>} : memref<18x18x128xbf16, #tpu.memory_space<vmem>>, vector<16x1x128xbf16>,
    %c1_7 = arith.constant 1 : index
    %c17_8 = arith.constant 17 : index
    %c0_9 = arith.constant 0 : index
    %5 = vector.load %arg12[%c1_7, %c17_8, %c0_9] : memref<18x18x128xbf16, #tpu.memory_space<vmem>>, vector<16x1x128xbf16>
    tpu.vector_store %arg12[%c1_7, %c17_8, %c0_9], %1 {strides = array<i32>} : memref<18x18x128xbf16, #tpu.memory_space<vmem>>, vector<16x1x128xbf16>,
    %c0_10 = arith.constant 0 : index
    %c0_11 = arith.constant 0 : index
    %6 = vector.load %arg3[%c0_10, %c0_11] : memref<1x256xf32, #tpu.memory_space<vmem>>, vector<1x256xf32>
    %c0_12 = arith.constant 0 : index
    %c0_13 = arith.constant 0 : index
    %7 = vector.load %arg4[%c0_12, %c0_13] : memref<1x256xf32, #tpu.memory_space<vmem>>, vector<1x256xf32>
    %c0_14 = arith.constant 0 : index
    %c0_15 = arith.constant 0 : index
    %c0_16 = arith.constant 0 : index
    %8 = vector.load %arg1[%c0_14, %c0_15, %c0_16] : memref<1x256x128xbf16, #tpu.memory_space<vmem>>, vector<1x128x128xbf16>
    %9 = vector.shape_cast %8 : vector<1x128x128xbf16> to vector<128x128xbf16>
    %c0_17 = arith.constant 0 : index
    %c0_18 = arith.constant 0 : index
    %10 = vector.load %arg2[%c0_17, %c0_18] : memref<128x256xbf16, #tpu.memory_space<vmem>>, vector<128x256xbf16>
    %cst_19 = arith.constant dense<0.000000e+00> : vector<128x256xf32>
    %11 = tpu.matmul %9, %10, %cst_19 {dimension_numbers = #tpu.dot_dimension_numbers<[1], [0], [0], [1], [0, 0, 1, 1], [], []>} : vector<128x128xbf16>, vector<128x256xbf16>, vector<128x256xf32> -> vector<128x256xf32>
    %12 = vector.broadcast %6 : vector<1x256xf32> to vector<128x256xf32>
    %13 = arith.mulf %11, %12 : vector<128x256xf32>
    %14 = vector.broadcast %7 : vector<1x256xf32> to vector<128x256xf32>
    %15 = arith.addf %13, %14 : vector<128x256xf32>
    %16 = vector.extract_strided_slice %15 {offsets = [0, 0], sizes = [128, 128], strides = [1, 1]} : vector<128x256xf32> to vector<128x128xf32>
    %17 = arith.truncf %16 : vector<128x128xf32> to vector<128x128xbf16>
    %c0_20 = arith.constant 0 : index
    %c0_21 = arith.constant 0 : index
    %18 = vector.load %arg14[%c0_20, %c0_21] : memref<256x128xbf16, #tpu.memory_space<vmem>>, vector<128x128xbf16>
    tpu.vector_store %arg14[%c0_20, %c0_21], %17 {strides = array<i32>} : memref<256x128xbf16, #tpu.memory_space<vmem>>, vector<128x128xbf16>,
    %19 = vector.extract_strided_slice %15 {offsets = [0, 128], sizes = [128, 128], strides = [1, 1]} : vector<128x256xf32> to vector<128x128xf32>
    %cst_22 = arith.constant 0.000000e+00 : f32
    %20 = vector.broadcast %cst_22 : f32 to vector<128x128xf32>
    %21 = arith.maximumf %19, %20 : vector<128x128xf32>
    %22 = arith.truncf %21 : vector<128x128xf32> to vector<128x128xbf16>
    %23 = vector.shape_cast %22 : vector<128x128xbf16> to vector<8x16x128xbf16>
    %c1_23 = arith.constant 1 : index
    %c1_24 = arith.constant 1 : index
    %c0_25 = arith.constant 0 : index
    %24 = vector.load %arg12[%c1_23, %c1_24, %c0_25] : memref<18x18x128xbf16, #tpu.memory_space<vmem>>, vector<8x16x128xbf16>
    tpu.vector_store %arg12[%c1_23, %c1_24, %c0_25], %23 {strides = array<i32>} : memref<18x18x128xbf16, #tpu.memory_space<vmem>>, vector<8x16x128xbf16>,
    %c0_26 = arith.constant 0 : index
    %c128 = arith.constant 128 : index
    %c0_27 = arith.constant 0 : index
    %25 = vector.load %arg1[%c0_26, %c128, %c0_27] : memref<1x256x128xbf16, #tpu.memory_space<vmem>>, vector<1x128x128xbf16>
    %26 = vector.shape_cast %25 : vector<1x128x128xbf16> to vector<128x128xbf16>
    %c0_28 = arith.constant 0 : index
    %c0_29 = arith.constant 0 : index
    %27 = vector.load %arg2[%c0_28, %c0_29] : memref<128x256xbf16, #tpu.memory_space<vmem>>, vector<128x256xbf16>
    %cst_30 = arith.constant dense<0.000000e+00> : vector<128x256xf32>
    %28 = tpu.matmul %26, %27, %cst_30 {dimension_numbers = #tpu.dot_dimension_numbers<[1], [0], [0], [1], [0, 0, 1, 1], [], []>} : vector<128x128xbf16>, vector<128x256xbf16>, vector<128x256xf32> -> vector<128x256xf32>
    %29 = vector.broadcast %6 : vector<1x256xf32> to vector<128x256xf32>
    %30 = arith.mulf %28, %29 : vector<128x256xf32>
    %31 = vector.broadcast %7 : vector<1x256xf32> to vector<128x256xf32>
    %32 = arith.addf %30, %31 : vector<128x256xf32>
    %33 = vector.extract_strided_slice %32 {offsets = [0, 0], sizes = [128, 128], strides = [1, 1]} : vector<128x256xf32> to vector<128x128xf32>
    %34 = arith.truncf %33 : vector<128x128xf32> to vector<128x128xbf16>
    %c128_31 = arith.constant 128 : index
    %c0_32 = arith.constant 0 : index
    %35 = vector.load %arg14[%c128_31, %c0_32] : memref<256x128xbf16, #tpu.memory_space<vmem>>, vector<128x128xbf16>
    tpu.vector_store %arg14[%c128_31, %c0_32], %34 {strides = array<i32>} : memref<256x128xbf16, #tpu.memory_space<vmem>>, vector<128x128xbf16>,
    %36 = vector.extract_strided_slice %32 {offsets = [0, 128], sizes = [128, 128], strides = [1, 1]} : vector<128x256xf32> to vector<128x128xf32>
    %cst_33 = arith.constant 0.000000e+00 : f32
    %37 = vector.broadcast %cst_33 : f32 to vector<128x128xf32>
    %38 = arith.maximumf %36, %37 : vector<128x128xf32>
    %39 = arith.truncf %38 : vector<128x128xf32> to vector<128x128xbf16>
    %40 = vector.shape_cast %39 : vector<128x128xbf16> to vector<8x16x128xbf16>
    %c9 = arith.constant 9 : index
    %c1_34 = arith.constant 1 : index
    %c0_35 = arith.constant 0 : index
    %41 = vector.load %arg12[%c9, %c1_34, %c0_35] : memref<18x18x128xbf16, #tpu.memory_space<vmem>>, vector<8x16x128xbf16>
    tpu.vector_store %arg12[%c9, %c1_34, %c0_35], %40 {strides = array<i32>} : memref<18x18x128xbf16, #tpu.memory_space<vmem>>, vector<8x16x128xbf16>,
    %c0_36 = arith.constant 0 : index
    %c0_37 = arith.constant 0 : index
    %c0_38 = arith.constant 0 : index
    %42 = vector.load %arg12[%c0_36, %c0_37, %c0_38] : memref<18x18x128xbf16, #tpu.memory_space<vmem>>, vector<16x16x128xbf16>
    %43 = vector.shape_cast %42 : vector<16x16x128xbf16> to vector<256x128xbf16>
    %c0_39 = arith.constant 0 : index
    %c0_40 = arith.constant 0 : index
    %44 = vector.load %arg13[%c0_39, %c0_40] : memref<256x1152xbf16, #tpu.memory_space<vmem>>, vector<256x128xbf16>
    tpu.vector_store %arg13[%c0_39, %c0_40], %43 {strides = array<i32>} : memref<256x1152xbf16, #tpu.memory_space<vmem>>, vector<256x128xbf16>,
    %c0_41 = arith.constant 0 : index
    %c1_42 = arith.constant 1 : index
    %c0_43 = arith.constant 0 : index
    %45 = vector.load %arg12[%c0_41, %c1_42, %c0_43] : memref<18x18x128xbf16, #tpu.memory_space<vmem>>, vector<16x16x128xbf16>
    %46 = vector.shape_cast %45 : vector<16x16x128xbf16> to vector<256x128xbf16>
    %c0_44 = arith.constant 0 : index
    %c128_45 = arith.constant 128 : index
    %47 = vector.load %arg13[%c0_44, %c128_45] : memref<256x1152xbf16, #tpu.memory_space<vmem>>, vector<256x128xbf16>
    tpu.vector_store %arg13[%c0_44, %c128_45], %46 {strides = array<i32>} : memref<256x1152xbf16, #tpu.memory_space<vmem>>, vector<256x128xbf16>,
    %c0_46 = arith.constant 0 : index
    %c2 = arith.constant 2 : index
    %c0_47 = arith.constant 0 : index
    %48 = vector.load %arg12[%c0_46, %c2, %c0_47] : memref<18x18x128xbf16, #tpu.memory_space<vmem>>, vector<16x16x128xbf16>
    %49 = vector.shape_cast %48 : vector<16x16x128xbf16> to vector<256x128xbf16>
    %c0_48 = arith.constant 0 : index
    %c256 = arith.constant 256 : index
    %50 = vector.load %arg13[%c0_48, %c256] : memref<256x1152xbf16, #tpu.memory_space<vmem>>, vector<256x128xbf16>
    tpu.vector_store %arg13[%c0_48, %c256], %49 {strides = array<i32>} : memref<256x1152xbf16, #tpu.memory_space<vmem>>, vector<256x128xbf16>,
    %c1_49 = arith.constant 1 : index
    %c0_50 = arith.constant 0 : index
    %c0_51 = arith.constant 0 : index
    %51 = vector.load %arg12[%c1_49, %c0_50, %c0_51] : memref<18x18x128xbf16, #tpu.memory_space<vmem>>, vector<16x16x128xbf16>
    %52 = vector.shape_cast %51 : vector<16x16x128xbf16> to vector<256x128xbf16>
    %c0_52 = arith.constant 0 : index
    %c384 = arith.constant 384 : index
    %53 = vector.load %arg13[%c0_52, %c384] : memref<256x1152xbf16, #tpu.memory_space<vmem>>, vector<256x128xbf16>
    tpu.vector_store %arg13[%c0_52, %c384], %52 {strides = array<i32>} : memref<256x1152xbf16, #tpu.memory_space<vmem>>, vector<256x128xbf16>,
    %c1_53 = arith.constant 1 : index
    %c1_54 = arith.constant 1 : index
    %c0_55 = arith.constant 0 : index
    %54 = vector.load %arg12[%c1_53, %c1_54, %c0_55] : memref<18x18x128xbf16, #tpu.memory_space<vmem>>, vector<16x16x128xbf16>
    %55 = vector.shape_cast %54 : vector<16x16x128xbf16> to vector<256x128xbf16>
    %c0_56 = arith.constant 0 : index
    %c512 = arith.constant 512 : index
    %56 = vector.load %arg13[%c0_56, %c512] : memref<256x1152xbf16, #tpu.memory_space<vmem>>, vector<256x128xbf16>
    tpu.vector_store %arg13[%c0_56, %c512], %55 {strides = array<i32>} : memref<256x1152xbf16, #tpu.memory_space<vmem>>, vector<256x128xbf16>,
    %c1_57 = arith.constant 1 : index
    %c2_58 = arith.constant 2 : index
    %c0_59 = arith.constant 0 : index
    %57 = vector.load %arg12[%c1_57, %c2_58, %c0_59] : memref<18x18x128xbf16, #tpu.memory_space<vmem>>, vector<16x16x128xbf16>
    %58 = vector.shape_cast %57 : vector<16x16x128xbf16> to vector<256x128xbf16>
    %c0_60 = arith.constant 0 : index
    %c640 = arith.constant 640 : index
    %59 = vector.load %arg13[%c0_60, %c640] : memref<256x1152xbf16, #tpu.memory_space<vmem>>, vector<256x128xbf16>
    tpu.vector_store %arg13[%c0_60, %c640], %58 {strides = array<i32>} : memref<256x1152xbf16, #tpu.memory_space<vmem>>, vector<256x128xbf16>,
    %c2_61 = arith.constant 2 : index
    %c0_62 = arith.constant 0 : index
    %c0_63 = arith.constant 0 : index
    %60 = vector.load %arg12[%c2_61, %c0_62, %c0_63] : memref<18x18x128xbf16, #tpu.memory_space<vmem>>, vector<16x16x128xbf16>
    %61 = vector.shape_cast %60 : vector<16x16x128xbf16> to vector<256x128xbf16>
    %c0_64 = arith.constant 0 : index
    %c768 = arith.constant 768 : index
    %62 = vector.load %arg13[%c0_64, %c768] : memref<256x1152xbf16, #tpu.memory_space<vmem>>, vector<256x128xbf16>
    tpu.vector_store %arg13[%c0_64, %c768], %61 {strides = array<i32>} : memref<256x1152xbf16, #tpu.memory_space<vmem>>, vector<256x128xbf16>,
    %c2_65 = arith.constant 2 : index
    %c1_66 = arith.constant 1 : index
    %c0_67 = arith.constant 0 : index
    %63 = vector.load %arg12[%c2_65, %c1_66, %c0_67] : memref<18x18x128xbf16, #tpu.memory_space<vmem>>, vector<16x16x128xbf16>
    %64 = vector.shape_cast %63 : vector<16x16x128xbf16> to vector<256x128xbf16>
    %c0_68 = arith.constant 0 : index
    %c896 = arith.constant 896 : index
    %65 = vector.load %arg13[%c0_68, %c896] : memref<256x1152xbf16, #tpu.memory_space<vmem>>, vector<256x128xbf16>
    tpu.vector_store %arg13[%c0_68, %c896], %64 {strides = array<i32>} : memref<256x1152xbf16, #tpu.memory_space<vmem>>, vector<256x128xbf16>,
    %c2_69 = arith.constant 2 : index
    %c2_70 = arith.constant 2 : index
    %c0_71 = arith.constant 0 : index
    %66 = vector.load %arg12[%c2_69, %c2_70, %c0_71] : memref<18x18x128xbf16, #tpu.memory_space<vmem>>, vector<16x16x128xbf16>
    %67 = vector.shape_cast %66 : vector<16x16x128xbf16> to vector<256x128xbf16>
    %c0_72 = arith.constant 0 : index
    %c1024 = arith.constant 1024 : index
    %68 = vector.load %arg13[%c0_72, %c1024] : memref<256x1152xbf16, #tpu.memory_space<vmem>>, vector<256x128xbf16>
    tpu.vector_store %arg13[%c0_72, %c1024], %67 {strides = array<i32>} : memref<256x1152xbf16, #tpu.memory_space<vmem>>, vector<256x128xbf16>,
    %c0_73 = arith.constant 0 : index
    %c0_74 = arith.constant 0 : index
    %69 = vector.load %arg6[%c0_73, %c0_74] : memref<1x128xf32, #tpu.memory_space<vmem>>, vector<1x128xf32>
    %c0_75 = arith.constant 0 : index
    %c0_76 = arith.constant 0 : index
    %70 = vector.load %arg7[%c0_75, %c0_76] : memref<1x128xf32, #tpu.memory_space<vmem>>, vector<1x128xf32>
    %c0_77 = arith.constant 0 : index
    %c0_78 = arith.constant 0 : index
    %71 = vector.load %arg9[%c0_77, %c0_78] : memref<1x128xf32, #tpu.memory_space<vmem>>, vector<1x128xf32>
    %c0_79 = arith.constant 0 : index
    %c0_80 = arith.constant 0 : index
    %72 = vector.load %arg10[%c0_79, %c0_80] : memref<1x128xf32, #tpu.memory_space<vmem>>, vector<1x128xf32>
    %c0_81 = arith.constant 0 : index
    %c0_82 = arith.constant 0 : index
    %73 = vector.load %arg13[%c0_81, %c0_82] : memref<256x1152xbf16, #tpu.memory_space<vmem>>, vector<128x1152xbf16>
    %c0_83 = arith.constant 0 : index
    %c0_84 = arith.constant 0 : index
    %74 = vector.load %arg5[%c0_83, %c0_84] : memref<1152x128xbf16, #tpu.memory_space<vmem>>, vector<1152x128xbf16>
    %cst_85 = arith.constant dense<0.000000e+00> : vector<128x128xf32>
    %75 = tpu.matmul %73, %74, %cst_85 {dimension_numbers = #tpu.dot_dimension_numbers<[1], [0], [0], [1], [0, 0, 1, 1], [], []>} : vector<128x1152xbf16>, vector<1152x128xbf16>, vector<128x128xf32> -> vector<128x128xf32>
    %76 = vector.broadcast %69 : vector<1x128xf32> to vector<128x128xf32>
    %77 = arith.mulf %75, %76 : vector<128x128xf32>
    %78 = vector.broadcast %70 : vector<1x128xf32> to vector<128x128xf32>
    %79 = arith.addf %77, %78 : vector<128x128xf32>
    %cst_86 = arith.constant 0.000000e+00 : f32
    %80 = vector.broadcast %cst_86 : f32 to vector<128x128xf32>
    %81 = arith.maximumf %79, %80 : vector<128x128xf32>
    %82 = arith.truncf %81 : vector<128x128xf32> to vector<128x128xbf16>
    %c0_87 = arith.constant 0 : index
    %c0_88 = arith.constant 0 : index
    %83 = vector.load %arg8[%c0_87, %c0_88] : memref<128x128xbf16, #tpu.memory_space<vmem>>, vector<128x128xbf16>
    %cst_89 = arith.constant dense<0.000000e+00> : vector<128x128xf32>
    %84 = tpu.matmul %82, %83, %cst_89 {dimension_numbers = #tpu.dot_dimension_numbers<[1], [0], [0], [1], [0, 0, 1, 1], [], []>} : vector<128x128xbf16>, vector<128x128xbf16>, vector<128x128xf32> -> vector<128x128xf32>
    %c0_90 = arith.constant 0 : index
    %c0_91 = arith.constant 0 : index
    %85 = vector.load %arg14[%c0_90, %c0_91] : memref<256x128xbf16, #tpu.memory_space<vmem>>, vector<128x128xbf16>
    %86 = arith.extf %85 : vector<128x128xbf16> to vector<128x128xf32>
    %87 = vector.broadcast %71 : vector<1x128xf32> to vector<128x128xf32>
    %88 = arith.mulf %84, %87 : vector<128x128xf32>
    %89 = vector.broadcast %72 : vector<1x128xf32> to vector<128x128xf32>
    %90 = arith.addf %88, %89 : vector<128x128xf32>
    %91 = arith.addf %90, %86 : vector<128x128xf32>
    %cst_92 = arith.constant 0.000000e+00 : f32
    %92 = vector.broadcast %cst_92 : f32 to vector<128x128xf32>
    %93 = arith.maximumf %91, %92 : vector<128x128xf32>
    %94 = arith.truncf %93 : vector<128x128xf32> to vector<128x128xbf16>
    %c0_93 = arith.constant 0 : index
    %c0_94 = arith.constant 0 : index
    %c0_95 = arith.constant 0 : index
    %95 = vector.load %arg11[%c0_93, %c0_94, %c0_95] : memref<1x256x128xbf16, #tpu.memory_space<vmem>>, vector<1x128x128xbf16>
    %96 = vector.shape_cast %95 : vector<1x128x128xbf16> to vector<128x128xbf16>
    %97 = vector.shape_cast %94 : vector<128x128xbf16> to vector<1x128x128xbf16>
    tpu.vector_store %arg11[%c0_93, %c0_94, %c0_95], %97 {strides = array<i32>} : memref<1x256x128xbf16, #tpu.memory_space<vmem>>, vector<1x128x128xbf16>,
    %c128_96 = arith.constant 128 : index
    %c0_97 = arith.constant 0 : index
    %98 = vector.load %arg13[%c128_96, %c0_97] : memref<256x1152xbf16, #tpu.memory_space<vmem>>, vector<128x1152xbf16>
    %c0_98 = arith.constant 0 : index
    %c0_99 = arith.constant 0 : index
    %99 = vector.load %arg5[%c0_98, %c0_99] : memref<1152x128xbf16, #tpu.memory_space<vmem>>, vector<1152x128xbf16>
    %cst_100 = arith.constant dense<0.000000e+00> : vector<128x128xf32>
    %100 = tpu.matmul %98, %99, %cst_100 {dimension_numbers = #tpu.dot_dimension_numbers<[1], [0], [0], [1], [0, 0, 1, 1], [], []>} : vector<128x1152xbf16>, vector<1152x128xbf16>, vector<128x128xf32> -> vector<128x128xf32>
    %101 = vector.broadcast %69 : vector<1x128xf32> to vector<128x128xf32>
    %102 = arith.mulf %100, %101 : vector<128x128xf32>
    %103 = vector.broadcast %70 : vector<1x128xf32> to vector<128x128xf32>
    %104 = arith.addf %102, %103 : vector<128x128xf32>
    %cst_101 = arith.constant 0.000000e+00 : f32
    %105 = vector.broadcast %cst_101 : f32 to vector<128x128xf32>
    %106 = arith.maximumf %104, %105 : vector<128x128xf32>
    %107 = arith.truncf %106 : vector<128x128xf32> to vector<128x128xbf16>
    %c0_102 = arith.constant 0 : index
    %c0_103 = arith.constant 0 : index
    %108 = vector.load %arg8[%c0_102, %c0_103] : memref<128x128xbf16, #tpu.memory_space<vmem>>, vector<128x128xbf16>
    %cst_104 = arith.constant dense<0.000000e+00> : vector<128x128xf32>
    %109 = tpu.matmul %107, %108, %cst_104 {dimension_numbers = #tpu.dot_dimension_numbers<[1], [0], [0], [1], [0, 0, 1, 1], [], []>} : vector<128x128xbf16>, vector<128x128xbf16>, vector<128x128xf32> -> vector<128x128xf32>
    %c128_105 = arith.constant 128 : index
    %c0_106 = arith.constant 0 : index
    %110 = vector.load %arg14[%c128_105, %c0_106] : memref<256x128xbf16, #tpu.memory_space<vmem>>, vector<128x128xbf16>
    %111 = arith.extf %110 : vector<128x128xbf16> to vector<128x128xf32>
    %112 = vector.broadcast %71 : vector<1x128xf32> to vector<128x128xf32>
    %113 = arith.mulf %109, %112 : vector<128x128xf32>
    %114 = vector.broadcast %72 : vector<1x128xf32> to vector<128x128xf32>
    %115 = arith.addf %113, %114 : vector<128x128xf32>
    %116 = arith.addf %115, %111 : vector<128x128xf32>
    %cst_107 = arith.constant 0.000000e+00 : f32
    %117 = vector.broadcast %cst_107 : f32 to vector<128x128xf32>
    %118 = arith.maximumf %116, %117 : vector<128x128xf32>
    %119 = arith.truncf %118 : vector<128x128xf32> to vector<128x128xbf16>
    %c0_108 = arith.constant 0 : index
    %c128_109 = arith.constant 128 : index
    %c0_110 = arith.constant 0 : index
    %120 = vector.load %arg11[%c0_108, %c128_109, %c0_110] : memref<1x256x128xbf16, #tpu.memory_space<vmem>>, vector<1x128x128xbf16>
    %121 = vector.shape_cast %120 : vector<1x128x128xbf16> to vector<128x128xbf16>
    %122 = vector.shape_cast %119 : vector<128x128xbf16> to vector<1x128x128xbf16>
    tpu.vector_store %arg11[%c0_108, %c128_109, %c0_110], %122 {strides = array<i32>} : memref<1x256x128xbf16, #tpu.memory_space<vmem>>, vector<1x128x128xbf16>,
    return
  }
  func.func @transform_0(%arg0: i32) -> (i32, i32, i32) {
    %c0_i32 = arith.constant 0 : i32
    %c0_i32_0 = arith.constant 0 : i32
    %c0_i32_1 = arith.constant 0 : i32
    return %arg0, %c0_i32, %c0_i32_0 : i32, i32, i32
  }
  func.func @transform_1(%arg0: i32) -> (i32, i32) {
    %c0_i32 = arith.constant 0 : i32
    %c0_i32_0 = arith.constant 0 : i32
    %c0_i32_1 = arith.constant 0 : i32
    return %c0_i32, %c0_i32_0 : i32, i32
  }
  func.func @transform_2(%arg0: i32) -> (i32, i32) {
    %c0_i32 = arith.constant 0 : i32
    %c0_i32_0 = arith.constant 0 : i32
    %c0_i32_1 = arith.constant 0 : i32
    return %c0_i32, %c0_i32_0 : i32, i32
  }
  func.func @transform_3(%arg0: i32) -> (i32, i32) {
    %c0_i32 = arith.constant 0 : i32
    %c0_i32_0 = arith.constant 0 : i32
    %c0_i32_1 = arith.constant 0 : i32
    return %c0_i32, %c0_i32_0 : i32, i32
  }
  func.func @transform_4(%arg0: i32) -> (i32, i32) {
    %c0_i32 = arith.constant 0 : i32
    %c0_i32_0 = arith.constant 0 : i32
    %c0_i32_1 = arith.constant 0 : i32
    return %c0_i32, %c0_i32_0 : i32, i32
  }
  func.func @transform_5(%arg0: i32) -> (i32, i32) {
    %c0_i32 = arith.constant 0 : i32
    %c0_i32_0 = arith.constant 0 : i32
    %c0_i32_1 = arith.constant 0 : i32
    return %c0_i32, %c0_i32_0 : i32, i32
  }
  func.func @transform_6(%arg0: i32) -> (i32, i32) {
    %c0_i32 = arith.constant 0 : i32
    %c0_i32_0 = arith.constant 0 : i32
    %c0_i32_1 = arith.constant 0 : i32
    return %c0_i32, %c0_i32_0 : i32, i32
  }
  func.func @transform_7(%arg0: i32) -> (i32, i32) {
    %c0_i32 = arith.constant 0 : i32
    %c0_i32_0 = arith.constant 0 : i32
    %c0_i32_1 = arith.constant 0 : i32
    return %c0_i32, %c0_i32_0 : i32, i32
  }
  func.func @transform_8(%arg0: i32) -> (i32, i32) {
    %c0_i32 = arith.constant 0 : i32
    %c0_i32_0 = arith.constant 0 : i32
    %c0_i32_1 = arith.constant 0 : i32
    return %c0_i32, %c0_i32_0 : i32, i32
  }
  func.func @transform_9(%arg0: i32) -> (i32, i32) {
    %c0_i32 = arith.constant 0 : i32
    %c0_i32_0 = arith.constant 0 : i32
    %c0_i32_1 = arith.constant 0 : i32
    return %c0_i32, %c0_i32_0 : i32, i32
  }
  func.func @transform_10(%arg0: i32) -> (i32, i32, i32) {
    %c0_i32 = arith.constant 0 : i32
    %c0_i32_0 = arith.constant 0 : i32
    %c0_i32_1 = arith.constant 0 : i32
    return %arg0, %c0_i32, %c0_i32_0 : i32, i32, i32
  }
}

</mosaic_0001>

<llo_original>
// kernel: tpu_custom_call.1
$region0: #{tpu_custom_call.1}
  #allocation0 [shape = 'u32[]', space=smem, size = 0x4, offset = 0x4, fixed_abs, tag = 'smem constant byte address 0x4 - core index']
  #allocation1 [shape = 'u32[144,128]{1,0:T(1,128)}', space=vmem, size = 0x12000, scoped, tag = 'internal scratch']
  #allocation2 [shape = 'bf16[18,18,128]{2,1,0:T(8,128)(2,1)}', space=vmem, size = 0x1b000, scoped, tag = 'scratch operand']
  #allocation3 [shape = 'bf16[256,1152]{1,0:T(16,128)(2,1)}', space=vmem, size = 0x90000, scoped, tag = 'scratch operand']
  #allocation4 [shape = 'bf16[256,128]{1,0:T(16,128)(2,1)}', space=vmem, size = 0x10000, scoped, tag = 'scratch operand']
  %s0 = inlined_call_operand.hbm [shape: bf16[2,256,128], index: 0, kind: input, shape index: {}]
  %s1 = inlined_call_operand.hbm [shape: bf16[128,256], index: 1, kind: input, shape index: {}]
  %s2 = inlined_call_operand.vmem [shape: f32[1,256], index: 2, kind: input, shape index: {}]
  %s3 = inlined_call_operand.vmem [shape: f32[1,256], index: 3, kind: input, shape index: {}]
  %s4 = inlined_call_operand.hbm [shape: bf16[1152,128], index: 4, kind: input, shape index: {}]
  %s5 = inlined_call_operand.vmem [shape: f32[1,128], index: 5, kind: input, shape index: {}]
  %s6 = inlined_call_operand.vmem [shape: f32[1,128], index: 6, kind: input, shape index: {}]
  %s7 = inlined_call_operand.hbm [shape: bf16[128,128], index: 7, kind: input, shape index: {}]
  %s8 = inlined_call_operand.vmem [shape: f32[1,128], index: 8, kind: input, shape index: {}]
  %s9 = inlined_call_operand.vmem [shape: f32[1,128], index: 9, kind: input, shape index: {}]
  %s10 = inlined_call_operand.hbm [shape: bf16[2,256,128], index: 10, kind: output, shape index: {}]
  %s11 = sld [smem:[#allocation0]]
  $region89: #{tpu_custom_call.1} parent=0
    _
  %s13 = ssub.s32 1, %s11
  %s14 = scalar_select 0, %s13, %s11
  $region1: #{tpu_custom_call.1} parent=0
    #allocation5 [shape = 'u8[131072]{0}', space=vmem, size = 0x20000, scoped, tag = 'input window, operand 0']
    #allocation6 [shape = 's32[2]{0}', space=sflag, size = 0x8, scoped, tag = 'scoped memory for tpu_custom_call.1']
    #allocation7 [shape = 's32[2]{0}', space=sflag, size = 0x8, scoped, tag = 'scoped memory for tpu_custom_call.1']
    #allocation8 [shape = 'u8[65536]{0}', space=vmem, size = 0x10000, scoped, tag = 'input window, operand 1, single buffered']
    #allocation9 [shape = 's32[1]{0}', space=sflag, size = 0x4, scoped, tag = 'scoped memory for tpu_custom_call.1']
    #allocation10 [shape = 'u8[294912]{0}', space=vmem, size = 0x48000, scoped, tag = 'input window, operand 4, single buffered']
    #allocation11 [shape = 'u8[32768]{0}', space=vmem, size = 0x8000, scoped, tag = 'input window, operand 7, single buffered']
    #allocation12 [shape = 's32[1]{0}', space=sflag, size = 0x4, scoped, tag = 'scoped memory for tpu_custom_call.1']
    #allocation13 [shape = 'u8[131072]{0}', space=vmem, size = 0x20000, scoped, tag = 'output window, operand 0']
    %15 = vsyncpa [#allocation6], 0
    %s16 = scalar_lea.sflag [#allocation6], 1
    %17 = vsyncpa %s16, 0
    %18 = vsyncpa [#allocation9], 0
    %19 = vsyncpa [#allocation12], 0
    %20 = vsyncpa [#allocation7], 0
    %s21 = scalar_lea.sflag [#allocation7], 1
    %22 = vsyncpa %s21, 0
    loop: start=0, step=1, limit=4
    $region2: #{tpu_custom_call.1} parent=1 // loop_pre_header
      _
    $region3: #{tpu_custom_call.1} parent=1 // loop_header
      %s24 = sphi 0, %s28
      %p25 = scmp.ge.s32.totalorder %s24, 4
      %s34 = sphi 0, %s36
      %s37 = sphi 0, %s34
      %s38 = sphi 0, %s37
      %s54 = sphi 0, %s38
      %s58 = sphi 0, %s58
      %s60 = sphi 0, %s58
      %s61 = sphi 0, %s60
      %s75 = sphi 0, %s61
      %s79 = sphi 0, %s79
      %s81 = sphi 0, %s79
      %s82 = sphi 0, %s81
      %s96 = sphi 0, %s82
      %s100 = sphi 0, %s100
      %s102 = sphi 0, %s100
      %s103 = sphi 0, %s102
      %s117 = sphi 0, %s103
      %s121 = sphi 0, %s121
      %s123 = sphi 0, %s121
      %s124 = sphi 0, %s123
      %s138 = sphi 0, %s124
      %s142 = sphi 0, %s142
      %s144 = sphi 0, %s142
      %s145 = sphi 0, %s144
      %s159 = sphi 0, %s145
      %s163 = sphi 0, %s163
      %s165 = sphi 0, %s163
      %s166 = sphi 0, %s165
      %s180 = sphi 0, %s166
      %s184 = sphi 0, %s184
      %s186 = sphi 0, %s184
      %s187 = sphi 0, %s186
      %s201 = sphi 0, %s187
      %s205 = sphi 0, %s205
      %s207 = sphi 0, %s205
      %s208 = sphi 0, %s207
      %s222 = sphi 0, %s208
      %s226 = sphi 0, %s226
      %s228 = sphi 0, %s226
      %s229 = sphi 0, %s228
      %s243 = sphi 0, %s229
      %s249 = sphi 0, %s251
      %s252 = sphi 0, %s249
      %s253 = sphi 0, %s252
      %s269 = sphi 0, %s253
    $region4: #{tpu_custom_call.1} parent=1 // loop_header_branch
      %27 = sbr.rel (%p25) target = $region8
    $region5: #{tpu_custom_call.1} parent=1 // loop_body
      %s29 = ssub.s32 %s24, 1
      %s30 = ssub.s32 %s24, 2
      %s31 = sadd.s32 %s24, 1
      %s32 = ssub.s32 %s24, %s31
      %p33 = scmp.eq.s32.totalorder %s32, 0
      %s35 = sadd.s32 %s34, 1
      %s36 = scalar_select %p33, %s34, %s35
      %p39 = pneg %p33
      %p40 = scmp.eq.s32.totalorder %s24, 1
      %p41 = por %p39, %p40
      %p42 = scmp.ne.s32.totalorder %s34, %s37
      %p43 = scmp.eq.s32.totalorder %s24, 0
      %p44 = por %p42, %p43
      %p45 = scmp.ne.s32.totalorder %s34, %s37
      %p46 = scmp.eq.s32.totalorder %s29, 1
      %p47 = por %p45, %p46
      %p48 = scmp.ne.s32.totalorder %s37, %s38
      %p49 = scmp.eq.s32.totalorder %s29, 0
      %p50 = por %p48, %p49
      %p51 = scmp.ne.s32.totalorder %s37, %s38
      %p52 = scmp.eq.s32.totalorder %s30, 1
      %p53 = por %p51, %p52
      %p55 = scmp.ne.s32.totalorder %s38, %s54
      %p56 = scmp.eq.s32.totalorder %s30, 0
      %p57 = por %p55, %p56
      %s59 = sadd.s32 %s58, 1
      %p62 = scmp.eq.s32.totalorder %s24, 1
      %p63 = scmp.ne.s32.totalorder %s58, %s60
      %p64 = scmp.eq.s32.totalorder %s24, 0
      %p65 = por %p63, %p64
      %p66 = scmp.ne.s32.totalorder %s58, %s60
      %p67 = scmp.eq.s32.totalorder %s29, 1
      %p68 = por %p66, %p67
      %p69 = scmp.ne.s32.totalorder %s60, %s61
      %p70 = scmp.eq.s32.totalorder %s29, 0
      %p71 = por %p69, %p70
      %p72 = scmp.ne.s32.totalorder %s60, %s61
      %p73 = scmp.eq.s32.totalorder %s30, 1
      %p74 = por %p72, %p73
      %p76 = scmp.ne.s32.totalorder %s61, %s75
      %p77 = scmp.eq.s32.totalorder %s30, 0
      %p78 = por %p76, %p77
      %s80 = sadd.s32 %s79, 1
      %p83 = scmp.eq.s32.totalorder %s24, 1
      %p84 = scmp.ne.s32.totalorder %s79, %s81
      %p85 = scmp.eq.s32.totalorder %s24, 0
      %p86 = por %p84, %p85
      %p87 = scmp.ne.s32.totalorder %s79, %s81
      %p88 = scmp.eq.s32.totalorder %s29, 1
      %p89 = por %p87, %p88
      %p90 = scmp.ne.s32.totalorder %s81, %s82
      %p91 = scmp.eq.s32.totalorder %s29, 0
      %p92 = por %p90, %p91
      %p93 = scmp.ne.s32.totalorder %s81, %s82
      %p94 = scmp.eq.s32.totalorder %s30, 1
      %p95 = por %p93, %p94
      %p97 = scmp.ne.s32.totalorder %s82, %s96
      %p98 = scmp.eq.s32.totalorder %s30, 0
      %p99 = por %p97, %p98
      %s101 = sadd.s32 %s100, 1
      %p104 = scmp.eq.s32.totalorder %s24, 1
      %p105 = scmp.ne.s32.totalorder %s100, %s102
      %p106 = scmp.eq.s32.totalorder %s24, 0
      %p107 = por %p105, %p106
      %p108 = scmp.ne.s32.totalorder %s100, %s102
      %p109 = scmp.eq.s32.totalorder %s29, 1
      %p110 = por %p108, %p109
      %p111 = scmp.ne.s32.totalorder %s102, %s103
      %p112 = scmp.eq.s32.totalorder %s29, 0
      %p113 = por %p111, %p112
      %p114 = scmp.ne.s32.totalorder %s102, %s103
      %p115 = scmp.eq.s32.totalorder %s30, 1
      %p116 = por %p114, %p115
      %p118 = scmp.ne.s32.totalorder %s103, %s117
      %p119 = scmp.eq.s32.totalorder %s30, 0
      %p120 = por %p118, %p119
      %s122 = sadd.s32 %s121, 1
      %p125 = scmp.eq.s32.totalorder %s24, 1
      %p126 = scmp.ne.s32.totalorder %s121, %s123
      %p127 = scmp.eq.s32.totalorder %s24, 0
      %p128 = por %p126, %p127
      %p129 = scmp.ne.s32.totalorder %s121, %s123
      %p130 = scmp.eq.s32.totalorder %s29, 1
      %p131 = por %p129, %p130
      %p132 = scmp.ne.s32.totalorder %s123, %s124
      %p133 = scmp.eq.s32.totalorder %s29, 0
      %p134 = por %p132, %p133
      %p135 = scmp.ne.s32.totalorder %s123, %s124
      %p136 = scmp.eq.s32.totalorder %s30, 1
      %p137 = por %p135, %p136
      %p139 = scmp.ne.s32.totalorder %s124, %s138
      %p140 = scmp.eq.s32.totalorder %s30, 0
      %p141 = por %p139, %p140
      %s143 = sadd.s32 %s142, 1
      %p146 = scmp.eq.s32.totalorder %s24, 1
      %p147 = scmp.ne.s32.totalorder %s142, %s144
      %p148 = scmp.eq.s32.totalorder %s24, 0
      %p149 = por %p147, %p148
      %p150 = scmp.ne.s32.totalorder %s142, %s144
      %p151 = scmp.eq.s32.totalorder %s29, 1
      %p152 = por %p150, %p151
      %p153 = scmp.ne.s32.totalorder %s144, %s145
      %p154 = scmp.eq.s32.totalorder %s29, 0
      %p155 = por %p153, %p154
      %p156 = scmp.ne.s32.totalorder %s144, %s145
      %p157 = scmp.eq.s32.totalorder %s30, 1
      %p158 = por %p156, %p157
      %p160 = scmp.ne.s32.totalorder %s145, %s159
      %p161 = scmp.eq.s32.totalorder %s30, 0
      %p162 = por %p160, %p161
      %s164 = sadd.s32 %s163, 1
      %p167 = scmp.eq.s32.totalorder %s24, 1
      %p168 = scmp.ne.s32.totalorder %s163, %s165
      %p169 = scmp.eq.s32.totalorder %s24, 0
      %p170 = por %p168, %p169
      %p171 = scmp.ne.s32.totalorder %s163, %s165
      %p172 = scmp.eq.s32.totalorder %s29, 1
      %p173 = por %p171, %p172
      %p174 = scmp.ne.s32.totalorder %s165, %s166
      %p175 = scmp.eq.s32.totalorder %s29, 0
      %p176 = por %p174, %p175
      %p177 = scmp.ne.s32.totalorder %s165, %s166
      %p178 = scmp.eq.s32.totalorder %s30, 1
      %p179 = por %p177, %p178
      %p181 = scmp.ne.s32.totalorder %s166, %s180
      %p182 = scmp.eq.s32.totalorder %s30, 0
      %p183 = por %p181, %p182
      %s185 = sadd.s32 %s184, 1
      %p188 = scmp.eq.s32.totalorder %s24, 1
      %p189 = scmp.ne.s32.totalorder %s184, %s186
      %p190 = scmp.eq.s32.totalorder %s24, 0
      %p191 = por %p189, %p190
      %p192 = scmp.ne.s32.totalorder %s184, %s186
      %p193 = scmp.eq.s32.totalorder %s29, 1
      %p194 = por %p192, %p193
      %p195 = scmp.ne.s32.totalorder %s186, %s187
      %p196 = scmp.eq.s32.totalorder %s29, 0
      %p197 = por %p195, %p196
      %p198 = scmp.ne.s32.totalorder %s186, %s187
      %p199 = scmp.eq.s32.totalorder %s30, 1
      %p200 = por %p198, %p199
      %p202 = scmp.ne.s32.totalorder %s187, %s201
      %p203 = scmp.eq.s32.totalorder %s30, 0
      %p204 = por %p202, %p203
      %s206 = sadd.s32 %s205, 1
      %p209 = scmp.eq.s32.totalorder %s24, 1
      %p210 = scmp.ne.s32.totalorder %s205, %s207
      %p211 = scmp.eq.s32.totalorder %s24, 0
      %p212 = por %p210, %p211
      %p213 = scmp.ne.s32.totalorder %s205, %s207
      %p214 = scmp.eq.s32.totalorder %s29, 1
      %p215 = por %p213, %p214
      %p216 = scmp.ne.s32.totalorder %s207, %s208
      %p217 = scmp.eq.s32.totalorder %s29, 0
      %p218 = por %p216, %p217
      %p219 = scmp.ne.s32.totalorder %s207, %s208
      %p220 = scmp.eq.s32.totalorder %s30, 1
      %p221 = por %p219, %p220
      %p223 = scmp.ne.s32.totalorder %s208, %s222
      %p224 = scmp.eq.s32.totalorder %s30, 0
      %p225 = por %p223, %p224
      %s227 = sadd.s32 %s226, 1
      %p230 = scmp.eq.s32.totalorder %s24, 1
      %p231 = scmp.ne.s32.totalorder %s226, %s228
      %p232 = scmp.eq.s32.totalorder %s24, 0
      %p233 = por %p231, %p232
      %p234 = scmp.ne.s32.totalorder %s226, %s228
      %p235 = scmp.eq.s32.totalorder %s29, 1
      %p236 = por %p234, %p235
      %p237 = scmp.ne.s32.totalorder %s228, %s229
      %p238 = scmp.eq.s32.totalorder %s29, 0
      %p239 = por %p237, %p238
      %p240 = scmp.ne.s32.totalorder %s228, %s229
      %p241 = scmp.eq.s32.totalorder %s30, 1
      %p242 = por %p240, %p241
      %p244 = scmp.ne.s32.totalorder %s229, %s243
      %p245 = scmp.eq.s32.totalorder %s30, 0
      %p246 = por %p244, %p245
      %s247 = ssub.s32 %s24, %s31
      %p248 = scmp.eq.s32.totalorder %s247, 0
      %s250 = sadd.s32 %s249, 1
      %s251 = scalar_select %p248, %s249, %s250
      %p254 = pneg %p248
      %p255 = scmp.eq.s32.totalorder %s24, 1
      %p256 = por %p254, %p255
      %p257 = scmp.ne.s32.totalorder %s249, %s252
      %p258 = scmp.eq.s32.totalorder %s24, 0
      %p259 = por %p257, %p258
      %p260 = scmp.ne.s32.totalorder %s249, %s252
      %p261 = scmp.eq.s32.totalorder %s29, 1
      %p262 = por %p260, %p261
      %p263 = scmp.ne.s32.totalorder %s252, %s253
      %p264 = scmp.eq.s32.totalorder %s29, 0
      %p265 = por %p263, %p264
      %p266 = scmp.ne.s32.totalorder %s252, %s253
      %p267 = scmp.eq.s32.totalorder %s30, 1
      %p268 = por %p266, %p267
      %p270 = scmp.ne.s32.totalorder %s253, %s269
      %p271 = scmp.eq.s32.totalorder %s30, 0
      %p272 = por %p270, %p271
      %p273 = scmp.le.s32.totalorder 1, %s24
      %p274 = scmp.lt.s32.totalorder %s24, 3
      %p275 = pnand %p273, %p274
      %p276 = pneg %p275
      // Predicated region
      $region9: #{tpu_custom_call.1} parent=5 // pred_check
        _
      $region10: #{tpu_custom_call.1} parent=5 // pred_check_branch
        %278 = sbr.rel (%p275) target = $region12
      $region11: #{tpu_custom_call.1} parent=5 // pred_region
        %s279 = ssub.s32 %s24, 1
        // Predicated region
        $region13: #{tpu_custom_call.1} parent=11 // pred_check
          %p280 = pneg %p71
        $region14: #{tpu_custom_call.1} parent=11 // pred_check_branch
          %282 = sbr.rel (%p280) target = $region16
        $region15: #{tpu_custom_call.1} parent=11 // pred_region
          %s284 = ssub.s32 2048, 2048
          %285 = vsyncadd [#allocation9], %s284
          %s286 = sshll.u32 [#allocation8], 4
          %s287 = int_to_ptr.vmem [resolvable:$true] %s286
          %292 = dma.hbm_to_vmem [thread:$0]  %s1, 2048, %s287, [#allocation9], 128, 128, 8
        $region16: #{tpu_custom_call.1} parent=11 // pred_fallthru
          _
        // Predicated region
        $region17: #{tpu_custom_call.1} parent=11 // pred_check
          %p293 = pneg %p92
        $region18: #{tpu_custom_call.1} parent=11 // pred_check_branch
          %295 = sbr.rel (%p293) target = $region20
        $region19: #{tpu_custom_call.1} parent=11 // pred_region
          _
        $region20: #{tpu_custom_call.1} parent=11 // pred_fallthru
          _
        // Predicated region
        $region21: #{tpu_custom_call.1} parent=11 // pred_check
          %p296 = pneg %p113
        $region22: #{tpu_custom_call.1} parent=11 // pred_check_branch
          %298 = sbr.rel (%p296) target = $region24
        $region23: #{tpu_custom_call.1} parent=11 // pred_region
          _
        $region24: #{tpu_custom_call.1} parent=11 // pred_fallthru
          _
        // Predicated region
        $region25: #{tpu_custom_call.1} parent=11 // pred_check
          %p299 = pneg %p134
        $region26: #{tpu_custom_call.1} parent=11 // pred_check_branch
          %301 = sbr.rel (%p299) target = $region28
        $region27: #{tpu_custom_call.1} parent=11 // pred_region
          %s303 = ssub.s32 9216, 9216
          %304 = vsyncadd [#allocation9], %s303
          %s305 = sshll.u32 [#allocation10], 4
          %s306 = int_to_ptr.vmem [resolvable:$true] %s305
          %311 = dma.hbm_to_vmem [thread:$0]  %s4, 9216, %s306, [#allocation9], 64, 64, 4
        $region28: #{tpu_custom_call.1} parent=11 // pred_fallthru
          _
        // Predicated region
        $region29: #{tpu_custom_call.1} parent=11 // pred_check
          %p312 = pneg %p155
        $region30: #{tpu_custom_call.1} parent=11 // pred_check_branch
          %314 = sbr.rel (%p312) target = $region32
        $region31: #{tpu_custom_call.1} parent=11 // pred_region
          _
        $region32: #{tpu_custom_call.1} parent=11 // pred_fallthru
          _
        // Predicated region
        $region33: #{tpu_custom_call.1} parent=11 // pred_check
          %p315 = pneg %p176
        $region34: #{tpu_custom_call.1} parent=11 // pred_check_branch
          %317 = sbr.rel (%p315) target = $region36
        $region35: #{tpu_custom_call.1} parent=11 // pred_region
          _
        $region36: #{tpu_custom_call.1} parent=11 // pred_fallthru
          _
        // Predicated region
        $region37: #{tpu_custom_call.1} parent=11 // pred_check
          %p318 = pneg %p197
        $region38: #{tpu_custom_call.1} parent=11 // pred_check_branch
          %320 = sbr.rel (%p318) target = $region40
        $region39: #{tpu_custom_call.1} parent=11 // pred_region
          %s322 = ssub.s32 1024, 1024
          %323 = vsyncadd [#allocation12], %s322
          %s324 = sshll.u32 [#allocation11], 4
          %s325 = int_to_ptr.vmem [resolvable:$true] %s324
          %330 = dma.hbm_to_vmem [thread:$0]  %s7, 1024, %s325, [#allocation12], 64, 64, 4
        $region40: #{tpu_custom_call.1} parent=11 // pred_fallthru
          _
        // Predicated region
        $region41: #{tpu_custom_call.1} parent=11 // pred_check
          %p331 = pneg %p218
        $region42: #{tpu_custom_call.1} parent=11 // pred_check_branch
          %333 = sbr.rel (%p331) target = $region44
        $region43: #{tpu_custom_call.1} parent=11 // pred_region
          _
        $region44: #{tpu_custom_call.1} parent=11 // pred_fallthru
          _
        // Predicated region
        $region45: #{tpu_custom_call.1} parent=11 // pred_check
          %p334 = pneg %p239
        $region46: #{tpu_custom_call.1} parent=11 // pred_check_branch
          %336 = sbr.rel (%p334) target = $region48
        $region47: #{tpu_custom_call.1} parent=11 // pred_region
          _
        $region48: #{tpu_custom_call.1} parent=11 // pred_fallthru
          _
      $region12: #{tpu_custom_call.1} parent=5 // pred_fallthru
        _
      %p337 = scmp.lt.s32.totalorder %s24, 2
      // Predicated region
      $region49: #{tpu_custom_call.1} parent=5 // pred_check
        %p338 = pneg %p337
      $region50: #{tpu_custom_call.1} parent=5 // pred_check_branch
        %340 = sbr.rel (%p338) target = $region52
      $region51: #{tpu_custom_call.1} parent=5 // pred_region
        // Predicated region
        $region53: #{tpu_custom_call.1} parent=51 // pred_check
          %p341 = pneg %p44
        $region54: #{tpu_custom_call.1} parent=51 // pred_check_branch
          %343 = sbr.rel (%p341) target = $region56
        $region55: #{tpu_custom_call.1} parent=51 // pred_region
          %s344 = sand.u32 %s34, 1
          %s345 = scalar_lea.sflag [#allocation6], %s344
          %s346 = sand.u32 %s34, 1
          %s347 = smul.addr %s346, 128
          %s348 = scalar_lea.vmem [#allocation5], %s347
          %s350 = ssub.s32 2048, 2048
          %351 = vsyncadd %s345, %s350
          %s352 = smul.addr %s24, 32
          %s353 = smul.addr %s352, 64
          %s354 = scalar_lea.hbm %s0, %s353
          %s355 = sshll.u32 %s348, 4
          %s356 = int_to_ptr.vmem [resolvable:$true] %s355
          %361 = dma.hbm_to_vmem [thread:$0]  %s354, 2048, %s356, %s345, 64, 64, 4
        $region56: #{tpu_custom_call.1} parent=51 // pred_fallthru
          _
      $region52: #{tpu_custom_call.1} parent=5 // pred_fallthru
        _
      %p362 = scmp.le.s32.totalorder 1, %s24
      %p363 = scmp.lt.s32.totalorder %s24, 3
      %p364 = pnand %p362, %p363
      %p365 = pneg %p364
      // Predicated region
      $region57: #{tpu_custom_call.1} parent=5 // pred_check
        _
      $region58: #{tpu_custom_call.1} parent=5 // pred_check_branch
        %367 = sbr.rel (%p364) target = $region60
      $region59: #{tpu_custom_call.1} parent=5 // pred_region
        %s368 = ssub.s32 %s24, 1
        %s369 = sand.u32 %s37, 1
        %s370 = scalar_lea.sflag [#allocation6], %s369
        %s371 = sand.u32 %s37, 1
        %s372 = smul.addr %s371, 128
        %s373 = scalar_lea.vmem [#allocation5], %s372
        // Predicated region
        $region61: #{tpu_custom_call.1} parent=59 // pred_check
          %p374 = pneg %p50
        $region62: #{tpu_custom_call.1} parent=59 // pred_check_branch
          %376 = sbr.rel (%p374) target = $region64
        $region63: #{tpu_custom_call.1} parent=59 // pred_region
          %377 = dma.done %s370, 2048
        $region64: #{tpu_custom_call.1} parent=59 // pred_fallthru
          _
        // Predicated region
        $region65: #{tpu_custom_call.1} parent=59 // pred_check
          %p378 = pneg %p71
        $region66: #{tpu_custom_call.1} parent=59 // pred_check_branch
          %380 = sbr.rel (%p378) target = $region68
        $region67: #{tpu_custom_call.1} parent=59 // pred_region
          %381 = dma.done [#allocation9], 2048
        $region68: #{tpu_custom_call.1} parent=59 // pred_fallthru
          _
        // Predicated region
        $region69: #{tpu_custom_call.1} parent=59 // pred_check
          %p382 = pneg %p134
        $region70: #{tpu_custom_call.1} parent=59 // pred_check_branch
          %384 = sbr.rel (%p382) target = $region72
        $region71: #{tpu_custom_call.1} parent=59 // pred_region
          %385 = dma.done [#allocation9], 9216
        $region72: #{tpu_custom_call.1} parent=59 // pred_fallthru
          _
        // Predicated region
        $region73: #{tpu_custom_call.1} parent=59 // pred_check
          %p386 = pneg %p197
        $region74: #{tpu_custom_call.1} parent=59 // pred_check_branch
          %388 = sbr.rel (%p386) target = $region76
        $region75: #{tpu_custom_call.1} parent=59 // pred_region
          %389 = dma.done [#allocation12], 1024
        $region76: #{tpu_custom_call.1} parent=59 // pred_fallthru
          _
        %s390 = sand.u32 %s37, 1
        %s391 = scalar_lea.sflag [#allocation6], %s390
        %s392 = sand.u32 %s37, 1
        %s393 = smul.addr %s392, 128
        %s394 = scalar_lea.vmem [#allocation5], %s393
        %p395 = pneg %p50
        %p396 = pneg %p47
        %p397 = pneg %p71
        %p398 = pneg %p68
        %p399 = pneg %p92
        %p400 = pneg %p89
        %p401 = pneg %p113
        %p402 = pneg %p110
        %p403 = pneg %p134
        %p404 = pneg %p131
        %p405 = pneg %p155
        %p406 = pneg %p152
        %p407 = pneg %p176
        %p408 = pneg %p173
        %p409 = pneg %p197
        %p410 = pneg %p194
        %p411 = pneg %p218
        %p412 = pneg %p215
        %p413 = pneg %p239
        %p414 = pneg %p236
        %p415 = pneg %p265
        %p416 = pneg %p262
        %s417 = sand.u32 %s252, 1
        %s418 = scalar_lea.sflag [#allocation7], %s417
        %s419 = sand.u32 %s252, 1
        %s420 = smul.addr %s419, 128
        %s421 = scalar_lea.vmem [#allocation13], %s420
        %423 = vst [vmem:[#allocation2] sm:$0xf] 0
        %424 = vst [vmem:[#allocation2 + $0x4] sm:$0xf] 0
        %425 = vst [vmem:[#allocation2 + $0x8] sm:$0x1] 0
        %s426 = scalar_lea.vmem [#allocation2], 204
        %427 = vst [vmem:[%s426] sm:$0xf] 0
        %428 = vst [vmem:[%s426 + $0x4] sm:$0xf] 0
        %429 = vst [vmem:[%s426 + $0x8] sm:$0x1] 0
        %s430 = scalar_lea.vmem [#allocation2], 12
        %vm431 = vcmask 1040384
        %vm432 = vsmask.f32 256
        %vm433 = vmand %vm431, %vm432
        %v434 = vld [vmem:[%s430] sm:$0x1]
        %v435 = vsel %vm433, 0, %v434
        %436 = vst [vmem:[%s430] sm:$0x1] %v435
        %v437 = vld [vmem:[%s430 + $0xc] sm:$0x1]
        %v438 = vsel %vm433, 0, %v437
        %439 = vst [vmem:[%s430 + $0xc] sm:$0x1] %v438
        %v440 = vld [vmem:[%s430 + $0x18] sm:$0x1]
        %v441 = vsel %vm433, 0, %v440
        %442 = vst [vmem:[%s430 + $0x18] sm:$0x1] %v441
        %v443 = vld [vmem:[%s430 + $0x24] sm:$0x1]
        %v444 = vsel %vm433, 0, %v443
        %445 = vst [vmem:[%s430 + $0x24] sm:$0x1] %v444
        %v446 = vld [vmem:[%s430 + $0x30] sm:$0x1]
        %v447 = vsel %vm433, 0, %v446
        %448 = vst [vmem:[%s430 + $0x30] sm:$0x1] %v447
        %v449 = vld [vmem:[%s430 + $0x3c] sm:$0x1]
        %v450 = vsel %vm433, 0, %v449
        %451 = vst [vmem:[%s430 + $0x3c] sm:$0x1] %v450
        %v452 = vld [vmem:[%s430 + $0x48] sm:$0x1]
        %v453 = vsel %vm433, 0, %v452
        %454 = vst [vmem:[%s430 + $0x48] sm:$0x1] %v453
        %v455 = vld [vmem:[%s430 + $0x54] sm:$0x1]
        %v456 = vsel %vm433, 0, %v455
        %457 = vst [vmem:[%s430 + $0x54] sm:$0x1] %v456
        %v458 = vld [vmem:[%s430 + $0x60] sm:$0x1]
        %v459 = vsel %vm433, 0, %v458
        %460 = vst [vmem:[%s430 + $0x60] sm:$0x1] %v459
        %v461 = vld [vmem:[%s430 + $0x6c] sm:$0x1]
        %v462 = vsel %vm433, 0, %v461
        %463 = vst [vmem:[%s430 + $0x6c] sm:$0x1] %v462
        %v464 = vld [vmem:[%s430 + $0x78] sm:$0x1]
        %v465 = vsel %vm433, 0, %v464
        %466 = vst [vmem:[%s430 + $0x78] sm:$0x1] %v465
        %v467 = vld [vmem:[%s430 + $0x84] sm:$0x1]
        %v468 = vsel %vm433, 0, %v467
        %469 = vst [vmem:[%s430 + $0x84] sm:$0x1] %v468
        %v470 = vld [vmem:[%s430 + $0x90] sm:$0x1]
        %v471 = vsel %vm433, 0, %v470
        %472 = vst [vmem:[%s430 + $0x90] sm:$0x1] %v471
        %v473 = vld [vmem:[%s430 + $0x9c] sm:$0x1]
        %v474 = vsel %vm433, 0, %v473
        %475 = vst [vmem:[%s430 + $0x9c] sm:$0x1] %v474
        %v476 = vld [vmem:[%s430 + $0xa8] sm:$0x1]
        %v477 = vsel %vm433, 0, %v476
        %478 = vst [vmem:[%s430 + $0xa8] sm:$0x1] %v477
        %v479 = vld [vmem:[%s430 + $0xb4] sm:$0x1]
        %v480 = vsel %vm433, 0, %v479
        %481 = vst [vmem:[%s430 + $0xb4] sm:$0x1] %v480
        %vm482 = vsmask.f32 7938
        %vm483 = vmand %vm431, %vm482
        %v484 = vld [vmem:[%s430 + $0x8] sm:$0x1]
        %v485 = vsel %vm483, 0, %v484
        %486 = vst [vmem:[%s430 + $0x8] sm:$0x1] %v485
        %v487 = vld [vmem:[%s430 + $0x14] sm:$0x1]
        %v488 = vsel %vm483, 0, %v487
        %489 = vst [vmem:[%s430 + $0x14] sm:$0x1] %v488
        %v490 = vld [vmem:[%s430 + $0x20] sm:$0x1]
        %v491 = vsel %vm483, 0, %v490
        %492 = vst [vmem:[%s430 + $0x20] sm:$0x1] %v491
        %v493 = vld [vmem:[%s430 + $0x2c] sm:$0x1]
        %v494 = vsel %vm483, 0, %v493
        %495 = vst [vmem:[%s430 + $0x2c] sm:$0x1] %v494
        %v496 = vld [vmem:[%s430 + $0x38] sm:$0x1]
        %v497 = vsel %vm483, 0, %v496
        %498 = vst [vmem:[%s430 + $0x38] sm:$0x1] %v497
        %v499 = vld [vmem:[%s430 + $0x44] sm:$0x1]
        %v500 = vsel %vm483, 0, %v499
        %501 = vst [vmem:[%s430 + $0x44] sm:$0x1] %v500
        %v502 = vld [vmem:[%s430 + $0x50] sm:$0x1]
        %v503 = vsel %vm483, 0, %v502
        %504 = vst [vmem:[%s430 + $0x50] sm:$0x1] %v503
        %v505 = vld [vmem:[%s430 + $0x5c] sm:$0x1]
        %v506 = vsel %vm483, 0, %v505
        %507 = vst [vmem:[%s430 + $0x5c] sm:$0x1] %v506
        %v508 = vld [vmem:[%s430 + $0x68] sm:$0x1]
        %v509 = vsel %vm483, 0, %v508
        %510 = vst [vmem:[%s430 + $0x68] sm:$0x1] %v509
        %v511 = vld [vmem:[%s430 + $0x74] sm:$0x1]
        %v512 = vsel %vm483, 0, %v511
        %513 = vst [vmem:[%s430 + $0x74] sm:$0x1] %v512
        %v514 = vld [vmem:[%s430 + $0x80] sm:$0x1]
        %v515 = vsel %vm483, 0, %v514
        %516 = vst [vmem:[%s430 + $0x80] sm:$0x1] %v515
        %v517 = vld [vmem:[%s430 + $0x8c] sm:$0x1]
        %v518 = vsel %vm483, 0, %v517
        %519 = vst [vmem:[%s430 + $0x8c] sm:$0x1] %v518
        %v520 = vld [vmem:[%s430 + $0x98] sm:$0x1]
        %v521 = vsel %vm483, 0, %v520
        %522 = vst [vmem:[%s430 + $0x98] sm:$0x1] %v521
        %v523 = vld [vmem:[%s430 + $0xa4] sm:$0x1]
        %v524 = vsel %vm483, 0, %v523
        %525 = vst [vmem:[%s430 + $0xa4] sm:$0x1] %v524
        %v526 = vld [vmem:[%s430 + $0xb0] sm:$0x1]
        %v527 = vsel %vm483, 0, %v526
        %528 = vst [vmem:[%s430 + $0xb0] sm:$0x1] %v527
        %v529 = vld [vmem:[%s430 + $0xbc] sm:$0x1]
        %v530 = vsel %vm483, 0, %v529
        %531 = vst [vmem:[%s430 + $0xbc] sm:$0x1] %v530
        %v532 = vld [vmem:[%s2] sm:$0x3]
        %v533 = vld [vmem:[%s3] sm:$0x3]
        %v534 = vld [vmem:[%s373] sm:$0xf]
        %v535 = vld [vmem:[%s373 + $0x4] sm:$0xf]
        %v536 = vld [vmem:[%s373 + $0x8] sm:$0xf]
        %v537 = vld [vmem:[%s373 + $0xc] sm:$0xf]
        %v538 = vld [vmem:[%s373 + $0x10] sm:$0xf]
        %v539 = vld [vmem:[%s373 + $0x14] sm:$0xf]
        %v540 = vld [vmem:[%s373 + $0x18] sm:$0xf]
        %v541 = vld [vmem:[%s373 + $0x1c] sm:$0xf]
        %v542 = vld [vmem:[%s373 + $0x20] sm:$0xf]
        %v543 = vld [vmem:[%s373 + $0x24] sm:$0xf]
        %v544 = vld [vmem:[%s373 + $0x28] sm:$0xf]
        %v545 = vld [vmem:[%s373 + $0x2c] sm:$0xf]
        %v546 = vld [vmem:[%s373 + $0x30] sm:$0xf]
        %v547 = vld [vmem:[%s373 + $0x34] sm:$0xf]
        %v548 = vld [vmem:[%s373 + $0x38] sm:$0xf]
        %v549 = vld [vmem:[%s373 + $0x3c] sm:$0xf]
        %v550 = vld [vmem:[#allocation8] sm:$0xff]
        %v551 = vld [vmem:[#allocation8 + $0x8] sm:$0xff]
        %v552 = vld [vmem:[#allocation8 + $0x10] sm:$0xff]
        %v553 = vld [vmem:[#allocation8 + $0x18] sm:$0xff]
        %v554 = vld [vmem:[#allocation8 + $0x20] sm:$0xff]
        %v555 = vld [vmem:[#allocation8 + $0x28] sm:$0xff]
        %v556 = vld [vmem:[#allocation8 + $0x30] sm:$0xff]
        %v557 = vld [vmem:[#allocation8 + $0x38] sm:$0xff]
        %v558 = vld [vmem:[#allocation8 + $0x40] sm:$0xff]
        %v559 = vld [vmem:[#allocation8 + $0x48] sm:$0xff]
        %v560 = vld [vmem:[#allocation8 + $0x50] sm:$0xff]
        %v561 = vld [vmem:[#allocation8 + $0x58] sm:$0xff]
        %v562 = vld [vmem:[#allocation8 + $0x60] sm:$0xff]
        %v563 = vld [vmem:[#allocation8 + $0x68] sm:$0xff]
        %v564 = vld [vmem:[#allocation8 + $0x70] sm:$0xff]
        %v565 = vld [vmem:[#allocation8 + $0x78] sm:$0xff]
        %v582 = vunpack.c.l.b16 %v534
        %v583 = vunpack.c.l.b16 %v535
        %v584 = vunpack.c.l.b16 %v536
        %v585 = vunpack.c.l.b16 %v537
        %v586 = vunpack.c.l.b16 %v538
        %v587 = vunpack.c.l.b16 %v539
        %v588 = vunpack.c.l.b16 %v540
        %v589 = vunpack.c.l.b16 %v541
        %v590 = vunpack.c.l.b16 %v542
        %v591 = vunpack.c.l.b16 %v543
        %v592 = vunpack.c.l.b16 %v544
        %v593 = vunpack.c.l.b16 %v545
        %v594 = vunpack.c.l.b16 %v546
        %v595 = vunpack.c.l.b16 %v547
        %v596 = vunpack.c.l.b16 %v548
        %v597 = vunpack.c.l.b16 %v549
        %v598 = vpack.c.b16 %v583, %v582
        %v599 = vpack.c.b16 %v585, %v584
        %v600 = vpack.c.b16 %v587, %v586
        %v601 = vpack.c.b16 %v589, %v588
        %v602 = vpack.c.b16 %v591, %v590
        %v603 = vpack.c.b16 %v593, %v592
        %v604 = vpack.c.b16 %v595, %v594
        %v605 = vpack.c.b16 %v597, %v596
        %v630 = vunpack.c.l.b16 %v550
        %v631 = vunpack.c.h.b16 %v550
        %v632 = vunpack.c.l.b16 %v551
        %v633 = vunpack.c.h.b16 %v551
        %v634 = vunpack.c.l.b16 %v552
        %v635 = vunpack.c.h.b16 %v552
        %v636 = vunpack.c.l.b16 %v553
        %v637 = vunpack.c.h.b16 %v553
        %v638 = vunpack.c.l.b16 %v554
        %v639 = vunpack.c.h.b16 %v554
        %v640 = vunpack.c.l.b16 %v555
        %v641 = vunpack.c.h.b16 %v555
        %v642 = vunpack.c.l.b16 %v556
        %v643 = vunpack.c.h.b16 %v556
        %v644 = vunpack.c.l.b16 %v557
        %v645 = vunpack.c.h.b16 %v557
        %v646 = vunpack.c.l.b16 %v558
        %v647 = vunpack.c.h.b16 %v558
        %v648 = vunpack.c.l.b16 %v559
        %v649 = vunpack.c.h.b16 %v559
        %v650 = vunpack.c.l.b16 %v560
        %v651 = vunpack.c.h.b16 %v560
        %v652 = vunpack.c.l.b16 %v561
        %v653 = vunpack.c.h.b16 %v561
        %v654 = vunpack.c.l.b16 %v562
        %v655 = vunpack.c.h.b16 %v562
        %v656 = vunpack.c.l.b16 %v563
        %v657 = vunpack.c.h.b16 %v563
        %v658 = vunpack.c.l.b16 %v564
        %v659 = vunpack.c.h.b16 %v564
        %v660 = vunpack.c.l.b16 %v565
        %v661 = vunpack.c.h.b16 %v565
        %v662 = vpack.c.b16 %v632, %v630
        %v663 = vpack.c.b16 %v633, %v631
        %v664 = vpack.c.b16 %v636, %v634
        %v665 = vpack.c.b16 %v637, %v635
        %v666 = vpack.c.b16 %v640, %v638
        %v667 = vpack.c.b16 %v641, %v639
        %v668 = vpack.c.b16 %v644, %v642
        %v669 = vpack.c.b16 %v645, %v643
        %v670 = vpack.c.b16 %v648, %v646
        %v671 = vpack.c.b16 %v649, %v647
        %v672 = vpack.c.b16 %v652, %v650
        %v673 = vpack.c.b16 %v653, %v651
        %v674 = vpack.c.b16 %v656, %v654
        %v675 = vpack.c.b16 %v657, %v655
        %v676 = vpack.c.b16 %v660, %v658
        %v677 = vpack.c.b16 %v661, %v659
        %694 = vmatprep.subr.bf16.mxu0 %v663
        %695 = vmatpush1.bf16.msra.mxu0 %v662
        %696 = vmatprep.subr.bf16.mxu0 %v665
        %697 = vmatpush1.bf16.msra.mxu0 %v664
        %698 = vmatprep.subr.bf16.mxu0 %v667
        %699 = vmatpush1.bf16.msra.mxu0 %v666
        %700 = vmatprep.subr.bf16.mxu0 %v669
        %701 = vmatpush1.bf16.msra.mxu0 %v668
        %702 = vmatprep.subr.bf16.mxu0 %v671
        %703 = vmatpush1.bf16.msra.mxu0 %v670
        %704 = vmatprep.subr.bf16.mxu0 %v673
        %705 = vmatpush1.bf16.msra.mxu0 %v672
        %706 = vmatprep.subr.bf16.mxu0 %v675
        %707 = vmatpush1.bf16.msra.mxu0 %v674
        %708 = vmatprep.subr.bf16.mxu0 %v677
        %709 = vmatpush1.bf16.msra.mxu0 %v676
        %710 = vmatprep.subr.bf16.mxu0 0
        %711 = vmatpush1.bf16.msra.mxu0 0
        %712 = vmatprep.subr.bf16.mxu0 0
        %713 = vmatpush1.bf16.msra.mxu0 0
        %714 = vmatprep.subr.bf16.mxu0 0
        %715 = vmatpush1.bf16.msra.mxu0 0
        %716 = vmatprep.subr.bf16.mxu0 0
        %717 = vmatpush1.bf16.msra.mxu0 0
        %718 = vmatprep.subr.bf16.mxu0 0
        %719 = vmatpush1.bf16.msra.mxu0 0
        %720 = vmatprep.subr.bf16.mxu0 0
        %721 = vmatpush1.bf16.msra.mxu0 0
        %722 = vmatprep.subr.bf16.mxu0 0
        %723 = vmatpush1.bf16.msra.mxu0 0
        %724 = vmatprep.subr.bf16.mxu0 0
        %725 = vmatpush1.bf16.msra.mxu0 0
        %726 = vmatprep.mubr.bf16.mxu0 0
        %727 = vmatmul.mubr.bf16.gmra.mrb[0].mxu0 %v598
        %v728 = vpop.f32.mrb[0].mxu0
        %v729 = vadd.f32 0.0, %v728
        %v730 = vpop.f32.mrb[0].mxu0
        %v731 = vadd.f32 0.0, %v730
        %v732 = vpop.f32.mrb[0].mxu0
        %v733 = vadd.f32 0.0, %v732
        %v734 = vpop.f32.mrb[0].mxu0
        %v735 = vadd.f32 0.0, %v734
        %736 = vmatprep.mubr.bf16.mxu0 0
        %737 = vmatmul.mubr.bf16.gmra.mrb[0].mxu0 %v599
        %v738 = vpop.f32.mrb[0].mxu0
        %v739 = vadd.f32 0.0, %v738
        %v740 = vpop.f32.mrb[0].mxu0
        %v741 = vadd.f32 0.0, %v740
        %v742 = vpop.f32.mrb[0].mxu0
        %v743 = vadd.f32 0.0, %v742
        %v744 = vpop.f32.mrb[0].mxu0
        %v745 = vadd.f32 0.0, %v744
        %746 = vmatprep.mubr.bf16.mxu0 0
        %747 = vmatmul.mubr.bf16.gmra.mrb[0].mxu0 %v600
        %v748 = vpop.f32.mrb[0].mxu0
        %v749 = vadd.f32 0.0, %v748
        %v750 = vpop.f32.mrb[0].mxu0
        %v751 = vadd.f32 0.0, %v750
        %v752 = vpop.f32.mrb[0].mxu0
        %v753 = vadd.f32 0.0, %v752
        %v754 = vpop.f32.mrb[0].mxu0
        %v755 = vadd.f32 0.0, %v754
        %756 = vmatprep.mubr.bf16.mxu0 0
        %757 = vmatmul.mubr.bf16.gmra.mrb[0].mxu0 %v601
        %v758 = vpop.f32.mrb[0].mxu0
        %v759 = vadd.f32 0.0, %v758
        %v760 = vpop.f32.mrb[0].mxu0
        %v761 = vadd.f32 0.0, %v760
        %v762 = vpop.f32.mrb[0].mxu0
        %v763 = vadd.f32 0.0, %v762
        %v764 = vpop.f32.mrb[0].mxu0
        %v765 = vadd.f32 0.0, %v764
        %766 = vmatprep.mubr.bf16.mxu0 0
        %767 = vmatmul.mubr.bf16.gmra.mrb[0].mxu0 %v602
        %v768 = vpop.f32.mrb[0].mxu0
        %v769 = vadd.f32 0.0, %v768
        %v770 = vpop.f32.mrb[0].mxu0
        %v771 = vadd.f32 0.0, %v770
        %v772 = vpop.f32.mrb[0].mxu0
        %v773 = vadd.f32 0.0, %v772
        %v774 = vpop.f32.mrb[0].mxu0
        %v775 = vadd.f32 0.0, %v774
        %776 = vmatprep.mubr.bf16.mxu0 0
        %777 = vmatmul.mubr.bf16.gmra.mrb[0].mxu0 %v603
        %v778 = vpop.f32.mrb[0].mxu0
        %v779 = vadd.f32 0.0, %v778
        %v780 = vpop.f32.mrb[0].mxu0
        %v781 = vadd.f32 0.0, %v780
        %v782 = vpop.f32.mrb[0].mxu0
        %v783 = vadd.f32 0.0, %v782
        %v784 = vpop.f32.mrb[0].mxu0
        %v785 = vadd.f32 0.0, %v784
        %786 = vmatprep.mubr.bf16.mxu0 0
        %787 = vmatmul.mubr.bf16.gmra.mrb[0].mxu0 %v604
        %v788 = vpop.f32.mrb[0].mxu0
        %v789 = vadd.f32 0.0, %v788
        %v790 = vpop.f32.mrb[0].mxu0
        %v791 = vadd.f32 0.0, %v790
        %v792 = vpop.f32.mrb[0].mxu0
        %v793 = vadd.f32 0.0, %v792
        %v794 = vpop.f32.mrb[0].mxu0
        %v795 = vadd.f32 0.0, %v794
        %796 = vmatprep.mubr.bf16.mxu0 0
        %797 = vmatmul.mubr.bf16.gmra.mrb[0].mxu0 %v605
        %v798 = vpop.f32.mrb[0].mxu0
        %v799 = vadd.f32 0.0, %v798
        %v800 = vpop.f32.mrb[0].mxu0
        %v801 = vadd.f32 0.0, %v800
        %v802 = vpop.f32.mrb[0].mxu0
        %v803 = vadd.f32 0.0, %v802
        %v804 = vpop.f32.mrb[0].mxu0
        %v805 = vadd.f32 0.0, %v804
        %806 = vdwg.mxu0
        %v808 = vlaneseq
        %v809 = vshrl.u32 %v808, 7
        %v810 = vsub.s32 0, %v809
        %v811 = vrot.slane %v532, %v810
        %v812 = vlaneseq
        %v813 = vshrl.u32 %v812, 7
        %v814 = vsub.s32 1, %v813
        %v815 = vrot.slane %v532, %v814
        %v818 = vmul.f32 %v729, %v811
        %v819 = vmul.f32 %v731, %v815
        %v820 = vmul.f32 %v733, %v811
        %v821 = vmul.f32 %v735, %v815
        %v822 = vmul.f32 %v739, %v811
        %v823 = vmul.f32 %v741, %v815
        %v824 = vmul.f32 %v743, %v811
        %v825 = vmul.f32 %v745, %v815
        %v826 = vmul.f32 %v749, %v811
        %v827 = vmul.f32 %v751, %v815
        %v828 = vmul.f32 %v753, %v811
        %v829 = vmul.f32 %v755, %v815
        %v830 = vmul.f32 %v759, %v811
        %v831 = vmul.f32 %v761, %v815
        %v832 = vmul.f32 %v763, %v811
        %v833 = vmul.f32 %v765, %v815
        %v834 = vmul.f32 %v769, %v811
        %v835 = vmul.f32 %v771, %v815
        %v836 = vmul.f32 %v773, %v811
        %v837 = vmul.f32 %v775, %v815
        %v838 = vmul.f32 %v779, %v811
        %v839 = vmul.f32 %v781, %v815
        %v840 = vmul.f32 %v783, %v811
        %v841 = vmul.f32 %v785, %v815
        %v842 = vmul.f32 %v789, %v811
        %v843 = vmul.f32 %v791, %v815
        %v844 = vmul.f32 %v793, %v811
        %v845 = vmul.f32 %v795, %v815
        %v846 = vmul.f32 %v799, %v811
        %v847 = vmul.f32 %v801, %v815
        %v848 = vmul.f32 %v803, %v811
        %v849 = vmul.f32 %v805, %v815
        %v851 = vlaneseq
        %v852 = vshrl.u32 %v851, 7
        %v853 = vsub.s32 0, %v852
        %v854 = vrot.slane %v533, %v853
        %v855 = vlaneseq
        %v856 = vshrl.u32 %v855, 7
        %v857 = vsub.s32 1, %v856
        %v858 = vrot.slane %v533, %v857
        %v861 = vadd.f32 %v818, %v854
        %v862 = vadd.f32 %v819, %v858
        %v863 = vadd.f32 %v820, %v854
        %v864 = vadd.f32 %v821, %v858
        %v865 = vadd.f32 %v822, %v854
        %v866 = vadd.f32 %v823, %v858
        %v867 = vadd.f32 %v824, %v854
        %v868 = vadd.f32 %v825, %v858
        %v869 = vadd.f32 %v826, %v854
        %v870 = vadd.f32 %v827, %v858
        %v871 = vadd.f32 %v828, %v854
        %v872 = vadd.f32 %v829, %v858
        %v873 = vadd.f32 %v830, %v854
        %v874 = vadd.f32 %v831, %v858
        %v875 = vadd.f32 %v832, %v854
        %v876 = vadd.f32 %v833, %v858
        %v877 = vadd.f32 %v834, %v854
        %v878 = vadd.f32 %v835, %v858
        %v879 = vadd.f32 %v836, %v854
        %v880 = vadd.f32 %v837, %v858
        %v881 = vadd.f32 %v838, %v854
        %v882 = vadd.f32 %v839, %v858
        %v883 = vadd.f32 %v840, %v854
        %v884 = vadd.f32 %v841, %v858
        %v885 = vadd.f32 %v842, %v854
        %v886 = vadd.f32 %v843, %v858
        %v887 = vadd.f32 %v844, %v854
        %v888 = vadd.f32 %v845, %v858
        %v889 = vadd.f32 %v846, %v854
        %v890 = vadd.f32 %v847, %v858
        %v891 = vadd.f32 %v848, %v854
        %v892 = vadd.f32 %v849, %v858
        %v893 = vpack.c.bf16 %v863, %v861
        %v894 = vpack.c.bf16 %v867, %v865
        %v895 = vpack.c.bf16 %v871, %v869
        %v896 = vpack.c.bf16 %v875, %v873
        %v897 = vpack.c.bf16 %v879, %v877
        %v898 = vpack.c.bf16 %v883, %v881
        %v899 = vpack.c.bf16 %v887, %v885
        %v900 = vpack.c.bf16 %v891, %v889
        %901 = vst [vmem:[#allocation4] sm:$0xff] %v893
        %902 = vst [vmem:[#allocation4 + $0x8] sm:$0xff] %v894
        %903 = vst [vmem:[#allocation4 + $0x10] sm:$0xff] %v895
        %904 = vst [vmem:[#allocation4 + $0x18] sm:$0xff] %v896
        %905 = vst [vmem:[#allocation4 + $0x20] sm:$0xff] %v897
        %906 = vst [vmem:[#allocation4 + $0x28] sm:$0xff] %v898
        %907 = vst [vmem:[#allocation4 + $0x30] sm:$0xff] %v899
        %908 = vst [vmem:[#allocation4 + $0x38] sm:$0xff] %v900
        %v909 = vmax.f32 %v862, 0.0
        %v910 = vmax.f32 %v864, 0.0
        %v911 = vmax.f32 %v866, 0.0
        %v912 = vmax.f32 %v868, 0.0
        %v913 = vmax.f32 %v870, 0.0
        %v914 = vmax.f32 %v872, 0.0
        %v915 = vmax.f32 %v874, 0.0
        %v916 = vmax.f32 %v876, 0.0
        %v917 = vmax.f32 %v878, 0.0
        %v918 = vmax.f32 %v880, 0.0
        %v919 = vmax.f32 %v882, 0.0
        %v920 = vmax.f32 %v884, 0.0
        %v921 = vmax.f32 %v886, 0.0
        %v922 = vmax.f32 %v888, 0.0
        %v923 = vmax.f32 %v890, 0.0
        %v924 = vmax.f32 %v892, 0.0
        %v925 = vpack.c.bf16 %v910, %v909
        %v926 = vpack.c.bf16 %v912, %v911
        %v927 = vpack.c.bf16 %v914, %v913
        %v928 = vpack.c.bf16 %v916, %v915
        %v929 = vpack.c.bf16 %v918, %v917
        %v930 = vpack.c.bf16 %v920, %v919
        %v931 = vpack.c.bf16 %v922, %v921
        %v932 = vpack.c.bf16 %v924, %v923
        %v941 = vunpack.c.l.b16 %v925
        %v942 = vunpack.c.h.b16 %v925
        %v943 = vunpack.c.l.b16 %v926
        %v944 = vunpack.c.h.b16 %v926
        %v945 = vunpack.c.l.b16 %v927
        %v946 = vunpack.c.h.b16 %v927
        %v947 = vunpack.c.l.b16 %v928
        %v948 = vunpack.c.h.b16 %v928
        %v949 = vunpack.c.l.b16 %v929
        %v950 = vunpack.c.h.b16 %v929
        %v951 = vunpack.c.l.b16 %v930
        %v952 = vunpack.c.h.b16 %v930
        %v953 = vunpack.c.l.b16 %v931
        %v954 = vunpack.c.h.b16 %v931
        %v955 = vunpack.c.l.b16 %v932
        %v956 = vunpack.c.h.b16 %v932
        %v957 = vpack.c.b16 %v941, %v941
        %v958 = vpack.c.b16 %v942, %v942
        %v959 = vpack.c.b16 %v943, %v943
        %v960 = vpack.c.b16 %v944, %v944
        %v961 = vpack.c.b16 %v945, %v945
        %v962 = vpack.c.b16 %v946, %v946
        %v963 = vpack.c.b16 %v947, %v947
        %v964 = vpack.c.b16 %v948, %v948
        %v965 = vpack.c.b16 %v949, %v949
        %v966 = vpack.c.b16 %v950, %v950
        %v967 = vpack.c.b16 %v951, %v951
        %v968 = vpack.c.b16 %v952, %v952
        %v969 = vpack.c.b16 %v953, %v953
        %v970 = vpack.c.b16 %v954, %v954
        %v971 = vpack.c.b16 %v955, %v955
        %v972 = vpack.c.b16 %v956, %v956
        %vm973 = vsmask.f32 4368
        %vm974 = vmor %vm432, %vm973
        %v976 = vshrl.u32 %v957, 16
        %v978 = vrot.slane %v976, 7
        %v979 = vshll.u32 %v957, 16
        %v981 = vor.u32 %v978, %v979
        %v982 = vrot.slane %v978, 4
        %v984 = vshrl.u32 %v958, 16
        %v986 = vrot.slane %v984, 7
        %v987 = vshll.u32 %v958, 16
        %v989 = vor.u32 %v986, %v987
        %v990 = vsel %vm974, %v982, %v989
        %v991 = vrot.slane %v986, 4
        %v993 = vshrl.u32 %v959, 16
        %v995 = vrot.slane %v993, 7
        %v996 = vshll.u32 %v959, 16
        %v998 = vor.u32 %v995, %v996
        %v999 = vrot.slane %v995, 4
        %v1001 = vshrl.u32 %v960, 16
        %v1003 = vrot.slane %v1001, 7
        %v1004 = vshll.u32 %v960, 16
        %v1006 = vor.u32 %v1003, %v1004
        %v1007 = vsel %vm974, %v999, %v1006
        %v1008 = vrot.slane %v1003, 4
        %v1010 = vshrl.u32 %v961, 16
        %v1012 = vrot.slane %v1010, 7
        %v1013 = vshll.u32 %v961, 16
        %v1015 = vor.u32 %v1012, %v1013
        %v1016 = vrot.slane %v1012, 4
        %v1018 = vshrl.u32 %v962, 16
        %v1020 = vrot.slane %v1018, 7
        %v1021 = vshll.u32 %v962, 16
        %v1023 = vor.u32 %v1020, %v1021
        %v1024 = vsel %vm974, %v1016, %v1023
        %v1025 = vrot.slane %v1020, 4
        %v1027 = vshrl.u32 %v963, 16
        %v1029 = vrot.slane %v1027, 7
        %v1030 = vshll.u32 %v963, 16
        %v1032 = vor.u32 %v1029, %v1030
        %v1033 = vrot.slane %v1029, 4
        %v1035 = vshrl.u32 %v964, 16
        %v1037 = vrot.slane %v1035, 7
        %v1038 = vshll.u32 %v964, 16
        %v1040 = vor.u32 %v1037, %v1038
        %v1041 = vsel %vm974, %v1033, %v1040
        %v1042 = vrot.slane %v1037, 4
        %v1044 = vshrl.u32 %v965, 16
        %v1046 = vrot.slane %v1044, 7
        %v1047 = vshll.u32 %v965, 16
        %v1049 = vor.u32 %v1046, %v1047
        %v1050 = vrot.slane %v1046, 4
        %v1052 = vshrl.u32 %v966, 16
        %v1054 = vrot.slane %v1052, 7
        %v1055 = vshll.u32 %v966, 16
        %v1057 = vor.u32 %v1054, %v1055
        %v1058 = vsel %vm974, %v1050, %v1057
        %v1059 = vrot.slane %v1054, 4
        %v1061 = vshrl.u32 %v967, 16
        %v1063 = vrot.slane %v1061, 7
        %v1064 = vshll.u32 %v967, 16
        %v1066 = vor.u32 %v1063, %v1064
        %v1067 = vrot.slane %v1063, 4
        %v1069 = vshrl.u32 %v968, 16
        %v1071 = vrot.slane %v1069, 7
        %v1072 = vshll.u32 %v968, 16
        %v1074 = vor.u32 %v1071, %v1072
        %v1075 = vsel %vm974, %v1067, %v1074
        %v1076 = vrot.slane %v1071, 4
        %v1078 = vshrl.u32 %v969, 16
        %v1080 = vrot.slane %v1078, 7
        %v1081 = vshll.u32 %v969, 16
        %v1083 = vor.u32 %v1080, %v1081
        %v1084 = vrot.slane %v1080, 4
        %v1086 = vshrl.u32 %v970, 16
        %v1088 = vrot.slane %v1086, 7
        %v1089 = vshll.u32 %v970, 16
        %v1091 = vor.u32 %v1088, %v1089
        %v1092 = vsel %vm974, %v1084, %v1091
        %v1093 = vrot.slane %v1088, 4
        %v1095 = vshrl.u32 %v971, 16
        %v1097 = vrot.slane %v1095, 7
        %v1098 = vshll.u32 %v971, 16
        %v1100 = vor.u32 %v1097, %v1098
        %v1101 = vrot.slane %v1097, 4
        %v1103 = vshrl.u32 %v972, 16
        %v1105 = vrot.slane %v1103, 7
        %v1106 = vshll.u32 %v972, 16
        %v1108 = vor.u32 %v1105, %v1106
        %v1109 = vsel %vm974, %v1101, %v1108
        %v1110 = vrot.slane %v1105, 4
        %vm1135 = vcmask 1043456
        %vm1136 = vmand %vm1135, %vm482
        %v1137 = vld [vmem:[%s430] sm:$0xf]
        %v1138 = vsel %vm1136, %v981, %v1137
        %1139 = vst [vmem:[%s430] sm:$0xf] %v1138
        %1140 = vst [vmem:[%s430 + $0x4] sm:$0xf] %v990
        %v1141 = vld [vmem:[%s430 + $0x8] sm:$0x1]
        %v1142 = vsel %vm433, %v991, %v1141
        %1143 = vst [vmem:[%s430 + $0x8] sm:$0x1] %v1142
        %v1144 = vld [vmem:[%s430 + $0xc] sm:$0xf]
        %v1145 = vsel %vm1136, %v998, %v1144
        %1146 = vst [vmem:[%s430 + $0xc] sm:$0xf] %v1145
        %1147 = vst [vmem:[%s430 + $0x10] sm:$0xf] %v1007
        %v1148 = vld [vmem:[%s430 + $0x14] sm:$0x1]
        %v1149 = vsel %vm433, %v1008, %v1148
        %1150 = vst [vmem:[%s430 + $0x14] sm:$0x1] %v1149
        %v1151 = vld [vmem:[%s430 + $0x18] sm:$0xf]
        %v1152 = vsel %vm1136, %v1015, %v1151
        %1153 = vst [vmem:[%s430 + $0x18] sm:$0xf] %v1152
        %1154 = vst [vmem:[%s430 + $0x1c] sm:$0xf] %v1024
        %v1155 = vld [vmem:[%s430 + $0x20] sm:$0x1]
        %v1156 = vsel %vm433, %v1025, %v1155
        %1157 = vst [vmem:[%s430 + $0x20] sm:$0x1] %v1156
        %v1158 = vld [vmem:[%s430 + $0x24] sm:$0xf]
        %v1159 = vsel %vm1136, %v1032, %v1158
        %1160 = vst [vmem:[%s430 + $0x24] sm:$0xf] %v1159
        %1161 = vst [vmem:[%s430 + $0x28] sm:$0xf] %v1041
        %v1162 = vld [vmem:[%s430 + $0x2c] sm:$0x1]
        %v1163 = vsel %vm433, %v1042, %v1162
        %1164 = vst [vmem:[%s430 + $0x2c] sm:$0x1] %v1163
        %v1165 = vld [vmem:[%s430 + $0x30] sm:$0xf]
        %v1166 = vsel %vm1136, %v1049, %v1165
        %1167 = vst [vmem:[%s430 + $0x30] sm:$0xf] %v1166
        %1168 = vst [vmem:[%s430 + $0x34] sm:$0xf] %v1058
        %v1169 = vld [vmem:[%s430 + $0x38] sm:$0x1]
        %v1170 = vsel %vm433, %v1059, %v1169
        %1171 = vst [vmem:[%s430 + $0x38] sm:$0x1] %v1170
        %v1172 = vld [vmem:[%s430 + $0x3c] sm:$0xf]
        %v1173 = vsel %vm1136, %v1066, %v1172
        %1174 = vst [vmem:[%s430 + $0x3c] sm:$0xf] %v1173
        %1175 = vst [vmem:[%s430 + $0x40] sm:$0xf] %v1075
        %v1176 = vld [vmem:[%s430 + $0x44] sm:$0x1]
        %v1177 = vsel %vm433, %v1076, %v1176
        %1178 = vst [vmem:[%s430 + $0x44] sm:$0x1] %v1177
        %v1179 = vld [vmem:[%s430 + $0x48] sm:$0xf]
        %v1180 = vsel %vm1136, %v1083, %v1179
        %1181 = vst [vmem:[%s430 + $0x48] sm:$0xf] %v1180
        %1182 = vst [vmem:[%s430 + $0x4c] sm:$0xf] %v1092
        %v1183 = vld [vmem:[%s430 + $0x50] sm:$0x1]
        %v1184 = vsel %vm433, %v1093, %v1183
        %1185 = vst [vmem:[%s430 + $0x50] sm:$0x1] %v1184
        %v1186 = vld [vmem:[%s430 + $0x54] sm:$0xf]
        %v1187 = vsel %vm1136, %v1100, %v1186
        %1188 = vst [vmem:[%s430 + $0x54] sm:$0xf] %v1187
        %1189 = vst [vmem:[%s430 + $0x58] sm:$0xf] %v1109
        %v1190 = vld [vmem:[%s430 + $0x5c] sm:$0x1]
        %v1191 = vsel %vm433, %v1110, %v1190
        %1192 = vst [vmem:[%s430 + $0x5c] sm:$0x1] %v1191
        %v1193 = vld [vmem:[%s373 + $0x40] sm:$0xf]
        %v1194 = vld [vmem:[%s373 + $0x44] sm:$0xf]
        %v1195 = vld [vmem:[%s373 + $0x48] sm:$0xf]
        %v1196 = vld [vmem:[%s373 + $0x4c] sm:$0xf]
        %v1197 = vld [vmem:[%s373 + $0x50] sm:$0xf]
        %v1198 = vld [vmem:[%s373 + $0x54] sm:$0xf]
        %v1199 = vld [vmem:[%s373 + $0x58] sm:$0xf]
        %v1200 = vld [vmem:[%s373 + $0x5c] sm:$0xf]
        %v1201 = vld [vmem:[%s373 + $0x60] sm:$0xf]
        %v1202 = vld [vmem:[%s373 + $0x64] sm:$0xf]
        %v1203 = vld [vmem:[%s373 + $0x68] sm:$0xf]
        %v1204 = vld [vmem:[%s373 + $0x6c] sm:$0xf]
        %v1205 = vld [vmem:[%s373 + $0x70] sm:$0xf]
        %v1206 = vld [vmem:[%s373 + $0x74] sm:$0xf]
        %v1207 = vld [vmem:[%s373 + $0x78] sm:$0xf]
        %v1208 = vld [vmem:[%s373 + $0x7c] sm:$0xf]
        %v1209 = vld [vmem:[#allocation8] sm:$0xff]
        %v1210 = vld [vmem:[#allocation8 + $0x8] sm:$0xff]
        %v1211 = vld [vmem:[#allocation8 + $0x10] sm:$0xff]
        %v1212 = vld [vmem:[#allocation8 + $0x18] sm:$0xff]
        %v1213 = vld [vmem:[#allocation8 + $0x20] sm:$0xff]
        %v1214 = vld [vmem:[#allocation8 + $0x28] sm:$0xff]
        %v1215 = vld [vmem:[#allocation8 + $0x30] sm:$0xff]
        %v1216 = vld [vmem:[#allocation8 + $0x38] sm:$0xff]
        %v1217 = vld [vmem:[#allocation8 + $0x40] sm:$0xff]
        %v1218 = vld [vmem:[#allocation8 + $0x48] sm:$0xff]
        %v1219 = vld [vmem:[#allocation8 + $0x50] sm:$0xff]
        %v1220 = vld [vmem:[#allocation8 + $0x58] sm:$0xff]
        %v1221 = vld [vmem:[#allocation8 + $0x60] sm:$0xff]
        %v1222 = vld [vmem:[#allocation8 + $0x68] sm:$0xff]
        %v1223 = vld [vmem:[#allocation8 + $0x70] sm:$0xff]
        %v1224 = vld [vmem:[#allocation8 + $0x78] sm:$0xff]
        %v1241 = vunpack.c.l.b16 %v1193
        %v1242 = vunpack.c.l.b16 %v1194
        %v1243 = vunpack.c.l.b16 %v1195
        %v1244 = vunpack.c.l.b16 %v1196
        %v1245 = vunpack.c.l.b16 %v1197
        %v1246 = vunpack.c.l.b16 %v1198
        %v1247 = vunpack.c.l.b16 %v1199
        %v1248 = vunpack.c.l.b16 %v1200
        %v1249 = vunpack.c.l.b16 %v1201
        %v1250 = vunpack.c.l.b16 %v1202
        %v1251 = vunpack.c.l.b16 %v1203
        %v1252 = vunpack.c.l.b16 %v1204
        %v1253 = vunpack.c.l.b16 %v1205
        %v1254 = vunpack.c.l.b16 %v1206
        %v1255 = vunpack.c.l.b16 %v1207
        %v1256 = vunpack.c.l.b16 %v1208
        %v1257 = vpack.c.b16 %v1242, %v1241
        %v1258 = vpack.c.b16 %v1244, %v1243
        %v1259 = vpack.c.b16 %v1246, %v1245
        %v1260 = vpack.c.b16 %v1248, %v1247
        %v1261 = vpack.c.b16 %v1250, %v1249
        %v1262 = vpack.c.b16 %v1252, %v1251
        %v1263 = vpack.c.b16 %v1254, %v1253
        %v1264 = vpack.c.b16 %v1256, %v1255
        %v1289 = vunpack.c.l.b16 %v1209
        %v1290 = vunpack.c.h.b16 %v1209
        %v1291 = vunpack.c.l.b16 %v1210
        %v1292 = vunpack.c.h.b16 %v1210
        %v1293 = vunpack.c.l.b16 %v1211
        %v1294 = vunpack.c.h.b16 %v1211
        %v1295 = vunpack.c.l.b16 %v1212
        %v1296 = vunpack.c.h.b16 %v1212
        %v1297 = vunpack.c.l.b16 %v1213
        %v1298 = vunpack.c.h.b16 %v1213
        %v1299 = vunpack.c.l.b16 %v1214
        %v1300 = vunpack.c.h.b16 %v1214
        %v1301 = vunpack.c.l.b16 %v1215
        %v1302 = vunpack.c.h.b16 %v1215
        %v1303 = vunpack.c.l.b16 %v1216
        %v1304 = vunpack.c.h.b16 %v1216
        %v1305 = vunpack.c.l.b16 %v1217
        %v1306 = vunpack.c.h.b16 %v1217
        %v1307 = vunpack.c.l.b16 %v1218
        %v1308 = vunpack.c.h.b16 %v1218
        %v1309 = vunpack.c.l.b16 %v1219
        %v1310 = vunpack.c.h.b16 %v1219
        %v1311 = vunpack.c.l.b16 %v1220
        %v1312 = vunpack.c.h.b16 %v1220
        %v1313 = vunpack.c.l.b16 %v1221
        %v1314 = vunpack.c.h.b16 %v1221
        %v1315 = vunpack.c.l.b16 %v1222
        %v1316 = vunpack.c.h.b16 %v1222
        %v1317 = vunpack.c.l.b16 %v1223
        %v1318 = vunpack.c.h.b16 %v1223
        %v1319 = vunpack.c.l.b16 %v1224
        %v1320 = vunpack.c.h.b16 %v1224
        %v1321 = vpack.c.b16 %v1291, %v1289
        %v1322 = vpack.c.b16 %v1292, %v1290
        %v1323 = vpack.c.b16 %v1295, %v1293
        %v1324 = vpack.c.b16 %v1296, %v1294
        %v1325 = vpack.c.b16 %v1299, %v1297
        %v1326 = vpack.c.b16 %v1300, %v1298
        %v1327 = vpack.c.b16 %v1303, %v1301
        %v1328 = vpack.c.b16 %v1304, %v1302
        %v1329 = vpack.c.b16 %v1307, %v1305
        %v1330 = vpack.c.b16 %v1308, %v1306
        %v1331 = vpack.c.b16 %v1311, %v1309
        %v1332 = vpack.c.b16 %v1312, %v1310
        %v1333 = vpack.c.b16 %v1315, %v1313
        %v1334 = vpack.c.b16 %v1316, %v1314
        %v1335 = vpack.c.b16 %v1319, %v1317
        %v1336 = vpack.c.b16 %v1320, %v1318
        %1353 = vmatprep.subr.bf16.mxu0 %v1322
        %1354 = vmatpush1.bf16.msra.mxu0 %v1321
        %1355 = vmatprep.subr.bf16.mxu0 %v1324
        %1356 = vmatpush1.bf16.msra.mxu0 %v1323
        %1357 = vmatprep.subr.bf16.mxu0 %v1326
        %1358 = vmatpush1.bf16.msra.mxu0 %v1325
        %1359 = vmatprep.subr.bf16.mxu0 %v1328
        %1360 = vmatpush1.bf16.msra.mxu0 %v1327
        %1361 = vmatprep.subr.bf16.mxu0 %v1330
        %1362 = vmatpush1.bf16.msra.mxu0 %v1329
        %1363 = vmatprep.subr.bf16.mxu0 %v1332
        %1364 = vmatpush1.bf16.msra.mxu0 %v1331
        %1365 = vmatprep.subr.bf16.mxu0 %v1334
        %1366 = vmatpush1.bf16.msra.mxu0 %v1333
        %1367 = vmatprep.subr.bf16.mxu0 %v1336
        %1368 = vmatpush1.bf16.msra.mxu0 %v1335
        %1369 = vmatprep.subr.bf16.mxu0 0
        %1370 = vmatpush1.bf16.msra.mxu0 0
        %1371 = vmatprep.subr.bf16.mxu0 0
        %1372 = vmatpush1.bf16.msra.mxu0 0
        %1373 = vmatprep.subr.bf16.mxu0 0
        %1374 = vmatpush1.bf16.msra.mxu0 0
        %1375 = vmatprep.subr.bf16.mxu0 0
        %1376 = vmatpush1.bf16.msra.mxu0 0
        %1377 = vmatprep.subr.bf16.mxu0 0
        %1378 = vmatpush1.bf16.msra.mxu0 0
        %1379 = vmatprep.subr.bf16.mxu0 0
        %1380 = vmatpush1.bf16.msra.mxu0 0
        %1381 = vmatprep.subr.bf16.mxu0 0
        %1382 = vmatpush1.bf16.msra.mxu0 0
        %1383 = vmatprep.subr.bf16.mxu0 0
        %1384 = vmatpush1.bf16.msra.mxu0 0
        %1385 = vmatprep.mubr.bf16.mxu0 0
        %1386 = vmatmul.mubr.bf16.gmra.mrb[0].mxu0 %v1257
        %v1387 = vpop.f32.mrb[0].mxu0
        %v1388 = vadd.f32 0.0, %v1387
        %v1389 = vpop.f32.mrb[0].mxu0
        %v1390 = vadd.f32 0.0, %v1389
        %v1391 = vpop.f32.mrb[0].mxu0
        %v1392 = vadd.f32 0.0, %v1391
        %v1393 = vpop.f32.mrb[0].mxu0
        %v1394 = vadd.f32 0.0, %v1393
        %1395 = vmatprep.mubr.bf16.mxu0 0
        %1396 = vmatmul.mubr.bf16.gmra.mrb[0].mxu0 %v1258
        %v1397 = vpop.f32.mrb[0].mxu0
        %v1398 = vadd.f32 0.0, %v1397
        %v1399 = vpop.f32.mrb[0].mxu0
        %v1400 = vadd.f32 0.0, %v1399
        %v1401 = vpop.f32.mrb[0].mxu0
        %v1402 = vadd.f32 0.0, %v1401
        %v1403 = vpop.f32.mrb[0].mxu0
        %v1404 = vadd.f32 0.0, %v1403
        %1405 = vmatprep.mubr.bf16.mxu0 0
        %1406 = vmatmul.mubr.bf16.gmra.mrb[0].mxu0 %v1259
        %v1407 = vpop.f32.mrb[0].mxu0
        %v1408 = vadd.f32 0.0, %v1407
        %v1409 = vpop.f32.mrb[0].mxu0
        %v1410 = vadd.f32 0.0, %v1409
        %v1411 = vpop.f32.mrb[0].mxu0
        %v1412 = vadd.f32 0.0, %v1411
        %v1413 = vpop.f32.mrb[0].mxu0
        %v1414 = vadd.f32 0.0, %v1413
        %1415 = vmatprep.mubr.bf16.mxu0 0
        %1416 = vmatmul.mubr.bf16.gmra.mrb[0].mxu0 %v1260
        %v1417 = vpop.f32.mrb[0].mxu0
        %v1418 = vadd.f32 0.0, %v1417
        %v1419 = vpop.f32.mrb[0].mxu0
        %v1420 = vadd.f32 0.0, %v1419
        %v1421 = vpop.f32.mrb[0].mxu0
        %v1422 = vadd.f32 0.0, %v1421
        %v1423 = vpop.f32.mrb[0].mxu0
        %v1424 = vadd.f32 0.0, %v1423
        %1425 = vmatprep.mubr.bf16.mxu0 0
        %1426 = vmatmul.mubr.bf16.gmra.mrb[0].mxu0 %v1261
        %v1427 = vpop.f32.mrb[0].mxu0
        %v1428 = vadd.f32 0.0, %v1427
        %v1429 = vpop.f32.mrb[0].mxu0
        %v1430 = vadd.f32 0.0, %v1429
        %v1431 = vpop.f32.mrb[0].mxu0
        %v1432 = vadd.f32 0.0, %v1431
        %v1433 = vpop.f32.mrb[0].mxu0
        %v1434 = vadd.f32 0.0, %v1433
        %1435 = vmatprep.mubr.bf16.mxu0 0
        %1436 = vmatmul.mubr.bf16.gmra.mrb[0].mxu0 %v1262
        %v1437 = vpop.f32.mrb[0].mxu0
        %v1438 = vadd.f32 0.0, %v1437
        %v1439 = vpop.f32.mrb[0].mxu0
        %v1440 = vadd.f32 0.0, %v1439
        %v1441 = vpop.f32.mrb[0].mxu0
        %v1442 = vadd.f32 0.0, %v1441
        %v1443 = vpop.f32.mrb[0].mxu0
        %v1444 = vadd.f32 0.0, %v1443
        %1445 = vmatprep.mubr.bf16.mxu0 0
        %1446 = vmatmul.mubr.bf16.gmra.mrb[0].mxu0 %v1263
        %v1447 = vpop.f32.mrb[0].mxu0
        %v1448 = vadd.f32 0.0, %v1447
        %v1449 = vpop.f32.mrb[0].mxu0
        %v1450 = vadd.f32 0.0, %v1449
        %v1451 = vpop.f32.mrb[0].mxu0
        %v1452 = vadd.f32 0.0, %v1451
        %v1453 = vpop.f32.mrb[0].mxu0
        %v1454 = vadd.f32 0.0, %v1453
        %1455 = vmatprep.mubr.bf16.mxu0 0
        %1456 = vmatmul.mubr.bf16.gmra.mrb[0].mxu0 %v1264
        %v1457 = vpop.f32.mrb[0].mxu0
        %v1458 = vadd.f32 0.0, %v1457
        %v1459 = vpop.f32.mrb[0].mxu0
        %v1460 = vadd.f32 0.0, %v1459
        %v1461 = vpop.f32.mrb[0].mxu0
        %v1462 = vadd.f32 0.0, %v1461
        %v1463 = vpop.f32.mrb[0].mxu0
        %v1464 = vadd.f32 0.0, %v1463
        %1465 = vdwg.mxu0
        %v1466 = vmul.f32 %v1388, %v811
        %v1467 = vmul.f32 %v1390, %v815
        %v1468 = vmul.f32 %v1392, %v811
        %v1469 = vmul.f32 %v1394, %v815
        %v1470 = vmul.f32 %v1398, %v811
        %v1471 = vmul.f32 %v1400, %v815
        %v1472 = vmul.f32 %v1402, %v811
        %v1473 = vmul.f32 %v1404, %v815
        %v1474 = vmul.f32 %v1408, %v811
        %v1475 = vmul.f32 %v1410, %v815
        %v1476 = vmul.f32 %v1412, %v811
        %v1477 = vmul.f32 %v1414, %v815
        %v1478 = vmul.f32 %v1418, %v811
        %v1479 = vmul.f32 %v1420, %v815
        %v1480 = vmul.f32 %v1422, %v811
        %v1481 = vmul.f32 %v1424, %v815
        %v1482 = vmul.f32 %v1428, %v811
        %v1483 = vmul.f32 %v1430, %v815
        %v1484 = vmul.f32 %v1432, %v811
        %v1485 = vmul.f32 %v1434, %v815
        %v1486 = vmul.f32 %v1438, %v811
        %v1487 = vmul.f32 %v1440, %v815
        %v1488 = vmul.f32 %v1442, %v811
        %v1489 = vmul.f32 %v1444, %v815
        %v1490 = vmul.f32 %v1448, %v811
        %v1491 = vmul.f32 %v1450, %v815
        %v1492 = vmul.f32 %v1452, %v811
        %v1493 = vmul.f32 %v1454, %v815
        %v1494 = vmul.f32 %v1458, %v811
        %v1495 = vmul.f32 %v1460, %v815
        %v1496 = vmul.f32 %v1462, %v811
        %v1497 = vmul.f32 %v1464, %v815
        %v1498 = vadd.f32 %v1466, %v854
        %v1499 = vadd.f32 %v1467, %v858
        %v1500 = vadd.f32 %v1468, %v854
        %v1501 = vadd.f32 %v1469, %v858
        %v1502 = vadd.f32 %v1470, %v854
        %v1503 = vadd.f32 %v1471, %v858
        %v1504 = vadd.f32 %v1472, %v854
        %v1505 = vadd.f32 %v1473, %v858
        %v1506 = vadd.f32 %v1474, %v854
        %v1507 = vadd.f32 %v1475, %v858
        %v1508 = vadd.f32 %v1476, %v854
        %v1509 = vadd.f32 %v1477, %v858
        %v1510 = vadd.f32 %v1478, %v854
        %v1511 = vadd.f32 %v1479, %v858
        %v1512 = vadd.f32 %v1480, %v854
        %v1513 = vadd.f32 %v1481, %v858
        %v1514 = vadd.f32 %v1482, %v854
        %v1515 = vadd.f32 %v1483, %v858
        %v1516 = vadd.f32 %v1484, %v854
        %v1517 = vadd.f32 %v1485, %v858
        %v1518 = vadd.f32 %v1486, %v854
        %v1519 = vadd.f32 %v1487, %v858
        %v1520 = vadd.f32 %v1488, %v854
        %v1521 = vadd.f32 %v1489, %v858
        %v1522 = vadd.f32 %v1490, %v854
        %v1523 = vadd.f32 %v1491, %v858
        %v1524 = vadd.f32 %v1492, %v854
        %v1525 = vadd.f32 %v1493, %v858
        %v1526 = vadd.f32 %v1494, %v854
        %v1527 = vadd.f32 %v1495, %v858
        %v1528 = vadd.f32 %v1496, %v854
        %v1529 = vadd.f32 %v1497, %v858
        %v1530 = vpack.c.bf16 %v1500, %v1498
        %v1531 = vpack.c.bf16 %v1504, %v1502
        %v1532 = vpack.c.bf16 %v1508, %v1506
        %v1533 = vpack.c.bf16 %v1512, %v1510
        %v1534 = vpack.c.bf16 %v1516, %v1514
        %v1535 = vpack.c.bf16 %v1520, %v1518
        %v1536 = vpack.c.bf16 %v1524, %v1522
        %v1537 = vpack.c.bf16 %v1528, %v1526
        %1538 = vst [vmem:[#allocation4 + $0x40] sm:$0xff] %v1530
        %1539 = vst [vmem:[#allocation4 + $0x48] sm:$0xff] %v1531
        %1540 = vst [vmem:[#allocation4 + $0x50] sm:$0xff] %v1532
        %1541 = vst [vmem:[#allocation4 + $0x58] sm:$0xff] %v1533
        %1542 = vst [vmem:[#allocation4 + $0x60] sm:$0xff] %v1534
        %1543 = vst [vmem:[#allocation4 + $0x68] sm:$0xff] %v1535
        %1544 = vst [vmem:[#allocation4 + $0x70] sm:$0xff] %v1536
        %1545 = vst [vmem:[#allocation4 + $0x78] sm:$0xff] %v1537
        %v1546 = vmax.f32 %v1499, 0.0
        %v1547 = vmax.f32 %v1501, 0.0
        %v1548 = vmax.f32 %v1503, 0.0
        %v1549 = vmax.f32 %v1505, 0.0
        %v1550 = vmax.f32 %v1507, 0.0
        %v1551 = vmax.f32 %v1509, 0.0
        %v1552 = vmax.f32 %v1511, 0.0
        %v1553 = vmax.f32 %v1513, 0.0
        %v1554 = vmax.f32 %v1515, 0.0
        %v1555 = vmax.f32 %v1517, 0.0
        %v1556 = vmax.f32 %v1519, 0.0
        %v1557 = vmax.f32 %v1521, 0.0
        %v1558 = vmax.f32 %v1523, 0.0
        %v1559 = vmax.f32 %v1525, 0.0
        %v1560 = vmax.f32 %v1527, 0.0
        %v1561 = vmax.f32 %v1529, 0.0
        %v1562 = vpack.c.bf16 %v1547, %v1546
        %v1563 = vpack.c.bf16 %v1549, %v1548
        %v1564 = vpack.c.bf16 %v1551, %v1550
        %v1565 = vpack.c.bf16 %v1553, %v1552
        %v1566 = vpack.c.bf16 %v1555, %v1554
        %v1567 = vpack.c.bf16 %v1557, %v1556
        %v1568 = vpack.c.bf16 %v1559, %v1558
        %v1569 = vpack.c.bf16 %v1561, %v1560
        %v1578 = vunpack.c.l.b16 %v1562
        %v1579 = vunpack.c.h.b16 %v1562
        %v1580 = vunpack.c.l.b16 %v1563
        %v1581 = vunpack.c.h.b16 %v1563
        %v1582 = vunpack.c.l.b16 %v1564
        %v1583 = vunpack.c.h.b16 %v1564
        %v1584 = vunpack.c.l.b16 %v1565
        %v1585 = vunpack.c.h.b16 %v1565
        %v1586 = vunpack.c.l.b16 %v1566
        %v1587 = vunpack.c.h.b16 %v1566
        %v1588 = vunpack.c.l.b16 %v1567
        %v1589 = vunpack.c.h.b16 %v1567
        %v1590 = vunpack.c.l.b16 %v1568
        %v1591 = vunpack.c.h.b16 %v1568
        %v1592 = vunpack.c.l.b16 %v1569
        %v1593 = vunpack.c.h.b16 %v1569
        %v1594 = vpack.c.b16 %v1578, %v1578
        %v1595 = vpack.c.b16 %v1579, %v1579
        %v1596 = vpack.c.b16 %v1580, %v1580
        %v1597 = vpack.c.b16 %v1581, %v1581
        %v1598 = vpack.c.b16 %v1582, %v1582
        %v1599 = vpack.c.b16 %v1583, %v1583
        %v1600 = vpack.c.b16 %v1584, %v1584
        %v1601 = vpack.c.b16 %v1585, %v1585
        %v1602 = vpack.c.b16 %v1586, %v1586
        %v1603 = vpack.c.b16 %v1587, %v1587
        %v1604 = vpack.c.b16 %v1588, %v1588
        %v1605 = vpack.c.b16 %v1589, %v1589
        %v1606 = vpack.c.b16 %v1590, %v1590
        %v1607 = vpack.c.b16 %v1591, %v1591
        %v1608 = vpack.c.b16 %v1592, %v1592
        %v1609 = vpack.c.b16 %v1593, %v1593
        %v1611 = vshrl.u32 %v1594, 16
        %v1613 = vrot.slane %v1611, 7
        %v1614 = vshll.u32 %v1594, 16
        %v1616 = vor.u32 %v1613, %v1614
        %v1617 = vrot.slane %v1613, 4
        %v1619 = vshrl.u32 %v1595, 16
        %v1621 = vrot.slane %v1619, 7
        %v1622 = vshll.u32 %v1595, 16
        %v1624 = vor.u32 %v1621, %v1622
        %v1625 = vsel %vm974, %v1617, %v1624
        %v1626 = vrot.slane %v1621, 4
        %v1628 = vshrl.u32 %v1596, 16
        %v1630 = vrot.slane %v1628, 7
        %v1631 = vshll.u32 %v1596, 16
        %v1633 = vor.u32 %v1630, %v1631
        %v1634 = vrot.slane %v1630, 4
        %v1636 = vshrl.u32 %v1597, 16
        %v1638 = vrot.slane %v1636, 7
        %v1639 = vshll.u32 %v1597, 16
        %v1641 = vor.u32 %v1638, %v1639
        %v1642 = vsel %vm974, %v1634, %v1641
        %v1643 = vrot.slane %v1638, 4
        %v1645 = vshrl.u32 %v1598, 16
        %v1647 = vrot.slane %v1645, 7
        %v1648 = vshll.u32 %v1598, 16
        %v1650 = vor.u32 %v1647, %v1648
        %v1651 = vrot.slane %v1647, 4
        %v1653 = vshrl.u32 %v1599, 16
        %v1655 = vrot.slane %v1653, 7
        %v1656 = vshll.u32 %v1599, 16
        %v1658 = vor.u32 %v1655, %v1656
        %v1659 = vsel %vm974, %v1651, %v1658
        %v1660 = vrot.slane %v1655, 4
        %v1662 = vshrl.u32 %v1600, 16
        %v1664 = vrot.slane %v1662, 7
        %v1665 = vshll.u32 %v1600, 16
        %v1667 = vor.u32 %v1664, %v1665
        %v1668 = vrot.slane %v1664, 4
        %v1670 = vshrl.u32 %v1601, 16
        %v1672 = vrot.slane %v1670, 7
        %v1673 = vshll.u32 %v1601, 16
        %v1675 = vor.u32 %v1672, %v1673
        %v1676 = vsel %vm974, %v1668, %v1675
        %v1677 = vrot.slane %v1672, 4
        %v1679 = vshrl.u32 %v1602, 16
        %v1681 = vrot.slane %v1679, 7
        %v1682 = vshll.u32 %v1602, 16
        %v1684 = vor.u32 %v1681, %v1682
        %v1685 = vrot.slane %v1681, 4
        %v1687 = vshrl.u32 %v1603, 16
        %v1689 = vrot.slane %v1687, 7
        %v1690 = vshll.u32 %v1603, 16
        %v1692 = vor.u32 %v1689, %v1690
        %v1693 = vsel %vm974, %v1685, %v1692
        %v1694 = vrot.slane %v1689, 4
        %v1696 = vshrl.u32 %v1604, 16
        %v1698 = vrot.slane %v1696, 7
        %v1699 = vshll.u32 %v1604, 16
        %v1701 = vor.u32 %v1698, %v1699
        %v1702 = vrot.slane %v1698, 4
        %v1704 = vshrl.u32 %v1605, 16
        %v1706 = vrot.slane %v1704, 7
        %v1707 = vshll.u32 %v1605, 16
        %v1709 = vor.u32 %v1706, %v1707
        %v1710 = vsel %vm974, %v1702, %v1709
        %v1711 = vrot.slane %v1706, 4
        %v1713 = vshrl.u32 %v1606, 16
        %v1715 = vrot.slane %v1713, 7
        %v1716 = vshll.u32 %v1606, 16
        %v1718 = vor.u32 %v1715, %v1716
        %v1719 = vrot.slane %v1715, 4
        %v1721 = vshrl.u32 %v1607, 16
        %v1723 = vrot.slane %v1721, 7
        %v1724 = vshll.u32 %v1607, 16
        %v1726 = vor.u32 %v1723, %v1724
        %v1727 = vsel %vm974, %v1719, %v1726
        %v1728 = vrot.slane %v1723, 4
        %v1730 = vshrl.u32 %v1608, 16
        %v1732 = vrot.slane %v1730, 7
        %v1733 = vshll.u32 %v1608, 16
        %v1735 = vor.u32 %v1732, %v1733
        %v1736 = vrot.slane %v1732, 4
        %v1738 = vshrl.u32 %v1609, 16
        %v1740 = vrot.slane %v1738, 7
        %v1741 = vshll.u32 %v1609, 16
        %v1743 = vor.u32 %v1740, %v1741
        %v1744 = vsel %vm974, %v1736, %v1743
        %v1745 = vrot.slane %v1740, 4
        %s1770 = scalar_lea.vmem [#allocation2], 108
        %v1771 = vld [vmem:[%s1770] sm:$0xf]
        %v1772 = vsel %vm1136, %v1616, %v1771
        %1773 = vst [vmem:[%s1770] sm:$0xf] %v1772
        %1774 = vst [vmem:[%s1770 + $0x4] sm:$0xf] %v1625
        %v1775 = vld [vmem:[%s1770 + $0x8] sm:$0x1]
        %v1776 = vsel %vm433, %v1626, %v1775
        %1777 = vst [vmem:[%s1770 + $0x8] sm:$0x1] %v1776
        %v1778 = vld [vmem:[%s1770 + $0xc] sm:$0xf]
        %v1779 = vsel %vm1136, %v1633, %v1778
        %1780 = vst [vmem:[%s1770 + $0xc] sm:$0xf] %v1779
        %1781 = vst [vmem:[%s1770 + $0x10] sm:$0xf] %v1642
        %v1782 = vld [vmem:[%s1770 + $0x14] sm:$0x1]
        %v1783 = vsel %vm433, %v1643, %v1782
        %1784 = vst [vmem:[%s1770 + $0x14] sm:$0x1] %v1783
        %v1785 = vld [vmem:[%s1770 + $0x18] sm:$0xf]
        %v1786 = vsel %vm1136, %v1650, %v1785
        %1787 = vst [vmem:[%s1770 + $0x18] sm:$0xf] %v1786
        %1788 = vst [vmem:[%s1770 + $0x1c] sm:$0xf] %v1659
        %v1789 = vld [vmem:[%s1770 + $0x20] sm:$0x1]
        %v1790 = vsel %vm433, %v1660, %v1789
        %1791 = vst [vmem:[%s1770 + $0x20] sm:$0x1] %v1790
        %v1792 = vld [vmem:[%s1770 + $0x24] sm:$0xf]
        %v1793 = vsel %vm1136, %v1667, %v1792
        %1794 = vst [vmem:[%s1770 + $0x24] sm:$0xf] %v1793
        %1795 = vst [vmem:[%s1770 + $0x28] sm:$0xf] %v1676
        %v1796 = vld [vmem:[%s1770 + $0x2c] sm:$0x1]
        %v1797 = vsel %vm433, %v1677, %v1796
        %1798 = vst [vmem:[%s1770 + $0x2c] sm:$0x1] %v1797
        %v1799 = vld [vmem:[%s1770 + $0x30] sm:$0xf]
        %v1800 = vsel %vm1136, %v1684, %v1799
        %1801 = vst [vmem:[%s1770 + $0x30] sm:$0xf] %v1800
        %1802 = vst [vmem:[%s1770 + $0x34] sm:$0xf] %v1693
        %v1803 = vld [vmem:[%s1770 + $0x38] sm:$0x1]
        %v1804 = vsel %vm433, %v1694, %v1803
        %1805 = vst [vmem:[%s1770 + $0x38] sm:$0x1] %v1804
        %v1806 = vld [vmem:[%s1770 + $0x3c] sm:$0xf]
        %v1807 = vsel %vm1136, %v1701, %v1806
        %1808 = vst [vmem:[%s1770 + $0x3c] sm:$0xf] %v1807
        %1809 = vst [vmem:[%s1770 + $0x40] sm:$0xf] %v1710
        %v1810 = vld [vmem:[%s1770 + $0x44] sm:$0x1]
        %v1811 = vsel %vm433, %v1711, %v1810
        %1812 = vst [vmem:[%s1770 + $0x44] sm:$0x1] %v1811
        %v1813 = vld [vmem:[%s1770 + $0x48] sm:$0xf]
        %v1814 = vsel %vm1136, %v1718, %v1813
        %1815 = vst [vmem:[%s1770 + $0x48] sm:$0xf] %v1814
        %1816 = vst [vmem:[%s1770 + $0x4c] sm:$0xf] %v1727
        %v1817 = vld [vmem:[%s1770 + $0x50] sm:$0x1]
        %v1818 = vsel %vm433, %v1728, %v1817
        %1819 = vst [vmem:[%s1770 + $0x50] sm:$0x1] %v1818
        %v1820 = vld [vmem:[%s1770 + $0x54] sm:$0xf]
        %v1821 = vsel %vm1136, %v1735, %v1820
        %1822 = vst [vmem:[%s1770 + $0x54] sm:$0xf] %v1821
        %1823 = vst [vmem:[%s1770 + $0x58] sm:$0xf] %v1744
        %v1824 = vld [vmem:[%s1770 + $0x5c] sm:$0x1]
        %v1825 = vsel %vm433, %v1745, %v1824
        %1826 = vst [vmem:[%s1770 + $0x5c] sm:$0x1] %v1825
        %v1827 = vld [vmem:[#allocation2] sm:$0xf]
        %v1828 = vld [vmem:[#allocation2 + $0x4] sm:$0xf]
        %v1829 = vld [vmem:[#allocation2 + $0xc] sm:$0xf]
        %v1830 = vld [vmem:[#allocation2 + $0x10] sm:$0xf]
        %v1831 = vld [vmem:[#allocation2 + $0x18] sm:$0xf]
        %v1832 = vld [vmem:[#allocation2 + $0x1c] sm:$0xf]
        %v1833 = vld [vmem:[#allocation2 + $0x24] sm:$0xf]
        %v1834 = vld [vmem:[#allocation2 + $0x28] sm:$0xf]
        %v1835 = vld [vmem:[#allocation2 + $0x30] sm:$0xf]
        %v1836 = vld [vmem:[#allocation2 + $0x34] sm:$0xf]
        %v1837 = vld [vmem:[#allocation2 + $0x3c] sm:$0xf]
        %v1838 = vld [vmem:[#allocation2 + $0x40] sm:$0xf]
        %v1839 = vld [vmem:[#allocation2 + $0x48] sm:$0xf]
        %v1840 = vld [vmem:[#allocation2 + $0x4c] sm:$0xf]
        %v1841 = vld [vmem:[#allocation2 + $0x54] sm:$0xf]
        %v1842 = vld [vmem:[#allocation2 + $0x58] sm:$0xf]
        %v1843 = vld [vmem:[#allocation2 + $0x60] sm:$0xf]
        %v1844 = vld [vmem:[#allocation2 + $0x64] sm:$0xf]
        %v1845 = vld [vmem:[#allocation2 + $0x6c] sm:$0xf]
        %v1846 = vld [vmem:[#allocation2 + $0x70] sm:$0xf]
        %v1847 = vld [vmem:[#allocation2 + $0x78] sm:$0xf]
        %v1848 = vld [vmem:[#allocation2 + $0x7c] sm:$0xf]
        %v1849 = vld [vmem:[#allocation2 + $0x84] sm:$0xf]
        %v1850 = vld [vmem:[#allocation2 + $0x88] sm:$0xf]
        %v1851 = vld [vmem:[#allocation2 + $0x90] sm:$0xf]
        %v1852 = vld [vmem:[#allocation2 + $0x94] sm:$0xf]
        %v1853 = vld [vmem:[#allocation2 + $0x9c] sm:$0xf]
        %v1854 = vld [vmem:[#allocation2 + $0xa0] sm:$0xf]
        %v1855 = vld [vmem:[#allocation2 + $0xa8] sm:$0xf]
        %v1856 = vld [vmem:[#allocation2 + $0xac] sm:$0xf]
        %v1857 = vld [vmem:[#allocation2 + $0xb4] sm:$0xf]
        %v1858 = vld [vmem:[#allocation2 + $0xb8] sm:$0xf]
        %v1891 = vunpack.c.l.b16 %v1827
        %v1892 = vunpack.c.l.b16 %v1828
        %v1893 = vunpack.c.l.b16 %v1829
        %v1894 = vunpack.c.l.b16 %v1830
        %v1895 = vunpack.c.l.b16 %v1831
        %v1896 = vunpack.c.l.b16 %v1832
        %v1897 = vunpack.c.l.b16 %v1833
        %v1898 = vunpack.c.l.b16 %v1834
        %v1899 = vunpack.c.l.b16 %v1835
        %v1900 = vunpack.c.l.b16 %v1836
        %v1901 = vunpack.c.l.b16 %v1837
        %v1902 = vunpack.c.l.b16 %v1838
        %v1903 = vunpack.c.l.b16 %v1839
        %v1904 = vunpack.c.l.b16 %v1840
        %v1905 = vunpack.c.l.b16 %v1841
        %v1906 = vunpack.c.l.b16 %v1842
        %v1907 = vunpack.c.l.b16 %v1843
        %v1908 = vunpack.c.l.b16 %v1844
        %v1909 = vunpack.c.l.b16 %v1845
        %v1910 = vunpack.c.l.b16 %v1846
        %v1911 = vunpack.c.l.b16 %v1847
        %v1912 = vunpack.c.l.b16 %v1848
        %v1913 = vunpack.c.l.b16 %v1849
        %v1914 = vunpack.c.l.b16 %v1850
        %v1915 = vunpack.c.l.b16 %v1851
        %v1916 = vunpack.c.l.b16 %v1852
        %v1917 = vunpack.c.l.b16 %v1853
        %v1918 = vunpack.c.l.b16 %v1854
        %v1919 = vunpack.c.l.b16 %v1855
        %v1920 = vunpack.c.l.b16 %v1856
        %v1921 = vunpack.c.l.b16 %v1857
        %v1922 = vunpack.c.l.b16 %v1858
        %v1923 = vpack.c.b16 %v1892, %v1891
        %v1924 = vpack.c.b16 %v1894, %v1893
        %v1925 = vpack.c.b16 %v1896, %v1895
        %v1926 = vpack.c.b16 %v1898, %v1897
        %v1927 = vpack.c.b16 %v1900, %v1899
        %v1928 = vpack.c.b16 %v1902, %v1901
        %v1929 = vpack.c.b16 %v1904, %v1903
        %v1930 = vpack.c.b16 %v1906, %v1905
        %v1931 = vpack.c.b16 %v1908, %v1907
        %v1932 = vpack.c.b16 %v1910, %v1909
        %v1933 = vpack.c.b16 %v1912, %v1911
        %v1934 = vpack.c.b16 %v1914, %v1913
        %v1935 = vpack.c.b16 %v1916, %v1915
        %v1936 = vpack.c.b16 %v1918, %v1917
        %v1937 = vpack.c.b16 %v1920, %v1919
        %v1938 = vpack.c.b16 %v1922, %v1921
        %1955 = vst [vmem:[#allocation3] sm:$0xff] %v1923
        %1956 = vst [vmem:[#allocation3 + $0x48] sm:$0xff] %v1924
        %1957 = vst [vmem:[#allocation3 + $0x90] sm:$0xff] %v1925
        %1958 = vst [vmem:[#allocation3 + $0xd8] sm:$0xff] %v1926
        %1959 = vst [vmem:[#allocation3 + $0x120] sm:$0xff] %v1927
        %1960 = vst [vmem:[#allocation3 + $0x168] sm:$0xff] %v1928
        %1961 = vst [vmem:[#allocation3 + $0x1b0] sm:$0xff] %v1929
        %1962 = vst [vmem:[#allocation3 + $0x1f8] sm:$0xff] %v1930
        %1963 = vst [vmem:[#allocation3 + $0x240] sm:$0xff] %v1931
        %1964 = vst [vmem:[#allocation3 + $0x288] sm:$0xff] %v1932
        %1965 = vst [vmem:[#allocation3 + $0x2d0] sm:$0xff] %v1933
        %1966 = vst [vmem:[#allocation3 + $0x318] sm:$0xff] %v1934
        %1967 = vst [vmem:[#allocation3 + $0x360] sm:$0xff] %v1935
        %1968 = vst [vmem:[#allocation3 + $0x3a8] sm:$0xff] %v1936
        %1969 = vst [vmem:[#allocation3 + $0x3f0] sm:$0xff] %v1937
        %1970 = vst [vmem:[#allocation3 + $0x438] sm:$0xff] %v1938
        %v1971 = vld [vmem:[#allocation2] sm:$0xf]
        %v1972 = vld [vmem:[#allocation2 + $0x4] sm:$0xf]
        %v1973 = vld [vmem:[#allocation2 + $0x8] sm:$0x1]
        %v1974 = vld [vmem:[#allocation2 + $0xc] sm:$0xf]
        %v1975 = vld [vmem:[#allocation2 + $0x10] sm:$0xf]
        %v1976 = vld [vmem:[#allocation2 + $0x14] sm:$0x1]
        %v1977 = vld [vmem:[#allocation2 + $0x18] sm:$0xf]
        %v1978 = vld [vmem:[#allocation2 + $0x1c] sm:$0xf]
        %v1979 = vld [vmem:[#allocation2 + $0x20] sm:$0x1]
        %v1980 = vld [vmem:[#allocation2 + $0x24] sm:$0xf]
        %v1981 = vld [vmem:[#allocation2 + $0x28] sm:$0xf]
        %v1982 = vld [vmem:[#allocation2 + $0x2c] sm:$0x1]
        %v1983 = vld [vmem:[#allocation2 + $0x30] sm:$0xf]
        %v1984 = vld [vmem:[#allocation2 + $0x34] sm:$0xf]
        %v1985 = vld [vmem:[#allocation2 + $0x38] sm:$0x1]
        %v1986 = vld [vmem:[#allocation2 + $0x3c] sm:$0xf]
        %v1987 = vld [vmem:[#allocation2 + $0x40] sm:$0xf]
        %v1988 = vld [vmem:[#allocation2 + $0x44] sm:$0x1]
        %v1989 = vld [vmem:[#allocation2 + $0x48] sm:$0xf]
        %v1990 = vld [vmem:[#allocation2 + $0x4c] sm:$0xf]
        %v1991 = vld [vmem:[#allocation2 + $0x50] sm:$0x1]
        %v1992 = vld [vmem:[#allocation2 + $0x54] sm:$0xf]
        %v1993 = vld [vmem:[#allocation2 + $0x58] sm:$0xf]
        %v1994 = vld [vmem:[#allocation2 + $0x5c] sm:$0x1]
        %v1995 = vld [vmem:[#allocation2 + $0x60] sm:$0xf]
        %v1996 = vld [vmem:[#allocation2 + $0x64] sm:$0xf]
        %v1997 = vld [vmem:[#allocation2 + $0x68] sm:$0x1]
        %v1998 = vld [vmem:[#allocation2 + $0x6c] sm:$0xf]
        %v1999 = vld [vmem:[#allocation2 + $0x70] sm:$0xf]
        %v2000 = vld [vmem:[#allocation2 + $0x74] sm:$0x1]
        %v2001 = vld [vmem:[#allocation2 + $0x78] sm:$0xf]
        %v2002 = vld [vmem:[#allocation2 + $0x7c] sm:$0xf]
        %v2003 = vld [vmem:[#allocation2 + $0x80] sm:$0x1]
        %v2004 = vld [vmem:[#allocation2 + $0x84] sm:$0xf]
        %v2005 = vld [vmem:[#allocation2 + $0x88] sm:$0xf]
        %v2006 = vld [vmem:[#allocation2 + $0x8c] sm:$0x1]
        %v2007 = vld [vmem:[#allocation2 + $0x90] sm:$0xf]
        %v2008 = vld [vmem:[#allocation2 + $0x94] sm:$0xf]
        %v2009 = vld [vmem:[#allocation2 + $0x98] sm:$0x1]
        %v2010 = vld [vmem:[#allocation2 + $0x9c] sm:$0xf]
        %v2011 = vld [vmem:[#allocation2 + $0xa0] sm:$0xf]
        %v2012 = vld [vmem:[#allocation2 + $0xa4] sm:$0x1]
        %v2013 = vld [vmem:[#allocation2 + $0xa8] sm:$0xf]
        %v2014 = vld [vmem:[#allocation2 + $0xac] sm:$0xf]
        %v2015 = vld [vmem:[#allocation2 + $0xb0] sm:$0x1]
        %v2016 = vld [vmem:[#allocation2 + $0xb4] sm:$0xf]
        %v2017 = vld [vmem:[#allocation2 + $0xb8] sm:$0xf]
        %v2018 = vld [vmem:[#allocation2 + $0xbc] sm:$0x1]
        %vm2019 = vsmask.f32 3328
        %vm2020 = vsmask.f32 7440
        %vm2021 = vmor %vm2019, %vm2020
        %v2023 = vshrl.u32 %v1971, 16
        %v2025 = vrot.slane %v2023, 4
        %v2026 = vshll.u32 %v1971, 16
        %v2028 = vrot.slane %v2026, 5
        %v2029 = vor.u32 %v2025, %v2028
        %v2030 = vrot.slane %v2029, 4
        %v2032 = vshll.u32 %v1972, 16
        %v2034 = vrot.slane %v2032, 5
        %v2035 = vsel %vm2021, %v2030, %v2034
        %v2036 = vshrl.u32 %v1972, 16
        %v2038 = vrot.slane %v2036, 4
        %v2039 = vor.u32 %v2038, %v2034
        %v2040 = vrot.slane %v2039, 4
        %v2042 = vshll.u32 %v1973, 16
        %v2044 = vrot.slane %v2042, 5
        %v2045 = vsel %vm2021, %v2040, %v2044
        %v2047 = vshrl.u32 %v1974, 16
        %v2049 = vrot.slane %v2047, 4
        %v2050 = vshll.u32 %v1974, 16
        %v2052 = vrot.slane %v2050, 5
        %v2053 = vor.u32 %v2049, %v2052
        %v2054 = vrot.slane %v2053, 4
        %v2056 = vshll.u32 %v1975, 16
        %v2058 = vrot.slane %v2056, 5
        %v2059 = vsel %vm2021, %v2054, %v2058
        %v2060 = vshrl.u32 %v1975, 16
        %v2062 = vrot.slane %v2060, 4
        %v2063 = vor.u32 %v2062, %v2058
        %v2064 = vrot.slane %v2063, 4
        %v2066 = vshll.u32 %v1976, 16
        %v2068 = vrot.slane %v2066, 5
        %v2069 = vsel %vm2021, %v2064, %v2068
        %v2071 = vshrl.u32 %v1977, 16
        %v2073 = vrot.slane %v2071, 4
        %v2074 = vshll.u32 %v1977, 16
        %v2076 = vrot.slane %v2074, 5
        %v2077 = vor.u32 %v2073, %v2076
        %v2078 = vrot.slane %v2077, 4
        %v2080 = vshll.u32 %v1978, 16
        %v2082 = vrot.slane %v2080, 5
        %v2083 = vsel %vm2021, %v2078, %v2082
        %v2084 = vshrl.u32 %v1978, 16
        %v2086 = vrot.slane %v2084, 4
        %v2087 = vor.u32 %v2086, %v2082
        %v2088 = vrot.slane %v2087, 4
        %v2090 = vshll.u32 %v1979, 16
        %v2092 = vrot.slane %v2090, 5
        %v2093 = vsel %vm2021, %v2088, %v2092
        %v2095 = vshrl.u32 %v1980, 16
        %v2097 = vrot.slane %v2095, 4
        %v2098 = vshll.u32 %v1980, 16
        %v2100 = vrot.slane %v2098, 5
        %v2101 = vor.u32 %v2097, %v2100
        %v2102 = vrot.slane %v2101, 4
        %v2104 = vshll.u32 %v1981, 16
        %v2106 = vrot.slane %v2104, 5
        %v2107 = vsel %vm2021, %v2102, %v2106
        %v2108 = vshrl.u32 %v1981, 16
        %v2110 = vrot.slane %v2108, 4
        %v2111 = vor.u32 %v2110, %v2106
        %v2112 = vrot.slane %v2111, 4
        %v2114 = vshll.u32 %v1982, 16
        %v2116 = vrot.slane %v2114, 5
        %v2117 = vsel %vm2021, %v2112, %v2116
        %v2119 = vshrl.u32 %v1983, 16
        %v2121 = vrot.slane %v2119, 4
        %v2122 = vshll.u32 %v1983, 16
        %v2124 = vrot.slane %v2122, 5
        %v2125 = vor.u32 %v2121, %v2124
        %v2126 = vrot.slane %v2125, 4
        %v2128 = vshll.u32 %v1984, 16
        %v2130 = vrot.slane %v2128, 5
        %v2131 = vsel %vm2021, %v2126, %v2130
        %v2132 = vshrl.u32 %v1984, 16
        %v2134 = vrot.slane %v2132, 4
        %v2135 = vor.u32 %v2134, %v2130
        %v2136 = vrot.slane %v2135, 4
        %v2138 = vshll.u32 %v1985, 16
        %v2140 = vrot.slane %v2138, 5
        %v2141 = vsel %vm2021, %v2136, %v2140
        %v2143 = vshrl.u32 %v1986, 16
        %v2145 = vrot.slane %v2143, 4
        %v2146 = vshll.u32 %v1986, 16
        %v2148 = vrot.slane %v2146, 5
        %v2149 = vor.u32 %v2145, %v2148
        %v2150 = vrot.slane %v2149, 4
        %v2152 = vshll.u32 %v1987, 16
        %v2154 = vrot.slane %v2152, 5
        %v2155 = vsel %vm2021, %v2150, %v2154
        %v2156 = vshrl.u32 %v1987, 16
        %v2158 = vrot.slane %v2156, 4
        %v2159 = vor.u32 %v2158, %v2154
        %v2160 = vrot.slane %v2159, 4
        %v2162 = vshll.u32 %v1988, 16
        %v2164 = vrot.slane %v2162, 5
        %v2165 = vsel %vm2021, %v2160, %v2164
        %v2167 = vshrl.u32 %v1989, 16
        %v2169 = vrot.slane %v2167, 4
        %v2170 = vshll.u32 %v1989, 16
        %v2172 = vrot.slane %v2170, 5
        %v2173 = vor.u32 %v2169, %v2172
        %v2174 = vrot.slane %v2173, 4
        %v2176 = vshll.u32 %v1990, 16
        %v2178 = vrot.slane %v2176, 5
        %v2179 = vsel %vm2021, %v2174, %v2178
        %v2180 = vshrl.u32 %v1990, 16
        %v2182 = vrot.slane %v2180, 4
        %v2183 = vor.u32 %v2182, %v2178
        %v2184 = vrot.slane %v2183, 4
        %v2186 = vshll.u32 %v1991, 16
        %v2188 = vrot.slane %v2186, 5
        %v2189 = vsel %vm2021, %v2184, %v2188
        %v2191 = vshrl.u32 %v1992, 16
        %v2193 = vrot.slane %v2191, 4
        %v2194 = vshll.u32 %v1992, 16
        %v2196 = vrot.slane %v2194, 5
        %v2197 = vor.u32 %v2193, %v2196
        %v2198 = vrot.slane %v2197, 4
        %v2200 = vshll.u32 %v1993, 16
        %v2202 = vrot.slane %v2200, 5
        %v2203 = vsel %vm2021, %v2198, %v2202
        %v2204 = vshrl.u32 %v1993, 16
        %v2206 = vrot.slane %v2204, 4
        %v2207 = vor.u32 %v2206, %v2202
        %v2208 = vrot.slane %v2207, 4
        %v2210 = vshll.u32 %v1994, 16
        %v2212 = vrot.slane %v2210, 5
        %v2213 = vsel %vm2021, %v2208, %v2212
        %v2215 = vshrl.u32 %v1995, 16
        %v2217 = vrot.slane %v2215, 4
        %v2218 = vshll.u32 %v1995, 16
        %v2220 = vrot.slane %v2218, 5
        %v2221 = vor.u32 %v2217, %v2220
        %v2222 = vrot.slane %v2221, 4
        %v2224 = vshll.u32 %v1996, 16
        %v2226 = vrot.slane %v2224, 5
        %v2227 = vsel %vm2021, %v2222, %v2226
        %v2228 = vshrl.u32 %v1996, 16
        %v2230 = vrot.slane %v2228, 4
        %v2231 = vor.u32 %v2230, %v2226
        %v2232 = vrot.slane %v2231, 4
        %v2234 = vshll.u32 %v1997, 16
        %v2236 = vrot.slane %v2234, 5
        %v2237 = vsel %vm2021, %v2232, %v2236
        %v2239 = vshrl.u32 %v1998, 16
        %v2241 = vrot.slane %v2239, 4
        %v2242 = vshll.u32 %v1998, 16
        %v2244 = vrot.slane %v2242, 5
        %v2245 = vor.u32 %v2241, %v2244
        %v2246 = vrot.slane %v2245, 4
        %v2248 = vshll.u32 %v1999, 16
        %v2250 = vrot.slane %v2248, 5
        %v2251 = vsel %vm2021, %v2246, %v2250
        %v2252 = vshrl.u32 %v1999, 16
        %v2254 = vrot.slane %v2252, 4
        %v2255 = vor.u32 %v2254, %v2250
        %v2256 = vrot.slane %v2255, 4
        %v2258 = vshll.u32 %v2000, 16
        %v2260 = vrot.slane %v2258, 5
        %v2261 = vsel %vm2021, %v2256, %v2260
        %v2263 = vshrl.u32 %v2001, 16
        %v2265 = vrot.slane %v2263, 4
        %v2266 = vshll.u32 %v2001, 16
        %v2268 = vrot.slane %v2266, 5
        %v2269 = vor.u32 %v2265, %v2268
        %v2270 = vrot.slane %v2269, 4
        %v2272 = vshll.u32 %v2002, 16
        %v2274 = vrot.slane %v2272, 5
        %v2275 = vsel %vm2021, %v2270, %v2274
        %v2276 = vshrl.u32 %v2002, 16
        %v2278 = vrot.slane %v2276, 4
        %v2279 = vor.u32 %v2278, %v2274
        %v2280 = vrot.slane %v2279, 4
        %v2282 = vshll.u32 %v2003, 16
        %v2284 = vrot.slane %v2282, 5
        %v2285 = vsel %vm2021, %v2280, %v2284
        %v2287 = vshrl.u32 %v2004, 16
        %v2289 = vrot.slane %v2287, 4
        %v2290 = vshll.u32 %v2004, 16
        %v2292 = vrot.slane %v2290, 5
        %v2293 = vor.u32 %v2289, %v2292
        %v2294 = vrot.slane %v2293, 4
        %v2296 = vshll.u32 %v2005, 16
        %v2298 = vrot.slane %v2296, 5
        %v2299 = vsel %vm2021, %v2294, %v2298
        %v2300 = vshrl.u32 %v2005, 16
        %v2302 = vrot.slane %v2300, 4
        %v2303 = vor.u32 %v2302, %v2298
        %v2304 = vrot.slane %v2303, 4
        %v2306 = vshll.u32 %v2006, 16
        %v2308 = vrot.slane %v2306, 5
        %v2309 = vsel %vm2021, %v2304, %v2308
        %v2311 = vshrl.u32 %v2007, 16
        %v2313 = vrot.slane %v2311, 4
        %v2314 = vshll.u32 %v2007, 16
        %v2316 = vrot.slane %v2314, 5
        %v2317 = vor.u32 %v2313, %v2316
        %v2318 = vrot.slane %v2317, 4
        %v2320 = vshll.u32 %v2008, 16
        %v2322 = vrot.slane %v2320, 5
        %v2323 = vsel %vm2021, %v2318, %v2322
        %v2324 = vshrl.u32 %v2008, 16
        %v2326 = vrot.slane %v2324, 4
        %v2327 = vor.u32 %v2326, %v2322
        %v2328 = vrot.slane %v2327, 4
        %v2330 = vshll.u32 %v2009, 16
        %v2332 = vrot.slane %v2330, 5
        %v2333 = vsel %vm2021, %v2328, %v2332
        %v2335 = vshrl.u32 %v2010, 16
        %v2337 = vrot.slane %v2335, 4
        %v2338 = vshll.u32 %v2010, 16
        %v2340 = vrot.slane %v2338, 5
        %v2341 = vor.u32 %v2337, %v2340
        %v2342 = vrot.slane %v2341, 4
        %v2344 = vshll.u32 %v2011, 16
        %v2346 = vrot.slane %v2344, 5
        %v2347 = vsel %vm2021, %v2342, %v2346
        %v2348 = vshrl.u32 %v2011, 16
        %v2350 = vrot.slane %v2348, 4
        %v2351 = vor.u32 %v2350, %v2346
        %v2352 = vrot.slane %v2351, 4
        %v2354 = vshll.u32 %v2012, 16
        %v2356 = vrot.slane %v2354, 5
        %v2357 = vsel %vm2021, %v2352, %v2356
        %v2359 = vshrl.u32 %v2013, 16
        %v2361 = vrot.slane %v2359, 4
        %v2362 = vshll.u32 %v2013, 16
        %v2364 = vrot.slane %v2362, 5
        %v2365 = vor.u32 %v2361, %v2364
        %v2366 = vrot.slane %v2365, 4
        %v2368 = vshll.u32 %v2014, 16
        %v2370 = vrot.slane %v2368, 5
        %v2371 = vsel %vm2021, %v2366, %v2370
        %v2372 = vshrl.u32 %v2014, 16
        %v2374 = vrot.slane %v2372, 4
        %v2375 = vor.u32 %v2374, %v2370
        %v2376 = vrot.slane %v2375, 4
        %v2378 = vshll.u32 %v2015, 16
        %v2380 = vrot.slane %v2378, 5
        %v2381 = vsel %vm2021, %v2376, %v2380
        %v2383 = vshrl.u32 %v2016, 16
        %v2385 = vrot.slane %v2383, 4
        %v2386 = vshll.u32 %v2016, 16
        %v2388 = vrot.slane %v2386, 5
        %v2389 = vor.u32 %v2385, %v2388
        %v2390 = vrot.slane %v2389, 4
        %v2392 = vshll.u32 %v2017, 16
        %v2394 = vrot.slane %v2392, 5
        %v2395 = vsel %vm2021, %v2390, %v2394
        %v2396 = vshrl.u32 %v2017, 16
        %v2398 = vrot.slane %v2396, 4
        %v2399 = vor.u32 %v2398, %v2394
        %v2400 = vrot.slane %v2399, 4
        %v2402 = vshll.u32 %v2018, 16
        %v2404 = vrot.slane %v2402, 5
        %v2405 = vsel %vm2021, %v2400, %v2404
        %v2406 = vunpack.c.l.b16 %v2035
        %v2407 = vunpack.c.l.b16 %v2045
        %v2408 = vunpack.c.l.b16 %v2059
        %v2409 = vunpack.c.l.b16 %v2069
        %v2410 = vunpack.c.l.b16 %v2083
        %v2411 = vunpack.c.l.b16 %v2093
        %v2412 = vunpack.c.l.b16 %v2107
        %v2413 = vunpack.c.l.b16 %v2117
        %v2414 = vunpack.c.l.b16 %v2131
        %v2415 = vunpack.c.l.b16 %v2141
        %v2416 = vunpack.c.l.b16 %v2155
        %v2417 = vunpack.c.l.b16 %v2165
        %v2418 = vunpack.c.l.b16 %v2179
        %v2419 = vunpack.c.l.b16 %v2189
        %v2420 = vunpack.c.l.b16 %v2203
        %v2421 = vunpack.c.l.b16 %v2213
        %v2422 = vunpack.c.l.b16 %v2227
        %v2423 = vunpack.c.l.b16 %v2237
        %v2424 = vunpack.c.l.b16 %v2251
        %v2425 = vunpack.c.l.b16 %v2261
        %v2426 = vunpack.c.l.b16 %v2275
        %v2427 = vunpack.c.l.b16 %v2285
        %v2428 = vunpack.c.l.b16 %v2299
        %v2429 = vunpack.c.l.b16 %v2309
        %v2430 = vunpack.c.l.b16 %v2323
        %v2431 = vunpack.c.l.b16 %v2333
        %v2432 = vunpack.c.l.b16 %v2347
        %v2433 = vunpack.c.l.b16 %v2357
        %v2434 = vunpack.c.l.b16 %v2371
        %v2435 = vunpack.c.l.b16 %v2381
        %v2436 = vunpack.c.l.b16 %v2395
        %v2437 = vunpack.c.l.b16 %v2405
        %v2438 = vpack.c.b16 %v2407, %v2406
        %v2439 = vpack.c.b16 %v2409, %v2408
        %v2440 = vpack.c.b16 %v2411, %v2410
        %v2441 = vpack.c.b16 %v2413, %v2412
        %v2442 = vpack.c.b16 %v2415, %v2414
        %v2443 = vpack.c.b16 %v2417, %v2416
        %v2444 = vpack.c.b16 %v2419, %v2418
        %v2445 = vpack.c.b16 %v2421, %v2420
        %v2446 = vpack.c.b16 %v2423, %v2422
        %v2447 = vpack.c.b16 %v2425, %v2424
        %v2448 = vpack.c.b16 %v2427, %v2426
        %v2449 = vpack.c.b16 %v2429, %v2428
        %v2450 = vpack.c.b16 %v2431, %v2430
        %v2451 = vpack.c.b16 %v2433, %v2432
        %v2452 = vpack.c.b16 %v2435, %v2434
        %v2453 = vpack.c.b16 %v2437, %v2436
        %2470 = vst [vmem:[#allocation3 + $0x8] sm:$0xff] %v2438
        %2471 = vst [vmem:[#allocation3 + $0x50] sm:$0xff] %v2439
        %2472 = vst [vmem:[#allocation3 + $0x98] sm:$0xff] %v2440
        %2473 = vst [vmem:[#allocation3 + $0xe0] sm:$0xff] %v2441
        %2474 = vst [vmem:[#allocation3 + $0x128] sm:$0xff] %v2442
        %2475 = vst [vmem:[#allocation3 + $0x170] sm:$0xff] %v2443
        %2476 = vst [vmem:[#allocation3 + $0x1b8] sm:$0xff] %v2444
        %2477 = vst [vmem:[#allocation3 + $0x200] sm:$0xff] %v2445
        %2478 = vst [vmem:[#allocation3 + $0x248] sm:$0xff] %v2446
        %2479 = vst [vmem:[#allocation3 + $0x290] sm:$0xff] %v2447
        %2480 = vst [vmem:[#allocation3 + $0x2d8] sm:$0xff] %v2448
        %2481 = vst [vmem:[#allocation3 + $0x320] sm:$0xff] %v2449
        %2482 = vst [vmem:[#allocation3 + $0x368] sm:$0xff] %v2450
        %2483 = vst [vmem:[#allocation3 + $0x3b0] sm:$0xff] %v2451
        %2484 = vst [vmem:[#allocation3 + $0x3f8] sm:$0xff] %v2452
        %2485 = vst [vmem:[#allocation3 + $0x440] sm:$0xff] %v2453
        %v2486 = vld [vmem:[#allocation2] sm:$0xe]
        %v2487 = vld [vmem:[#allocation2 + $0x4] sm:$0xf]
        %v2488 = vld [vmem:[#allocation2 + $0x8] sm:$0x1]
        %v2489 = vld [vmem:[#allocation2 + $0xc] sm:$0xe]
        %v2490 = vld [vmem:[#allocation2 + $0x10] sm:$0xf]
        %v2491 = vld [vmem:[#allocation2 + $0x14] sm:$0x1]
        %v2492 = vld [vmem:[#allocation2 + $0x18] sm:$0xe]
        %v2493 = vld [vmem:[#allocation2 + $0x1c] sm:$0xf]
        %v2494 = vld [vmem:[#allocation2 + $0x20] sm:$0x1]
        %v2495 = vld [vmem:[#allocation2 + $0x24] sm:$0xe]
        %v2496 = vld [vmem:[#allocation2 + $0x28] sm:$0xf]
        %v2497 = vld [vmem:[#allocation2 + $0x2c] sm:$0x1]
        %v2498 = vld [vmem:[#allocation2 + $0x30] sm:$0xe]
        %v2499 = vld [vmem:[#allocation2 + $0x34] sm:$0xf]
        %v2500 = vld [vmem:[#allocation2 + $0x38] sm:$0x1]
        %v2501 = vld [vmem:[#allocation2 + $0x3c] sm:$0xe]
        %v2502 = vld [vmem:[#allocation2 + $0x40] sm:$0xf]
        %v2503 = vld [vmem:[#allocation2 + $0x44] sm:$0x1]
        %v2504 = vld [vmem:[#allocation2 + $0x48] sm:$0xe]
        %v2505 = vld [vmem:[#allocation2 + $0x4c] sm:$0xf]
        %v2506 = vld [vmem:[#allocation2 + $0x50] sm:$0x1]
        %v2507 = vld [vmem:[#allocation2 + $0x54] sm:$0xe]
        %v2508 = vld [vmem:[#allocation2 + $0x58] sm:$0xf]
        %v2509 = vld [vmem:[#allocation2 + $0x5c] sm:$0x1]
        %v2510 = vld [vmem:[#allocation2 + $0x60] sm:$0xe]
        %v2511 = vld [vmem:[#allocation2 + $0x64] sm:$0xf]
        %v2512 = vld [vmem:[#allocation2 + $0x68] sm:$0x1]
        %v2513 = vld [vmem:[#allocation2 + $0x6c] sm:$0xe]
        %v2514 = vld [vmem:[#allocation2 + $0x70] sm:$0xf]
        %v2515 = vld [vmem:[#allocation2 + $0x74] sm:$0x1]
        %v2516 = vld [vmem:[#allocation2 + $0x78] sm:$0xe]
        %v2517 = vld [vmem:[#allocation2 + $0x7c] sm:$0xf]
        %v2518 = vld [vmem:[#allocation2 + $0x80] sm:$0x1]
        %v2519 = vld [vmem:[#allocation2 + $0x84] sm:$0xe]
        %v2520 = vld [vmem:[#allocation2 + $0x88] sm:$0xf]
        %v2521 = vld [vmem:[#allocation2 + $0x8c] sm:$0x1]
        %v2522 = vld [vmem:[#allocation2 + $0x90] sm:$0xe]
        %v2523 = vld [vmem:[#allocation2 + $0x94] sm:$0xf]
        %v2524 = vld [vmem:[#allocation2 + $0x98] sm:$0x1]
        %v2525 = vld [vmem:[#allocation2 + $0x9c] sm:$0xe]
        %v2526 = vld [vmem:[#allocation2 + $0xa0] sm:$0xf]
        %v2527 = vld [vmem:[#allocation2 + $0xa4] sm:$0x1]
        %v2528 = vld [vmem:[#allocation2 + $0xa8] sm:$0xe]
        %v2529 = vld [vmem:[#allocation2 + $0xac] sm:$0xf]
        %v2530 = vld [vmem:[#allocation2 + $0xb0] sm:$0x1]
        %v2531 = vld [vmem:[#allocation2 + $0xb4] sm:$0xe]
        %v2532 = vld [vmem:[#allocation2 + $0xb8] sm:$0xf]
        %v2533 = vld [vmem:[#allocation2 + $0xbc] sm:$0x1]
        %vm2582 = vcmask 1042432
        %vm2583 = vcmask 1046532
        %vm2584 = vmor %vm2582, %vm2583
        %v2585 = vrot.slane %v2486, 5
        %v2586 = vrot.slane %v2585, 4
        %v2587 = vrot.slane %v2487, 5
        %v2588 = vsel %vm2584, %v2586, %v2587
        %v2589 = vrot.slane %v2587, 4
        %v2590 = vrot.slane %v2488, 5
        %v2591 = vsel %vm2584, %v2589, %v2590
        %v2592 = vrot.slane %v2489, 5
        %v2593 = vrot.slane %v2592, 4
        %v2594 = vrot.slane %v2490, 5
        %v2595 = vsel %vm2584, %v2593, %v2594
        %v2596 = vrot.slane %v2594, 4
        %v2597 = vrot.slane %v2491, 5
        %v2598 = vsel %vm2584, %v2596, %v2597
        %v2599 = vrot.slane %v2492, 5
        %v2600 = vrot.slane %v2599, 4
        %v2601 = vrot.slane %v2493, 5
        %v2602 = vsel %vm2584, %v2600, %v2601
        %v2603 = vrot.slane %v2601, 4
        %v2604 = vrot.slane %v2494, 5
        %v2605 = vsel %vm2584, %v2603, %v2604
        %v2606 = vrot.slane %v2495, 5
        %v2607 = vrot.slane %v2606, 4
        %v2608 = vrot.slane %v2496, 5
        %v2609 = vsel %vm2584, %v2607, %v2608
        %v2610 = vrot.slane %v2608, 4
        %v2611 = vrot.slane %v2497, 5
        %v2612 = vsel %vm2584, %v2610, %v2611
        %v2613 = vrot.slane %v2498, 5
        %v2614 = vrot.slane %v2613, 4
        %v2615 = vrot.slane %v2499, 5
        %v2616 = vsel %vm2584, %v2614, %v2615
        %v2617 = vrot.slane %v2615, 4
        %v2618 = vrot.slane %v2500, 5
        %v2619 = vsel %vm2584, %v2617, %v2618
        %v2620 = vrot.slane %v2501, 5
        %v2621 = vrot.slane %v2620, 4
        %v2622 = vrot.slane %v2502, 5
        %v2623 = vsel %vm2584, %v2621, %v2622
        %v2624 = vrot.slane %v2622, 4
        %v2625 = vrot.slane %v2503, 5
        %v2626 = vsel %vm2584, %v2624, %v2625
        %v2627 = vrot.slane %v2504, 5
        %v2628 = vrot.slane %v2627, 4
        %v2629 = vrot.slane %v2505, 5
        %v2630 = vsel %vm2584, %v2628, %v2629
        %v2631 = vrot.slane %v2629, 4
        %v2632 = vrot.slane %v2506, 5
        %v2633 = vsel %vm2584, %v2631, %v2632
        %v2634 = vrot.slane %v2507, 5
        %v2635 = vrot.slane %v2634, 4
        %v2636 = vrot.slane %v2508, 5
        %v2637 = vsel %vm2584, %v2635, %v2636
        %v2638 = vrot.slane %v2636, 4
        %v2639 = vrot.slane %v2509, 5
        %v2640 = vsel %vm2584, %v2638, %v2639
        %v2641 = vrot.slane %v2510, 5
        %v2642 = vrot.slane %v2641, 4
        %v2643 = vrot.slane %v2511, 5
        %v2644 = vsel %vm2584, %v2642, %v2643
        %v2645 = vrot.slane %v2643, 4
        %v2646 = vrot.slane %v2512, 5
        %v2647 = vsel %vm2584, %v2645, %v2646
        %v2648 = vrot.slane %v2513, 5
        %v2649 = vrot.slane %v2648, 4
        %v2650 = vrot.slane %v2514, 5
        %v2651 = vsel %vm2584, %v2649, %v2650
        %v2652 = vrot.slane %v2650, 4
        %v2653 = vrot.slane %v2515, 5
        %v2654 = vsel %vm2584, %v2652, %v2653
        %v2655 = vrot.slane %v2516, 5
        %v2656 = vrot.slane %v2655, 4
        %v2657 = vrot.slane %v2517, 5
        %v2658 = vsel %vm2584, %v2656, %v2657
        %v2659 = vrot.slane %v2657, 4
        %v2660 = vrot.slane %v2518, 5
        %v2661 = vsel %vm2584, %v2659, %v2660
        %v2662 = vrot.slane %v2519, 5
        %v2663 = vrot.slane %v2662, 4
        %v2664 = vrot.slane %v2520, 5
        %v2665 = vsel %vm2584, %v2663, %v2664
        %v2666 = vrot.slane %v2664, 4
        %v2667 = vrot.slane %v2521, 5
        %v2668 = vsel %vm2584, %v2666, %v2667
        %v2669 = vrot.slane %v2522, 5
        %v2670 = vrot.slane %v2669, 4
        %v2671 = vrot.slane %v2523, 5
        %v2672 = vsel %vm2584, %v2670, %v2671
        %v2673 = vrot.slane %v2671, 4
        %v2674 = vrot.slane %v2524, 5
        %v2675 = vsel %vm2584, %v2673, %v2674
        %v2676 = vrot.slane %v2525, 5
        %v2677 = vrot.slane %v2676, 4
        %v2678 = vrot.slane %v2526, 5
        %v2679 = vsel %vm2584, %v2677, %v2678
        %v2680 = vrot.slane %v2678, 4
        %v2681 = vrot.slane %v2527, 5
        %v2682 = vsel %vm2584, %v2680, %v2681
        %v2683 = vrot.slane %v2528, 5
        %v2684 = vrot.slane %v2683, 4
        %v2685 = vrot.slane %v2529, 5
        %v2686 = vsel %vm2584, %v2684, %v2685
        %v2687 = vrot.slane %v2685, 4
        %v2688 = vrot.slane %v2530, 5
        %v2689 = vsel %vm2584, %v2687, %v2688
        %v2690 = vrot.slane %v2531, 5
        %v2691 = vrot.slane %v2690, 4
        %v2692 = vrot.slane %v2532, 5
        %v2693 = vsel %vm2584, %v2691, %v2692
        %v2694 = vrot.slane %v2692, 4
        %v2695 = vrot.slane %v2533, 5
        %v2696 = vsel %vm2584, %v2694, %v2695
        %v2697 = vunpack.c.l.b16 %v2588
        %v2698 = vunpack.c.l.b16 %v2591
        %v2699 = vunpack.c.l.b16 %v2595
        %v2700 = vunpack.c.l.b16 %v2598
        %v2701 = vunpack.c.l.b16 %v2602
        %v2702 = vunpack.c.l.b16 %v2605
        %v2703 = vunpack.c.l.b16 %v2609
        %v2704 = vunpack.c.l.b16 %v2612
        %v2705 = vunpack.c.l.b16 %v2616
        %v2706 = vunpack.c.l.b16 %v2619
        %v2707 = vunpack.c.l.b16 %v2623
        %v2708 = vunpack.c.l.b16 %v2626
        %v2709 = vunpack.c.l.b16 %v2630
        %v2710 = vunpack.c.l.b16 %v2633
        %v2711 = vunpack.c.l.b16 %v2637
        %v2712 = vunpack.c.l.b16 %v2640
        %v2713 = vunpack.c.l.b16 %v2644
        %v2714 = vunpack.c.l.b16 %v2647
        %v2715 = vunpack.c.l.b16 %v2651
        %v2716 = vunpack.c.l.b16 %v2654
        %v2717 = vunpack.c.l.b16 %v2658
        %v2718 = vunpack.c.l.b16 %v2661
        %v2719 = vunpack.c.l.b16 %v2665
        %v2720 = vunpack.c.l.b16 %v2668
        %v2721 = vunpack.c.l.b16 %v2672
        %v2722 = vunpack.c.l.b16 %v2675
        %v2723 = vunpack.c.l.b16 %v2679
        %v2724 = vunpack.c.l.b16 %v2682
        %v2725 = vunpack.c.l.b16 %v2686
        %v2726 = vunpack.c.l.b16 %v2689
        %v2727 = vunpack.c.l.b16 %v2693
        %v2728 = vunpack.c.l.b16 %v2696
        %v2729 = vpack.c.b16 %v2698, %v2697
        %v2730 = vpack.c.b16 %v2700, %v2699
        %v2731 = vpack.c.b16 %v2702, %v2701
        %v2732 = vpack.c.b16 %v2704, %v2703
        %v2733 = vpack.c.b16 %v2706, %v2705
        %v2734 = vpack.c.b16 %v2708, %v2707
        %v2735 = vpack.c.b16 %v2710, %v2709
        %v2736 = vpack.c.b16 %v2712, %v2711
        %v2737 = vpack.c.b16 %v2714, %v2713
        %v2738 = vpack.c.b16 %v2716, %v2715
        %v2739 = vpack.c.b16 %v2718, %v2717
        %v2740 = vpack.c.b16 %v2720, %v2719
        %v2741 = vpack.c.b16 %v2722, %v2721
        %v2742 = vpack.c.b16 %v2724, %v2723
        %v2743 = vpack.c.b16 %v2726, %v2725
        %v2744 = vpack.c.b16 %v2728, %v2727
        %2761 = vst [vmem:[#allocation3 + $0x10] sm:$0xff] %v2729
        %2762 = vst [vmem:[#allocation3 + $0x58] sm:$0xff] %v2730
        %2763 = vst [vmem:[#allocation3 + $0xa0] sm:$0xff] %v2731
        %2764 = vst [vmem:[#allocation3 + $0xe8] sm:$0xff] %v2732
        %2765 = vst [vmem:[#allocation3 + $0x130] sm:$0xff] %v2733
        %2766 = vst [vmem:[#allocation3 + $0x178] sm:$0xff] %v2734
        %2767 = vst [vmem:[#allocation3 + $0x1c0] sm:$0xff] %v2735
        %2768 = vst [vmem:[#allocation3 + $0x208] sm:$0xff] %v2736
        %2769 = vst [vmem:[#allocation3 + $0x250] sm:$0xff] %v2737
        %2770 = vst [vmem:[#allocation3 + $0x298] sm:$0xff] %v2738
        %2771 = vst [vmem:[#allocation3 + $0x2e0] sm:$0xff] %v2739
        %2772 = vst [vmem:[#allocation3 + $0x328] sm:$0xff] %v2740
        %2773 = vst [vmem:[#allocation3 + $0x370] sm:$0xff] %v2741
        %2774 = vst [vmem:[#allocation3 + $0x3b8] sm:$0xff] %v2742
        %2775 = vst [vmem:[#allocation3 + $0x400] sm:$0xff] %v2743
        %2776 = vst [vmem:[#allocation3 + $0x448] sm:$0xff] %v2744
        %v2777 = vld [vmem:[%s430] sm:$0xf]
        %v2778 = vld [vmem:[%s430 + $0x4] sm:$0xf]
        %v2779 = vld [vmem:[%s430 + $0xc] sm:$0xf]
        %v2780 = vld [vmem:[%s430 + $0x10] sm:$0xf]
        %v2781 = vld [vmem:[%s430 + $0x18] sm:$0xf]
        %v2782 = vld [vmem:[%s430 + $0x1c] sm:$0xf]
        %v2783 = vld [vmem:[%s430 + $0x24] sm:$0xf]
        %v2784 = vld [vmem:[%s430 + $0x28] sm:$0xf]
        %v2785 = vld [vmem:[%s430 + $0x30] sm:$0xf]
        %v2786 = vld [vmem:[%s430 + $0x34] sm:$0xf]
        %v2787 = vld [vmem:[%s430 + $0x3c] sm:$0xf]
        %v2788 = vld [vmem:[%s430 + $0x40] sm:$0xf]
        %v2789 = vld [vmem:[%s430 + $0x48] sm:$0xf]
        %v2790 = vld [vmem:[%s430 + $0x4c] sm:$0xf]
        %v2791 = vld [vmem:[%s430 + $0x54] sm:$0xf]
        %v2792 = vld [vmem:[%s430 + $0x58] sm:$0xf]
        %v2793 = vld [vmem:[%s430 + $0x60] sm:$0xf]
        %v2794 = vld [vmem:[%s430 + $0x64] sm:$0xf]
        %v2795 = vld [vmem:[%s430 + $0x6c] sm:$0xf]
        %v2796 = vld [vmem:[%s430 + $0x70] sm:$0xf]
        %v2797 = vld [vmem:[%s430 + $0x78] sm:$0xf]
        %v2798 = vld [vmem:[%s430 + $0x7c] sm:$0xf]
        %v2799 = vld [vmem:[%s430 + $0x84] sm:$0xf]
        %v2800 = vld [vmem:[%s430 + $0x88] sm:$0xf]
        %v2801 = vld [vmem:[%s430 + $0x90] sm:$0xf]
        %v2802 = vld [vmem:[%s430 + $0x94] sm:$0xf]
        %v2803 = vld [vmem:[%s430 + $0x9c] sm:$0xf]
        %v2804 = vld [vmem:[%s430 + $0xa0] sm:$0xf]
        %v2805 = vld [vmem:[%s430 + $0xa8] sm:$0xf]
        %v2806 = vld [vmem:[%s430 + $0xac] sm:$0xf]
        %v2807 = vld [vmem:[%s430 + $0xb4] sm:$0xf]
        %v2808 = vld [vmem:[%s430 + $0xb8] sm:$0xf]
        %v2841 = vunpack.c.l.b16 %v2777
        %v2842 = vunpack.c.l.b16 %v2778
        %v2843 = vunpack.c.l.b16 %v2779
        %v2844 = vunpack.c.l.b16 %v2780
        %v2845 = vunpack.c.l.b16 %v2781
        %v2846 = vunpack.c.l.b16 %v2782
        %v2847 = vunpack.c.l.b16 %v2783
        %v2848 = vunpack.c.l.b16 %v2784
        %v2849 = vunpack.c.l.b16 %v2785
        %v2850 = vunpack.c.l.b16 %v2786
        %v2851 = vunpack.c.l.b16 %v2787
        %v2852 = vunpack.c.l.b16 %v2788
        %v2853 = vunpack.c.l.b16 %v2789
        %v2854 = vunpack.c.l.b16 %v2790
        %v2855 = vunpack.c.l.b16 %v2791
        %v2856 = vunpack.c.l.b16 %v2792
        %v2857 = vunpack.c.l.b16 %v2793
        %v2858 = vunpack.c.l.b16 %v2794
        %v2859 = vunpack.c.l.b16 %v2795
        %v2860 = vunpack.c.l.b16 %v2796
        %v2861 = vunpack.c.l.b16 %v2797
        %v2862 = vunpack.c.l.b16 %v2798
        %v2863 = vunpack.c.l.b16 %v2799
        %v2864 = vunpack.c.l.b16 %v2800
        %v2865 = vunpack.c.l.b16 %v2801
        %v2866 = vunpack.c.l.b16 %v2802
        %v2867 = vunpack.c.l.b16 %v2803
        %v2868 = vunpack.c.l.b16 %v2804
        %v2869 = vunpack.c.l.b16 %v2805
        %v2870 = vunpack.c.l.b16 %v2806
        %v2871 = vunpack.c.l.b16 %v2807
        %v2872 = vunpack.c.l.b16 %v2808
        %v2873 = vpack.c.b16 %v2842, %v2841
        %v2874 = vpack.c.b16 %v2844, %v2843
        %v2875 = vpack.c.b16 %v2846, %v2845
        %v2876 = vpack.c.b16 %v2848, %v2847
        %v2877 = vpack.c.b16 %v2850, %v2849
        %v2878 = vpack.c.b16 %v2852, %v2851
        %v2879 = vpack.c.b16 %v2854, %v2853
        %v2880 = vpack.c.b16 %v2856, %v2855
        %v2881 = vpack.c.b16 %v2858, %v2857
        %v2882 = vpack.c.b16 %v2860, %v2859
        %v2883 = vpack.c.b16 %v2862, %v2861
        %v2884 = vpack.c.b16 %v2864, %v2863
        %v2885 = vpack.c.b16 %v2866, %v2865
        %v2886 = vpack.c.b16 %v2868, %v2867
        %v2887 = vpack.c.b16 %v2870, %v2869
        %v2888 = vpack.c.b16 %v2872, %v2871
        %2905 = vst [vmem:[#allocation3 + $0x18] sm:$0xff] %v2873
        %2906 = vst [vmem:[#allocation3 + $0x60] sm:$0xff] %v2874
        %2907 = vst [vmem:[#allocation3 + $0xa8] sm:$0xff] %v2875
        %2908 = vst [vmem:[#allocation3 + $0xf0] sm:$0xff] %v2876
        %2909 = vst [vmem:[#allocation3 + $0x138] sm:$0xff] %v2877
        %2910 = vst [vmem:[#allocation3 + $0x180] sm:$0xff] %v2878
        %2911 = vst [vmem:[#allocation3 + $0x1c8] sm:$0xff] %v2879
        %2912 = vst [vmem:[#allocation3 + $0x210] sm:$0xff] %v2880
        %2913 = vst [vmem:[#allocation3 + $0x258] sm:$0xff] %v2881
        %2914 = vst [vmem:[#allocation3 + $0x2a0] sm:$0xff] %v2882
        %2915 = vst [vmem:[#allocation3 + $0x2e8] sm:$0xff] %v2883
        %2916 = vst [vmem:[#allocation3 + $0x330] sm:$0xff] %v2884
        %2917 = vst [vmem:[#allocation3 + $0x378] sm:$0xff] %v2885
        %2918 = vst [vmem:[#allocation3 + $0x3c0] sm:$0xff] %v2886
        %2919 = vst [vmem:[#allocation3 + $0x408] sm:$0xff] %v2887
        %2920 = vst [vmem:[#allocation3 + $0x450] sm:$0xff] %v2888
        %v2921 = vld [vmem:[%s430] sm:$0xf]
        %v2922 = vld [vmem:[%s430 + $0x4] sm:$0xf]
        %v2923 = vld [vmem:[%s430 + $0x8] sm:$0x1]
        %v2924 = vld [vmem:[%s430 + $0xc] sm:$0xf]
        %v2925 = vld [vmem:[%s430 + $0x10] sm:$0xf]
        %v2926 = vld [vmem:[%s430 + $0x14] sm:$0x1]
        %v2927 = vld [vmem:[%s430 + $0x18] sm:$0xf]
        %v2928 = vld [vmem:[%s430 + $0x1c] sm:$0xf]
        %v2929 = vld [vmem:[%s430 + $0x20] sm:$0x1]
        %v2930 = vld [vmem:[%s430 + $0x24] sm:$0xf]
        %v2931 = vld [vmem:[%s430 + $0x28] sm:$0xf]
        %v2932 = vld [vmem:[%s430 + $0x2c] sm:$0x1]
        %v2933 = vld [vmem:[%s430 + $0x30] sm:$0xf]
        %v2934 = vld [vmem:[%s430 + $0x34] sm:$0xf]
        %v2935 = vld [vmem:[%s430 + $0x38] sm:$0x1]
        %v2936 = vld [vmem:[%s430 + $0x3c] sm:$0xf]
        %v2937 = vld [vmem:[%s430 + $0x40] sm:$0xf]
        %v2938 = vld [vmem:[%s430 + $0x44] sm:$0x1]
        %v2939 = vld [vmem:[%s430 + $0x48] sm:$0xf]
        %v2940 = vld [vmem:[%s430 + $0x4c] sm:$0xf]
        %v2941 = vld [vmem:[%s430 + $0x50] sm:$0x1]
        %v2942 = vld [vmem:[%s430 + $0x54] sm:$0xf]
        %v2943 = vld [vmem:[%s430 + $0x58] sm:$0xf]
        %v2944 = vld [vmem:[%s430 + $0x5c] sm:$0x1]
        %v2945 = vld [vmem:[%s430 + $0x60] sm:$0xf]
        %v2946 = vld [vmem:[%s430 + $0x64] sm:$0xf]
        %v2947 = vld [vmem:[%s430 + $0x68] sm:$0x1]
        %v2948 = vld [vmem:[%s430 + $0x6c] sm:$0xf]
        %v2949 = vld [vmem:[%s430 + $0x70] sm:$0xf]
        %v2950 = vld [vmem:[%s430 + $0x74] sm:$0x1]
        %v2951 = vld [vmem:[%s430 + $0x78] sm:$0xf]
        %v2952 = vld [vmem:[%s430 + $0x7c] sm:$0xf]
        %v2953 = vld [vmem:[%s430 + $0x80] sm:$0x1]
        %v2954 = vld [vmem:[%s430 + $0x84] sm:$0xf]
        %v2955 = vld [vmem:[%s430 + $0x88] sm:$0xf]
        %v2956 = vld [vmem:[%s430 + $0x8c] sm:$0x1]
        %v2957 = vld [vmem:[%s430 + $0x90] sm:$0xf]
        %v2958 = vld [vmem:[%s430 + $0x94] sm:$0xf]
        %v2959 = vld [vmem:[%s430 + $0x98] sm:$0x1]
        %v2960 = vld [vmem:[%s430 + $0x9c] sm:$0xf]
        %v2961 = vld [vmem:[%s430 + $0xa0] sm:$0xf]
        %v2962 = vld [vmem:[%s430 + $0xa4] sm:$0x1]
        %v2963 = vld [vmem:[%s430 + $0xa8] sm:$0xf]
        %v2964 = vld [vmem:[%s430 + $0xac] sm:$0xf]
        %v2965 = vld [vmem:[%s430 + $0xb0] sm:$0x1]
        %v2966 = vld [vmem:[%s430 + $0xb4] sm:$0xf]
        %v2967 = vld [vmem:[%s430 + $0xb8] sm:$0xf]
        %v2968 = vld [vmem:[%s430 + $0xbc] sm:$0x1]
        %v2970 = vshrl.u32 %v2921, 16
        %v2972 = vrot.slane %v2970, 4
        %v2973 = vshll.u32 %v2921, 16
        %v2975 = vrot.slane %v2973, 5
        %v2976 = vor.u32 %v2972, %v2975
        %v2977 = vrot.slane %v2976, 4
        %v2979 = vshll.u32 %v2922, 16
        %v2981 = vrot.slane %v2979, 5
        %v2982 = vsel %vm2021, %v2977, %v2981
        %v2983 = vshrl.u32 %v2922, 16
        %v2985 = vrot.slane %v2983, 4
        %v2986 = vor.u32 %v2985, %v2981
        %v2987 = vrot.slane %v2986, 4
        %v2989 = vshll.u32 %v2923, 16
        %v2991 = vrot.slane %v2989, 5
        %v2992 = vsel %vm2021, %v2987, %v2991
        %v2994 = vshrl.u32 %v2924, 16
        %v2996 = vrot.slane %v2994, 4
        %v2997 = vshll.u32 %v2924, 16
        %v2999 = vrot.slane %v2997, 5
        %v3000 = vor.u32 %v2996, %v2999
        %v3001 = vrot.slane %v3000, 4
        %v3003 = vshll.u32 %v2925, 16
        %v3005 = vrot.slane %v3003, 5
        %v3006 = vsel %vm2021, %v3001, %v3005
        %v3007 = vshrl.u32 %v2925, 16
        %v3009 = vrot.slane %v3007, 4
        %v3010 = vor.u32 %v3009, %v3005
        %v3011 = vrot.slane %v3010, 4
        %v3013 = vshll.u32 %v2926, 16
        %v3015 = vrot.slane %v3013, 5
        %v3016 = vsel %vm2021, %v3011, %v3015
        %v3018 = vshrl.u32 %v2927, 16
        %v3020 = vrot.slane %v3018, 4
        %v3021 = vshll.u32 %v2927, 16
        %v3023 = vrot.slane %v3021, 5
        %v3024 = vor.u32 %v3020, %v3023
        %v3025 = vrot.slane %v3024, 4
        %v3027 = vshll.u32 %v2928, 16
        %v3029 = vrot.slane %v3027, 5
        %v3030 = vsel %vm2021, %v3025, %v3029
        %v3031 = vshrl.u32 %v2928, 16
        %v3033 = vrot.slane %v3031, 4
        %v3034 = vor.u32 %v3033, %v3029
        %v3035 = vrot.slane %v3034, 4
        %v3037 = vshll.u32 %v2929, 16
        %v3039 = vrot.slane %v3037, 5
        %v3040 = vsel %vm2021, %v3035, %v3039
        %v3042 = vshrl.u32 %v2930, 16
        %v3044 = vrot.slane %v3042, 4
        %v3045 = vshll.u32 %v2930, 16
        %v3047 = vrot.slane %v3045, 5
        %v3048 = vor.u32 %v3044, %v3047
        %v3049 = vrot.slane %v3048, 4
        %v3051 = vshll.u32 %v2931, 16
        %v3053 = vrot.slane %v3051, 5
        %v3054 = vsel %vm2021, %v3049, %v3053
        %v3055 = vshrl.u32 %v2931, 16
        %v3057 = vrot.slane %v3055, 4
        %v3058 = vor.u32 %v3057, %v3053
        %v3059 = vrot.slane %v3058, 4
        %v3061 = vshll.u32 %v2932, 16
        %v3063 = vrot.slane %v3061, 5
        %v3064 = vsel %vm2021, %v3059, %v3063
        %v3066 = vshrl.u32 %v2933, 16
        %v3068 = vrot.slane %v3066, 4
        %v3069 = vshll.u32 %v2933, 16
        %v3071 = vrot.slane %v3069, 5
        %v3072 = vor.u32 %v3068, %v3071
        %v3073 = vrot.slane %v3072, 4
        %v3075 = vshll.u32 %v2934, 16
        %v3077 = vrot.slane %v3075, 5
        %v3078 = vsel %vm2021, %v3073, %v3077
        %v3079 = vshrl.u32 %v2934, 16
        %v3081 = vrot.slane %v3079, 4
        %v3082 = vor.u32 %v3081, %v3077
        %v3083 = vrot.slane %v3082, 4
        %v3085 = vshll.u32 %v2935, 16
        %v3087 = vrot.slane %v3085, 5
        %v3088 = vsel %vm2021, %v3083, %v3087
        %v3090 = vshrl.u32 %v2936, 16
        %v3092 = vrot.slane %v3090, 4
        %v3093 = vshll.u32 %v2936, 16
        %v3095 = vrot.slane %v3093, 5
        %v3096 = vor.u32 %v3092, %v3095
        %v3097 = vrot.slane %v3096, 4
        %v3099 = vshll.u32 %v2937, 16
        %v3101 = vrot.slane %v3099, 5
        %v3102 = vsel %vm2021, %v3097, %v3101
        %v3103 = vshrl.u32 %v2937, 16
        %v3105 = vrot.slane %v3103, 4
        %v3106 = vor.u32 %v3105, %v3101
        %v3107 = vrot.slane %v3106, 4
        %v3109 = vshll.u32 %v2938, 16
        %v3111 = vrot.slane %v3109, 5
        %v3112 = vsel %vm2021, %v3107, %v3111
        %v3114 = vshrl.u32 %v2939, 16
        %v3116 = vrot.slane %v3114, 4
        %v3117 = vshll.u32 %v2939, 16
        %v3119 = vrot.slane %v3117, 5
        %v3120 = vor.u32 %v3116, %v3119
        %v3121 = vrot.slane %v3120, 4
        %v3123 = vshll.u32 %v2940, 16
        %v3125 = vrot.slane %v3123, 5
        %v3126 = vsel %vm2021, %v3121, %v3125
        %v3127 = vshrl.u32 %v2940, 16
        %v3129 = vrot.slane %v3127, 4
        %v3130 = vor.u32 %v3129, %v3125
        %v3131 = vrot.slane %v3130, 4
        %v3133 = vshll.u32 %v2941, 16
        %v3135 = vrot.slane %v3133, 5
        %v3136 = vsel %vm2021, %v3131, %v3135
        %v3138 = vshrl.u32 %v2942, 16
        %v3140 = vrot.slane %v3138, 4
        %v3141 = vshll.u32 %v2942, 16
        %v3143 = vrot.slane %v3141, 5
        %v3144 = vor.u32 %v3140, %v3143
        %v3145 = vrot.slane %v3144, 4
        %v3147 = vshll.u32 %v2943, 16
        %v3149 = vrot.slane %v3147, 5
        %v3150 = vsel %vm2021, %v3145, %v3149
        %v3151 = vshrl.u32 %v2943, 16
        %v3153 = vrot.slane %v3151, 4
        %v3154 = vor.u32 %v3153, %v3149
        %v3155 = vrot.slane %v3154, 4
        %v3157 = vshll.u32 %v2944, 16
        %v3159 = vrot.slane %v3157, 5
        %v3160 = vsel %vm2021, %v3155, %v3159
        %v3162 = vshrl.u32 %v2945, 16
        %v3164 = vrot.slane %v3162, 4
        %v3165 = vshll.u32 %v2945, 16
        %v3167 = vrot.slane %v3165, 5
        %v3168 = vor.u32 %v3164, %v3167
        %v3169 = vrot.slane %v3168, 4
        %v3171 = vshll.u32 %v2946, 16
        %v3173 = vrot.slane %v3171, 5
        %v3174 = vsel %vm2021, %v3169, %v3173
        %v3175 = vshrl.u32 %v2946, 16
        %v3177 = vrot.slane %v3175, 4
        %v3178 = vor.u32 %v3177, %v3173
        %v3179 = vrot.slane %v3178, 4
        %v3181 = vshll.u32 %v2947, 16
        %v3183 = vrot.slane %v3181, 5
        %v3184 = vsel %vm2021, %v3179, %v3183
        %v3186 = vshrl.u32 %v2948, 16
        %v3188 = vrot.slane %v3186, 4
        %v3189 = vshll.u32 %v2948, 16
        %v3191 = vrot.slane %v3189, 5
        %v3192 = vor.u32 %v3188, %v3191
        %v3193 = vrot.slane %v3192, 4
        %v3195 = vshll.u32 %v2949, 16
        %v3197 = vrot.slane %v3195, 5
        %v3198 = vsel %vm2021, %v3193, %v3197
        %v3199 = vshrl.u32 %v2949, 16
        %v3201 = vrot.slane %v3199, 4
        %v3202 = vor.u32 %v3201, %v3197
        %v3203 = vrot.slane %v3202, 4
        %v3205 = vshll.u32 %v2950, 16
        %v3207 = vrot.slane %v3205, 5
        %v3208 = vsel %vm2021, %v3203, %v3207
        %v3210 = vshrl.u32 %v2951, 16
        %v3212 = vrot.slane %v3210, 4
        %v3213 = vshll.u32 %v2951, 16
        %v3215 = vrot.slane %v3213, 5
        %v3216 = vor.u32 %v3212, %v3215
        %v3217 = vrot.slane %v3216, 4
        %v3219 = vshll.u32 %v2952, 16
        %v3221 = vrot.slane %v3219, 5
        %v3222 = vsel %vm2021, %v3217, %v3221
        %v3223 = vshrl.u32 %v2952, 16
        %v3225 = vrot.slane %v3223, 4
        %v3226 = vor.u32 %v3225, %v3221
        %v3227 = vrot.slane %v3226, 4
        %v3229 = vshll.u32 %v2953, 16
        %v3231 = vrot.slane %v3229, 5
        %v3232 = vsel %vm2021, %v3227, %v3231
        %v3234 = vshrl.u32 %v2954, 16
        %v3236 = vrot.slane %v3234, 4
        %v3237 = vshll.u32 %v2954, 16
        %v3239 = vrot.slane %v3237, 5
        %v3240 = vor.u32 %v3236, %v3239
        %v3241 = vrot.slane %v3240, 4
        %v3243 = vshll.u32 %v2955, 16
        %v3245 = vrot.slane %v3243, 5
        %v3246 = vsel %vm2021, %v3241, %v3245
        %v3247 = vshrl.u32 %v2955, 16
        %v3249 = vrot.slane %v3247, 4
        %v3250 = vor.u32 %v3249, %v3245
        %v3251 = vrot.slane %v3250, 4
        %v3253 = vshll.u32 %v2956, 16
        %v3255 = vrot.slane %v3253, 5
        %v3256 = vsel %vm2021, %v3251, %v3255
        %v3258 = vshrl.u32 %v2957, 16
        %v3260 = vrot.slane %v3258, 4
        %v3261 = vshll.u32 %v2957, 16
        %v3263 = vrot.slane %v3261, 5
        %v3264 = vor.u32 %v3260, %v3263
        %v3265 = vrot.slane %v3264, 4
        %v3267 = vshll.u32 %v2958, 16
        %v3269 = vrot.slane %v3267, 5
        %v3270 = vsel %vm2021, %v3265, %v3269
        %v3271 = vshrl.u32 %v2958, 16
        %v3273 = vrot.slane %v3271, 4
        %v3274 = vor.u32 %v3273, %v3269
        %v3275 = vrot.slane %v3274, 4
        %v3277 = vshll.u32 %v2959, 16
        %v3279 = vrot.slane %v3277, 5
        %v3280 = vsel %vm2021, %v3275, %v3279
        %v3282 = vshrl.u32 %v2960, 16
        %v3284 = vrot.slane %v3282, 4
        %v3285 = vshll.u32 %v2960, 16
        %v3287 = vrot.slane %v3285, 5
        %v3288 = vor.u32 %v3284, %v3287
        %v3289 = vrot.slane %v3288, 4
        %v3291 = vshll.u32 %v2961, 16
        %v3293 = vrot.slane %v3291, 5
        %v3294 = vsel %vm2021, %v3289, %v3293
        %v3295 = vshrl.u32 %v2961, 16
        %v3297 = vrot.slane %v3295, 4
        %v3298 = vor.u32 %v3297, %v3293
        %v3299 = vrot.slane %v3298, 4
        %v3301 = vshll.u32 %v2962, 16
        %v3303 = vrot.slane %v3301, 5
        %v3304 = vsel %vm2021, %v3299, %v3303
        %v3306 = vshrl.u32 %v2963, 16
        %v3308 = vrot.slane %v3306, 4
        %v3309 = vshll.u32 %v2963, 16
        %v3311 = vrot.slane %v3309, 5
        %v3312 = vor.u32 %v3308, %v3311
        %v3313 = vrot.slane %v3312, 4
        %v3315 = vshll.u32 %v2964, 16
        %v3317 = vrot.slane %v3315, 5
        %v3318 = vsel %vm2021, %v3313, %v3317
        %v3319 = vshrl.u32 %v2964, 16
        %v3321 = vrot.slane %v3319, 4
        %v3322 = vor.u32 %v3321, %v3317
        %v3323 = vrot.slane %v3322, 4
        %v3325 = vshll.u32 %v2965, 16
        %v3327 = vrot.slane %v3325, 5
        %v3328 = vsel %vm2021, %v3323, %v3327
        %v3330 = vshrl.u32 %v2966, 16
        %v3332 = vrot.slane %v3330, 4
        %v3333 = vshll.u32 %v2966, 16
        %v3335 = vrot.slane %v3333, 5
        %v3336 = vor.u32 %v3332, %v3335
        %v3337 = vrot.slane %v3336, 4
        %v3339 = vshll.u32 %v2967, 16
        %v3341 = vrot.slane %v3339, 5
        %v3342 = vsel %vm2021, %v3337, %v3341
        %v3343 = vshrl.u32 %v2967, 16
        %v3345 = vrot.slane %v3343, 4
        %v3346 = vor.u32 %v3345, %v3341
        %v3347 = vrot.slane %v3346, 4
        %v3349 = vshll.u32 %v2968, 16
        %v3351 = vrot.slane %v3349, 5
        %v3352 = vsel %vm2021, %v3347, %v3351
        %v3353 = vunpack.c.l.b16 %v2982
        %v3354 = vunpack.c.l.b16 %v2992
        %v3355 = vunpack.c.l.b16 %v3006
        %v3356 = vunpack.c.l.b16 %v3016
        %v3357 = vunpack.c.l.b16 %v3030
        %v3358 = vunpack.c.l.b16 %v3040
        %v3359 = vunpack.c.l.b16 %v3054
        %v3360 = vunpack.c.l.b16 %v3064
        %v3361 = vunpack.c.l.b16 %v3078
        %v3362 = vunpack.c.l.b16 %v3088
        %v3363 = vunpack.c.l.b16 %v3102
        %v3364 = vunpack.c.l.b16 %v3112
        %v3365 = vunpack.c.l.b16 %v3126
        %v3366 = vunpack.c.l.b16 %v3136
        %v3367 = vunpack.c.l.b16 %v3150
        %v3368 = vunpack.c.l.b16 %v3160
        %v3369 = vunpack.c.l.b16 %v3174
        %v3370 = vunpack.c.l.b16 %v3184
        %v3371 = vunpack.c.l.b16 %v3198
        %v3372 = vunpack.c.l.b16 %v3208
        %v3373 = vunpack.c.l.b16 %v3222
        %v3374 = vunpack.c.l.b16 %v3232
        %v3375 = vunpack.c.l.b16 %v3246
        %v3376 = vunpack.c.l.b16 %v3256
        %v3377 = vunpack.c.l.b16 %v3270
        %v3378 = vunpack.c.l.b16 %v3280
        %v3379 = vunpack.c.l.b16 %v3294
        %v3380 = vunpack.c.l.b16 %v3304
        %v3381 = vunpack.c.l.b16 %v3318
        %v3382 = vunpack.c.l.b16 %v3328
        %v3383 = vunpack.c.l.b16 %v3342
        %v3384 = vunpack.c.l.b16 %v3352
        %v3385 = vpack.c.b16 %v3354, %v3353
        %v3386 = vpack.c.b16 %v3356, %v3355
        %v3387 = vpack.c.b16 %v3358, %v3357
        %v3388 = vpack.c.b16 %v3360, %v3359
        %v3389 = vpack.c.b16 %v3362, %v3361
        %v3390 = vpack.c.b16 %v3364, %v3363
        %v3391 = vpack.c.b16 %v3366, %v3365
        %v3392 = vpack.c.b16 %v3368, %v3367
        %v3393 = vpack.c.b16 %v3370, %v3369
        %v3394 = vpack.c.b16 %v3372, %v3371
        %v3395 = vpack.c.b16 %v3374, %v3373
        %v3396 = vpack.c.b16 %v3376, %v3375
        %v3397 = vpack.c.b16 %v3378, %v3377
        %v3398 = vpack.c.b16 %v3380, %v3379
        %v3399 = vpack.c.b16 %v3382, %v3381
        %v3400 = vpack.c.b16 %v3384, %v3383
        %3417 = vst [vmem:[#allocation3 + $0x20] sm:$0xff] %v3385
        %3418 = vst [vmem:[#allocation3 + $0x68] sm:$0xff] %v3386
        %3419 = vst [vmem:[#allocation3 + $0xb0] sm:$0xff] %v3387
        %3420 = vst [vmem:[#allocation3 + $0xf8] sm:$0xff] %v3388
        %3421 = vst [vmem:[#allocation3 + $0x140] sm:$0xff] %v3389
        %3422 = vst [vmem:[#allocation3 + $0x188] sm:$0xff] %v3390
        %3423 = vst [vmem:[#allocation3 + $0x1d0] sm:$0xff] %v3391
        %3424 = vst [vmem:[#allocation3 + $0x218] sm:$0xff] %v3392
        %3425 = vst [vmem:[#allocation3 + $0x260] sm:$0xff] %v3393
        %3426 = vst [vmem:[#allocation3 + $0x2a8] sm:$0xff] %v3394
        %3427 = vst [vmem:[#allocation3 + $0x2f0] sm:$0xff] %v3395
        %3428 = vst [vmem:[#allocation3 + $0x338] sm:$0xff] %v3396
        %3429 = vst [vmem:[#allocation3 + $0x380] sm:$0xff] %v3397
        %3430 = vst [vmem:[#allocation3 + $0x3c8] sm:$0xff] %v3398
        %3431 = vst [vmem:[#allocation3 + $0x410] sm:$0xff] %v3399
        %3432 = vst [vmem:[#allocation3 + $0x458] sm:$0xff] %v3400
        %v3433 = vld [vmem:[%s430] sm:$0xe]
        %v3434 = vld [vmem:[%s430 + $0x4] sm:$0xf]
        %v3435 = vld [vmem:[%s430 + $0x8] sm:$0x1]
        %v3436 = vld [vmem:[%s430 + $0xc] sm:$0xe]
        %v3437 = vld [vmem:[%s430 + $0x10] sm:$0xf]
        %v3438 = vld [vmem:[%s430 + $0x14] sm:$0x1]
        %v3439 = vld [vmem:[%s430 + $0x18] sm:$0xe]
        %v3440 = vld [vmem:[%s430 + $0x1c] sm:$0xf]
        %v3441 = vld [vmem:[%s430 + $0x20] sm:$0x1]
        %v3442 = vld [vmem:[%s430 + $0x24] sm:$0xe]
        %v3443 = vld [vmem:[%s430 + $0x28] sm:$0xf]
        %v3444 = vld [vmem:[%s430 + $0x2c] sm:$0x1]
        %v3445 = vld [vmem:[%s430 + $0x30] sm:$0xe]
        %v3446 = vld [vmem:[%s430 + $0x34] sm:$0xf]
        %v3447 = vld [vmem:[%s430 + $0x38] sm:$0x1]
        %v3448 = vld [vmem:[%s430 + $0x3c] sm:$0xe]
        %v3449 = vld [vmem:[%s430 + $0x40] sm:$0xf]
        %v3450 = vld [vmem:[%s430 + $0x44] sm:$0x1]
        %v3451 = vld [vmem:[%s430 + $0x48] sm:$0xe]
        %v3452 = vld [vmem:[%s430 + $0x4c] sm:$0xf]
        %v3453 = vld [vmem:[%s430 + $0x50] sm:$0x1]
        %v3454 = vld [vmem:[%s430 + $0x54] sm:$0xe]
        %v3455 = vld [vmem:[%s430 + $0x58] sm:$0xf]
        %v3456 = vld [vmem:[%s430 + $0x5c] sm:$0x1]
        %v3457 = vld [vmem:[%s430 + $0x60] sm:$0xe]
        %v3458 = vld [vmem:[%s430 + $0x64] sm:$0xf]
        %v3459 = vld [vmem:[%s430 + $0x68] sm:$0x1]
        %v3460 = vld [vmem:[%s430 + $0x6c] sm:$0xe]
        %v3461 = vld [vmem:[%s430 + $0x70] sm:$0xf]
        %v3462 = vld [vmem:[%s430 + $0x74] sm:$0x1]
        %v3463 = vld [vmem:[%s430 + $0x78] sm:$0xe]
        %v3464 = vld [vmem:[%s430 + $0x7c] sm:$0xf]
        %v3465 = vld [vmem:[%s430 + $0x80] sm:$0x1]
        %v3466 = vld [vmem:[%s430 + $0x84] sm:$0xe]
        %v3467 = vld [vmem:[%s430 + $0x88] sm:$0xf]
        %v3468 = vld [vmem:[%s430 + $0x8c] sm:$0x1]
        %v3469 = vld [vmem:[%s430 + $0x90] sm:$0xe]
        %v3470 = vld [vmem:[%s430 + $0x94] sm:$0xf]
        %v3471 = vld [vmem:[%s430 + $0x98] sm:$0x1]
        %v3472 = vld [vmem:[%s430 + $0x9c] sm:$0xe]
        %v3473 = vld [vmem:[%s430 + $0xa0] sm:$0xf]
        %v3474 = vld [vmem:[%s430 + $0xa4] sm:$0x1]
        %v3475 = vld [vmem:[%s430 + $0xa8] sm:$0xe]
        %v3476 = vld [vmem:[%s430 + $0xac] sm:$0xf]
        %v3477 = vld [vmem:[%s430 + $0xb0] sm:$0x1]
        %v3478 = vld [vmem:[%s430 + $0xb4] sm:$0xe]
        %v3479 = vld [vmem:[%s430 + $0xb8] sm:$0xf]
        %v3480 = vld [vmem:[%s430 + $0xbc] sm:$0x1]
        %v3529 = vrot.slane %v3433, 5
        %v3530 = vrot.slane %v3529, 4
        %v3531 = vrot.slane %v3434, 5
        %v3532 = vsel %vm2584, %v3530, %v3531
        %v3533 = vrot.slane %v3531, 4
        %v3534 = vrot.slane %v3435, 5
        %v3535 = vsel %vm2584, %v3533, %v3534
        %v3536 = vrot.slane %v3436, 5
        %v3537 = vrot.slane %v3536, 4
        %v3538 = vrot.slane %v3437, 5
        %v3539 = vsel %vm2584, %v3537, %v3538
        %v3540 = vrot.slane %v3538, 4
        %v3541 = vrot.slane %v3438, 5
        %v3542 = vsel %vm2584, %v3540, %v3541
        %v3543 = vrot.slane %v3439, 5
        %v3544 = vrot.slane %v3543, 4
        %v3545 = vrot.slane %v3440, 5
        %v3546 = vsel %vm2584, %v3544, %v3545
        %v3547 = vrot.slane %v3545, 4
        %v3548 = vrot.slane %v3441, 5
        %v3549 = vsel %vm2584, %v3547, %v3548
        %v3550 = vrot.slane %v3442, 5
        %v3551 = vrot.slane %v3550, 4
        %v3552 = vrot.slane %v3443, 5
        %v3553 = vsel %vm2584, %v3551, %v3552
        %v3554 = vrot.slane %v3552, 4
        %v3555 = vrot.slane %v3444, 5
        %v3556 = vsel %vm2584, %v3554, %v3555
        %v3557 = vrot.slane %v3445, 5
        %v3558 = vrot.slane %v3557, 4
        %v3559 = vrot.slane %v3446, 5
        %v3560 = vsel %vm2584, %v3558, %v3559
        %v3561 = vrot.slane %v3559, 4
        %v3562 = vrot.slane %v3447, 5
        %v3563 = vsel %vm2584, %v3561, %v3562
        %v3564 = vrot.slane %v3448, 5
        %v3565 = vrot.slane %v3564, 4
        %v3566 = vrot.slane %v3449, 5
        %v3567 = vsel %vm2584, %v3565, %v3566
        %v3568 = vrot.slane %v3566, 4
        %v3569 = vrot.slane %v3450, 5
        %v3570 = vsel %vm2584, %v3568, %v3569
        %v3571 = vrot.slane %v3451, 5
        %v3572 = vrot.slane %v3571, 4
        %v3573 = vrot.slane %v3452, 5
        %v3574 = vsel %vm2584, %v3572, %v3573
        %v3575 = vrot.slane %v3573, 4
        %v3576 = vrot.slane %v3453, 5
        %v3577 = vsel %vm2584, %v3575, %v3576
        %v3578 = vrot.slane %v3454, 5
        %v3579 = vrot.slane %v3578, 4
        %v3580 = vrot.slane %v3455, 5
        %v3581 = vsel %vm2584, %v3579, %v3580
        %v3582 = vrot.slane %v3580, 4
        %v3583 = vrot.slane %v3456, 5
        %v3584 = vsel %vm2584, %v3582, %v3583
        %v3585 = vrot.slane %v3457, 5
        %v3586 = vrot.slane %v3585, 4
        %v3587 = vrot.slane %v3458, 5
        %v3588 = vsel %vm2584, %v3586, %v3587
        %v3589 = vrot.slane %v3587, 4
        %v3590 = vrot.slane %v3459, 5
        %v3591 = vsel %vm2584, %v3589, %v3590
        %v3592 = vrot.slane %v3460, 5
        %v3593 = vrot.slane %v3592, 4
        %v3594 = vrot.slane %v3461, 5
        %v3595 = vsel %vm2584, %v3593, %v3594
        %v3596 = vrot.slane %v3594, 4
        %v3597 = vrot.slane %v3462, 5
        %v3598 = vsel %vm2584, %v3596, %v3597
        %v3599 = vrot.slane %v3463, 5
        %v3600 = vrot.slane %v3599, 4
        %v3601 = vrot.slane %v3464, 5
        %v3602 = vsel %vm2584, %v3600, %v3601
        %v3603 = vrot.slane %v3601, 4
        %v3604 = vrot.slane %v3465, 5
        %v3605 = vsel %vm2584, %v3603, %v3604
        %v3606 = vrot.slane %v3466, 5
        %v3607 = vrot.slane %v3606, 4
        %v3608 = vrot.slane %v3467, 5
        %v3609 = vsel %vm2584, %v3607, %v3608
        %v3610 = vrot.slane %v3608, 4
        %v3611 = vrot.slane %v3468, 5
        %v3612 = vsel %vm2584, %v3610, %v3611
        %v3613 = vrot.slane %v3469, 5
        %v3614 = vrot.slane %v3613, 4
        %v3615 = vrot.slane %v3470, 5
        %v3616 = vsel %vm2584, %v3614, %v3615
        %v3617 = vrot.slane %v3615, 4
        %v3618 = vrot.slane %v3471, 5
        %v3619 = vsel %vm2584, %v3617, %v3618
        %v3620 = vrot.slane %v3472, 5
        %v3621 = vrot.slane %v3620, 4
        %v3622 = vrot.slane %v3473, 5
        %v3623 = vsel %vm2584, %v3621, %v3622
        %v3624 = vrot.slane %v3622, 4
        %v3625 = vrot.slane %v3474, 5
        %v3626 = vsel %vm2584, %v3624, %v3625
        %v3627 = vrot.slane %v3475, 5
        %v3628 = vrot.slane %v3627, 4
        %v3629 = vrot.slane %v3476, 5
        %v3630 = vsel %vm2584, %v3628, %v3629
        %v3631 = vrot.slane %v3629, 4
        %v3632 = vrot.slane %v3477, 5
        %v3633 = vsel %vm2584, %v3631, %v3632
        %v3634 = vrot.slane %v3478, 5
        %v3635 = vrot.slane %v3634, 4
        %v3636 = vrot.slane %v3479, 5
        %v3637 = vsel %vm2584, %v3635, %v3636
        %v3638 = vrot.slane %v3636, 4
        %v3639 = vrot.slane %v3480, 5
        %v3640 = vsel %vm2584, %v3638, %v3639
        %v3641 = vunpack.c.l.b16 %v3532
        %v3642 = vunpack.c.l.b16 %v3535
        %v3643 = vunpack.c.l.b16 %v3539
        %v3644 = vunpack.c.l.b16 %v3542
        %v3645 = vunpack.c.l.b16 %v3546
        %v3646 = vunpack.c.l.b16 %v3549
        %v3647 = vunpack.c.l.b16 %v3553
        %v3648 = vunpack.c.l.b16 %v3556
        %v3649 = vunpack.c.l.b16 %v3560
        %v3650 = vunpack.c.l.b16 %v3563
        %v3651 = vunpack.c.l.b16 %v3567
        %v3652 = vunpack.c.l.b16 %v3570
        %v3653 = vunpack.c.l.b16 %v3574
        %v3654 = vunpack.c.l.b16 %v3577
        %v3655 = vunpack.c.l.b16 %v3581
        %v3656 = vunpack.c.l.b16 %v3584
        %v3657 = vunpack.c.l.b16 %v3588
        %v3658 = vunpack.c.l.b16 %v3591
        %v3659 = vunpack.c.l.b16 %v3595
        %v3660 = vunpack.c.l.b16 %v3598
        %v3661 = vunpack.c.l.b16 %v3602
        %v3662 = vunpack.c.l.b16 %v3605
        %v3663 = vunpack.c.l.b16 %v3609
        %v3664 = vunpack.c.l.b16 %v3612
        %v3665 = vunpack.c.l.b16 %v3616
        %v3666 = vunpack.c.l.b16 %v3619
        %v3667 = vunpack.c.l.b16 %v3623
        %v3668 = vunpack.c.l.b16 %v3626
        %v3669 = vunpack.c.l.b16 %v3630
        %v3670 = vunpack.c.l.b16 %v3633
        %v3671 = vunpack.c.l.b16 %v3637
        %v3672 = vunpack.c.l.b16 %v3640
        %v3673 = vpack.c.b16 %v3642, %v3641
        %v3674 = vpack.c.b16 %v3644, %v3643
        %v3675 = vpack.c.b16 %v3646, %v3645
        %v3676 = vpack.c.b16 %v3648, %v3647
        %v3677 = vpack.c.b16 %v3650, %v3649
        %v3678 = vpack.c.b16 %v3652, %v3651
        %v3679 = vpack.c.b16 %v3654, %v3653
        %v3680 = vpack.c.b16 %v3656, %v3655
        %v3681 = vpack.c.b16 %v3658, %v3657
        %v3682 = vpack.c.b16 %v3660, %v3659
        %v3683 = vpack.c.b16 %v3662, %v3661
        %v3684 = vpack.c.b16 %v3664, %v3663
        %v3685 = vpack.c.b16 %v3666, %v3665
        %v3686 = vpack.c.b16 %v3668, %v3667
        %v3687 = vpack.c.b16 %v3670, %v3669
        %v3688 = vpack.c.b16 %v3672, %v3671
        %3705 = vst [vmem:[#allocation3 + $0x28] sm:$0xff] %v3673
        %3706 = vst [vmem:[#allocation3 + $0x70] sm:$0xff] %v3674
        %3707 = vst [vmem:[#allocation3 + $0xb8] sm:$0xff] %v3675
        %3708 = vst [vmem:[#allocation3 + $0x100] sm:$0xff] %v3676
        %3709 = vst [vmem:[#allocation3 + $0x148] sm:$0xff] %v3677
        %3710 = vst [vmem:[#allocation3 + $0x190] sm:$0xff] %v3678
        %3711 = vst [vmem:[#allocation3 + $0x1d8] sm:$0xff] %v3679
        %3712 = vst [vmem:[#allocation3 + $0x220] sm:$0xff] %v3680
        %3713 = vst [vmem:[#allocation3 + $0x268] sm:$0xff] %v3681
        %3714 = vst [vmem:[#allocation3 + $0x2b0] sm:$0xff] %v3682
        %3715 = vst [vmem:[#allocation3 + $0x2f8] sm:$0xff] %v3683
        %3716 = vst [vmem:[#allocation3 + $0x340] sm:$0xff] %v3684
        %3717 = vst [vmem:[#allocation3 + $0x388] sm:$0xff] %v3685
        %3718 = vst [vmem:[#allocation3 + $0x3d0] sm:$0xff] %v3686
        %3719 = vst [vmem:[#allocation3 + $0x418] sm:$0xff] %v3687
        %3720 = vst [vmem:[#allocation3 + $0x460] sm:$0xff] %v3688
        %s3721 = scalar_lea.vmem [#allocation2], 24
        %v3722 = vld [vmem:[%s3721] sm:$0xf]
        %v3723 = vld [vmem:[%s3721 + $0x4] sm:$0xf]
        %v3724 = vld [vmem:[%s3721 + $0xc] sm:$0xf]
        %v3725 = vld [vmem:[%s3721 + $0x10] sm:$0xf]
        %v3726 = vld [vmem:[%s3721 + $0x18] sm:$0xf]
        %v3727 = vld [vmem:[%s3721 + $0x1c] sm:$0xf]
        %v3728 = vld [vmem:[%s3721 + $0x24] sm:$0xf]
        %v3729 = vld [vmem:[%s3721 + $0x28] sm:$0xf]
        %v3730 = vld [vmem:[%s3721 + $0x30] sm:$0xf]
        %v3731 = vld [vmem:[%s3721 + $0x34] sm:$0xf]
        %v3732 = vld [vmem:[%s3721 + $0x3c] sm:$0xf]
        %v3733 = vld [vmem:[%s3721 + $0x40] sm:$0xf]
        %v3734 = vld [vmem:[%s3721 + $0x48] sm:$0xf]
        %v3735 = vld [vmem:[%s3721 + $0x4c] sm:$0xf]
        %v3736 = vld [vmem:[%s3721 + $0x54] sm:$0xf]
        %v3737 = vld [vmem:[%s3721 + $0x58] sm:$0xf]
        %v3738 = vld [vmem:[%s3721 + $0x60] sm:$0xf]
        %v3739 = vld [vmem:[%s3721 + $0x64] sm:$0xf]
        %v3740 = vld [vmem:[%s3721 + $0x6c] sm:$0xf]
        %v3741 = vld [vmem:[%s3721 + $0x70] sm:$0xf]
        %v3742 = vld [vmem:[%s3721 + $0x78] sm:$0xf]
        %v3743 = vld [vmem:[%s3721 + $0x7c] sm:$0xf]
        %v3744 = vld [vmem:[%s3721 + $0x84] sm:$0xf]
        %v3745 = vld [vmem:[%s3721 + $0x88] sm:$0xf]
        %v3746 = vld [vmem:[%s3721 + $0x90] sm:$0xf]
        %v3747 = vld [vmem:[%s3721 + $0x94] sm:$0xf]
        %v3748 = vld [vmem:[%s3721 + $0x9c] sm:$0xf]
        %v3749 = vld [vmem:[%s3721 + $0xa0] sm:$0xf]
        %v3750 = vld [vmem:[%s3721 + $0xa8] sm:$0xf]
        %v3751 = vld [vmem:[%s3721 + $0xac] sm:$0xf]
        %v3752 = vld [vmem:[%s3721 + $0xb4] sm:$0xf]
        %v3753 = vld [vmem:[%s3721 + $0xb8] sm:$0xf]
        %v3786 = vunpack.c.l.b16 %v3722
        %v3787 = vunpack.c.l.b16 %v3723
        %v3788 = vunpack.c.l.b16 %v3724
        %v3789 = vunpack.c.l.b16 %v3725
        %v3790 = vunpack.c.l.b16 %v3726
        %v3791 = vunpack.c.l.b16 %v3727
        %v3792 = vunpack.c.l.b16 %v3728
        %v3793 = vunpack.c.l.b16 %v3729
        %v3794 = vunpack.c.l.b16 %v3730
        %v3795 = vunpack.c.l.b16 %v3731
        %v3796 = vunpack.c.l.b16 %v3732
        %v3797 = vunpack.c.l.b16 %v3733
        %v3798 = vunpack.c.l.b16 %v3734
        %v3799 = vunpack.c.l.b16 %v3735
        %v3800 = vunpack.c.l.b16 %v3736
        %v3801 = vunpack.c.l.b16 %v3737
        %v3802 = vunpack.c.l.b16 %v3738
        %v3803 = vunpack.c.l.b16 %v3739
        %v3804 = vunpack.c.l.b16 %v3740
        %v3805 = vunpack.c.l.b16 %v3741
        %v3806 = vunpack.c.l.b16 %v3742
        %v3807 = vunpack.c.l.b16 %v3743
        %v3808 = vunpack.c.l.b16 %v3744
        %v3809 = vunpack.c.l.b16 %v3745
        %v3810 = vunpack.c.l.b16 %v3746
        %v3811 = vunpack.c.l.b16 %v3747
        %v3812 = vunpack.c.l.b16 %v3748
        %v3813 = vunpack.c.l.b16 %v3749
        %v3814 = vunpack.c.l.b16 %v3750
        %v3815 = vunpack.c.l.b16 %v3751
        %v3816 = vunpack.c.l.b16 %v3752
        %v3817 = vunpack.c.l.b16 %v3753
        %v3818 = vpack.c.b16 %v3787, %v3786
        %v3819 = vpack.c.b16 %v3789, %v3788
        %v3820 = vpack.c.b16 %v3791, %v3790
        %v3821 = vpack.c.b16 %v3793, %v3792
        %v3822 = vpack.c.b16 %v3795, %v3794
        %v3823 = vpack.c.b16 %v3797, %v3796
        %v3824 = vpack.c.b16 %v3799, %v3798
        %v3825 = vpack.c.b16 %v3801, %v3800
        %v3826 = vpack.c.b16 %v3803, %v3802
        %v3827 = vpack.c.b16 %v3805, %v3804
        %v3828 = vpack.c.b16 %v3807, %v3806
        %v3829 = vpack.c.b16 %v3809, %v3808
        %v3830 = vpack.c.b16 %v3811, %v3810
        %v3831 = vpack.c.b16 %v3813, %v3812
        %v3832 = vpack.c.b16 %v3815, %v3814
        %v3833 = vpack.c.b16 %v3817, %v3816
        %3850 = vst [vmem:[#allocation3 + $0x30] sm:$0xff] %v3818
        %3851 = vst [vmem:[#allocation3 + $0x78] sm:$0xff] %v3819
        %3852 = vst [vmem:[#allocation3 + $0xc0] sm:$0xff] %v3820
        %3853 = vst [vmem:[#allocation3 + $0x108] sm:$0xff] %v3821
        %3854 = vst [vmem:[#allocation3 + $0x150] sm:$0xff] %v3822
        %3855 = vst [vmem:[#allocation3 + $0x198] sm:$0xff] %v3823
        %3856 = vst [vmem:[#allocation3 + $0x1e0] sm:$0xff] %v3824
        %3857 = vst [vmem:[#allocation3 + $0x228] sm:$0xff] %v3825
        %3858 = vst [vmem:[#allocation3 + $0x270] sm:$0xff] %v3826
        %3859 = vst [vmem:[#allocation3 + $0x2b8] sm:$0xff] %v3827
        %3860 = vst [vmem:[#allocation3 + $0x300] sm:$0xff] %v3828
        %3861 = vst [vmem:[#allocation3 + $0x348] sm:$0xff] %v3829
        %3862 = vst [vmem:[#allocation3 + $0x390] sm:$0xff] %v3830
        %3863 = vst [vmem:[#allocation3 + $0x3d8] sm:$0xff] %v3831
        %3864 = vst [vmem:[#allocation3 + $0x420] sm:$0xff] %v3832
        %3865 = vst [vmem:[#allocation3 + $0x468] sm:$0xff] %v3833
        %v3866 = vld [vmem:[%s3721] sm:$0xf]
        %v3867 = vld [vmem:[%s3721 + $0x4] sm:$0xf]
        %v3868 = vld [vmem:[%s3721 + $0x8] sm:$0x1]
        %v3869 = vld [vmem:[%s3721 + $0xc] sm:$0xf]
        %v3870 = vld [vmem:[%s3721 + $0x10] sm:$0xf]
        %v3871 = vld [vmem:[%s3721 + $0x14] sm:$0x1]
        %v3872 = vld [vmem:[%s3721 + $0x18] sm:$0xf]
        %v3873 = vld [vmem:[%s3721 + $0x1c] sm:$0xf]
        %v3874 = vld [vmem:[%s3721 + $0x20] sm:$0x1]
        %v3875 = vld [vmem:[%s3721 + $0x24] sm:$0xf]
        %v3876 = vld [vmem:[%s3721 + $0x28] sm:$0xf]
        %v3877 = vld [vmem:[%s3721 + $0x2c] sm:$0x1]
        %v3878 = vld [vmem:[%s3721 + $0x30] sm:$0xf]
        %v3879 = vld [vmem:[%s3721 + $0x34] sm:$0xf]
        %v3880 = vld [vmem:[%s3721 + $0x38] sm:$0x1]
        %v3881 = vld [vmem:[%s3721 + $0x3c] sm:$0xf]
        %v3882 = vld [vmem:[%s3721 + $0x40] sm:$0xf]
        %v3883 = vld [vmem:[%s3721 + $0x44] sm:$0x1]
        %v3884 = vld [vmem:[%s3721 + $0x48] sm:$0xf]
        %v3885 = vld [vmem:[%s3721 + $0x4c] sm:$0xf]
        %v3886 = vld [vmem:[%s3721 + $0x50] sm:$0x1]
        %v3887 = vld [vmem:[%s3721 + $0x54] sm:$0xf]
        %v3888 = vld [vmem:[%s3721 + $0x58] sm:$0xf]
        %v3889 = vld [vmem:[%s3721 + $0x5c] sm:$0x1]
        %v3890 = vld [vmem:[%s3721 + $0x60] sm:$0xf]
        %v3891 = vld [vmem:[%s3721 + $0x64] sm:$0xf]
        %v3892 = vld [vmem:[%s3721 + $0x68] sm:$0x1]
        %v3893 = vld [vmem:[%s3721 + $0x6c] sm:$0xf]
        %v3894 = vld [vmem:[%s3721 + $0x70] sm:$0xf]
        %v3895 = vld [vmem:[%s3721 + $0x74] sm:$0x1]
        %v3896 = vld [vmem:[%s3721 + $0x78] sm:$0xf]
        %v3897 = vld [vmem:[%s3721 + $0x7c] sm:$0xf]
        %v3898 = vld [vmem:[%s3721 + $0x80] sm:$0x1]
        %v3899 = vld [vmem:[%s3721 + $0x84] sm:$0xf]
        %v3900 = vld [vmem:[%s3721 + $0x88] sm:$0xf]
        %v3901 = vld [vmem:[%s3721 + $0x8c] sm:$0x1]
        %v3902 = vld [vmem:[%s3721 + $0x90] sm:$0xf]
        %v3903 = vld [vmem:[%s3721 + $0x94] sm:$0xf]
        %v3904 = vld [vmem:[%s3721 + $0x98] sm:$0x1]
        %v3905 = vld [vmem:[%s3721 + $0x9c] sm:$0xf]
        %v3906 = vld [vmem:[%s3721 + $0xa0] sm:$0xf]
        %v3907 = vld [vmem:[%s3721 + $0xa4] sm:$0x1]
        %v3908 = vld [vmem:[%s3721 + $0xa8] sm:$0xf]
        %v3909 = vld [vmem:[%s3721 + $0xac] sm:$0xf]
        %v3910 = vld [vmem:[%s3721 + $0xb0] sm:$0x1]
        %v3911 = vld [vmem:[%s3721 + $0xb4] sm:$0xf]
        %v3912 = vld [vmem:[%s3721 + $0xb8] sm:$0xf]
        %v3913 = vld [vmem:[%s3721 + $0xbc] sm:$0x1]
        %v3915 = vshrl.u32 %v3866, 16
        %v3917 = vrot.slane %v3915, 4
        %v3918 = vshll.u32 %v3866, 16
        %v3920 = vrot.slane %v3918, 5
        %v3921 = vor.u32 %v3917, %v3920
        %v3922 = vrot.slane %v3921, 4
        %v3924 = vshll.u32 %v3867, 16
        %v3926 = vrot.slane %v3924, 5
        %v3927 = vsel %vm2021, %v3922, %v3926
        %v3928 = vshrl.u32 %v3867, 16
        %v3930 = vrot.slane %v3928, 4
        %v3931 = vor.u32 %v3930, %v3926
        %v3932 = vrot.slane %v3931, 4
        %v3934 = vshll.u32 %v3868, 16
        %v3936 = vrot.slane %v3934, 5
        %v3937 = vsel %vm2021, %v3932, %v3936
        %v3939 = vshrl.u32 %v3869, 16
        %v3941 = vrot.slane %v3939, 4
        %v3942 = vshll.u32 %v3869, 16
        %v3944 = vrot.slane %v3942, 5
        %v3945 = vor.u32 %v3941, %v3944
        %v3946 = vrot.slane %v3945, 4
        %v3948 = vshll.u32 %v3870, 16
        %v3950 = vrot.slane %v3948, 5
        %v3951 = vsel %vm2021, %v3946, %v3950
        %v3952 = vshrl.u32 %v3870, 16
        %v3954 = vrot.slane %v3952, 4
        %v3955 = vor.u32 %v3954, %v3950
        %v3956 = vrot.slane %v3955, 4
        %v3958 = vshll.u32 %v3871, 16
        %v3960 = vrot.slane %v3958, 5
        %v3961 = vsel %vm2021, %v3956, %v3960
        %v3963 = vshrl.u32 %v3872, 16
        %v3965 = vrot.slane %v3963, 4
        %v3966 = vshll.u32 %v3872, 16
        %v3968 = vrot.slane %v3966, 5
        %v3969 = vor.u32 %v3965, %v3968
        %v3970 = vrot.slane %v3969, 4
        %v3972 = vshll.u32 %v3873, 16
        %v3974 = vrot.slane %v3972, 5
        %v3975 = vsel %vm2021, %v3970, %v3974
        %v3976 = vshrl.u32 %v3873, 16
        %v3978 = vrot.slane %v3976, 4
        %v3979 = vor.u32 %v3978, %v3974
        %v3980 = vrot.slane %v3979, 4
        %v3982 = vshll.u32 %v3874, 16
        %v3984 = vrot.slane %v3982, 5
        %v3985 = vsel %vm2021, %v3980, %v3984
        %v3987 = vshrl.u32 %v3875, 16
        %v3989 = vrot.slane %v3987, 4
        %v3990 = vshll.u32 %v3875, 16
        %v3992 = vrot.slane %v3990, 5
        %v3993 = vor.u32 %v3989, %v3992
        %v3994 = vrot.slane %v3993, 4
        %v3996 = vshll.u32 %v3876, 16
        %v3998 = vrot.slane %v3996, 5
        %v3999 = vsel %vm2021, %v3994, %v3998
        %v4000 = vshrl.u32 %v3876, 16
        %v4002 = vrot.slane %v4000, 4
        %v4003 = vor.u32 %v4002, %v3998
        %v4004 = vrot.slane %v4003, 4
        %v4006 = vshll.u32 %v3877, 16
        %v4008 = vrot.slane %v4006, 5
        %v4009 = vsel %vm2021, %v4004, %v4008
        %v4011 = vshrl.u32 %v3878, 16
        %v4013 = vrot.slane %v4011, 4
        %v4014 = vshll.u32 %v3878, 16
        %v4016 = vrot.slane %v4014, 5
        %v4017 = vor.u32 %v4013, %v4016
        %v4018 = vrot.slane %v4017, 4
        %v4020 = vshll.u32 %v3879, 16
        %v4022 = vrot.slane %v4020, 5
        %v4023 = vsel %vm2021, %v4018, %v4022
        %v4024 = vshrl.u32 %v3879, 16
        %v4026 = vrot.slane %v4024, 4
        %v4027 = vor.u32 %v4026, %v4022
        %v4028 = vrot.slane %v4027, 4
        %v4030 = vshll.u32 %v3880, 16
        %v4032 = vrot.slane %v4030, 5
        %v4033 = vsel %vm2021, %v4028, %v4032
        %v4035 = vshrl.u32 %v3881, 16
        %v4037 = vrot.slane %v4035, 4
        %v4038 = vshll.u32 %v3881, 16
        %v4040 = vrot.slane %v4038, 5
        %v4041 = vor.u32 %v4037, %v4040
        %v4042 = vrot.slane %v4041, 4
        %v4044 = vshll.u32 %v3882, 16
        %v4046 = vrot.slane %v4044, 5
        %v4047 = vsel %vm2021, %v4042, %v4046
        %v4048 = vshrl.u32 %v3882, 16
        %v4050 = vrot.slane %v4048, 4
        %v4051 = vor.u32 %v4050, %v4046
        %v4052 = vrot.slane %v4051, 4
        %v4054 = vshll.u32 %v3883, 16
        %v4056 = vrot.slane %v4054, 5
        %v4057 = vsel %vm2021, %v4052, %v4056
        %v4059 = vshrl.u32 %v3884, 16
        %v4061 = vrot.slane %v4059, 4
        %v4062 = vshll.u32 %v3884, 16
        %v4064 = vrot.slane %v4062, 5
        %v4065 = vor.u32 %v4061, %v4064
        %v4066 = vrot.slane %v4065, 4
        %v4068 = vshll.u32 %v3885, 16
        %v4070 = vrot.slane %v4068, 5
        %v4071 = vsel %vm2021, %v4066, %v4070
        %v4072 = vshrl.u32 %v3885, 16
        %v4074 = vrot.slane %v4072, 4
        %v4075 = vor.u32 %v4074, %v4070
        %v4076 = vrot.slane %v4075, 4
        %v4078 = vshll.u32 %v3886, 16
        %v4080 = vrot.slane %v4078, 5
        %v4081 = vsel %vm2021, %v4076, %v4080
        %v4083 = vshrl.u32 %v3887, 16
        %v4085 = vrot.slane %v4083, 4
        %v4086 = vshll.u32 %v3887, 16
        %v4088 = vrot.slane %v4086, 5
        %v4089 = vor.u32 %v4085, %v4088
        %v4090 = vrot.slane %v4089, 4
        %v4092 = vshll.u32 %v3888, 16
        %v4094 = vrot.slane %v4092, 5
        %v4095 = vsel %vm2021, %v4090, %v4094
        %v4096 = vshrl.u32 %v3888, 16
        %v4098 = vrot.slane %v4096, 4
        %v4099 = vor.u32 %v4098, %v4094
        %v4100 = vrot.slane %v4099, 4
        %v4102 = vshll.u32 %v3889, 16
        %v4104 = vrot.slane %v4102, 5
        %v4105 = vsel %vm2021, %v4100, %v4104
        %v4107 = vshrl.u32 %v3890, 16
        %v4109 = vrot.slane %v4107, 4
        %v4110 = vshll.u32 %v3890, 16
        %v4112 = vrot.slane %v4110, 5
        %v4113 = vor.u32 %v4109, %v4112
        %v4114 = vrot.slane %v4113, 4
        %v4116 = vshll.u32 %v3891, 16
        %v4118 = vrot.slane %v4116, 5
        %v4119 = vsel %vm2021, %v4114, %v4118
        %v4120 = vshrl.u32 %v3891, 16
        %v4122 = vrot.slane %v4120, 4
        %v4123 = vor.u32 %v4122, %v4118
        %v4124 = vrot.slane %v4123, 4
        %v4126 = vshll.u32 %v3892, 16
        %v4128 = vrot.slane %v4126, 5
        %v4129 = vsel %vm2021, %v4124, %v4128
        %v4131 = vshrl.u32 %v3893, 16
        %v4133 = vrot.slane %v4131, 4
        %v4134 = vshll.u32 %v3893, 16
        %v4136 = vrot.slane %v4134, 5
        %v4137 = vor.u32 %v4133, %v4136
        %v4138 = vrot.slane %v4137, 4
        %v4140 = vshll.u32 %v3894, 16
        %v4142 = vrot.slane %v4140, 5
        %v4143 = vsel %vm2021, %v4138, %v4142
        %v4144 = vshrl.u32 %v3894, 16
        %v4146 = vrot.slane %v4144, 4
        %v4147 = vor.u32 %v4146, %v4142
        %v4148 = vrot.slane %v4147, 4
        %v4150 = vshll.u32 %v3895, 16
        %v4152 = vrot.slane %v4150, 5
        %v4153 = vsel %vm2021, %v4148, %v4152
        %v4155 = vshrl.u32 %v3896, 16
        %v4157 = vrot.slane %v4155, 4
        %v4158 = vshll.u32 %v3896, 16
        %v4160 = vrot.slane %v4158, 5
        %v4161 = vor.u32 %v4157, %v4160
        %v4162 = vrot.slane %v4161, 4
        %v4164 = vshll.u32 %v3897, 16
        %v4166 = vrot.slane %v4164, 5
        %v4167 = vsel %vm2021, %v4162, %v4166
        %v4168 = vshrl.u32 %v3897, 16
        %v4170 = vrot.slane %v4168, 4
        %v4171 = vor.u32 %v4170, %v4166
        %v4172 = vrot.slane %v4171, 4
        %v4174 = vshll.u32 %v3898, 16
        %v4176 = vrot.slane %v4174, 5
        %v4177 = vsel %vm2021, %v4172, %v4176
        %v4179 = vshrl.u32 %v3899, 16
        %v4181 = vrot.slane %v4179, 4
        %v4182 = vshll.u32 %v3899, 16
        %v4184 = vrot.slane %v4182, 5
        %v4185 = vor.u32 %v4181, %v4184
        %v4186 = vrot.slane %v4185, 4
        %v4188 = vshll.u32 %v3900, 16
        %v4190 = vrot.slane %v4188, 5
        %v4191 = vsel %vm2021, %v4186, %v4190
        %v4192 = vshrl.u32 %v3900, 16
        %v4194 = vrot.slane %v4192, 4
        %v4195 = vor.u32 %v4194, %v4190
        %v4196 = vrot.slane %v4195, 4
        %v4198 = vshll.u32 %v3901, 16
        %v4200 = vrot.slane %v4198, 5
        %v4201 = vsel %vm2021, %v4196, %v4200
        %v4203 = vshrl.u32 %v3902, 16
        %v4205 = vrot.slane %v4203, 4
        %v4206 = vshll.u32 %v3902, 16
        %v4208 = vrot.slane %v4206, 5
        %v4209 = vor.u32 %v4205, %v4208
        %v4210 = vrot.slane %v4209, 4
        %v4212 = vshll.u32 %v3903, 16
        %v4214 = vrot.slane %v4212, 5
        %v4215 = vsel %vm2021, %v4210, %v4214
        %v4216 = vshrl.u32 %v3903, 16
        %v4218 = vrot.slane %v4216, 4
        %v4219 = vor.u32 %v4218, %v4214
        %v4220 = vrot.slane %v4219, 4
        %v4222 = vshll.u32 %v3904, 16
        %v4224 = vrot.slane %v4222, 5
        %v4225 = vsel %vm2021, %v4220, %v4224
        %v4227 = vshrl.u32 %v3905, 16
        %v4229 = vrot.slane %v4227, 4
        %v4230 = vshll.u32 %v3905, 16
        %v4232 = vrot.slane %v4230, 5
        %v4233 = vor.u32 %v4229, %v4232
        %v4234 = vrot.slane %v4233, 4
        %v4236 = vshll.u32 %v3906, 16
        %v4238 = vrot.slane %v4236, 5
        %v4239 = vsel %vm2021, %v4234, %v4238
        %v4240 = vshrl.u32 %v3906, 16
        %v4242 = vrot.slane %v4240, 4
        %v4243 = vor.u32 %v4242, %v4238
        %v4244 = vrot.slane %v4243, 4
        %v4246 = vshll.u32 %v3907, 16
        %v4248 = vrot.slane %v4246, 5
        %v4249 = vsel %vm2021, %v4244, %v4248
        %v4251 = vshrl.u32 %v3908, 16
        %v4253 = vrot.slane %v4251, 4
        %v4254 = vshll.u32 %v3908, 16
        %v4256 = vrot.slane %v4254, 5
        %v4257 = vor.u32 %v4253, %v4256
        %v4258 = vrot.slane %v4257, 4
        %v4260 = vshll.u32 %v3909, 16
        %v4262 = vrot.slane %v4260, 5
        %v4263 = vsel %vm2021, %v4258, %v4262
        %v4264 = vshrl.u32 %v3909, 16
        %v4266 = vrot.slane %v4264, 4
        %v4267 = vor.u32 %v4266, %v4262
        %v4268 = vrot.slane %v4267, 4
        %v4270 = vshll.u32 %v3910, 16
        %v4272 = vrot.slane %v4270, 5
        %v4273 = vsel %vm2021, %v4268, %v4272
        %v4275 = vshrl.u32 %v3911, 16
        %v4277 = vrot.slane %v4275, 4
        %v4278 = vshll.u32 %v3911, 16
        %v4280 = vrot.slane %v4278, 5
        %v4281 = vor.u32 %v4277, %v4280
        %v4282 = vrot.slane %v4281, 4
        %v4284 = vshll.u32 %v3912, 16
        %v4286 = vrot.slane %v4284, 5
        %v4287 = vsel %vm2021, %v4282, %v4286
        %v4288 = vshrl.u32 %v3912, 16
        %v4290 = vrot.slane %v4288, 4
        %v4291 = vor.u32 %v4290, %v4286
        %v4292 = vrot.slane %v4291, 4
        %v4294 = vshll.u32 %v3913, 16
        %v4296 = vrot.slane %v4294, 5
        %v4297 = vsel %vm2021, %v4292, %v4296
        %v4298 = vunpack.c.l.b16 %v3927
        %v4299 = vunpack.c.l.b16 %v3937
        %v4300 = vunpack.c.l.b16 %v3951
        %v4301 = vunpack.c.l.b16 %v3961
        %v4302 = vunpack.c.l.b16 %v3975
        %v4303 = vunpack.c.l.b16 %v3985
        %v4304 = vunpack.c.l.b16 %v3999
        %v4305 = vunpack.c.l.b16 %v4009
        %v4306 = vunpack.c.l.b16 %v4023
        %v4307 = vunpack.c.l.b16 %v4033
        %v4308 = vunpack.c.l.b16 %v4047
        %v4309 = vunpack.c.l.b16 %v4057
        %v4310 = vunpack.c.l.b16 %v4071
        %v4311 = vunpack.c.l.b16 %v4081
        %v4312 = vunpack.c.l.b16 %v4095
        %v4313 = vunpack.c.l.b16 %v4105
        %v4314 = vunpack.c.l.b16 %v4119
        %v4315 = vunpack.c.l.b16 %v4129
        %v4316 = vunpack.c.l.b16 %v4143
        %v4317 = vunpack.c.l.b16 %v4153
        %v4318 = vunpack.c.l.b16 %v4167
        %v4319 = vunpack.c.l.b16 %v4177
        %v4320 = vunpack.c.l.b16 %v4191
        %v4321 = vunpack.c.l.b16 %v4201
        %v4322 = vunpack.c.l.b16 %v4215
        %v4323 = vunpack.c.l.b16 %v4225
        %v4324 = vunpack.c.l.b16 %v4239
        %v4325 = vunpack.c.l.b16 %v4249
        %v4326 = vunpack.c.l.b16 %v4263
        %v4327 = vunpack.c.l.b16 %v4273
        %v4328 = vunpack.c.l.b16 %v4287
        %v4329 = vunpack.c.l.b16 %v4297
        %v4330 = vpack.c.b16 %v4299, %v4298
        %v4331 = vpack.c.b16 %v4301, %v4300
        %v4332 = vpack.c.b16 %v4303, %v4302
        %v4333 = vpack.c.b16 %v4305, %v4304
        %v4334 = vpack.c.b16 %v4307, %v4306
        %v4335 = vpack.c.b16 %v4309, %v4308
        %v4336 = vpack.c.b16 %v4311, %v4310
        %v4337 = vpack.c.b16 %v4313, %v4312
        %v4338 = vpack.c.b16 %v4315, %v4314
        %v4339 = vpack.c.b16 %v4317, %v4316
        %v4340 = vpack.c.b16 %v4319, %v4318
        %v4341 = vpack.c.b16 %v4321, %v4320
        %v4342 = vpack.c.b16 %v4323, %v4322
        %v4343 = vpack.c.b16 %v4325, %v4324
        %v4344 = vpack.c.b16 %v4327, %v4326
        %v4345 = vpack.c.b16 %v4329, %v4328
        %4362 = vst [vmem:[#allocation3 + $0x38] sm:$0xff] %v4330
        %4363 = vst [vmem:[#allocation3 + $0x80] sm:$0xff] %v4331
        %4364 = vst [vmem:[#allocation3 + $0xc8] sm:$0xff] %v4332
        %4365 = vst [vmem:[#allocation3 + $0x110] sm:$0xff] %v4333
        %4366 = vst [vmem:[#allocation3 + $0x158] sm:$0xff] %v4334
        %4367 = vst [vmem:[#allocation3 + $0x1a0] sm:$0xff] %v4335
        %4368 = vst [vmem:[#allocation3 + $0x1e8] sm:$0xff] %v4336
        %4369 = vst [vmem:[#allocation3 + $0x230] sm:$0xff] %v4337
        %4370 = vst [vmem:[#allocation3 + $0x278] sm:$0xff] %v4338
        %4371 = vst [vmem:[#allocation3 + $0x2c0] sm:$0xff] %v4339
        %4372 = vst [vmem:[#allocation3 + $0x308] sm:$0xff] %v4340
        %4373 = vst [vmem:[#allocation3 + $0x350] sm:$0xff] %v4341
        %4374 = vst [vmem:[#allocation3 + $0x398] sm:$0xff] %v4342
        %4375 = vst [vmem:[#allocation3 + $0x3e0] sm:$0xff] %v4343
        %4376 = vst [vmem:[#allocation3 + $0x428] sm:$0xff] %v4344
        %4377 = vst [vmem:[#allocation3 + $0x470] sm:$0xff] %v4345
        %v4378 = vld [vmem:[%s3721] sm:$0xe]
        %v4379 = vld [vmem:[%s3721 + $0x4] sm:$0xf]
        %v4380 = vld [vmem:[%s3721 + $0x8] sm:$0x1]
        %v4381 = vld [vmem:[%s3721 + $0xc] sm:$0xe]
        %v4382 = vld [vmem:[%s3721 + $0x10] sm:$0xf]
        %v4383 = vld [vmem:[%s3721 + $0x14] sm:$0x1]
        %v4384 = vld [vmem:[%s3721 + $0x18] sm:$0xe]
        %v4385 = vld [vmem:[%s3721 + $0x1c] sm:$0xf]
        %v4386 = vld [vmem:[%s3721 + $0x20] sm:$0x1]
        %v4387 = vld [vmem:[%s3721 + $0x24] sm:$0xe]
        %v4388 = vld [vmem:[%s3721 + $0x28] sm:$0xf]
        %v4389 = vld [vmem:[%s3721 + $0x2c] sm:$0x1]
        %v4390 = vld [vmem:[%s3721 + $0x30] sm:$0xe]
        %v4391 = vld [vmem:[%s3721 + $0x34] sm:$0xf]
        %v4392 = vld [vmem:[%s3721 + $0x38] sm:$0x1]
        %v4393 = vld [vmem:[%s3721 + $0x3c] sm:$0xe]
        %v4394 = vld [vmem:[%s3721 + $0x40] sm:$0xf]
        %v4395 = vld [vmem:[%s3721 + $0x44] sm:$0x1]
        %v4396 = vld [vmem:[%s3721 + $0x48] sm:$0xe]
        %v4397 = vld [vmem:[%s3721 + $0x4c] sm:$0xf]
        %v4398 = vld [vmem:[%s3721 + $0x50] sm:$0x1]
        %v4399 = vld [vmem:[%s3721 + $0x54] sm:$0xe]
        %v4400 = vld [vmem:[%s3721 + $0x58] sm:$0xf]
        %v4401 = vld [vmem:[%s3721 + $0x5c] sm:$0x1]
        %v4402 = vld [vmem:[%s3721 + $0x60] sm:$0xe]
        %v4403 = vld [vmem:[%s3721 + $0x64] sm:$0xf]
        %v4404 = vld [vmem:[%s3721 + $0x68] sm:$0x1]
        %v4405 = vld [vmem:[%s3721 + $0x6c] sm:$0xe]
        %v4406 = vld [vmem:[%s3721 + $0x70] sm:$0xf]
        %v4407 = vld [vmem:[%s3721 + $0x74] sm:$0x1]
        %v4408 = vld [vmem:[%s3721 + $0x78] sm:$0xe]
        %v4409 = vld [vmem:[%s3721 + $0x7c] sm:$0xf]
        %v4410 = vld [vmem:[%s3721 + $0x80] sm:$0x1]
        %v4411 = vld [vmem:[%s3721 + $0x84] sm:$0xe]
        %v4412 = vld [vmem:[%s3721 + $0x88] sm:$0xf]
        %v4413 = vld [vmem:[%s3721 + $0x8c] sm:$0x1]
        %v4414 = vld [vmem:[%s3721 + $0x90] sm:$0xe]
        %v4415 = vld [vmem:[%s3721 + $0x94] sm:$0xf]
        %v4416 = vld [vmem:[%s3721 + $0x98] sm:$0x1]
        %v4417 = vld [vmem:[%s3721 + $0x9c] sm:$0xe]
        %v4418 = vld [vmem:[%s3721 + $0xa0] sm:$0xf]
        %v4419 = vld [vmem:[%s3721 + $0xa4] sm:$0x1]
        %v4420 = vld [vmem:[%s3721 + $0xa8] sm:$0xe]
        %v4421 = vld [vmem:[%s3721 + $0xac] sm:$0xf]
        %v4422 = vld [vmem:[%s3721 + $0xb0] sm:$0x1]
        %v4423 = vld [vmem:[%s3721 + $0xb4] sm:$0xe]
        %v4424 = vld [vmem:[%s3721 + $0xb8] sm:$0xf]
        %v4425 = vld [vmem:[%s3721 + $0xbc] sm:$0x1]
        %v4474 = vrot.slane %v4378, 5
        %v4475 = vrot.slane %v4474, 4
        %v4476 = vrot.slane %v4379, 5
        %v4477 = vsel %vm2584, %v4475, %v4476
        %v4478 = vrot.slane %v4476, 4
        %v4479 = vrot.slane %v4380, 5
        %v4480 = vsel %vm2584, %v4478, %v4479
        %v4481 = vrot.slane %v4381, 5
        %v4482 = vrot.slane %v4481, 4
        %v4483 = vrot.slane %v4382, 5
        %v4484 = vsel %vm2584, %v4482, %v4483
        %v4485 = vrot.slane %v4483, 4
        %v4486 = vrot.slane %v4383, 5
        %v4487 = vsel %vm2584, %v4485, %v4486
        %v4488 = vrot.slane %v4384, 5
        %v4489 = vrot.slane %v4488, 4
        %v4490 = vrot.slane %v4385, 5
        %v4491 = vsel %vm2584, %v4489, %v4490
        %v4492 = vrot.slane %v4490, 4
        %v4493 = vrot.slane %v4386, 5
        %v4494 = vsel %vm2584, %v4492, %v4493
        %v4495 = vrot.slane %v4387, 5
        %v4496 = vrot.slane %v4495, 4
        %v4497 = vrot.slane %v4388, 5
        %v4498 = vsel %vm2584, %v4496, %v4497
        %v4499 = vrot.slane %v4497, 4
        %v4500 = vrot.slane %v4389, 5
        %v4501 = vsel %vm2584, %v4499, %v4500
        %v4502 = vrot.slane %v4390, 5
        %v4503 = vrot.slane %v4502, 4
        %v4504 = vrot.slane %v4391, 5
        %v4505 = vsel %vm2584, %v4503, %v4504
        %v4506 = vrot.slane %v4504, 4
        %v4507 = vrot.slane %v4392, 5
        %v4508 = vsel %vm2584, %v4506, %v4507
        %v4509 = vrot.slane %v4393, 5
        %v4510 = vrot.slane %v4509, 4
        %v4511 = vrot.slane %v4394, 5
        %v4512 = vsel %vm2584, %v4510, %v4511
        %v4513 = vrot.slane %v4511, 4
        %v4514 = vrot.slane %v4395, 5
        %v4515 = vsel %vm2584, %v4513, %v4514
        %v4516 = vrot.slane %v4396, 5
        %v4517 = vrot.slane %v4516, 4
        %v4518 = vrot.slane %v4397, 5
        %v4519 = vsel %vm2584, %v4517, %v4518
        %v4520 = vrot.slane %v4518, 4
        %v4521 = vrot.slane %v4398, 5
        %v4522 = vsel %vm2584, %v4520, %v4521
        %v4523 = vrot.slane %v4399, 5
        %v4524 = vrot.slane %v4523, 4
        %v4525 = vrot.slane %v4400, 5
        %v4526 = vsel %vm2584, %v4524, %v4525
        %v4527 = vrot.slane %v4525, 4
        %v4528 = vrot.slane %v4401, 5
        %v4529 = vsel %vm2584, %v4527, %v4528
        %v4530 = vrot.slane %v4402, 5
        %v4531 = vrot.slane %v4530, 4
        %v4532 = vrot.slane %v4403, 5
        %v4533 = vsel %vm2584, %v4531, %v4532
        %v4534 = vrot.slane %v4532, 4
        %v4535 = vrot.slane %v4404, 5
        %v4536 = vsel %vm2584, %v4534, %v4535
        %v4537 = vrot.slane %v4405, 5
        %v4538 = vrot.slane %v4537, 4
        %v4539 = vrot.slane %v4406, 5
        %v4540 = vsel %vm2584, %v4538, %v4539
        %v4541 = vrot.slane %v4539, 4
        %v4542 = vrot.slane %v4407, 5
        %v4543 = vsel %vm2584, %v4541, %v4542
        %v4544 = vrot.slane %v4408, 5
        %v4545 = vrot.slane %v4544, 4
        %v4546 = vrot.slane %v4409, 5
        %v4547 = vsel %vm2584, %v4545, %v4546
        %v4548 = vrot.slane %v4546, 4
        %v4549 = vrot.slane %v4410, 5
        %v4550 = vsel %vm2584, %v4548, %v4549
        %v4551 = vrot.slane %v4411, 5
        %v4552 = vrot.slane %v4551, 4
        %v4553 = vrot.slane %v4412, 5
        %v4554 = vsel %vm2584, %v4552, %v4553
        %v4555 = vrot.slane %v4553, 4
        %v4556 = vrot.slane %v4413, 5
        %v4557 = vsel %vm2584, %v4555, %v4556
        %v4558 = vrot.slane %v4414, 5
        %v4559 = vrot.slane %v4558, 4
        %v4560 = vrot.slane %v4415, 5
        %v4561 = vsel %vm2584, %v4559, %v4560
        %v4562 = vrot.slane %v4560, 4
        %v4563 = vrot.slane %v4416, 5
        %v4564 = vsel %vm2584, %v4562, %v4563
        %v4565 = vrot.slane %v4417, 5
        %v4566 = vrot.slane %v4565, 4
        %v4567 = vrot.slane %v4418, 5
        %v4568 = vsel %vm2584, %v4566, %v4567
        %v4569 = vrot.slane %v4567, 4
        %v4570 = vrot.slane %v4419, 5
        %v4571 = vsel %vm2584, %v4569, %v4570
        %v4572 = vrot.slane %v4420, 5
        %v4573 = vrot.slane %v4572, 4
        %v4574 = vrot.slane %v4421, 5
        %v4575 = vsel %vm2584, %v4573, %v4574
        %v4576 = vrot.slane %v4574, 4
        %v4577 = vrot.slane %v4422, 5
        %v4578 = vsel %vm2584, %v4576, %v4577
        %v4579 = vrot.slane %v4423, 5
        %v4580 = vrot.slane %v4579, 4
        %v4581 = vrot.slane %v4424, 5
        %v4582 = vsel %vm2584, %v4580, %v4581
        %v4583 = vrot.slane %v4581, 4
        %v4584 = vrot.slane %v4425, 5
        %v4585 = vsel %vm2584, %v4583, %v4584
        %v4586 = vunpack.c.l.b16 %v4477
        %v4587 = vunpack.c.l.b16 %v4480
        %v4588 = vunpack.c.l.b16 %v4484
        %v4589 = vunpack.c.l.b16 %v4487
        %v4590 = vunpack.c.l.b16 %v4491
        %v4591 = vunpack.c.l.b16 %v4494
        %v4592 = vunpack.c.l.b16 %v4498
        %v4593 = vunpack.c.l.b16 %v4501
        %v4594 = vunpack.c.l.b16 %v4505
        %v4595 = vunpack.c.l.b16 %v4508
        %v4596 = vunpack.c.l.b16 %v4512
        %v4597 = vunpack.c.l.b16 %v4515
        %v4598 = vunpack.c.l.b16 %v4519
        %v4599 = vunpack.c.l.b16 %v4522
        %v4600 = vunpack.c.l.b16 %v4526
        %v4601 = vunpack.c.l.b16 %v4529
        %v4602 = vunpack.c.l.b16 %v4533
        %v4603 = vunpack.c.l.b16 %v4536
        %v4604 = vunpack.c.l.b16 %v4540
        %v4605 = vunpack.c.l.b16 %v4543
        %v4606 = vunpack.c.l.b16 %v4547
        %v4607 = vunpack.c.l.b16 %v4550
        %v4608 = vunpack.c.l.b16 %v4554
        %v4609 = vunpack.c.l.b16 %v4557
        %v4610 = vunpack.c.l.b16 %v4561
        %v4611 = vunpack.c.l.b16 %v4564
        %v4612 = vunpack.c.l.b16 %v4568
        %v4613 = vunpack.c.l.b16 %v4571
        %v4614 = vunpack.c.l.b16 %v4575
        %v4615 = vunpack.c.l.b16 %v4578
        %v4616 = vunpack.c.l.b16 %v4582
        %v4617 = vunpack.c.l.b16 %v4585
        %v4618 = vpack.c.b16 %v4587, %v4586
        %v4619 = vpack.c.b16 %v4589, %v4588
        %v4620 = vpack.c.b16 %v4591, %v4590
        %v4621 = vpack.c.b16 %v4593, %v4592
        %v4622 = vpack.c.b16 %v4595, %v4594
        %v4623 = vpack.c.b16 %v4597, %v4596
        %v4624 = vpack.c.b16 %v4599, %v4598
        %v4625 = vpack.c.b16 %v4601, %v4600
        %v4626 = vpack.c.b16 %v4603, %v4602
        %v4627 = vpack.c.b16 %v4605, %v4604
        %v4628 = vpack.c.b16 %v4607, %v4606
        %v4629 = vpack.c.b16 %v4609, %v4608
        %v4630 = vpack.c.b16 %v4611, %v4610
        %v4631 = vpack.c.b16 %v4613, %v4612
        %v4632 = vpack.c.b16 %v4615, %v4614
        %v4633 = vpack.c.b16 %v4617, %v4616
        %4650 = vst [vmem:[#allocation3 + $0x40] sm:$0xff] %v4618
        %4651 = vst [vmem:[#allocation3 + $0x88] sm:$0xff] %v4619
        %4652 = vst [vmem:[#allocation3 + $0xd0] sm:$0xff] %v4620
        %4653 = vst [vmem:[#allocation3 + $0x118] sm:$0xff] %v4621
        %4654 = vst [vmem:[#allocation3 + $0x160] sm:$0xff] %v4622
        %4655 = vst [vmem:[#allocation3 + $0x1a8] sm:$0xff] %v4623
        %4656 = vst [vmem:[#allocation3 + $0x1f0] sm:$0xff] %v4624
        %4657 = vst [vmem:[#allocation3 + $0x238] sm:$0xff] %v4625
        %4658 = vst [vmem:[#allocation3 + $0x280] sm:$0xff] %v4626
        %4659 = vst [vmem:[#allocation3 + $0x2c8] sm:$0xff] %v4627
        %4660 = vst [vmem:[#allocation3 + $0x310] sm:$0xff] %v4628
        %4661 = vst [vmem:[#allocation3 + $0x358] sm:$0xff] %v4629
        %4662 = vst [vmem:[#allocation3 + $0x3a0] sm:$0xff] %v4630
        %4663 = vst [vmem:[#allocation3 + $0x3e8] sm:$0xff] %v4631
        %4664 = vst [vmem:[#allocation3 + $0x430] sm:$0xff] %v4632
        %4665 = vst [vmem:[#allocation3 + $0x478] sm:$0xff] %v4633
        %v4666 = vld [vmem:[%s5] sm:$0x1]
        %v4667 = vld [vmem:[%s6] sm:$0x1]
        %v4668 = vld [vmem:[%s8] sm:$0x1]
        %v4669 = vld [vmem:[%s9] sm:$0x1]
        %v4670 = vld [vmem:[#allocation3] sm:$0xff]
        %v4671 = vld [vmem:[#allocation3 + $0x8] sm:$0xff]
        %v4672 = vld [vmem:[#allocation3 + $0x10] sm:$0xff]
        %v4673 = vld [vmem:[#allocation3 + $0x18] sm:$0xff]
        %v4674 = vld [vmem:[#allocation3 + $0x20] sm:$0xff]
        %v4675 = vld [vmem:[#allocation3 + $0x28] sm:$0xff]
        %v4676 = vld [vmem:[#allocation3 + $0x30] sm:$0xff]
        %v4677 = vld [vmem:[#allocation3 + $0x38] sm:$0xff]
        %v4678 = vld [vmem:[#allocation3 + $0x40] sm:$0xff]
        %v4679 = vld [vmem:[#allocation3 + $0x48] sm:$0xff]
        %v4680 = vld [vmem:[#allocation3 + $0x50] sm:$0xff]
        %v4681 = vld [vmem:[#allocation3 + $0x58] sm:$0xff]
        %v4682 = vld [vmem:[#allocation3 + $0x60] sm:$0xff]
        %v4683 = vld [vmem:[#allocation3 + $0x68] sm:$0xff]
        %v4684 = vld [vmem:[#allocation3 + $0x70] sm:$0xff]
        %v4685 = vld [vmem:[#allocation3 + $0x78] sm:$0xff]
        %v4686 = vld [vmem:[#allocation3 + $0x80] sm:$0xff]
        %v4687 = vld [vmem:[#allocation3 + $0x88] sm:$0xff]
        %v4688 = vld [vmem:[#allocation3 + $0x90] sm:$0xff]
        %v4689 = vld [vmem:[#allocation3 + $0x98] sm:$0xff]
        %v4690 = vld [vmem:[#allocation3 + $0xa0] sm:$0xff]
        %v4691 = vld [vmem:[#allocation3 + $0xa8] sm:$0xff]
        %v4692 = vld [vmem:[#allocation3 + $0xb0] sm:$0xff]
        %v4693 = vld [vmem:[#allocation3 + $0xb8] sm:$0xff]
        %v4694 = vld [vmem:[#allocation3 + $0xc0] sm:$0xff]
        %v4695 = vld [vmem:[#allocation3 + $0xc8] sm:$0xff]
        %v4696 = vld [vmem:[#allocation3 + $0xd0] sm:$0xff]
        %v4697 = vld [vmem:[#allocation3 + $0xd8] sm:$0xff]
        %v4698 = vld [vmem:[#allocation3 + $0xe0] sm:$0xff]
        %v4699 = vld [vmem:[#allocation3 + $0xe8] sm:$0xff]
        %v4700 = vld [vmem:[#allocation3 + $0xf0] sm:$0xff]
        %v4701 = vld [vmem:[#allocation3 + $0xf8] sm:$0xff]
        %v4702 = vld [vmem:[#allocation3 + $0x100] sm:$0xff]
        %v4703 = vld [vmem:[#allocation3 + $0x108] sm:$0xff]
        %v4704 = vld [vmem:[#allocation3 + $0x110] sm:$0xff]
        %v4705 = vld [vmem:[#allocation3 + $0x118] sm:$0xff]
        %v4706 = vld [vmem:[#allocation3 + $0x120] sm:$0xff]
        %v4707 = vld [vmem:[#allocation3 + $0x128] sm:$0xff]
        %v4708 = vld [vmem:[#allocation3 + $0x130] sm:$0xff]
        %v4709 = vld [vmem:[#allocation3 + $0x138] sm:$0xff]
        %v4710 = vld [vmem:[#allocation3 + $0x140] sm:$0xff]
        %v4711 = vld [vmem:[#allocation3 + $0x148] sm:$0xff]
        %v4712 = vld [vmem:[#allocation3 + $0x150] sm:$0xff]
        %v4713 = vld [vmem:[#allocation3 + $0x158] sm:$0xff]
        %v4714 = vld [vmem:[#allocation3 + $0x160] sm:$0xff]
        %v4715 = vld [vmem:[#allocation3 + $0x168] sm:$0xff]
        %v4716 = vld [vmem:[#allocation3 + $0x170] sm:$0xff]
        %v4717 = vld [vmem:[#allocation3 + $0x178] sm:$0xff]
        %v4718 = vld [vmem:[#allocation3 + $0x180] sm:$0xff]
        %v4719 = vld [vmem:[#allocation3 + $0x188] sm:$0xff]
        %v4720 = vld [vmem:[#allocation3 + $0x190] sm:$0xff]
        %v4721 = vld [vmem:[#allocation3 + $0x198] sm:$0xff]
        %v4722 = vld [vmem:[#allocation3 + $0x1a0] sm:$0xff]
        %v4723 = vld [vmem:[#allocation3 + $0x1a8] sm:$0xff]
        %v4724 = vld [vmem:[#allocation3 + $0x1b0] sm:$0xff]
        %v4725 = vld [vmem:[#allocation3 + $0x1b8] sm:$0xff]
        %v4726 = vld [vmem:[#allocation3 + $0x1c0] sm:$0xff]
        %v4727 = vld [vmem:[#allocation3 + $0x1c8] sm:$0xff]
        %v4728 = vld [vmem:[#allocation3 + $0x1d0] sm:$0xff]
        %v4729 = vld [vmem:[#allocation3 + $0x1d8] sm:$0xff]
        %v4730 = vld [vmem:[#allocation3 + $0x1e0] sm:$0xff]
        %v4731 = vld [vmem:[#allocation3 + $0x1e8] sm:$0xff]
        %v4732 = vld [vmem:[#allocation3 + $0x1f0] sm:$0xff]
        %v4733 = vld [vmem:[#allocation3 + $0x1f8] sm:$0xff]
        %v4734 = vld [vmem:[#allocation3 + $0x200] sm:$0xff]
        %v4735 = vld [vmem:[#allocation3 + $0x208] sm:$0xff]
        %v4736 = vld [vmem:[#allocation3 + $0x210] sm:$0xff]
        %v4737 = vld [vmem:[#allocation3 + $0x218] sm:$0xff]
        %v4738 = vld [vmem:[#allocation3 + $0x220] sm:$0xff]
        %v4739 = vld [vmem:[#allocation3 + $0x228] sm:$0xff]
        %v4740 = vld [vmem:[#allocation3 + $0x230] sm:$0xff]
        %v4741 = vld [vmem:[#allocation3 + $0x238] sm:$0xff]
        %v4742 = vld [vmem:[#allocation10] sm:$0xf]
        %v4743 = vld [vmem:[#allocation10 + $0x4] sm:$0xf]
        %v4744 = vld [vmem:[#allocation10 + $0x8] sm:$0xf]
        %v4745 = vld [vmem:[#allocation10 + $0xc] sm:$0xf]
        %v4746 = vld [vmem:[#allocation10 + $0x10] sm:$0xf]
        %v4747 = vld [vmem:[#allocation10 + $0x14] sm:$0xf]
        %v4748 = vld [vmem:[#allocation10 + $0x18] sm:$0xf]
        %v4749 = vld [vmem:[#allocation10 + $0x1c] sm:$0xf]
        %v4750 = vld [vmem:[#allocation10 + $0x20] sm:$0xf]
        %v4751 = vld [vmem:[#allocation10 + $0x24] sm:$0xf]
        %v4752 = vld [vmem:[#allocation10 + $0x28] sm:$0xf]
        %v4753 = vld [vmem:[#allocation10 + $0x2c] sm:$0xf]
        %v4754 = vld [vmem:[#allocation10 + $0x30] sm:$0xf]
        %v4755 = vld [vmem:[#allocation10 + $0x34] sm:$0xf]
        %v4756 = vld [vmem:[#allocation10 + $0x38] sm:$0xf]
        %v4757 = vld [vmem:[#allocation10 + $0x3c] sm:$0xf]
        %v4758 = vld [vmem:[#allocation10 + $0x40] sm:$0xf]
        %v4759 = vld [vmem:[#allocation10 + $0x44] sm:$0xf]
        %v4760 = vld [vmem:[#allocation10 + $0x48] sm:$0xf]
        %v4761 = vld [vmem:[#allocation10 + $0x4c] sm:$0xf]
        %v4762 = vld [vmem:[#allocation10 + $0x50] sm:$0xf]
        %v4763 = vld [vmem:[#allocation10 + $0x54] sm:$0xf]
        %v4764 = vld [vmem:[#allocation10 + $0x58] sm:$0xf]
        %v4765 = vld [vmem:[#allocation10 + $0x5c] sm:$0xf]
        %v4766 = vld [vmem:[#allocation10 + $0x60] sm:$0xf]
        %v4767 = vld [vmem:[#allocation10 + $0x64] sm:$0xf]
        %v4768 = vld [vmem:[#allocation10 + $0x68] sm:$0xf]
        %v4769 = vld [vmem:[#allocation10 + $0x6c] sm:$0xf]
        %v4770 = vld [vmem:[#allocation10 + $0x70] sm:$0xf]
        %v4771 = vld [vmem:[#allocation10 + $0x74] sm:$0xf]
        %v4772 = vld [vmem:[#allocation10 + $0x78] sm:$0xf]
        %v4773 = vld [vmem:[#allocation10 + $0x7c] sm:$0xf]
        %v4774 = vld [vmem:[#allocation10 + $0x80] sm:$0xf]
        %v4775 = vld [vmem:[#allocation10 + $0x84] sm:$0xf]
        %v4776 = vld [vmem:[#allocation10 + $0x88] sm:$0xf]
        %v4777 = vld [vmem:[#allocation10 + $0x8c] sm:$0xf]
        %v4778 = vld [vmem:[#allocation10 + $0x90] sm:$0xf]
        %v4779 = vld [vmem:[#allocation10 + $0x94] sm:$0xf]
        %v4780 = vld [vmem:[#allocation10 + $0x98] sm:$0xf]
        %v4781 = vld [vmem:[#allocation10 + $0x9c] sm:$0xf]
        %v4782 = vld [vmem:[#allocation10 + $0xa0] sm:$0xf]
        %v4783 = vld [vmem:[#allocation10 + $0xa4] sm:$0xf]
        %v4784 = vld [vmem:[#allocation10 + $0xa8] sm:$0xf]
        %v4785 = vld [vmem:[#allocation10 + $0xac] sm:$0xf]
        %v4786 = vld [vmem:[#allocation10 + $0xb0] sm:$0xf]
        %v4787 = vld [vmem:[#allocation10 + $0xb4] sm:$0xf]
        %v4788 = vld [vmem:[#allocation10 + $0xb8] sm:$0xf]
        %v4789 = vld [vmem:[#allocation10 + $0xbc] sm:$0xf]
        %v4790 = vld [vmem:[#allocation10 + $0xc0] sm:$0xf]
        %v4791 = vld [vmem:[#allocation10 + $0xc4] sm:$0xf]
        %v4792 = vld [vmem:[#allocation10 + $0xc8] sm:$0xf]
        %v4793 = vld [vmem:[#allocation10 + $0xcc] sm:$0xf]
        %v4794 = vld [vmem:[#allocation10 + $0xd0] sm:$0xf]
        %v4795 = vld [vmem:[#allocation10 + $0xd4] sm:$0xf]
        %v4796 = vld [vmem:[#allocation10 + $0xd8] sm:$0xf]
        %v4797 = vld [vmem:[#allocation10 + $0xdc] sm:$0xf]
        %v4798 = vld [vmem:[#allocation10 + $0xe0] sm:$0xf]
        %v4799 = vld [vmem:[#allocation10 + $0xe4] sm:$0xf]
        %v4800 = vld [vmem:[#allocation10 + $0xe8] sm:$0xf]
        %v4801 = vld [vmem:[#allocation10 + $0xec] sm:$0xf]
        %v4802 = vld [vmem:[#allocation10 + $0xf0] sm:$0xf]
        %v4803 = vld [vmem:[#allocation10 + $0xf4] sm:$0xf]
        %v4804 = vld [vmem:[#allocation10 + $0xf8] sm:$0xf]
        %v4805 = vld [vmem:[#allocation10 + $0xfc] sm:$0xf]
        %v4806 = vld [vmem:[#allocation10 + $0x100] sm:$0xf]
        %v4807 = vld [vmem:[#allocation10 + $0x104] sm:$0xf]
        %v4808 = vld [vmem:[#allocation10 + $0x108] sm:$0xf]
        %v4809 = vld [vmem:[#allocation10 + $0x10c] sm:$0xf]
        %v4810 = vld [vmem:[#allocation10 + $0x110] sm:$0xf]
        %v4811 = vld [vmem:[#allocation10 + $0x114] sm:$0xf]
        %v4812 = vld [vmem:[#allocation10 + $0x118] sm:$0xf]
        %v4813 = vld [vmem:[#allocation10 + $0x11c] sm:$0xf]
        %v4814 = vld [vmem:[#allocation10 + $0x120] sm:$0xf]
        %v4815 = vld [vmem:[#allocation10 + $0x124] sm:$0xf]
        %v4816 = vld [vmem:[#allocation10 + $0x128] sm:$0xf]
        %v4817 = vld [vmem:[#allocation10 + $0x12c] sm:$0xf]
        %v4818 = vld [vmem:[#allocation10 + $0x130] sm:$0xf]
        %v4819 = vld [vmem:[#allocation10 + $0x134] sm:$0xf]
        %v4820 = vld [vmem:[#allocation10 + $0x138] sm:$0xf]
        %v4821 = vld [vmem:[#allocation10 + $0x13c] sm:$0xf]
        %v4822 = vld [vmem:[#allocation10 + $0x140] sm:$0xf]
        %v4823 = vld [vmem:[#allocation10 + $0x144] sm:$0xf]
        %v4824 = vld [vmem:[#allocation10 + $0x148] sm:$0xf]
        %v4825 = vld [vmem:[#allocation10 + $0x14c] sm:$0xf]
        %v4826 = vld [vmem:[#allocation10 + $0x150] sm:$0xf]
        %v4827 = vld [vmem:[#allocation10 + $0x154] sm:$0xf]
        %v4828 = vld [vmem:[#allocation10 + $0x158] sm:$0xf]
        %v4829 = vld [vmem:[#allocation10 + $0x15c] sm:$0xf]
        %v4830 = vld [vmem:[#allocation10 + $0x160] sm:$0xf]
        %v4831 = vld [vmem:[#allocation10 + $0x164] sm:$0xf]
        %v4832 = vld [vmem:[#allocation10 + $0x168] sm:$0xf]
        %v4833 = vld [vmem:[#allocation10 + $0x16c] sm:$0xf]
        %v4834 = vld [vmem:[#allocation10 + $0x170] sm:$0xf]
        %v4835 = vld [vmem:[#allocation10 + $0x174] sm:$0xf]
        %v4836 = vld [vmem:[#allocation10 + $0x178] sm:$0xf]
        %v4837 = vld [vmem:[#allocation10 + $0x17c] sm:$0xf]
        %v4838 = vld [vmem:[#allocation10 + $0x180] sm:$0xf]
        %v4839 = vld [vmem:[#allocation10 + $0x184] sm:$0xf]
        %v4840 = vld [vmem:[#allocation10 + $0x188] sm:$0xf]
        %v4841 = vld [vmem:[#allocation10 + $0x18c] sm:$0xf]
        %v4842 = vld [vmem:[#allocation10 + $0x190] sm:$0xf]
        %v4843 = vld [vmem:[#allocation10 + $0x194] sm:$0xf]
        %v4844 = vld [vmem:[#allocation10 + $0x198] sm:$0xf]
        %v4845 = vld [vmem:[#allocation10 + $0x19c] sm:$0xf]
        %v4846 = vld [vmem:[#allocation10 + $0x1a0] sm:$0xf]
        %v4847 = vld [vmem:[#allocation10 + $0x1a4] sm:$0xf]
        %v4848 = vld [vmem:[#allocation10 + $0x1a8] sm:$0xf]
        %v4849 = vld [vmem:[#allocation10 + $0x1ac] sm:$0xf]
        %v4850 = vld [vmem:[#allocation10 + $0x1b0] sm:$0xf]
        %v4851 = vld [vmem:[#allocation10 + $0x1b4] sm:$0xf]
        %v4852 = vld [vmem:[#allocation10 + $0x1b8] sm:$0xf]
        %v4853 = vld [vmem:[#allocation10 + $0x1bc] sm:$0xf]
        %v4854 = vld [vmem:[#allocation10 + $0x1c0] sm:$0xf]
        %v4855 = vld [vmem:[#allocation10 + $0x1c4] sm:$0xf]
        %v4856 = vld [vmem:[#allocation10 + $0x1c8] sm:$0xf]
        %v4857 = vld [vmem:[#allocation10 + $0x1cc] sm:$0xf]
        %v4858 = vld [vmem:[#allocation10 + $0x1d0] sm:$0xf]
        %v4859 = vld [vmem:[#allocation10 + $0x1d4] sm:$0xf]
        %v4860 = vld [vmem:[#allocation10 + $0x1d8] sm:$0xf]
        %v4861 = vld [vmem:[#allocation10 + $0x1dc] sm:$0xf]
        %v4862 = vld [vmem:[#allocation10 + $0x1e0] sm:$0xf]
        %v4863 = vld [vmem:[#allocation10 + $0x1e4] sm:$0xf]
        %v4864 = vld [vmem:[#allocation10 + $0x1e8] sm:$0xf]
        %v4865 = vld [vmem:[#allocation10 + $0x1ec] sm:$0xf]
        %v4866 = vld [vmem:[#allocation10 + $0x1f0] sm:$0xf]
        %v4867 = vld [vmem:[#allocation10 + $0x1f4] sm:$0xf]
        %v4868 = vld [vmem:[#allocation10 + $0x1f8] sm:$0xf]
        %v4869 = vld [vmem:[#allocation10 + $0x1fc] sm:$0xf]
        %v4870 = vld [vmem:[#allocation10 + $0x200] sm:$0xf]
        %v4871 = vld [vmem:[#allocation10 + $0x204] sm:$0xf]
        %v4872 = vld [vmem:[#allocation10 + $0x208] sm:$0xf]
        %v4873 = vld [vmem:[#allocation10 + $0x20c] sm:$0xf]
        %v4874 = vld [vmem:[#allocation10 + $0x210] sm:$0xf]
        %v4875 = vld [vmem:[#allocation10 + $0x214] sm:$0xf]
        %v4876 = vld [vmem:[#allocation10 + $0x218] sm:$0xf]
        %v4877 = vld [vmem:[#allocation10 + $0x21c] sm:$0xf]
        %v4878 = vld [vmem:[#allocation10 + $0x220] sm:$0xf]
        %v4879 = vld [vmem:[#allocation10 + $0x224] sm:$0xf]
        %v4880 = vld [vmem:[#allocation10 + $0x228] sm:$0xf]
        %v4881 = vld [vmem:[#allocation10 + $0x22c] sm:$0xf]
        %v4882 = vld [vmem:[#allocation10 + $0x230] sm:$0xf]
        %v4883 = vld [vmem:[#allocation10 + $0x234] sm:$0xf]
        %v4884 = vld [vmem:[#allocation10 + $0x238] sm:$0xf]
        %v4885 = vld [vmem:[#allocation10 + $0x23c] sm:$0xf]
        %v5030 = vunpack.c.l.b16 %v4742
        %v5031 = vunpack.c.l.b16 %v4743
        %v5032 = vunpack.c.l.b16 %v4744
        %v5033 = vunpack.c.l.b16 %v4745
        %v5034 = vunpack.c.l.b16 %v4746
        %v5035 = vunpack.c.l.b16 %v4747
        %v5036 = vunpack.c.l.b16 %v4748
        %v5037 = vunpack.c.l.b16 %v4749
        %v5038 = vunpack.c.l.b16 %v4750
        %v5039 = vunpack.c.l.b16 %v4751
        %v5040 = vunpack.c.l.b16 %v4752
        %v5041 = vunpack.c.l.b16 %v4753
        %v5042 = vunpack.c.l.b16 %v4754
        %v5043 = vunpack.c.l.b16 %v4755
        %v5044 = vunpack.c.l.b16 %v4756
        %v5045 = vunpack.c.l.b16 %v4757
        %v5046 = vunpack.c.l.b16 %v4758
        %v5047 = vunpack.c.l.b16 %v4759
        %v5048 = vunpack.c.l.b16 %v4760
        %v5049 = vunpack.c.l.b16 %v4761
        %v5050 = vunpack.c.l.b16 %v4762
        %v5051 = vunpack.c.l.b16 %v4763
        %v5052 = vunpack.c.l.b16 %v4764
        %v5053 = vunpack.c.l.b16 %v4765
        %v5054 = vunpack.c.l.b16 %v4766
        %v5055 = vunpack.c.l.b16 %v4767
        %v5056 = vunpack.c.l.b16 %v4768
        %v5057 = vunpack.c.l.b16 %v4769
        %v5058 = vunpack.c.l.b16 %v4770
        %v5059 = vunpack.c.l.b16 %v4771
        %v5060 = vunpack.c.l.b16 %v4772
        %v5061 = vunpack.c.l.b16 %v4773
        %v5062 = vunpack.c.l.b16 %v4774
        %v5063 = vunpack.c.l.b16 %v4775
        %v5064 = vunpack.c.l.b16 %v4776
        %v5065 = vunpack.c.l.b16 %v4777
        %v5066 = vunpack.c.l.b16 %v4778
        %v5067 = vunpack.c.l.b16 %v4779
        %v5068 = vunpack.c.l.b16 %v4780
        %v5069 = vunpack.c.l.b16 %v4781
        %v5070 = vunpack.c.l.b16 %v4782
        %v5071 = vunpack.c.l.b16 %v4783
        %v5072 = vunpack.c.l.b16 %v4784
        %v5073 = vunpack.c.l.b16 %v4785
        %v5074 = vunpack.c.l.b16 %v4786
        %v5075 = vunpack.c.l.b16 %v4787
        %v5076 = vunpack.c.l.b16 %v4788
        %v5077 = vunpack.c.l.b16 %v4789
        %v5078 = vunpack.c.l.b16 %v4790
        %v5079 = vunpack.c.l.b16 %v4791
        %v5080 = vunpack.c.l.b16 %v4792
        %v5081 = vunpack.c.l.b16 %v4793
        %v5082 = vunpack.c.l.b16 %v4794
        %v5083 = vunpack.c.l.b16 %v4795
        %v5084 = vunpack.c.l.b16 %v4796
        %v5085 = vunpack.c.l.b16 %v4797
        %v5086 = vunpack.c.l.b16 %v4798
        %v5087 = vunpack.c.l.b16 %v4799
        %v5088 = vunpack.c.l.b16 %v4800
        %v5089 = vunpack.c.l.b16 %v4801
        %v5090 = vunpack.c.l.b16 %v4802
        %v5091 = vunpack.c.l.b16 %v4803
        %v5092 = vunpack.c.l.b16 %v4804
        %v5093 = vunpack.c.l.b16 %v4805
        %v5094 = vunpack.c.l.b16 %v4806
        %v5095 = vunpack.c.l.b16 %v4807
        %v5096 = vunpack.c.l.b16 %v4808
        %v5097 = vunpack.c.l.b16 %v4809
        %v5098 = vunpack.c.l.b16 %v4810
        %v5099 = vunpack.c.l.b16 %v4811
        %v5100 = vunpack.c.l.b16 %v4812
        %v5101 = vunpack.c.l.b16 %v4813
        %v5102 = vunpack.c.l.b16 %v4814
        %v5103 = vunpack.c.l.b16 %v4815
        %v5104 = vunpack.c.l.b16 %v4816
        %v5105 = vunpack.c.l.b16 %v4817
        %v5106 = vunpack.c.l.b16 %v4818
        %v5107 = vunpack.c.l.b16 %v4819
        %v5108 = vunpack.c.l.b16 %v4820
        %v5109 = vunpack.c.l.b16 %v4821
        %v5110 = vunpack.c.l.b16 %v4822
        %v5111 = vunpack.c.l.b16 %v4823
        %v5112 = vunpack.c.l.b16 %v4824
        %v5113 = vunpack.c.l.b16 %v4825
        %v5114 = vunpack.c.l.b16 %v4826
        %v5115 = vunpack.c.l.b16 %v4827
        %v5116 = vunpack.c.l.b16 %v4828
        %v5117 = vunpack.c.l.b16 %v4829
        %v5118 = vunpack.c.l.b16 %v4830
        %v5119 = vunpack.c.l.b16 %v4831
        %v5120 = vunpack.c.l.b16 %v4832
        %v5121 = vunpack.c.l.b16 %v4833
        %v5122 = vunpack.c.l.b16 %v4834
        %v5123 = vunpack.c.l.b16 %v4835
        %v5124 = vunpack.c.l.b16 %v4836
        %v5125 = vunpack.c.l.b16 %v4837
        %v5126 = vunpack.c.l.b16 %v4838
        %v5127 = vunpack.c.l.b16 %v4839
        %v5128 = vunpack.c.l.b16 %v4840
        %v5129 = vunpack.c.l.b16 %v4841
        %v5130 = vunpack.c.l.b16 %v4842
        %v5131 = vunpack.c.l.b16 %v4843
        %v5132 = vunpack.c.l.b16 %v4844
        %v5133 = vunpack.c.l.b16 %v4845
        %v5134 = vunpack.c.l.b16 %v4846
        %v5135 = vunpack.c.l.b16 %v4847
        %v5136 = vunpack.c.l.b16 %v4848
        %v5137 = vunpack.c.l.b16 %v4849
        %v5138 = vunpack.c.l.b16 %v4850
        %v5139 = vunpack.c.l.b16 %v4851
        %v5140 = vunpack.c.l.b16 %v4852
        %v5141 = vunpack.c.l.b16 %v4853
        %v5142 = vunpack.c.l.b16 %v4854
        %v5143 = vunpack.c.l.b16 %v4855
        %v5144 = vunpack.c.l.b16 %v4856
        %v5145 = vunpack.c.l.b16 %v4857
        %v5146 = vunpack.c.l.b16 %v4858
        %v5147 = vunpack.c.l.b16 %v4859
        %v5148 = vunpack.c.l.b16 %v4860
        %v5149 = vunpack.c.l.b16 %v4861
        %v5150 = vunpack.c.l.b16 %v4862
        %v5151 = vunpack.c.l.b16 %v4863
        %v5152 = vunpack.c.l.b16 %v4864
        %v5153 = vunpack.c.l.b16 %v4865
        %v5154 = vunpack.c.l.b16 %v4866
        %v5155 = vunpack.c.l.b16 %v4867
        %v5156 = vunpack.c.l.b16 %v4868
        %v5157 = vunpack.c.l.b16 %v4869
        %v5158 = vunpack.c.l.b16 %v4870
        %v5159 = vunpack.c.l.b16 %v4871
        %v5160 = vunpack.c.l.b16 %v4872
        %v5161 = vunpack.c.l.b16 %v4873
        %v5162 = vunpack.c.l.b16 %v4874
        %v5163 = vunpack.c.l.b16 %v4875
        %v5164 = vunpack.c.l.b16 %v4876
        %v5165 = vunpack.c.l.b16 %v4877
        %v5166 = vunpack.c.l.b16 %v4878
        %v5167 = vunpack.c.l.b16 %v4879
        %v5168 = vunpack.c.l.b16 %v4880
        %v5169 = vunpack.c.l.b16 %v4881
        %v5170 = vunpack.c.l.b16 %v4882
        %v5171 = vunpack.c.l.b16 %v4883
        %v5172 = vunpack.c.l.b16 %v4884
        %v5173 = vunpack.c.l.b16 %v4885
        %v5174 = vpack.c.b16 %v5031, %v5030
        %v5175 = vpack.c.b16 %v5033, %v5032
        %v5176 = vpack.c.b16 %v5035, %v5034
        %v5177 = vpack.c.b16 %v5037, %v5036
        %v5178 = vpack.c.b16 %v5039, %v5038
        %v5179 = vpack.c.b16 %v5041, %v5040
        %v5180 = vpack.c.b16 %v5043, %v5042
        %v5181 = vpack.c.b16 %v5045, %v5044
        %v5182 = vpack.c.b16 %v5047, %v5046
        %v5183 = vpack.c.b16 %v5049, %v5048
        %v5184 = vpack.c.b16 %v5051, %v5050
        %v5185 = vpack.c.b16 %v5053, %v5052
        %v5186 = vpack.c.b16 %v5055, %v5054
        %v5187 = vpack.c.b16 %v5057, %v5056
        %v5188 = vpack.c.b16 %v5059, %v5058
        %v5189 = vpack.c.b16 %v5061, %v5060
        %v5190 = vpack.c.b16 %v5063, %v5062
        %v5191 = vpack.c.b16 %v5065, %v5064
        %v5192 = vpack.c.b16 %v5067, %v5066
        %v5193 = vpack.c.b16 %v5069, %v5068
        %v5194 = vpack.c.b16 %v5071, %v5070
        %v5195 = vpack.c.b16 %v5073, %v5072
        %v5196 = vpack.c.b16 %v5075, %v5074
        %v5197 = vpack.c.b16 %v5077, %v5076
        %v5198 = vpack.c.b16 %v5079, %v5078
        %v5199 = vpack.c.b16 %v5081, %v5080
        %v5200 = vpack.c.b16 %v5083, %v5082
        %v5201 = vpack.c.b16 %v5085, %v5084
        %v5202 = vpack.c.b16 %v5087, %v5086
        %v5203 = vpack.c.b16 %v5089, %v5088
        %v5204 = vpack.c.b16 %v5091, %v5090
        %v5205 = vpack.c.b16 %v5093, %v5092
        %v5206 = vpack.c.b16 %v5095, %v5094
        %v5207 = vpack.c.b16 %v5097, %v5096
        %v5208 = vpack.c.b16 %v5099, %v5098
        %v5209 = vpack.c.b16 %v5101, %v5100
        %v5210 = vpack.c.b16 %v5103, %v5102
        %v5211 = vpack.c.b16 %v5105, %v5104
        %v5212 = vpack.c.b16 %v5107, %v5106
        %v5213 = vpack.c.b16 %v5109, %v5108
        %v5214 = vpack.c.b16 %v5111, %v5110
        %v5215 = vpack.c.b16 %v5113, %v5112
        %v5216 = vpack.c.b16 %v5115, %v5114
        %v5217 = vpack.c.b16 %v5117, %v5116
        %v5218 = vpack.c.b16 %v5119, %v5118
        %v5219 = vpack.c.b16 %v5121, %v5120
        %v5220 = vpack.c.b16 %v5123, %v5122
        %v5221 = vpack.c.b16 %v5125, %v5124
        %v5222 = vpack.c.b16 %v5127, %v5126
        %v5223 = vpack.c.b16 %v5129, %v5128
        %v5224 = vpack.c.b16 %v5131, %v5130
        %v5225 = vpack.c.b16 %v5133, %v5132
        %v5226 = vpack.c.b16 %v5135, %v5134
        %v5227 = vpack.c.b16 %v5137, %v5136
        %v5228 = vpack.c.b16 %v5139, %v5138
        %v5229 = vpack.c.b16 %v5141, %v5140
        %v5230 = vpack.c.b16 %v5143, %v5142
        %v5231 = vpack.c.b16 %v5145, %v5144
        %v5232 = vpack.c.b16 %v5147, %v5146
        %v5233 = vpack.c.b16 %v5149, %v5148
        %v5234 = vpack.c.b16 %v5151, %v5150
        %v5235 = vpack.c.b16 %v5153, %v5152
        %v5236 = vpack.c.b16 %v5155, %v5154
        %v5237 = vpack.c.b16 %v5157, %v5156
        %v5238 = vpack.c.b16 %v5159, %v5158
        %v5239 = vpack.c.b16 %v5161, %v5160
        %v5240 = vpack.c.b16 %v5163, %v5162
        %v5241 = vpack.c.b16 %v5165, %v5164
        %v5242 = vpack.c.b16 %v5167, %v5166
        %v5243 = vpack.c.b16 %v5169, %v5168
        %v5244 = vpack.c.b16 %v5171, %v5170
        %v5245 = vpack.c.b16 %v5173, %v5172
        %5318 = vmatprep.subr.bf16.mxu0 0
        %5319 = vmatpush1.bf16.msra.mxu0 %v5174
        %5320 = vmatprep.subr.bf16.mxu0 0
        %5321 = vmatpush1.bf16.msra.mxu0 %v5175
        %5322 = vmatprep.subr.bf16.mxu0 0
        %5323 = vmatpush1.bf16.msra.mxu0 %v5176
        %5324 = vmatprep.subr.bf16.mxu0 0
        %5325 = vmatpush1.bf16.msra.mxu0 %v5177
        %5326 = vmatprep.subr.bf16.mxu0 0
        %5327 = vmatpush1.bf16.msra.mxu0 %v5178
        %5328 = vmatprep.subr.bf16.mxu0 0
        %5329 = vmatpush1.bf16.msra.mxu0 %v5179
        %5330 = vmatprep.subr.bf16.mxu0 0
        %5331 = vmatpush1.bf16.msra.mxu0 %v5180
        %5332 = vmatprep.subr.bf16.mxu0 0
        %5333 = vmatpush1.bf16.msra.mxu0 %v5181
        %5334 = vmatprep.subr.bf16.mxu0 0
        %5335 = vmatpush1.bf16.msra.mxu0 %v5182
        %5336 = vmatprep.subr.bf16.mxu0 0
        %5337 = vmatpush1.bf16.msra.mxu0 %v5183
        %5338 = vmatprep.subr.bf16.mxu0 0
        %5339 = vmatpush1.bf16.msra.mxu0 %v5184
        %5340 = vmatprep.subr.bf16.mxu0 0
        %5341 = vmatpush1.bf16.msra.mxu0 %v5185
        %5342 = vmatprep.subr.bf16.mxu0 0
        %5343 = vmatpush1.bf16.msra.mxu0 %v5186
        %5344 = vmatprep.subr.bf16.mxu0 0
        %5345 = vmatpush1.bf16.msra.mxu0 %v5187
        %5346 = vmatprep.subr.bf16.mxu0 0
        %5347 = vmatpush1.bf16.msra.mxu0 %v5188
        %5348 = vmatprep.subr.bf16.mxu0 0
        %5349 = vmatpush1.bf16.msra.mxu0 %v5189
        %5350 = vmatprep.mubr.bf16.mxu0 %v4671
        %5351 = vmatmul.mubr.bf16.gmra.mrb[0].mxu0 %v4670
        %v5352 = vpop.f32.mrb[0].mxu0
        %v5353 = vadd.f32 0.0, %v5352
        %v5354 = vpop.f32.mrb[0].mxu0
        %v5355 = vpop.f32.mrb[0].mxu0
        %v5356 = vadd.f32 0.0, %v5355
        %v5357 = vpop.f32.mrb[0].mxu0
        %5358 = vmatprep.mubr.bf16.mxu0 %v4680
        %5359 = vmatmul.mubr.bf16.gmra.mrb[0].mxu0 %v4679
        %v5360 = vpop.f32.mrb[0].mxu0
        %v5361 = vadd.f32 0.0, %v5360
        %v5362 = vpop.f32.mrb[0].mxu0
        %v5363 = vpop.f32.mrb[0].mxu0
        %v5364 = vadd.f32 0.0, %v5363
        %v5365 = vpop.f32.mrb[0].mxu0
        %5366 = vmatprep.mubr.bf16.mxu0 %v4689
        %5367 = vmatmul.mubr.bf16.gmra.mrb[0].mxu0 %v4688
        %v5368 = vpop.f32.mrb[0].mxu0
        %v5369 = vadd.f32 0.0, %v5368
        %v5370 = vpop.f32.mrb[0].mxu0
        %v5371 = vpop.f32.mrb[0].mxu0
        %v5372 = vadd.f32 0.0, %v5371
        %v5373 = vpop.f32.mrb[0].mxu0
        %5374 = vmatprep.mubr.bf16.mxu0 %v4698
        %5375 = vmatmul.mubr.bf16.gmra.mrb[0].mxu0 %v4697
        %v5376 = vpop.f32.mrb[0].mxu0
        %v5377 = vadd.f32 0.0, %v5376
        %v5378 = vpop.f32.mrb[0].mxu0
        %v5379 = vpop.f32.mrb[0].mxu0
        %v5380 = vadd.f32 0.0, %v5379
        %v5381 = vpop.f32.mrb[0].mxu0
        %5382 = vmatprep.mubr.bf16.mxu0 %v4707
        %5383 = vmatmul.mubr.bf16.gmra.mrb[0].mxu0 %v4706
        %v5384 = vpop.f32.mrb[0].mxu0
        %v5385 = vadd.f32 0.0, %v5384
        %v5386 = vpop.f32.mrb[0].mxu0
        %v5387 = vpop.f32.mrb[0].mxu0
        %v5388 = vadd.f32 0.0, %v5387
        %v5389 = vpop.f32.mrb[0].mxu0
        %5390 = vmatprep.mubr.bf16.mxu0 %v4716
        %5391 = vmatmul.mubr.bf16.gmra.mrb[0].mxu0 %v4715
        %v5392 = vpop.f32.mrb[0].mxu0
        %v5393 = vadd.f32 0.0, %v5392
        %v5394 = vpop.f32.mrb[0].mxu0
        %v5395 = vpop.f32.mrb[0].mxu0
        %v5396 = vadd.f32 0.0, %v5395
        %v5397 = vpop.f32.mrb[0].mxu0
        %5398 = vmatprep.mubr.bf16.mxu0 %v4725
        %5399 = vmatmul.mubr.bf16.gmra.mrb[0].mxu0 %v4724
        %v5400 = vpop.f32.mrb[0].mxu0
        %v5401 = vadd.f32 0.0, %v5400
        %v5402 = vpop.f32.mrb[0].mxu0
        %v5403 = vpop.f32.mrb[0].mxu0
        %v5404 = vadd.f32 0.0, %v5403
        %v5405 = vpop.f32.mrb[0].mxu0
        %5406 = vmatprep.mubr.bf16.mxu0 %v4734
        %5407 = vmatmul.mubr.bf16.gmra.mrb[0].mxu0 %v4733
        %v5408 = vpop.f32.mrb[0].mxu0
        %v5409 = vadd.f32 0.0, %v5408
        %v5410 = vpop.f32.mrb[0].mxu0
        %v5411 = vpop.f32.mrb[0].mxu0
        %v5412 = vadd.f32 0.0, %v5411
        %v5413 = vpop.f32.mrb[0].mxu0
        %5414 = vdwg.mxu0
        %5415 = vmatprep.subr.bf16.mxu0 0
        %5416 = vmatpush1.bf16.msra.mxu0 %v5190
        %5417 = vmatprep.subr.bf16.mxu0 0
        %5418 = vmatpush1.bf16.msra.mxu0 %v5191
        %5419 = vmatprep.subr.bf16.mxu0 0
        %5420 = vmatpush1.bf16.msra.mxu0 %v5192
        %5421 = vmatprep.subr.bf16.mxu0 0
        %5422 = vmatpush1.bf16.msra.mxu0 %v5193
        %5423 = vmatprep.subr.bf16.mxu0 0
        %5424 = vmatpush1.bf16.msra.mxu0 %v5194
        %5425 = vmatprep.subr.bf16.mxu0 0
        %5426 = vmatpush1.bf16.msra.mxu0 %v5195
        %5427 = vmatprep.subr.bf16.mxu0 0
        %5428 = vmatpush1.bf16.msra.mxu0 %v5196
        %5429 = vmatprep.subr.bf16.mxu0 0
        %5430 = vmatpush1.bf16.msra.mxu0 %v5197
        %5431 = vmatprep.subr.bf16.mxu0 0
        %5432 = vmatpush1.bf16.msra.mxu0 %v5198
        %5433 = vmatprep.subr.bf16.mxu0 0
        %5434 = vmatpush1.bf16.msra.mxu0 %v5199
        %5435 = vmatprep.subr.bf16.mxu0 0
        %5436 = vmatpush1.bf16.msra.mxu0 %v5200
        %5437 = vmatprep.subr.bf16.mxu0 0
        %5438 = vmatpush1.bf16.msra.mxu0 %v5201
        %5439 = vmatprep.subr.bf16.mxu0 0
        %5440 = vmatpush1.bf16.msra.mxu0 %v5202
        %5441 = vmatprep.subr.bf16.mxu0 0
        %5442 = vmatpush1.bf16.msra.mxu0 %v5203
        %5443 = vmatprep.subr.bf16.mxu0 0
        %5444 = vmatpush1.bf16.msra.mxu0 %v5204
        %5445 = vmatprep.subr.bf16.mxu0 0
        %5446 = vmatpush1.bf16.msra.mxu0 %v5205
        %5447 = vmatprep.mubr.bf16.mxu0 %v4673
        %5448 = vmatmul.mubr.bf16.gmra.mrb[0].mxu0 %v4672
        %v5449 = vpop.f32.mrb[0].mxu0
        %v5450 = vadd.f32 %v5353, %v5449
        %v5451 = vpop.f32.mrb[0].mxu0
        %v5452 = vpop.f32.mrb[0].mxu0
        %v5453 = vadd.f32 %v5356, %v5452
        %v5454 = vpop.f32.mrb[0].mxu0
        %5455 = vmatprep.mubr.bf16.mxu0 %v4682
        %5456 = vmatmul.mubr.bf16.gmra.mrb[0].mxu0 %v4681
        %v5457 = vpop.f32.mrb[0].mxu0
        %v5458 = vadd.f32 %v5361, %v5457
        %v5459 = vpop.f32.mrb[0].mxu0
        %v5460 = vpop.f32.mrb[0].mxu0
        %v5461 = vadd.f32 %v5364, %v5460
        %v5462 = vpop.f32.mrb[0].mxu0
        %5463 = vmatprep.mubr.bf16.mxu0 %v4691
        %5464 = vmatmul.mubr.bf16.gmra.mrb[0].mxu0 %v4690
        %v5465 = vpop.f32.mrb[0].mxu0
        %v5466 = vadd.f32 %v5369, %v5465
        %v5467 = vpop.f32.mrb[0].mxu0
        %v5468 = vpop.f32.mrb[0].mxu0
        %v5469 = vadd.f32 %v5372, %v5468
        %v5470 = vpop.f32.mrb[0].mxu0
        %5471 = vmatprep.mubr.bf16.mxu0 %v4700
        %5472 = vmatmul.mubr.bf16.gmra.mrb[0].mxu0 %v4699
        %v5473 = vpop.f32.mrb[0].mxu0
        %v5474 = vadd.f32 %v5377, %v5473
        %v5475 = vpop.f32.mrb[0].mxu0
        %v5476 = vpop.f32.mrb[0].mxu0
        %v5477 = vadd.f32 %v5380, %v5476
        %v5478 = vpop.f32.mrb[0].mxu0
        %5479 = vmatprep.mubr.bf16.mxu0 %v4709
        %5480 = vmatmul.mubr.bf16.gmra.mrb[0].mxu0 %v4708
        %v5481 = vpop.f32.mrb[0].mxu0
        %v5482 = vadd.f32 %v5385, %v5481
        %v5483 = vpop.f32.mrb[0].mxu0
        %v5484 = vpop.f32.mrb[0].mxu0
        %v5485 = vadd.f32 %v5388, %v5484
        %v5486 = vpop.f32.mrb[0].mxu0
        %5487 = vmatprep.mubr.bf16.mxu0 %v4718
        %5488 = vmatmul.mubr.bf16.gmra.mrb[0].mxu0 %v4717
        %v5489 = vpop.f32.mrb[0].mxu0
        %v5490 = vadd.f32 %v5393, %v5489
        %v5491 = vpop.f32.mrb[0].mxu0
        %v5492 = vpop.f32.mrb[0].mxu0
        %v5493 = vadd.f32 %v5396, %v5492
        %v5494 = vpop.f32.mrb[0].mxu0
        %5495 = vmatprep.mubr.bf16.mxu0 %v4727
        %5496 = vmatmul.mubr.bf16.gmra.mrb[0].mxu0 %v4726
        %v5497 = vpop.f32.mrb[0].mxu0
        %v5498 = vadd.f32 %v5401, %v5497
        %v5499 = vpop.f32.mrb[0].mxu0
        %v5500 = vpop.f32.mrb[0].mxu0
        %v5501 = vadd.f32 %v5404, %v5500
        %v5502 = vpop.f32.mrb[0].mxu0
        %5503 = vmatprep.mubr.bf16.mxu0 %v4736
        %5504 = vmatmul.mubr.bf16.gmra.mrb[0].mxu0 %v4735
        %v5505 = vpop.f32.mrb[0].mxu0
        %v5506 = vadd.f32 %v5409, %v5505
        %v5507 = vpop.f32.mrb[0].mxu0
        %v5508 = vpop.f32.mrb[0].mxu0
        %v5509 = vadd.f32 %v5412, %v5508
        %v5510 = vpop.f32.mrb[0].mxu0
        %5511 = vdwg.mxu0
        %5512 = vmatprep.subr.bf16.mxu0 0
        %5513 = vmatpush1.bf16.msra.mxu0 %v5206
        %5514 = vmatprep.subr.bf16.mxu0 0
        %5515 = vmatpush1.bf16.msra.mxu0 %v5207
        %5516 = vmatprep.subr.bf16.mxu0 0
        %5517 = vmatpush1.bf16.msra.mxu0 %v5208
        %5518 = vmatprep.subr.bf16.mxu0 0
        %5519 = vmatpush1.bf16.msra.mxu0 %v5209
        %5520 = vmatprep.subr.bf16.mxu0 0
        %5521 = vmatpush1.bf16.msra.mxu0 %v5210
        %5522 = vmatprep.subr.bf16.mxu0 0
        %5523 = vmatpush1.bf16.msra.mxu0 %v5211
        %5524 = vmatprep.subr.bf16.mxu0 0
        %5525 = vmatpush1.bf16.msra.mxu0 %v5212
        %5526 = vmatprep.subr.bf16.mxu0 0
        %5527 = vmatpush1.bf16.msra.mxu0 %v5213
        %5528 = vmatprep.subr.bf16.mxu0 0
        %5529 = vmatpush1.bf16.msra.mxu0 %v5214
        %5530 = vmatprep.subr.bf16.mxu0 0
        %5531 = vmatpush1.bf16.msra.mxu0 %v5215
        %5532 = vmatprep.subr.bf16.mxu0 0
        %5533 = vmatpush1.bf16.msra.mxu0 %v5216
        %5534 = vmatprep.subr.bf16.mxu0 0
        %5535 = vmatpush1.bf16.msra.mxu0 %v5217
        %5536 = vmatprep.subr.bf16.mxu0 0
        %5537 = vmatpush1.bf16.msra.mxu0 %v5218
        %5538 = vmatprep.subr.bf16.mxu0 0
        %5539 = vmatpush1.bf16.msra.mxu0 %v5219
        %5540 = vmatprep.subr.bf16.mxu0 0
        %5541 = vmatpush1.bf16.msra.mxu0 %v5220
        %5542 = vmatprep.subr.bf16.mxu0 0
        %5543 = vmatpush1.bf16.msra.mxu0 %v5221
        %5544 = vmatprep.mubr.bf16.mxu0 %v4675
        %5545 = vmatmul.mubr.bf16.gmra.mrb[0].mxu0 %v4674
        %v5546 = vpop.f32.mrb[0].mxu0
        %v5547 = vadd.f32 %v5450, %v5546
        %v5548 = vpop.f32.mrb[0].mxu0
        %v5549 = vpop.f32.mrb[0].mxu0
        %v5550 = vadd.f32 %v5453, %v5549
        %v5551 = vpop.f32.mrb[0].mxu0
        %5552 = vmatprep.mubr.bf16.mxu0 %v4684
        %5553 = vmatmul.mubr.bf16.gmra.mrb[0].mxu0 %v4683
        %v5554 = vpop.f32.mrb[0].mxu0
        %v5555 = vadd.f32 %v5458, %v5554
        %v5556 = vpop.f32.mrb[0].mxu0
        %v5557 = vpop.f32.mrb[0].mxu0
        %v5558 = vadd.f32 %v5461, %v5557
        %v5559 = vpop.f32.mrb[0].mxu0
        %5560 = vmatprep.mubr.bf16.mxu0 %v4693
        %5561 = vmatmul.mubr.bf16.gmra.mrb[0].mxu0 %v4692
        %v5562 = vpop.f32.mrb[0].mxu0
        %v5563 = vadd.f32 %v5466, %v5562
        %v5564 = vpop.f32.mrb[0].mxu0
        %v5565 = vpop.f32.mrb[0].mxu0
        %v5566 = vadd.f32 %v5469, %v5565
        %v5567 = vpop.f32.mrb[0].mxu0
        %5568 = vmatprep.mubr.bf16.mxu0 %v4702
        %5569 = vmatmul.mubr.bf16.gmra.mrb[0].mxu0 %v4701
        %v5570 = vpop.f32.mrb[0].mxu0
        %v5571 = vadd.f32 %v5474, %v5570
        %v5572 = vpop.f32.mrb[0].mxu0
        %v5573 = vpop.f32.mrb[0].mxu0
        %v5574 = vadd.f32 %v5477, %v5573
        %v5575 = vpop.f32.mrb[0].mxu0
        %5576 = vmatprep.mubr.bf16.mxu0 %v4711
        %5577 = vmatmul.mubr.bf16.gmra.mrb[0].mxu0 %v4710
        %v5578 = vpop.f32.mrb[0].mxu0
        %v5579 = vadd.f32 %v5482, %v5578
        %v5580 = vpop.f32.mrb[0].mxu0
        %v5581 = vpop.f32.mrb[0].mxu0
        %v5582 = vadd.f32 %v5485, %v5581
        %v5583 = vpop.f32.mrb[0].mxu0
        %5584 = vmatprep.mubr.bf16.mxu0 %v4720
        %5585 = vmatmul.mubr.bf16.gmra.mrb[0].mxu0 %v4719
        %v5586 = vpop.f32.mrb[0].mxu0
        %v5587 = vadd.f32 %v5490, %v5586
        %v5588 = vpop.f32.mrb[0].mxu0
        %v5589 = vpop.f32.mrb[0].mxu0
        %v5590 = vadd.f32 %v5493, %v5589
        %v5591 = vpop.f32.mrb[0].mxu0
        %5592 = vmatprep.mubr.bf16.mxu0 %v4729
        %5593 = vmatmul.mubr.bf16.gmra.mrb[0].mxu0 %v4728
        %v5594 = vpop.f32.mrb[0].mxu0
        %v5595 = vadd.f32 %v5498, %v5594
        %v5596 = vpop.f32.mrb[0].mxu0
        %v5597 = vpop.f32.mrb[0].mxu0
        %v5598 = vadd.f32 %v5501, %v5597
        %v5599 = vpop.f32.mrb[0].mxu0
        %5600 = vmatprep.mubr.bf16.mxu0 %v4738
        %5601 = vmatmul.mubr.bf16.gmra.mrb[0].mxu0 %v4737
        %v5602 = vpop.f32.mrb[0].mxu0
        %v5603 = vadd.f32 %v5506, %v5602
        %v5604 = vpop.f32.mrb[0].mxu0
        %v5605 = vpop.f32.mrb[0].mxu0
        %v5606 = vadd.f32 %v5509, %v5605
        %v5607 = vpop.f32.mrb[0].mxu0
        %5608 = vdwg.mxu0
        %5609 = vmatprep.subr.bf16.mxu0 0
        %5610 = vmatpush1.bf16.msra.mxu0 %v5222
        %5611 = vmatprep.subr.bf16.mxu0 0
        %5612 = vmatpush1.bf16.msra.mxu0 %v5223
        %5613 = vmatprep.subr.bf16.mxu0 0
        %5614 = vmatpush1.bf16.msra.mxu0 %v5224
        %5615 = vmatprep.subr.bf16.mxu0 0
        %5616 = vmatpush1.bf16.msra.mxu0 %v5225
        %5617 = vmatprep.subr.bf16.mxu0 0
        %5618 = vmatpush1.bf16.msra.mxu0 %v5226
        %5619 = vmatprep.subr.bf16.mxu0 0
        %5620 = vmatpush1.bf16.msra.mxu0 %v5227
        %5621 = vmatprep.subr.bf16.mxu0 0
        %5622 = vmatpush1.bf16.msra.mxu0 %v5228
        %5623 = vmatprep.subr.bf16.mxu0 0
        %5624 = vmatpush1.bf16.msra.mxu0 %v5229
        %5625 = vmatprep.subr.bf16.mxu0 0
        %5626 = vmatpush1.bf16.msra.mxu0 %v5230
        %5627 = vmatprep.subr.bf16.mxu0 0
        %5628 = vmatpush1.bf16.msra.mxu0 %v5231
        %5629 = vmatprep.subr.bf16.mxu0 0
        %5630 = vmatpush1.bf16.msra.mxu0 %v5232
        %5631 = vmatprep.subr.bf16.mxu0 0
        %5632 = vmatpush1.bf16.msra.mxu0 %v5233
        %5633 = vmatprep.subr.bf16.mxu0 0
        %5634 = vmatpush1.bf16.msra.mxu0 %v5234
        %5635 = vmatprep.subr.bf16.mxu0 0
        %5636 = vmatpush1.bf16.msra.mxu0 %v5235
        %5637 = vmatprep.subr.bf16.mxu0 0
        %5638 = vmatpush1.bf16.msra.mxu0 %v5236
        %5639 = vmatprep.subr.bf16.mxu0 0
        %5640 = vmatpush1.bf16.msra.mxu0 %v5237
        %5641 = vmatprep.mubr.bf16.mxu0 %v4677
        %5642 = vmatmul.mubr.bf16.gmra.mrb[0].mxu0 %v4676
        %v5643 = vpop.f32.mrb[0].mxu0
        %v5644 = vadd.f32 %v5547, %v5643
        %v5645 = vpop.f32.mrb[0].mxu0
        %v5646 = vpop.f32.mrb[0].mxu0
        %v5647 = vadd.f32 %v5550, %v5646
        %v5648 = vpop.f32.mrb[0].mxu0
        %5649 = vmatprep.mubr.bf16.mxu0 %v4686
        %5650 = vmatmul.mubr.bf16.gmra.mrb[0].mxu0 %v4685
        %v5651 = vpop.f32.mrb[0].mxu0
        %v5652 = vadd.f32 %v5555, %v5651
        %v5653 = vpop.f32.mrb[0].mxu0
        %v5654 = vpop.f32.mrb[0].mxu0
        %v5655 = vadd.f32 %v5558, %v5654
        %v5656 = vpop.f32.mrb[0].mxu0
        %5657 = vmatprep.mubr.bf16.mxu0 %v4695
        %5658 = vmatmul.mubr.bf16.gmra.mrb[0].mxu0 %v4694
        %v5659 = vpop.f32.mrb[0].mxu0
        %v5660 = vadd.f32 %v5563, %v5659
        %v5661 = vpop.f32.mrb[0].mxu0
        %v5662 = vpop.f32.mrb[0].mxu0
        %v5663 = vadd.f32 %v5566, %v5662
        %v5664 = vpop.f32.mrb[0].mxu0
        %5665 = vmatprep.mubr.bf16.mxu0 %v4704
        %5666 = vmatmul.mubr.bf16.gmra.mrb[0].mxu0 %v4703
        %v5667 = vpop.f32.mrb[0].mxu0
        %v5668 = vadd.f32 %v5571, %v5667
        %v5669 = vpop.f32.mrb[0].mxu0
        %v5670 = vpop.f32.mrb[0].mxu0
        %v5671 = vadd.f32 %v5574, %v5670
        %v5672 = vpop.f32.mrb[0].mxu0
        %5673 = vmatprep.mubr.bf16.mxu0 %v4713
        %5674 = vmatmul.mubr.bf16.gmra.mrb[0].mxu0 %v4712
        %v5675 = vpop.f32.mrb[0].mxu0
        %v5676 = vadd.f32 %v5579, %v5675
        %v5677 = vpop.f32.mrb[0].mxu0
        %v5678 = vpop.f32.mrb[0].mxu0
        %v5679 = vadd.f32 %v5582, %v5678
        %v5680 = vpop.f32.mrb[0].mxu0
        %5681 = vmatprep.mubr.bf16.mxu0 %v4722
        %5682 = vmatmul.mubr.bf16.gmra.mrb[0].mxu0 %v4721
        %v5683 = vpop.f32.mrb[0].mxu0
        %v5684 = vadd.f32 %v5587, %v5683
        %v5685 = vpop.f32.mrb[0].mxu0
        %v5686 = vpop.f32.mrb[0].mxu0
        %v5687 = vadd.f32 %v5590, %v5686
        %v5688 = vpop.f32.mrb[0].mxu0
        %5689 = vmatprep.mubr.bf16.mxu0 %v4731
        %5690 = vmatmul.mubr.bf16.gmra.mrb[0].mxu0 %v4730
        %v5691 = vpop.f32.mrb[0].mxu0
        %v5692 = vadd.f32 %v5595, %v5691
        %v5693 = vpop.f32.mrb[0].mxu0
        %v5694 = vpop.f32.mrb[0].mxu0
        %v5695 = vadd.f32 %v5598, %v5694
        %v5696 = vpop.f32.mrb[0].mxu0
        %5697 = vmatprep.mubr.bf16.mxu0 %v4740
        %5698 = vmatmul.mubr.bf16.gmra.mrb[0].mxu0 %v4739
        %v5699 = vpop.f32.mrb[0].mxu0
        %v5700 = vadd.f32 %v5603, %v5699
        %v5701 = vpop.f32.mrb[0].mxu0
        %v5702 = vpop.f32.mrb[0].mxu0
        %v5703 = vadd.f32 %v5606, %v5702
        %v5704 = vpop.f32.mrb[0].mxu0
        %5705 = vdwg.mxu0
        %5706 = vmatprep.subr.bf16.mxu0 0
        %5707 = vmatpush1.bf16.msra.mxu0 %v5238
        %5708 = vmatprep.subr.bf16.mxu0 0
        %5709 = vmatpush1.bf16.msra.mxu0 %v5239
        %5710 = vmatprep.subr.bf16.mxu0 0
        %5711 = vmatpush1.bf16.msra.mxu0 %v5240
        %5712 = vmatprep.subr.bf16.mxu0 0
        %5713 = vmatpush1.bf16.msra.mxu0 %v5241
        %5714 = vmatprep.subr.bf16.mxu0 0
        %5715 = vmatpush1.bf16.msra.mxu0 %v5242
        %5716 = vmatprep.subr.bf16.mxu0 0
        %5717 = vmatpush1.bf16.msra.mxu0 %v5243
        %5718 = vmatprep.subr.bf16.mxu0 0
        %5719 = vmatpush1.bf16.msra.mxu0 %v5244
        %5720 = vmatprep.subr.bf16.mxu0 0
        %5721 = vmatpush1.bf16.msra.mxu0 %v5245
        %5722 = vmatprep.subr.bf16.mxu0 0
        %5723 = vmatpush1.bf16.msra.mxu0 0
        %5724 = vmatprep.subr.bf16.mxu0 0
        %5725 = vmatpush1.bf16.msra.mxu0 0
        %5726 = vmatprep.subr.bf16.mxu0 0
        %5727 = vmatpush1.bf16.msra.mxu0 0
        %5728 = vmatprep.subr.bf16.mxu0 0
        %5729 = vmatpush1.bf16.msra.mxu0 0
        %5730 = vmatprep.subr.bf16.mxu0 0
        %5731 = vmatpush1.bf16.msra.mxu0 0
        %5732 = vmatprep.subr.bf16.mxu0 0
        %5733 = vmatpush1.bf16.msra.mxu0 0
        %5734 = vmatprep.subr.bf16.mxu0 0
        %5735 = vmatpush1.bf16.msra.mxu0 0
        %5736 = vmatprep.subr.bf16.mxu0 0
        %5737 = vmatpush1.bf16.msra.mxu0 0
        %5738 = vmatprep.mubr.bf16.mxu0 0
        %5739 = vmatmul.mubr.bf16.gmra.mrb[0].mxu0 %v4678
        %v5740 = vpop.f32.mrb[0].mxu0
        %v5741 = vadd.f32 %v5644, %v5740
        %v5742 = vpop.f32.mrb[0].mxu0
        %v5743 = vpop.f32.mrb[0].mxu0
        %v5744 = vadd.f32 %v5647, %v5743
        %v5745 = vpop.f32.mrb[0].mxu0
        %5746 = vmatprep.mubr.bf16.mxu0 0
        %5747 = vmatmul.mubr.bf16.gmra.mrb[0].mxu0 %v4687
        %v5748 = vpop.f32.mrb[0].mxu0
        %v5749 = vadd.f32 %v5652, %v5748
        %v5750 = vpop.f32.mrb[0].mxu0
        %v5751 = vpop.f32.mrb[0].mxu0
        %v5752 = vadd.f32 %v5655, %v5751
        %v5753 = vpop.f32.mrb[0].mxu0
        %5754 = vmatprep.mubr.bf16.mxu0 0
        %5755 = vmatmul.mubr.bf16.gmra.mrb[0].mxu0 %v4696
        %v5756 = vpop.f32.mrb[0].mxu0
        %v5757 = vadd.f32 %v5660, %v5756
        %v5758 = vpop.f32.mrb[0].mxu0
        %v5759 = vpop.f32.mrb[0].mxu0
        %v5760 = vadd.f32 %v5663, %v5759
        %v5761 = vpop.f32.mrb[0].mxu0
        %5762 = vmatprep.mubr.bf16.mxu0 0
        %5763 = vmatmul.mubr.bf16.gmra.mrb[0].mxu0 %v4705
        %v5764 = vpop.f32.mrb[0].mxu0
        %v5765 = vadd.f32 %v5668, %v5764
        %v5766 = vpop.f32.mrb[0].mxu0
        %v5767 = vpop.f32.mrb[0].mxu0
        %v5768 = vadd.f32 %v5671, %v5767
        %v5769 = vpop.f32.mrb[0].mxu0
        %5770 = vmatprep.mubr.bf16.mxu0 0
        %5771 = vmatmul.mubr.bf16.gmra.mrb[0].mxu0 %v4714
        %v5772 = vpop.f32.mrb[0].mxu0
        %v5773 = vadd.f32 %v5676, %v5772
        %v5774 = vpop.f32.mrb[0].mxu0
        %v5775 = vpop.f32.mrb[0].mxu0
        %v5776 = vadd.f32 %v5679, %v5775
        %v5777 = vpop.f32.mrb[0].mxu0
        %5778 = vmatprep.mubr.bf16.mxu0 0
        %5779 = vmatmul.mubr.bf16.gmra.mrb[0].mxu0 %v4723
        %v5780 = vpop.f32.mrb[0].mxu0
        %v5781 = vadd.f32 %v5684, %v5780
        %v5782 = vpop.f32.mrb[0].mxu0
        %v5783 = vpop.f32.mrb[0].mxu0
        %v5784 = vadd.f32 %v5687, %v5783
        %v5785 = vpop.f32.mrb[0].mxu0
        %5786 = vmatprep.mubr.bf16.mxu0 0
        %5787 = vmatmul.mubr.bf16.gmra.mrb[0].mxu0 %v4732
        %v5788 = vpop.f32.mrb[0].mxu0
        %v5789 = vadd.f32 %v5692, %v5788
        %v5790 = vpop.f32.mrb[0].mxu0
        %v5791 = vpop.f32.mrb[0].mxu0
        %v5792 = vadd.f32 %v5695, %v5791
        %v5793 = vpop.f32.mrb[0].mxu0
        %5794 = vmatprep.mubr.bf16.mxu0 0
        %5795 = vmatmul.mubr.bf16.gmra.mrb[0].mxu0 %v4741
        %v5796 = vpop.f32.mrb[0].mxu0
        %v5797 = vadd.f32 %v5700, %v5796
        %v5798 = vpop.f32.mrb[0].mxu0
        %v5799 = vpop.f32.mrb[0].mxu0
        %v5800 = vadd.f32 %v5703, %v5799
        %v5801 = vpop.f32.mrb[0].mxu0
        %5802 = vdwg.mxu0
        %v5804 = vlaneseq
        %v5805 = vshrl.u32 %v5804, 7
        %v5806 = vsub.s32 0, %v5805
        %v5807 = vrot.slane %v4666, %v5806
        %v5809 = vmul.f32 %v5741, %v5807
        %v5810 = vmul.f32 %v5744, %v5807
        %v5811 = vmul.f32 %v5749, %v5807
        %v5812 = vmul.f32 %v5752, %v5807
        %v5813 = vmul.f32 %v5757, %v5807
        %v5814 = vmul.f32 %v5760, %v5807
        %v5815 = vmul.f32 %v5765, %v5807
        %v5816 = vmul.f32 %v5768, %v5807
        %v5817 = vmul.f32 %v5773, %v5807
        %v5818 = vmul.f32 %v5776, %v5807
        %v5819 = vmul.f32 %v5781, %v5807
        %v5820 = vmul.f32 %v5784, %v5807
        %v5821 = vmul.f32 %v5789, %v5807
        %v5822 = vmul.f32 %v5792, %v5807
        %v5823 = vmul.f32 %v5797, %v5807
        %v5824 = vmul.f32 %v5800, %v5807
        %v5826 = vlaneseq
        %v5827 = vshrl.u32 %v5826, 7
        %v5828 = vsub.s32 0, %v5827
        %v5829 = vrot.slane %v4667, %v5828
        %v5831 = vadd.f32 %v5809, %v5829
        %v5832 = vadd.f32 %v5810, %v5829
        %v5833 = vadd.f32 %v5811, %v5829
        %v5834 = vadd.f32 %v5812, %v5829
        %v5835 = vadd.f32 %v5813, %v5829
        %v5836 = vadd.f32 %v5814, %v5829
        %v5837 = vadd.f32 %v5815, %v5829
        %v5838 = vadd.f32 %v5816, %v5829
        %v5839 = vadd.f32 %v5817, %v5829
        %v5840 = vadd.f32 %v5818, %v5829
        %v5841 = vadd.f32 %v5819, %v5829
        %v5842 = vadd.f32 %v5820, %v5829
        %v5843 = vadd.f32 %v5821, %v5829
        %v5844 = vadd.f32 %v5822, %v5829
        %v5845 = vadd.f32 %v5823, %v5829
        %v5846 = vadd.f32 %v5824, %v5829
        %v5847 = vmax.f32 %v5831, 0.0
        %v5848 = vmax.f32 %v5832, 0.0
        %v5849 = vmax.f32 %v5833, 0.0
        %v5850 = vmax.f32 %v5834, 0.0
        %v5851 = vmax.f32 %v5835, 0.0
        %v5852 = vmax.f32 %v5836, 0.0
        %v5853 = vmax.f32 %v5837, 0.0
        %v5854 = vmax.f32 %v5838, 0.0
        %v5855 = vmax.f32 %v5839, 0.0
        %v5856 = vmax.f32 %v5840, 0.0
        %v5857 = vmax.f32 %v5841, 0.0
        %v5858 = vmax.f32 %v5842, 0.0
        %v5859 = vmax.f32 %v5843, 0.0
        %v5860 = vmax.f32 %v5844, 0.0
        %v5861 = vmax.f32 %v5845, 0.0
        %v5862 = vmax.f32 %v5846, 0.0
        %v5863 = vpack.c.bf16 %v5848, %v5847
        %v5864 = vpack.c.bf16 %v5850, %v5849
        %v5865 = vpack.c.bf16 %v5852, %v5851
        %v5866 = vpack.c.bf16 %v5854, %v5853
        %v5867 = vpack.c.bf16 %v5856, %v5855
        %v5868 = vpack.c.bf16 %v5858, %v5857
        %v5869 = vpack.c.bf16 %v5860, %v5859
        %v5870 = vpack.c.bf16 %v5862, %v5861
        %v5871 = vld [vmem:[#allocation11] sm:$0xf]
        %v5872 = vld [vmem:[#allocation11 + $0x4] sm:$0xf]
        %v5873 = vld [vmem:[#allocation11 + $0x8] sm:$0xf]
        %v5874 = vld [vmem:[#allocation11 + $0xc] sm:$0xf]
        %v5875 = vld [vmem:[#allocation11 + $0x10] sm:$0xf]
        %v5876 = vld [vmem:[#allocation11 + $0x14] sm:$0xf]
        %v5877 = vld [vmem:[#allocation11 + $0x18] sm:$0xf]
        %v5878 = vld [vmem:[#allocation11 + $0x1c] sm:$0xf]
        %v5879 = vld [vmem:[#allocation11 + $0x20] sm:$0xf]
        %v5880 = vld [vmem:[#allocation11 + $0x24] sm:$0xf]
        %v5881 = vld [vmem:[#allocation11 + $0x28] sm:$0xf]
        %v5882 = vld [vmem:[#allocation11 + $0x2c] sm:$0xf]
        %v5883 = vld [vmem:[#allocation11 + $0x30] sm:$0xf]
        %v5884 = vld [vmem:[#allocation11 + $0x34] sm:$0xf]
        %v5885 = vld [vmem:[#allocation11 + $0x38] sm:$0xf]
        %v5886 = vld [vmem:[#allocation11 + $0x3c] sm:$0xf]
        %v5903 = vunpack.c.l.b16 %v5871
        %v5904 = vunpack.c.l.b16 %v5872
        %v5905 = vunpack.c.l.b16 %v5873
        %v5906 = vunpack.c.l.b16 %v5874
        %v5907 = vunpack.c.l.b16 %v5875
        %v5908 = vunpack.c.l.b16 %v5876
        %v5909 = vunpack.c.l.b16 %v5877
        %v5910 = vunpack.c.l.b16 %v5878
        %v5911 = vunpack.c.l.b16 %v5879
        %v5912 = vunpack.c.l.b16 %v5880
        %v5913 = vunpack.c.l.b16 %v5881
        %v5914 = vunpack.c.l.b16 %v5882
        %v5915 = vunpack.c.l.b16 %v5883
        %v5916 = vunpack.c.l.b16 %v5884
        %v5917 = vunpack.c.l.b16 %v5885
        %v5918 = vunpack.c.l.b16 %v5886
        %v5919 = vpack.c.b16 %v5904, %v5903
        %v5920 = vpack.c.b16 %v5906, %v5905
        %v5921 = vpack.c.b16 %v5908, %v5907
        %v5922 = vpack.c.b16 %v5910, %v5909
        %v5923 = vpack.c.b16 %v5912, %v5911
        %v5924 = vpack.c.b16 %v5914, %v5913
        %v5925 = vpack.c.b16 %v5916, %v5915
        %v5926 = vpack.c.b16 %v5918, %v5917
        %5935 = vmatprep.subr.bf16.mxu0 0
        %5936 = vmatpush1.bf16.msra.mxu0 %v5919
        %5937 = vmatprep.subr.bf16.mxu0 0
        %5938 = vmatpush1.bf16.msra.mxu0 %v5920
        %5939 = vmatprep.subr.bf16.mxu0 0
        %5940 = vmatpush1.bf16.msra.mxu0 %v5921
        %5941 = vmatprep.subr.bf16.mxu0 0
        %5942 = vmatpush1.bf16.msra.mxu0 %v5922
        %5943 = vmatprep.subr.bf16.mxu0 0
        %5944 = vmatpush1.bf16.msra.mxu0 %v5923
        %5945 = vmatprep.subr.bf16.mxu0 0
        %5946 = vmatpush1.bf16.msra.mxu0 %v5924
        %5947 = vmatprep.subr.bf16.mxu0 0
        %5948 = vmatpush1.bf16.msra.mxu0 %v5925
        %5949 = vmatprep.subr.bf16.mxu0 0
        %5950 = vmatpush1.bf16.msra.mxu0 %v5926
        %5951 = vmatprep.subr.bf16.mxu0 0
        %5952 = vmatpush1.bf16.msra.mxu0 0
        %5953 = vmatprep.subr.bf16.mxu0 0
        %5954 = vmatpush1.bf16.msra.mxu0 0
        %5955 = vmatprep.subr.bf16.mxu0 0
        %5956 = vmatpush1.bf16.msra.mxu0 0
        %5957 = vmatprep.subr.bf16.mxu0 0
        %5958 = vmatpush1.bf16.msra.mxu0 0
        %5959 = vmatprep.subr.bf16.mxu0 0
        %5960 = vmatpush1.bf16.msra.mxu0 0
        %5961 = vmatprep.subr.bf16.mxu0 0
        %5962 = vmatpush1.bf16.msra.mxu0 0
        %5963 = vmatprep.subr.bf16.mxu0 0
        %5964 = vmatpush1.bf16.msra.mxu0 0
        %5965 = vmatprep.subr.bf16.mxu0 0
        %5966 = vmatpush1.bf16.msra.mxu0 0
        %5967 = vmatprep.mubr.bf16.mxu0 0
        %5968 = vmatmul.mubr.bf16.gmra.mrb[0].mxu0 %v5863
        %v5969 = vpop.f32.mrb[0].mxu0
        %v5970 = vadd.f32 0.0, %v5969
        %v5971 = vpop.f32.mrb[0].mxu0
        %v5972 = vpop.f32.mrb[0].mxu0
        %v5973 = vadd.f32 0.0, %v5972
        %v5974 = vpop.f32.mrb[0].mxu0
        %5975 = vmatprep.mubr.bf16.mxu0 0
        %5976 = vmatmul.mubr.bf16.gmra.mrb[0].mxu0 %v5864
        %v5977 = vpop.f32.mrb[0].mxu0
        %v5978 = vadd.f32 0.0, %v5977
        %v5979 = vpop.f32.mrb[0].mxu0
        %v5980 = vpop.f32.mrb[0].mxu0
        %v5981 = vadd.f32 0.0, %v5980
        %v5982 = vpop.f32.mrb[0].mxu0
        %5983 = vmatprep.mubr.bf16.mxu0 0
        %5984 = vmatmul.mubr.bf16.gmra.mrb[0].mxu0 %v5865
        %v5985 = vpop.f32.mrb[0].mxu0
        %v5986 = vadd.f32 0.0, %v5985
        %v5987 = vpop.f32.mrb[0].mxu0
        %v5988 = vpop.f32.mrb[0].mxu0
        %v5989 = vadd.f32 0.0, %v5988
        %v5990 = vpop.f32.mrb[0].mxu0
        %5991 = vmatprep.mubr.bf16.mxu0 0
        %5992 = vmatmul.mubr.bf16.gmra.mrb[0].mxu0 %v5866
        %v5993 = vpop.f32.mrb[0].mxu0
        %v5994 = vadd.f32 0.0, %v5993
        %v5995 = vpop.f32.mrb[0].mxu0
        %v5996 = vpop.f32.mrb[0].mxu0
        %v5997 = vadd.f32 0.0, %v5996
        %v5998 = vpop.f32.mrb[0].mxu0
        %5999 = vmatprep.mubr.bf16.mxu0 0
        %6000 = vmatmul.mubr.bf16.gmra.mrb[0].mxu0 %v5867
        %v6001 = vpop.f32.mrb[0].mxu0
        %v6002 = vadd.f32 0.0, %v6001
        %v6003 = vpop.f32.mrb[0].mxu0
        %v6004 = vpop.f32.mrb[0].mxu0
        %v6005 = vadd.f32 0.0, %v6004
        %v6006 = vpop.f32.mrb[0].mxu0
        %6007 = vmatprep.mubr.bf16.mxu0 0
        %6008 = vmatmul.mubr.bf16.gmra.mrb[0].mxu0 %v5868
        %v6009 = vpop.f32.mrb[0].mxu0
        %v6010 = vadd.f32 0.0, %v6009
        %v6011 = vpop.f32.mrb[0].mxu0
        %v6012 = vpop.f32.mrb[0].mxu0
        %v6013 = vadd.f32 0.0, %v6012
        %v6014 = vpop.f32.mrb[0].mxu0
        %6015 = vmatprep.mubr.bf16.mxu0 0
        %6016 = vmatmul.mubr.bf16.gmra.mrb[0].mxu0 %v5869
        %v6017 = vpop.f32.mrb[0].mxu0
        %v6018 = vadd.f32 0.0, %v6017
        %v6019 = vpop.f32.mrb[0].mxu0
        %v6020 = vpop.f32.mrb[0].mxu0
        %v6021 = vadd.f32 0.0, %v6020
        %v6022 = vpop.f32.mrb[0].mxu0
        %6023 = vmatprep.mubr.bf16.mxu0 0
        %6024 = vmatmul.mubr.bf16.gmra.mrb[0].mxu0 %v5870
        %v6025 = vpop.f32.mrb[0].mxu0
        %v6026 = vadd.f32 0.0, %v6025
        %v6027 = vpop.f32.mrb[0].mxu0
        %v6028 = vpop.f32.mrb[0].mxu0
        %v6029 = vadd.f32 0.0, %v6028
        %v6030 = vpop.f32.mrb[0].mxu0
        %6031 = vdwg.mxu0
        %v6032 = vld [vmem:[#allocation4] sm:$0xff]
        %v6033 = vld [vmem:[#allocation4 + $0x8] sm:$0xff]
        %v6034 = vld [vmem:[#allocation4 + $0x10] sm:$0xff]
        %v6035 = vld [vmem:[#allocation4 + $0x18] sm:$0xff]
        %v6036 = vld [vmem:[#allocation4 + $0x20] sm:$0xff]
        %v6037 = vld [vmem:[#allocation4 + $0x28] sm:$0xff]
        %v6038 = vld [vmem:[#allocation4 + $0x30] sm:$0xff]
        %v6039 = vld [vmem:[#allocation4 + $0x38] sm:$0xff]
        %v6040 = vunpack.c.l.bf16 %v6032
        %v6041 = vunpack.c.h.bf16 %v6032
        %v6042 = vunpack.c.l.bf16 %v6033
        %v6043 = vunpack.c.h.bf16 %v6033
        %v6044 = vunpack.c.l.bf16 %v6034
        %v6045 = vunpack.c.h.bf16 %v6034
        %v6046 = vunpack.c.l.bf16 %v6035
        %v6047 = vunpack.c.h.bf16 %v6035
        %v6048 = vunpack.c.l.bf16 %v6036
        %v6049 = vunpack.c.h.bf16 %v6036
        %v6050 = vunpack.c.l.bf16 %v6037
        %v6051 = vunpack.c.h.bf16 %v6037
        %v6052 = vunpack.c.l.bf16 %v6038
        %v6053 = vunpack.c.h.bf16 %v6038
        %v6054 = vunpack.c.l.bf16 %v6039
        %v6055 = vunpack.c.h.bf16 %v6039
        %v6057 = vlaneseq
        %v6058 = vshrl.u32 %v6057, 7
        %v6059 = vsub.s32 0, %v6058
        %v6060 = vrot.slane %v4668, %v6059
        %v6062 = vmul.f32 %v5970, %v6060
        %v6063 = vmul.f32 %v5973, %v6060
        %v6064 = vmul.f32 %v5978, %v6060
        %v6065 = vmul.f32 %v5981, %v6060
        %v6066 = vmul.f32 %v5986, %v6060
        %v6067 = vmul.f32 %v5989, %v6060
        %v6068 = vmul.f32 %v5994, %v6060
        %v6069 = vmul.f32 %v5997, %v6060
        %v6070 = vmul.f32 %v6002, %v6060
        %v6071 = vmul.f32 %v6005, %v6060
        %v6072 = vmul.f32 %v6010, %v6060
        %v6073 = vmul.f32 %v6013, %v6060
        %v6074 = vmul.f32 %v6018, %v6060
        %v6075 = vmul.f32 %v6021, %v6060
        %v6076 = vmul.f32 %v6026, %v6060
        %v6077 = vmul.f32 %v6029, %v6060
        %v6079 = vlaneseq
        %v6080 = vshrl.u32 %v6079, 7
        %v6081 = vsub.s32 0, %v6080
        %v6082 = vrot.slane %v4669, %v6081
        %v6084 = vadd.f32 %v6062, %v6082
        %v6085 = vadd.f32 %v6063, %v6082
        %v6086 = vadd.f32 %v6064, %v6082
        %v6087 = vadd.f32 %v6065, %v6082
        %v6088 = vadd.f32 %v6066, %v6082
        %v6089 = vadd.f32 %v6067, %v6082
        %v6090 = vadd.f32 %v6068, %v6082
        %v6091 = vadd.f32 %v6069, %v6082
        %v6092 = vadd.f32 %v6070, %v6082
        %v6093 = vadd.f32 %v6071, %v6082
        %v6094 = vadd.f32 %v6072, %v6082
        %v6095 = vadd.f32 %v6073, %v6082
        %v6096 = vadd.f32 %v6074, %v6082
        %v6097 = vadd.f32 %v6075, %v6082
        %v6098 = vadd.f32 %v6076, %v6082
        %v6099 = vadd.f32 %v6077, %v6082
        %v6100 = vadd.f32 %v6084, %v6040
        %v6101 = vadd.f32 %v6085, %v6041
        %v6102 = vadd.f32 %v6086, %v6042
        %v6103 = vadd.f32 %v6087, %v6043
        %v6104 = vadd.f32 %v6088, %v6044
        %v6105 = vadd.f32 %v6089, %v6045
        %v6106 = vadd.f32 %v6090, %v6046
        %v6107 = vadd.f32 %v6091, %v6047
        %v6108 = vadd.f32 %v6092, %v6048
        %v6109 = vadd.f32 %v6093, %v6049
        %v6110 = vadd.f32 %v6094, %v6050
        %v6111 = vadd.f32 %v6095, %v6051
        %v6112 = vadd.f32 %v6096, %v6052
        %v6113 = vadd.f32 %v6097, %v6053
        %v6114 = vadd.f32 %v6098, %v6054
        %v6115 = vadd.f32 %v6099, %v6055
        %v6116 = vmax.f32 %v6100, 0.0
        %v6117 = vmax.f32 %v6101, 0.0
        %v6118 = vmax.f32 %v6102, 0.0
        %v6119 = vmax.f32 %v6103, 0.0
        %v6120 = vmax.f32 %v6104, 0.0
        %v6121 = vmax.f32 %v6105, 0.0
        %v6122 = vmax.f32 %v6106, 0.0
        %v6123 = vmax.f32 %v6107, 0.0
        %v6124 = vmax.f32 %v6108, 0.0
        %v6125 = vmax.f32 %v6109, 0.0
        %v6126 = vmax.f32 %v6110, 0.0
        %v6127 = vmax.f32 %v6111, 0.0
        %v6128 = vmax.f32 %v6112, 0.0
        %v6129 = vmax.f32 %v6113, 0.0
        %v6130 = vmax.f32 %v6114, 0.0
        %v6131 = vmax.f32 %v6115, 0.0
        %v6132 = vpack.c.bf16 %v6117, %v6116
        %v6133 = vpack.c.bf16 %v6119, %v6118
        %v6134 = vpack.c.bf16 %v6121, %v6120
        %v6135 = vpack.c.bf16 %v6123, %v6122
        %v6136 = vpack.c.bf16 %v6125, %v6124
        %v6137 = vpack.c.bf16 %v6127, %v6126
        %v6138 = vpack.c.bf16 %v6129, %v6128
        %v6139 = vpack.c.bf16 %v6131, %v6130
        %v6148 = vunpack.c.l.b16 %v6132
        %v6149 = vunpack.c.h.b16 %v6132
        %v6150 = vunpack.c.l.b16 %v6133
        %v6151 = vunpack.c.h.b16 %v6133
        %v6152 = vunpack.c.l.b16 %v6134
        %v6153 = vunpack.c.h.b16 %v6134
        %v6154 = vunpack.c.l.b16 %v6135
        %v6155 = vunpack.c.h.b16 %v6135
        %v6156 = vunpack.c.l.b16 %v6136
        %v6157 = vunpack.c.h.b16 %v6136
        %v6158 = vunpack.c.l.b16 %v6137
        %v6159 = vunpack.c.h.b16 %v6137
        %v6160 = vunpack.c.l.b16 %v6138
        %v6161 = vunpack.c.h.b16 %v6138
        %v6162 = vunpack.c.l.b16 %v6139
        %v6163 = vunpack.c.h.b16 %v6139
        %v6164 = vpack.c.b16 %v6148, %v6148
        %v6165 = vpack.c.b16 %v6149, %v6149
        %v6166 = vpack.c.b16 %v6150, %v6150
        %v6167 = vpack.c.b16 %v6151, %v6151
        %v6168 = vpack.c.b16 %v6152, %v6152
        %v6169 = vpack.c.b16 %v6153, %v6153
        %v6170 = vpack.c.b16 %v6154, %v6154
        %v6171 = vpack.c.b16 %v6155, %v6155
        %v6172 = vpack.c.b16 %v6156, %v6156
        %v6173 = vpack.c.b16 %v6157, %v6157
        %v6174 = vpack.c.b16 %v6158, %v6158
        %v6175 = vpack.c.b16 %v6159, %v6159
        %v6176 = vpack.c.b16 %v6160, %v6160
        %v6177 = vpack.c.b16 %v6161, %v6161
        %v6178 = vpack.c.b16 %v6162, %v6162
        %v6179 = vpack.c.b16 %v6163, %v6163
        %6196 = vst [vmem:[%s421] sm:$0xf] %v6164
        %6197 = vst [vmem:[%s421 + $0x4] sm:$0xf] %v6165
        %6198 = vst [vmem:[%s421 + $0x8] sm:$0xf] %v6166
        %6199 = vst [vmem:[%s421 + $0xc] sm:$0xf] %v6167
        %6200 = vst [vmem:[%s421 + $0x10] sm:$0xf] %v6168
        %6201 = vst [vmem:[%s421 + $0x14] sm:$0xf] %v6169
        %6202 = vst [vmem:[%s421 + $0x18] sm:$0xf] %v6170
        %6203 = vst [vmem:[%s421 + $0x1c] sm:$0xf] %v6171
        %6204 = vst [vmem:[%s421 + $0x20] sm:$0xf] %v6172
        %6205 = vst [vmem:[%s421 + $0x24] sm:$0xf] %v6173
        %6206 = vst [vmem:[%s421 + $0x28] sm:$0xf] %v6174
        %6207 = vst [vmem:[%s421 + $0x2c] sm:$0xf] %v6175
        %6208 = vst [vmem:[%s421 + $0x30] sm:$0xf] %v6176
        %6209 = vst [vmem:[%s421 + $0x34] sm:$0xf] %v6177
        %6210 = vst [vmem:[%s421 + $0x38] sm:$0xf] %v6178
        %6211 = vst [vmem:[%s421 + $0x3c] sm:$0xf] %v6179
        %v6212 = vld [vmem:[#allocation3 + $0x240] sm:$0xff]
        %v6213 = vld [vmem:[#allocation3 + $0x248] sm:$0xff]
        %v6214 = vld [vmem:[#allocation3 + $0x250] sm:$0xff]
        %v6215 = vld [vmem:[#allocation3 + $0x258] sm:$0xff]
        %v6216 = vld [vmem:[#allocation3 + $0x260] sm:$0xff]
        %v6217 = vld [vmem:[#allocation3 + $0x268] sm:$0xff]
        %v6218 = vld [vmem:[#allocation3 + $0x270] sm:$0xff]
        %v6219 = vld [vmem:[#allocation3 + $0x278] sm:$0xff]
        %v6220 = vld [vmem:[#allocation3 + $0x280] sm:$0xff]
        %v6221 = vld [vmem:[#allocation3 + $0x288] sm:$0xff]
        %v6222 = vld [vmem:[#allocation3 + $0x290] sm:$0xff]
        %v6223 = vld [vmem:[#allocation3 + $0x298] sm:$0xff]
        %v6224 = vld [vmem:[#allocation3 + $0x2a0] sm:$0xff]
        %v6225 = vld [vmem:[#allocation3 + $0x2a8] sm:$0xff]
        %v6226 = vld [vmem:[#allocation3 + $0x2b0] sm:$0xff]
        %v6227 = vld [vmem:[#allocation3 + $0x2b8] sm:$0xff]
        %v6228 = vld [vmem:[#allocation3 + $0x2c0] sm:$0xff]
        %v6229 = vld [vmem:[#allocation3 + $0x2c8] sm:$0xff]
        %v6230 = vld [vmem:[#allocation3 + $0x2d0] sm:$0xff]
        %v6231 = vld [vmem:[#allocation3 + $0x2d8] sm:$0xff]
        %v6232 = vld [vmem:[#allocation3 + $0x2e0] sm:$0xff]
        %v6233 = vld [vmem:[#allocation3 + $0x2e8] sm:$0xff]
        %v6234 = vld [vmem:[#allocation3 + $0x2f0] sm:$0xff]
        %v6235 = vld [vmem:[#allocation3 + $0x2f8] sm:$0xff]
        %v6236 = vld [vmem:[#allocation3 + $0x300] sm:$0xff]
        %v6237 = vld [vmem:[#allocation3 + $0x308] sm:$0xff]
        %v6238 = vld [vmem:[#allocation3 + $0x310] sm:$0xff]
        %v6239 = vld [vmem:[#allocation3 + $0x318] sm:$0xff]
        %v6240 = vld [vmem:[#allocation3 + $0x320] sm:$0xff]
        %v6241 = vld [vmem:[#allocation3 + $0x328] sm:$0xff]
        %v6242 = vld [vmem:[#allocation3 + $0x330] sm:$0xff]
        %v6243 = vld [vmem:[#allocation3 + $0x338] sm:$0xff]
        %v6244 = vld [vmem:[#allocation3 + $0x340] sm:$0xff]
        %v6245 = vld [vmem:[#allocation3 + $0x348] sm:$0xff]
        %v6246 = vld [vmem:[#allocation3 + $0x350] sm:$0xff]
        %v6247 = vld [vmem:[#allocation3 + $0x358] sm:$0xff]
        %v6248 = vld [vmem:[#allocation3 + $0x360] sm:$0xff]
        %v6249 = vld [vmem:[#allocation3 + $0x368] sm:$0xff]
        %v6250 = vld [vmem:[#allocation3 + $0x370] sm:$0xff]
        %v6251 = vld [vmem:[#allocation3 + $0x378] sm:$0xff]
        %v6252 = vld [vmem:[#allocation3 + $0x380] sm:$0xff]
        %v6253 = vld [vmem:[#allocation3 + $0x388] sm:$0xff]
        %v6254 = vld [vmem:[#allocation3 + $0x390] sm:$0xff]
        %v6255 = vld [vmem:[#allocation3 + $0x398] sm:$0xff]
        %v6256 = vld [vmem:[#allocation3 + $0x3a0] sm:$0xff]
        %v6257 = vld [vmem:[#allocation3 + $0x3a8] sm:$0xff]
        %v6258 = vld [vmem:[#allocation3 + $0x3b0] sm:$0xff]
        %v6259 = vld [vmem:[#allocation3 + $0x3b8] sm:$0xff]
        %v6260 = vld [vmem:[#allocation3 + $0x3c0] sm:$0xff]
        %v6261 = vld [vmem:[#allocation3 + $0x3c8] sm:$0xff]
        %v6262 = vld [vmem:[#allocation3 + $0x3d0] sm:$0xff]
        %v6263 = vld [vmem:[#allocation3 + $0x3d8] sm:$0xff]
        %v6264 = vld [vmem:[#allocation3 + $0x3e0] sm:$0xff]
        %v6265 = vld [vmem:[#allocation3 + $0x3e8] sm:$0xff]
        %v6266 = vld [vmem:[#allocation3 + $0x3f0] sm:$0xff]
        %v6267 = vld [vmem:[#allocation3 + $0x3f8] sm:$0xff]
        %v6268 = vld [vmem:[#allocation3 + $0x400] sm:$0xff]
        %v6269 = vld [vmem:[#allocation3 + $0x408] sm:$0xff]
        %v6270 = vld [vmem:[#allocation3 + $0x410] sm:$0xff]
        %v6271 = vld [vmem:[#allocation3 + $0x418] sm:$0xff]
        %v6272 = vld [vmem:[#allocation3 + $0x420] sm:$0xff]
        %v6273 = vld [vmem:[#allocation3 + $0x428] sm:$0xff]
        %v6274 = vld [vmem:[#allocation3 + $0x430] sm:$0xff]
        %v6275 = vld [vmem:[#allocation3 + $0x438] sm:$0xff]
        %v6276 = vld [vmem:[#allocation3 + $0x440] sm:$0xff]
        %v6277 = vld [vmem:[#allocation3 + $0x448] sm:$0xff]
        %v6278 = vld [vmem:[#allocation3 + $0x450] sm:$0xff]
        %v6279 = vld [vmem:[#allocation3 + $0x458] sm:$0xff]
        %v6280 = vld [vmem:[#allocation3 + $0x460] sm:$0xff]
        %v6281 = vld [vmem:[#allocation3 + $0x468] sm:$0xff]
        %v6282 = vld [vmem:[#allocation3 + $0x470] sm:$0xff]
        %v6283 = vld [vmem:[#allocation3 + $0x478] sm:$0xff]
        %v6284 = vld [vmem:[#allocation10] sm:$0xf]
        %v6285 = vld [vmem:[#allocation10 + $0x4] sm:$0xf]
        %v6286 = vld [vmem:[#allocation10 + $0x8] sm:$0xf]
        %v6287 = vld [vmem:[#allocation10 + $0xc] sm:$0xf]
        %v6288 = vld [vmem:[#allocation10 + $0x10] sm:$0xf]
        %v6289 = vld [vmem:[#allocation10 + $0x14] sm:$0xf]
        %v6290 = vld [vmem:[#allocation10 + $0x18] sm:$0xf]
        %v6291 = vld [vmem:[#allocation10 + $0x1c] sm:$0xf]
        %v6292 = vld [vmem:[#allocation10 + $0x20] sm:$0xf]
        %v6293 = vld [vmem:[#allocation10 + $0x24] sm:$0xf]
        %v6294 = vld [vmem:[#allocation10 + $0x28] sm:$0xf]
        %v6295 = vld [vmem:[#allocation10 + $0x2c] sm:$0xf]
        %v6296 = vld [vmem:[#allocation10 + $0x30] sm:$0xf]
        %v6297 = vld [vmem:[#allocation10 + $0x34] sm:$0xf]
        %v6298 = vld [vmem:[#allocation10 + $0x38] sm:$0xf]
        %v6299 = vld [vmem:[#allocation10 + $0x3c] sm:$0xf]
        %v6300 = vld [vmem:[#allocation10 + $0x40] sm:$0xf]
        %v6301 = vld [vmem:[#allocation10 + $0x44] sm:$0xf]
        %v6302 = vld [vmem:[#allocation10 + $0x48] sm:$0xf]
        %v6303 = vld [vmem:[#allocation10 + $0x4c] sm:$0xf]
        %v6304 = vld [vmem:[#allocation10 + $0x50] sm:$0xf]
        %v6305 = vld [vmem:[#allocation10 + $0x54] sm:$0xf]
        %v6306 = vld [vmem:[#allocation10 + $0x58] sm:$0xf]
        %v6307 = vld [vmem:[#allocation10 + $0x5c] sm:$0xf]
        %v6308 = vld [vmem:[#allocation10 + $0x60] sm:$0xf]
        %v6309 = vld [vmem:[#allocation10 + $0x64] sm:$0xf]
        %v6310 = vld [vmem:[#allocation10 + $0x68] sm:$0xf]
        %v6311 = vld [vmem:[#allocation10 + $0x6c] sm:$0xf]
        %v6312 = vld [vmem:[#allocation10 + $0x70] sm:$0xf]
        %v6313 = vld [vmem:[#allocation10 + $0x74] sm:$0xf]
        %v6314 = vld [vmem:[#allocation10 + $0x78] sm:$0xf]
        %v6315 = vld [vmem:[#allocation10 + $0x7c] sm:$0xf]
        %v6316 = vld [vmem:[#allocation10 + $0x80] sm:$0xf]
        %v6317 = vld [vmem:[#allocation10 + $0x84] sm:$0xf]
        %v6318 = vld [vmem:[#allocation10 + $0x88] sm:$0xf]
        %v6319 = vld [vmem:[#allocation10 + $0x8c] sm:$0xf]
        %v6320 = vld [vmem:[#allocation10 + $0x90] sm:$0xf]
        %v6321 = vld [vmem:[#allocation10 + $0x94] sm:$0xf]
        %v6322 = vld [vmem:[#allocation10 + $0x98] sm:$0xf]
        %v6323 = vld [vmem:[#allocation10 + $0x9c] sm:$0xf]
        %v6324 = vld [vmem:[#allocation10 + $0xa0] sm:$0xf]
        %v6325 = vld [vmem:[#allocation10 + $0xa4] sm:$0xf]
        %v6326 = vld [vmem:[#allocation10 + $0xa8] sm:$0xf]
        %v6327 = vld [vmem:[#allocation10 + $0xac] sm:$0xf]
        %v6328 = vld [vmem:[#allocation10 + $0xb0] sm:$0xf]
        %v6329 = vld [vmem:[#allocation10 + $0xb4] sm:$0xf]
        %v6330 = vld [vmem:[#allocation10 + $0xb8] sm:$0xf]
        %v6331 = vld [vmem:[#allocation10 + $0xbc] sm:$0xf]
        %v6332 = vld [vmem:[#allocation10 + $0xc0] sm:$0xf]
        %v6333 = vld [vmem:[#allocation10 + $0xc4] sm:$0xf]
        %v6334 = vld [vmem:[#allocation10 + $0xc8] sm:$0xf]
        %v6335 = vld [vmem:[#allocation10 + $0xcc] sm:$0xf]
        %v6336 = vld [vmem:[#allocation10 + $0xd0] sm:$0xf]
        %v6337 = vld [vmem:[#allocation10 + $0xd4] sm:$0xf]
        %v6338 = vld [vmem:[#allocation10 + $0xd8] sm:$0xf]
        %v6339 = vld [vmem:[#allocation10 + $0xdc] sm:$0xf]
        %v6340 = vld [vmem:[#allocation10 + $0xe0] sm:$0xf]
        %v6341 = vld [vmem:[#allocation10 + $0xe4] sm:$0xf]
        %v6342 = vld [vmem:[#allocation10 + $0xe8] sm:$0xf]
        %v6343 = vld [vmem:[#allocation10 + $0xec] sm:$0xf]
        %v6344 = vld [vmem:[#allocation10 + $0xf0] sm:$0xf]
        %v6345 = vld [vmem:[#allocation10 + $0xf4] sm:$0xf]
        %v6346 = vld [vmem:[#allocation10 + $0xf8] sm:$0xf]
        %v6347 = vld [vmem:[#allocation10 + $0xfc] sm:$0xf]
        %v6348 = vld [vmem:[#allocation10 + $0x100] sm:$0xf]
        %v6349 = vld [vmem:[#allocation10 + $0x104] sm:$0xf]
        %v6350 = vld [vmem:[#allocation10 + $0x108] sm:$0xf]
        %v6351 = vld [vmem:[#allocation10 + $0x10c] sm:$0xf]
        %v6352 = vld [vmem:[#allocation10 + $0x110] sm:$0xf]
        %v6353 = vld [vmem:[#allocation10 + $0x114] sm:$0xf]
        %v6354 = vld [vmem:[#allocation10 + $0x118] sm:$0xf]
        %v6355 = vld [vmem:[#allocation10 + $0x11c] sm:$0xf]
        %v6356 = vld [vmem:[#allocation10 + $0x120] sm:$0xf]
        %v6357 = vld [vmem:[#allocation10 + $0x124] sm:$0xf]
        %v6358 = vld [vmem:[#allocation10 + $0x128] sm:$0xf]
        %v6359 = vld [vmem:[#allocation10 + $0x12c] sm:$0xf]
        %v6360 = vld [vmem:[#allocation10 + $0x130] sm:$0xf]
        %v6361 = vld [vmem:[#allocation10 + $0x134] sm:$0xf]
        %v6362 = vld [vmem:[#allocation10 + $0x138] sm:$0xf]
        %v6363 = vld [vmem:[#allocation10 + $0x13c] sm:$0xf]
        %v6364 = vld [vmem:[#allocation10 + $0x140] sm:$0xf]
        %v6365 = vld [vmem:[#allocation10 + $0x144] sm:$0xf]
        %v6366 = vld [vmem:[#allocation10 + $0x148] sm:$0xf]
        %v6367 = vld [vmem:[#allocation10 + $0x14c] sm:$0xf]
        %v6368 = vld [vmem:[#allocation10 + $0x150] sm:$0xf]
        %v6369 = vld [vmem:[#allocation10 + $0x154] sm:$0xf]
        %v6370 = vld [vmem:[#allocation10 + $0x158] sm:$0xf]
        %v6371 = vld [vmem:[#allocation10 + $0x15c] sm:$0xf]
        %v6372 = vld [vmem:[#allocation10 + $0x160] sm:$0xf]
        %v6373 = vld [vmem:[#allocation10 + $0x164] sm:$0xf]
        %v6374 = vld [vmem:[#allocation10 + $0x168] sm:$0xf]
        %v6375 = vld [vmem:[#allocation10 + $0x16c] sm:$0xf]
        %v6376 = vld [vmem:[#allocation10 + $0x170] sm:$0xf]
        %v6377 = vld [vmem:[#allocation10 + $0x174] sm:$0xf]
        %v6378 = vld [vmem:[#allocation10 + $0x178] sm:$0xf]
        %v6379 = vld [vmem:[#allocation10 + $0x17c] sm:$0xf]
        %v6380 = vld [vmem:[#allocation10 + $0x180] sm:$0xf]
        %v6381 = vld [vmem:[#allocation10 + $0x184] sm:$0xf]
        %v6382 = vld [vmem:[#allocation10 + $0x188] sm:$0xf]
        %v6383 = vld [vmem:[#allocation10 + $0x18c] sm:$0xf]
        %v6384 = vld [vmem:[#allocation10 + $0x190] sm:$0xf]
        %v6385 = vld [vmem:[#allocation10 + $0x194] sm:$0xf]
        %v6386 = vld [vmem:[#allocation10 + $0x198] sm:$0xf]
        %v6387 = vld [vmem:[#allocation10 + $0x19c] sm:$0xf]
        %v6388 = vld [vmem:[#allocation10 + $0x1a0] sm:$0xf]
        %v6389 = vld [vmem:[#allocation10 + $0x1a4] sm:$0xf]
        %v6390 = vld [vmem:[#allocation10 + $0x1a8] sm:$0xf]
        %v6391 = vld [vmem:[#allocation10 + $0x1ac] sm:$0xf]
        %v6392 = vld [vmem:[#allocation10 + $0x1b0] sm:$0xf]
        %v6393 = vld [vmem:[#allocation10 + $0x1b4] sm:$0xf]
        %v6394 = vld [vmem:[#allocation10 + $0x1b8] sm:$0xf]
        %v6395 = vld [vmem:[#allocation10 + $0x1bc] sm:$0xf]
        %v6396 = vld [vmem:[#allocation10 + $0x1c0] sm:$0xf]
        %v6397 = vld [vmem:[#allocation10 + $0x1c4] sm:$0xf]
        %v6398 = vld [vmem:[#allocation10 + $0x1c8] sm:$0xf]
        %v6399 = vld [vmem:[#allocation10 + $0x1cc] sm:$0xf]
        %v6400 = vld [vmem:[#allocation10 + $0x1d0] sm:$0xf]
        %v6401 = vld [vmem:[#allocation10 + $0x1d4] sm:$0xf]
        %v6402 = vld [vmem:[#allocation10 + $0x1d8] sm:$0xf]
        %v6403 = vld [vmem:[#allocation10 + $0x1dc] sm:$0xf]
        %v6404 = vld [vmem:[#allocation10 + $0x1e0] sm:$0xf]
        %v6405 = vld [vmem:[#allocation10 + $0x1e4] sm:$0xf]
        %v6406 = vld [vmem:[#allocation10 + $0x1e8] sm:$0xf]
        %v6407 = vld [vmem:[#allocation10 + $0x1ec] sm:$0xf]
        %v6408 = vld [vmem:[#allocation10 + $0x1f0] sm:$0xf]
        %v6409 = vld [vmem:[#allocation10 + $0x1f4] sm:$0xf]
        %v6410 = vld [vmem:[#allocation10 + $0x1f8] sm:$0xf]
        %v6411 = vld [vmem:[#allocation10 + $0x1fc] sm:$0xf]
        %v6412 = vld [vmem:[#allocation10 + $0x200] sm:$0xf]
        %v6413 = vld [vmem:[#allocation10 + $0x204] sm:$0xf]
        %v6414 = vld [vmem:[#allocation10 + $0x208] sm:$0xf]
        %v6415 = vld [vmem:[#allocation10 + $0x20c] sm:$0xf]
        %v6416 = vld [vmem:[#allocation10 + $0x210] sm:$0xf]
        %v6417 = vld [vmem:[#allocation10 + $0x214] sm:$0xf]
        %v6418 = vld [vmem:[#allocation10 + $0x218] sm:$0xf]
        %v6419 = vld [vmem:[#allocation10 + $0x21c] sm:$0xf]
        %v6420 = vld [vmem:[#allocation10 + $0x220] sm:$0xf]
        %v6421 = vld [vmem:[#allocation10 + $0x224] sm:$0xf]
        %v6422 = vld [vmem:[#allocation10 + $0x228] sm:$0xf]
        %v6423 = vld [vmem:[#allocation10 + $0x22c] sm:$0xf]
        %v6424 = vld [vmem:[#allocation10 + $0x230] sm:$0xf]
        %v6425 = vld [vmem:[#allocation10 + $0x234] sm:$0xf]
        %v6426 = vld [vmem:[#allocation10 + $0x238] sm:$0xf]
        %v6427 = vld [vmem:[#allocation10 + $0x23c] sm:$0xf]
        %v6572 = vunpack.c.l.b16 %v6284
        %v6573 = vunpack.c.l.b16 %v6285
        %v6574 = vunpack.c.l.b16 %v6286
        %v6575 = vunpack.c.l.b16 %v6287
        %v6576 = vunpack.c.l.b16 %v6288
        %v6577 = vunpack.c.l.b16 %v6289
        %v6578 = vunpack.c.l.b16 %v6290
        %v6579 = vunpack.c.l.b16 %v6291
        %v6580 = vunpack.c.l.b16 %v6292
        %v6581 = vunpack.c.l.b16 %v6293
        %v6582 = vunpack.c.l.b16 %v6294
        %v6583 = vunpack.c.l.b16 %v6295
        %v6584 = vunpack.c.l.b16 %v6296
        %v6585 = vunpack.c.l.b16 %v6297
        %v6586 = vunpack.c.l.b16 %v6298
        %v6587 = vunpack.c.l.b16 %v6299
        %v6588 = vunpack.c.l.b16 %v6300
        %v6589 = vunpack.c.l.b16 %v6301
        %v6590 = vunpack.c.l.b16 %v6302
        %v6591 = vunpack.c.l.b16 %v6303
        %v6592 = vunpack.c.l.b16 %v6304
        %v6593 = vunpack.c.l.b16 %v6305
        %v6594 = vunpack.c.l.b16 %v6306
        %v6595 = vunpack.c.l.b16 %v6307
        %v6596 = vunpack.c.l.b16 %v6308
        %v6597 = vunpack.c.l.b16 %v6309
        %v6598 = vunpack.c.l.b16 %v6310
        %v6599 = vunpack.c.l.b16 %v6311
        %v6600 = vunpack.c.l.b16 %v6312
        %v6601 = vunpack.c.l.b16 %v6313
        %v6602 = vunpack.c.l.b16 %v6314
        %v6603 = vunpack.c.l.b16 %v6315
        %v6604 = vunpack.c.l.b16 %v6316
        %v6605 = vunpack.c.l.b16 %v6317
        %v6606 = vunpack.c.l.b16 %v6318
        %v6607 = vunpack.c.l.b16 %v6319
        %v6608 = vunpack.c.l.b16 %v6320
        %v6609 = vunpack.c.l.b16 %v6321
        %v6610 = vunpack.c.l.b16 %v6322
        %v6611 = vunpack.c.l.b16 %v6323
        %v6612 = vunpack.c.l.b16 %v6324
        %v6613 = vunpack.c.l.b16 %v6325
        %v6614 = vunpack.c.l.b16 %v6326
        %v6615 = vunpack.c.l.b16 %v6327
        %v6616 = vunpack.c.l.b16 %v6328
        %v6617 = vunpack.c.l.b16 %v6329
        %v6618 = vunpack.c.l.b16 %v6330
        %v6619 = vunpack.c.l.b16 %v6331
        %v6620 = vunpack.c.l.b16 %v6332
        %v6621 = vunpack.c.l.b16 %v6333
        %v6622 = vunpack.c.l.b16 %v6334
        %v6623 = vunpack.c.l.b16 %v6335
        %v6624 = vunpack.c.l.b16 %v6336
        %v6625 = vunpack.c.l.b16 %v6337
        %v6626 = vunpack.c.l.b16 %v6338
        %v6627 = vunpack.c.l.b16 %v6339
        %v6628 = vunpack.c.l.b16 %v6340
        %v6629 = vunpack.c.l.b16 %v6341
        %v6630 = vunpack.c.l.b16 %v6342
        %v6631 = vunpack.c.l.b16 %v6343
        %v6632 = vunpack.c.l.b16 %v6344
        %v6633 = vunpack.c.l.b16 %v6345
        %v6634 = vunpack.c.l.b16 %v6346
        %v6635 = vunpack.c.l.b16 %v6347
        %v6636 = vunpack.c.l.b16 %v6348
        %v6637 = vunpack.c.l.b16 %v6349
        %v6638 = vunpack.c.l.b16 %v6350
        %v6639 = vunpack.c.l.b16 %v6351
        %v6640 = vunpack.c.l.b16 %v6352
        %v6641 = vunpack.c.l.b16 %v6353
        %v6642 = vunpack.c.l.b16 %v6354
        %v6643 = vunpack.c.l.b16 %v6355
        %v6644 = vunpack.c.l.b16 %v6356
        %v6645 = vunpack.c.l.b16 %v6357
        %v6646 = vunpack.c.l.b16 %v6358
        %v6647 = vunpack.c.l.b16 %v6359
        %v6648 = vunpack.c.l.b16 %v6360
        %v6649 = vunpack.c.l.b16 %v6361
        %v6650 = vunpack.c.l.b16 %v6362
        %v6651 = vunpack.c.l.b16 %v6363
        %v6652 = vunpack.c.l.b16 %v6364
        %v6653 = vunpack.c.l.b16 %v6365
        %v6654 = vunpack.c.l.b16 %v6366
        %v6655 = vunpack.c.l.b16 %v6367
        %v6656 = vunpack.c.l.b16 %v6368
        %v6657 = vunpack.c.l.b16 %v6369
        %v6658 = vunpack.c.l.b16 %v6370
        %v6659 = vunpack.c.l.b16 %v6371
        %v6660 = vunpack.c.l.b16 %v6372
        %v6661 = vunpack.c.l.b16 %v6373
        %v6662 = vunpack.c.l.b16 %v6374
        %v6663 = vunpack.c.l.b16 %v6375
        %v6664 = vunpack.c.l.b16 %v6376
        %v6665 = vunpack.c.l.b16 %v6377
        %v6666 = vunpack.c.l.b16 %v6378
        %v6667 = vunpack.c.l.b16 %v6379
        %v6668 = vunpack.c.l.b16 %v6380
        %v6669 = vunpack.c.l.b16 %v6381
        %v6670 = vunpack.c.l.b16 %v6382
        %v6671 = vunpack.c.l.b16 %v6383
        %v6672 = vunpack.c.l.b16 %v6384
        %v6673 = vunpack.c.l.b16 %v6385
        %v6674 = vunpack.c.l.b16 %v6386
        %v6675 = vunpack.c.l.b16 %v6387
        %v6676 = vunpack.c.l.b16 %v6388
        %v6677 = vunpack.c.l.b16 %v6389
        %v6678 = vunpack.c.l.b16 %v6390
        %v6679 = vunpack.c.l.b16 %v6391
        %v6680 = vunpack.c.l.b16 %v6392
        %v6681 = vunpack.c.l.b16 %v6393
        %v6682 = vunpack.c.l.b16 %v6394
        %v6683 = vunpack.c.l.b16 %v6395
        %v6684 = vunpack.c.l.b16 %v6396
        %v6685 = vunpack.c.l.b16 %v6397
        %v6686 = vunpack.c.l.b16 %v6398
        %v6687 = vunpack.c.l.b16 %v6399
        %v6688 = vunpack.c.l.b16 %v6400
        %v6689 = vunpack.c.l.b16 %v6401
        %v6690 = vunpack.c.l.b16 %v6402
        %v6691 = vunpack.c.l.b16 %v6403
        %v6692 = vunpack.c.l.b16 %v6404
        %v6693 = vunpack.c.l.b16 %v6405
        %v6694 = vunpack.c.l.b16 %v6406
        %v6695 = vunpack.c.l.b16 %v6407
        %v6696 = vunpack.c.l.b16 %v6408
        %v6697 = vunpack.c.l.b16 %v6409
        %v6698 = vunpack.c.l.b16 %v6410
        %v6699 = vunpack.c.l.b16 %v6411
        %v6700 = vunpack.c.l.b16 %v6412
        %v6701 = vunpack.c.l.b16 %v6413
        %v6702 = vunpack.c.l.b16 %v6414
        %v6703 = vunpack.c.l.b16 %v6415
        %v6704 = vunpack.c.l.b16 %v6416
        %v6705 = vunpack.c.l.b16 %v6417
        %v6706 = vunpack.c.l.b16 %v6418
        %v6707 = vunpack.c.l.b16 %v6419
        %v6708 = vunpack.c.l.b16 %v6420
        %v6709 = vunpack.c.l.b16 %v6421
        %v6710 = vunpack.c.l.b16 %v6422
        %v6711 = vunpack.c.l.b16 %v6423
        %v6712 = vunpack.c.l.b16 %v6424
        %v6713 = vunpack.c.l.b16 %v6425
        %v6714 = vunpack.c.l.b16 %v6426
        %v6715 = vunpack.c.l.b16 %v6427
        %v6716 = vpack.c.b16 %v6573, %v6572
        %v6717 = vpack.c.b16 %v6575, %v6574
        %v6718 = vpack.c.b16 %v6577, %v6576
        %v6719 = vpack.c.b16 %v6579, %v6578
        %v6720 = vpack.c.b16 %v6581, %v6580
        %v6721 = vpack.c.b16 %v6583, %v6582
        %v6722 = vpack.c.b16 %v6585, %v6584
        %v6723 = vpack.c.b16 %v6587, %v6586
        %v6724 = vpack.c.b16 %v6589, %v6588
        %v6725 = vpack.c.b16 %v6591, %v6590
        %v6726 = vpack.c.b16 %v6593, %v6592
        %v6727 = vpack.c.b16 %v6595, %v6594
        %v6728 = vpack.c.b16 %v6597, %v6596
        %v6729 = vpack.c.b16 %v6599, %v6598
        %v6730 = vpack.c.b16 %v6601, %v6600
        %v6731 = vpack.c.b16 %v6603, %v6602
        %v6732 = vpack.c.b16 %v6605, %v6604
        %v6733 = vpack.c.b16 %v6607, %v6606
        %v6734 = vpack.c.b16 %v6609, %v6608
        %v6735 = vpack.c.b16 %v6611, %v6610
        %v6736 = vpack.c.b16 %v6613, %v6612
        %v6737 = vpack.c.b16 %v6615, %v6614
        %v6738 = vpack.c.b16 %v6617, %v6616
        %v6739 = vpack.c.b16 %v6619, %v6618
        %v6740 = vpack.c.b16 %v6621, %v6620
        %v6741 = vpack.c.b16 %v6623, %v6622
        %v6742 = vpack.c.b16 %v6625, %v6624
        %v6743 = vpack.c.b16 %v6627, %v6626
        %v6744 = vpack.c.b16 %v6629, %v6628
        %v6745 = vpack.c.b16 %v6631, %v6630
        %v6746 = vpack.c.b16 %v6633, %v6632
        %v6747 = vpack.c.b16 %v6635, %v6634
        %v6748 = vpack.c.b16 %v6637, %v6636
        %v6749 = vpack.c.b16 %v6639, %v6638
        %v6750 = vpack.c.b16 %v6641, %v6640
        %v6751 = vpack.c.b16 %v6643, %v6642
        %v6752 = vpack.c.b16 %v6645, %v6644
        %v6753 = vpack.c.b16 %v6647, %v6646
        %v6754 = vpack.c.b16 %v6649, %v6648
        %v6755 = vpack.c.b16 %v6651, %v6650
        %v6756 = vpack.c.b16 %v6653, %v6652
        %v6757 = vpack.c.b16 %v6655, %v6654
        %v6758 = vpack.c.b16 %v6657, %v6656
        %v6759 = vpack.c.b16 %v6659, %v6658
        %v6760 = vpack.c.b16 %v6661, %v6660
        %v6761 = vpack.c.b16 %v6663, %v6662
        %v6762 = vpack.c.b16 %v6665, %v6664
        %v6763 = vpack.c.b16 %v6667, %v6666
        %v6764 = vpack.c.b16 %v6669, %v6668
        %v6765 = vpack.c.b16 %v6671, %v6670
        %v6766 = vpack.c.b16 %v6673, %v6672
        %v6767 = vpack.c.b16 %v6675, %v6674
        %v6768 = vpack.c.b16 %v6677, %v6676
        %v6769 = vpack.c.b16 %v6679, %v6678
        %v6770 = vpack.c.b16 %v6681, %v6680
        %v6771 = vpack.c.b16 %v6683, %v6682
        %v6772 = vpack.c.b16 %v6685, %v6684
        %v6773 = vpack.c.b16 %v6687, %v6686
        %v6774 = vpack.c.b16 %v6689, %v6688
        %v6775 = vpack.c.b16 %v6691, %v6690
        %v6776 = vpack.c.b16 %v6693, %v6692
        %v6777 = vpack.c.b16 %v6695, %v6694
        %v6778 = vpack.c.b16 %v6697, %v6696
        %v6779 = vpack.c.b16 %v6699, %v6698
        %v6780 = vpack.c.b16 %v6701, %v6700
        %v6781 = vpack.c.b16 %v6703, %v6702
        %v6782 = vpack.c.b16 %v6705, %v6704
        %v6783 = vpack.c.b16 %v6707, %v6706
        %v6784 = vpack.c.b16 %v6709, %v6708
        %v6785 = vpack.c.b16 %v6711, %v6710
        %v6786 = vpack.c.b16 %v6713, %v6712
        %v6787 = vpack.c.b16 %v6715, %v6714
        %6860 = vmatprep.subr.bf16.mxu0 0
        %6861 = vmatpush1.bf16.msra.mxu0 %v6716
        %6862 = vmatprep.subr.bf16.mxu0 0
        %6863 = vmatpush1.bf16.msra.mxu0 %v6717
        %6864 = vmatprep.subr.bf16.mxu0 0
        %6865 = vmatpush1.bf16.msra.mxu0 %v6718
        %6866 = vmatprep.subr.bf16.mxu0 0
        %6867 = vmatpush1.bf16.msra.mxu0 %v6719
        %6868 = vmatprep.subr.bf16.mxu0 0
        %6869 = vmatpush1.bf16.msra.mxu0 %v6720
        %6870 = vmatprep.subr.bf16.mxu0 0
        %6871 = vmatpush1.bf16.msra.mxu0 %v6721
        %6872 = vmatprep.subr.bf16.mxu0 0
        %6873 = vmatpush1.bf16.msra.mxu0 %v6722
        %6874 = vmatprep.subr.bf16.mxu0 0
        %6875 = vmatpush1.bf16.msra.mxu0 %v6723
        %6876 = vmatprep.subr.bf16.mxu0 0
        %6877 = vmatpush1.bf16.msra.mxu0 %v6724
        %6878 = vmatprep.subr.bf16.mxu0 0
        %6879 = vmatpush1.bf16.msra.mxu0 %v6725
        %6880 = vmatprep.subr.bf16.mxu0 0
        %6881 = vmatpush1.bf16.msra.mxu0 %v6726
        %6882 = vmatprep.subr.bf16.mxu0 0
        %6883 = vmatpush1.bf16.msra.mxu0 %v6727
        %6884 = vmatprep.subr.bf16.mxu0 0
        %6885 = vmatpush1.bf16.msra.mxu0 %v6728
        %6886 = vmatprep.subr.bf16.mxu0 0
        %6887 = vmatpush1.bf16.msra.mxu0 %v6729
        %6888 = vmatprep.subr.bf16.mxu0 0
        %6889 = vmatpush1.bf16.msra.mxu0 %v6730
        %6890 = vmatprep.subr.bf16.mxu0 0
        %6891 = vmatpush1.bf16.msra.mxu0 %v6731
        %6892 = vmatprep.mubr.bf16.mxu0 %v6213
        %6893 = vmatmul.mubr.bf16.gmra.mrb[0].mxu0 %v6212
        %v6894 = vpop.f32.mrb[0].mxu0
        %v6895 = vadd.f32 0.0, %v6894
        %v6896 = vpop.f32.mrb[0].mxu0
        %v6897 = vpop.f32.mrb[0].mxu0
        %v6898 = vadd.f32 0.0, %v6897
        %v6899 = vpop.f32.mrb[0].mxu0
        %6900 = vmatprep.mubr.bf16.mxu0 %v6222
        %6901 = vmatmul.mubr.bf16.gmra.mrb[0].mxu0 %v6221
        %v6902 = vpop.f32.mrb[0].mxu0
        %v6903 = vadd.f32 0.0, %v6902
        %v6904 = vpop.f32.mrb[0].mxu0
        %v6905 = vpop.f32.mrb[0].mxu0
        %v6906 = vadd.f32 0.0, %v6905
        %v6907 = vpop.f32.mrb[0].mxu0
        %6908 = vmatprep.mubr.bf16.mxu0 %v6231
        %6909 = vmatmul.mubr.bf16.gmra.mrb[0].mxu0 %v6230
        %v6910 = vpop.f32.mrb[0].mxu0
        %v6911 = vadd.f32 0.0, %v6910
        %v6912 = vpop.f32.mrb[0].mxu0
        %v6913 = vpop.f32.mrb[0].mxu0
        %v6914 = vadd.f32 0.0, %v6913
        %v6915 = vpop.f32.mrb[0].mxu0
        %6916 = vmatprep.mubr.bf16.mxu0 %v6240
        %6917 = vmatmul.mubr.bf16.gmra.mrb[0].mxu0 %v6239
        %v6918 = vpop.f32.mrb[0].mxu0
        %v6919 = vadd.f32 0.0, %v6918
        %v6920 = vpop.f32.mrb[0].mxu0
        %v6921 = vpop.f32.mrb[0].mxu0
        %v6922 = vadd.f32 0.0, %v6921
        %v6923 = vpop.f32.mrb[0].mxu0
        %6924 = vmatprep.mubr.bf16.mxu0 %v6249
        %6925 = vmatmul.mubr.bf16.gmra.mrb[0].mxu0 %v6248
        %v6926 = vpop.f32.mrb[0].mxu0
        %v6927 = vadd.f32 0.0, %v6926
        %v6928 = vpop.f32.mrb[0].mxu0
        %v6929 = vpop.f32.mrb[0].mxu0
        %v6930 = vadd.f32 0.0, %v6929
        %v6931 = vpop.f32.mrb[0].mxu0
        %6932 = vmatprep.mubr.bf16.mxu0 %v6258
        %6933 = vmatmul.mubr.bf16.gmra.mrb[0].mxu0 %v6257
        %v6934 = vpop.f32.mrb[0].mxu0
        %v6935 = vadd.f32 0.0, %v6934
        %v6936 = vpop.f32.mrb[0].mxu0
        %v6937 = vpop.f32.mrb[0].mxu0
        %v6938 = vadd.f32 0.0, %v6937
        %v6939 = vpop.f32.mrb[0].mxu0
        %6940 = vmatprep.mubr.bf16.mxu0 %v6267
        %6941 = vmatmul.mubr.bf16.gmra.mrb[0].mxu0 %v6266
        %v6942 = vpop.f32.mrb[0].mxu0
        %v6943 = vadd.f32 0.0, %v6942
        %v6944 = vpop.f32.mrb[0].mxu0
        %v6945 = vpop.f32.mrb[0].mxu0
        %v6946 = vadd.f32 0.0, %v6945
        %v6947 = vpop.f32.mrb[0].mxu0
        %6948 = vmatprep.mubr.bf16.mxu0 %v6276
        %6949 = vmatmul.mubr.bf16.gmra.mrb[0].mxu0 %v6275
        %v6950 = vpop.f32.mrb[0].mxu0
        %v6951 = vadd.f32 0.0, %v6950
        %v6952 = vpop.f32.mrb[0].mxu0
        %v6953 = vpop.f32.mrb[0].mxu0
        %v6954 = vadd.f32 0.0, %v6953
        %v6955 = vpop.f32.mrb[0].mxu0
        %6956 = vdwg.mxu0
        %6957 = vmatprep.subr.bf16.mxu0 0
        %6958 = vmatpush1.bf16.msra.mxu0 %v6732
        %6959 = vmatprep.subr.bf16.mxu0 0
        %6960 = vmatpush1.bf16.msra.mxu0 %v6733
        %6961 = vmatprep.subr.bf16.mxu0 0
        %6962 = vmatpush1.bf16.msra.mxu0 %v6734
        %6963 = vmatprep.subr.bf16.mxu0 0
        %6964 = vmatpush1.bf16.msra.mxu0 %v6735
        %6965 = vmatprep.subr.bf16.mxu0 0
        %6966 = vmatpush1.bf16.msra.mxu0 %v6736
        %6967 = vmatprep.subr.bf16.mxu0 0
        %6968 = vmatpush1.bf16.msra.mxu0 %v6737
        %6969 = vmatprep.subr.bf16.mxu0 0
        %6970 = vmatpush1.bf16.msra.mxu0 %v6738
        %6971 = vmatprep.subr.bf16.mxu0 0
        %6972 = vmatpush1.bf16.msra.mxu0 %v6739
        %6973 = vmatprep.subr.bf16.mxu0 0
        %6974 = vmatpush1.bf16.msra.mxu0 %v6740
        %6975 = vmatprep.subr.bf16.mxu0 0
        %6976 = vmatpush1.bf16.msra.mxu0 %v6741
        %6977 = vmatprep.subr.bf16.mxu0 0
        %6978 = vmatpush1.bf16.msra.mxu0 %v6742
        %6979 = vmatprep.subr.bf16.mxu0 0
        %6980 = vmatpush1.bf16.msra.mxu0 %v6743
        %6981 = vmatprep.subr.bf16.mxu0 0
        %6982 = vmatpush1.bf16.msra.mxu0 %v6744
        %6983 = vmatprep.subr.bf16.mxu0 0
        %6984 = vmatpush1.bf16.msra.mxu0 %v6745
        %6985 = vmatprep.subr.bf16.mxu0 0
        %6986 = vmatpush1.bf16.msra.mxu0 %v6746
        %6987 = vmatprep.subr.bf16.mxu0 0
        %6988 = vmatpush1.bf16.msra.mxu0 %v6747
        %6989 = vmatprep.mubr.bf16.mxu0 %v6215
        %6990 = vmatmul.mubr.bf16.gmra.mrb[0].mxu0 %v6214
        %v6991 = vpop.f32.mrb[0].mxu0
        %v6992 = vadd.f32 %v6895, %v6991
        %v6993 = vpop.f32.mrb[0].mxu0
        %v6994 = vpop.f32.mrb[0].mxu0
        %v6995 = vadd.f32 %v6898, %v6994
        %v6996 = vpop.f32.mrb[0].mxu0
        %6997 = vmatprep.mubr.bf16.mxu0 %v6224
        %6998 = vmatmul.mubr.bf16.gmra.mrb[0].mxu0 %v6223
        %v6999 = vpop.f32.mrb[0].mxu0
        %v7000 = vadd.f32 %v6903, %v6999
        %v7001 = vpop.f32.mrb[0].mxu0
        %v7002 = vpop.f32.mrb[0].mxu0
        %v7003 = vadd.f32 %v6906, %v7002
        %v7004 = vpop.f32.mrb[0].mxu0
        %7005 = vmatprep.mubr.bf16.mxu0 %v6233
        %7006 = vmatmul.mubr.bf16.gmra.mrb[0].mxu0 %v6232
        %v7007 = vpop.f32.mrb[0].mxu0
        %v7008 = vadd.f32 %v6911, %v7007
        %v7009 = vpop.f32.mrb[0].mxu0
        %v7010 = vpop.f32.mrb[0].mxu0
        %v7011 = vadd.f32 %v6914, %v7010
        %v7012 = vpop.f32.mrb[0].mxu0
        %7013 = vmatprep.mubr.bf16.mxu0 %v6242
        %7014 = vmatmul.mubr.bf16.gmra.mrb[0].mxu0 %v6241
        %v7015 = vpop.f32.mrb[0].mxu0
        %v7016 = vadd.f32 %v6919, %v7015
        %v7017 = vpop.f32.mrb[0].mxu0
        %v7018 = vpop.f32.mrb[0].mxu0
        %v7019 = vadd.f32 %v6922, %v7018
        %v7020 = vpop.f32.mrb[0].mxu0
        %7021 = vmatprep.mubr.bf16.mxu0 %v6251
        %7022 = vmatmul.mubr.bf16.gmra.mrb[0].mxu0 %v6250
        %v7023 = vpop.f32.mrb[0].mxu0
        %v7024 = vadd.f32 %v6927, %v7023
        %v7025 = vpop.f32.mrb[0].mxu0
        %v7026 = vpop.f32.mrb[0].mxu0
        %v7027 = vadd.f32 %v6930, %v7026
        %v7028 = vpop.f32.mrb[0].mxu0
        %7029 = vmatprep.mubr.bf16.mxu0 %v6260
        %7030 = vmatmul.mubr.bf16.gmra.mrb[0].mxu0 %v6259
        %v7031 = vpop.f32.mrb[0].mxu0
        %v7032 = vadd.f32 %v6935, %v7031
        %v7033 = vpop.f32.mrb[0].mxu0
        %v7034 = vpop.f32.mrb[0].mxu0
        %v7035 = vadd.f32 %v6938, %v7034
        %v7036 = vpop.f32.mrb[0].mxu0
        %7037 = vmatprep.mubr.bf16.mxu0 %v6269
        %7038 = vmatmul.mubr.bf16.gmra.mrb[0].mxu0 %v6268
        %v7039 = vpop.f32.mrb[0].mxu0
        %v7040 = vadd.f32 %v6943, %v7039
        %v7041 = vpop.f32.mrb[0].mxu0
        %v7042 = vpop.f32.mrb[0].mxu0
        %v7043 = vadd.f32 %v6946, %v7042
        %v7044 = vpop.f32.mrb[0].mxu0
        %7045 = vmatprep.mubr.bf16.mxu0 %v6278
        %7046 = vmatmul.mubr.bf16.gmra.mrb[0].mxu0 %v6277
        %v7047 = vpop.f32.mrb[0].mxu0
        %v7048 = vadd.f32 %v6951, %v7047
        %v7049 = vpop.f32.mrb[0].mxu0
        %v7050 = vpop.f32.mrb[0].mxu0
        %v7051 = vadd.f32 %v6954, %v7050
        %v7052 = vpop.f32.mrb[0].mxu0
        %7053 = vdwg.mxu0
        %7054 = vmatprep.subr.bf16.mxu0 0
        %7055 = vmatpush1.bf16.msra.mxu0 %v6748
        %7056 = vmatprep.subr.bf16.mxu0 0
        %7057 = vmatpush1.bf16.msra.mxu0 %v6749
        %7058 = vmatprep.subr.bf16.mxu0 0
        %7059 = vmatpush1.bf16.msra.mxu0 %v6750
        %7060 = vmatprep.subr.bf16.mxu0 0
        %7061 = vmatpush1.bf16.msra.mxu0 %v6751
        %7062 = vmatprep.subr.bf16.mxu0 0
        %7063 = vmatpush1.bf16.msra.mxu0 %v6752
        %7064 = vmatprep.subr.bf16.mxu0 0
        %7065 = vmatpush1.bf16.msra.mxu0 %v6753
        %7066 = vmatprep.subr.bf16.mxu0 0
        %7067 = vmatpush1.bf16.msra.mxu0 %v6754
        %7068 = vmatprep.subr.bf16.mxu0 0
        %7069 = vmatpush1.bf16.msra.mxu0 %v6755
        %7070 = vmatprep.subr.bf16.mxu0 0
        %7071 = vmatpush1.bf16.msra.mxu0 %v6756
        %7072 = vmatprep.subr.bf16.mxu0 0
        %7073 = vmatpush1.bf16.msra.mxu0 %v6757
        %7074 = vmatprep.subr.bf16.mxu0 0
        %7075 = vmatpush1.bf16.msra.mxu0 %v6758
        %7076 = vmatprep.subr.bf16.mxu0 0
        %7077 = vmatpush1.bf16.msra.mxu0 %v6759
        %7078 = vmatprep.subr.bf16.mxu0 0
        %7079 = vmatpush1.bf16.msra.mxu0 %v6760
        %7080 = vmatprep.subr.bf16.mxu0 0
        %7081 = vmatpush1.bf16.msra.mxu0 %v6761
        %7082 = vmatprep.subr.bf16.mxu0 0
        %7083 = vmatpush1.bf16.msra.mxu0 %v6762
        %7084 = vmatprep.subr.bf16.mxu0 0
        %7085 = vmatpush1.bf16.msra.mxu0 %v6763
        %7086 = vmatprep.mubr.bf16.mxu0 %v6217
        %7087 = vmatmul.mubr.bf16.gmra.mrb[0].mxu0 %v6216
        %v7088 = vpop.f32.mrb[0].mxu0
        %v7089 = vadd.f32 %v6992, %v7088
        %v7090 = vpop.f32.mrb[0].mxu0
        %v7091 = vpop.f32.mrb[0].mxu0
        %v7092 = vadd.f32 %v6995, %v7091
        %v7093 = vpop.f32.mrb[0].mxu0
        %7094 = vmatprep.mubr.bf16.mxu0 %v6226
        %7095 = vmatmul.mubr.bf16.gmra.mrb[0].mxu0 %v6225
        %v7096 = vpop.f32.mrb[0].mxu0
        %v7097 = vadd.f32 %v7000, %v7096
        %v7098 = vpop.f32.mrb[0].mxu0
        %v7099 = vpop.f32.mrb[0].mxu0
        %v7100 = vadd.f32 %v7003, %v7099
        %v7101 = vpop.f32.mrb[0].mxu0
        %7102 = vmatprep.mubr.bf16.mxu0 %v6235
        %7103 = vmatmul.mubr.bf16.gmra.mrb[0].mxu0 %v6234
        %v7104 = vpop.f32.mrb[0].mxu0
        %v7105 = vadd.f32 %v7008, %v7104
        %v7106 = vpop.f32.mrb[0].mxu0
        %v7107 = vpop.f32.mrb[0].mxu0
        %v7108 = vadd.f32 %v7011, %v7107
        %v7109 = vpop.f32.mrb[0].mxu0
        %7110 = vmatprep.mubr.bf16.mxu0 %v6244
        %7111 = vmatmul.mubr.bf16.gmra.mrb[0].mxu0 %v6243
        %v7112 = vpop.f32.mrb[0].mxu0
        %v7113 = vadd.f32 %v7016, %v7112
        %v7114 = vpop.f32.mrb[0].mxu0
        %v7115 = vpop.f32.mrb[0].mxu0
        %v7116 = vadd.f32 %v7019, %v7115
        %v7117 = vpop.f32.mrb[0].mxu0
        %7118 = vmatprep.mubr.bf16.mxu0 %v6253
        %7119 = vmatmul.mubr.bf16.gmra.mrb[0].mxu0 %v6252
        %v7120 = vpop.f32.mrb[0].mxu0
        %v7121 = vadd.f32 %v7024, %v7120
        %v7122 = vpop.f32.mrb[0].mxu0
        %v7123 = vpop.f32.mrb[0].mxu0
        %v7124 = vadd.f32 %v7027, %v7123
        %v7125 = vpop.f32.mrb[0].mxu0
        %7126 = vmatprep.mubr.bf16.mxu0 %v6262
        %7127 = vmatmul.mubr.bf16.gmra.mrb[0].mxu0 %v6261
        %v7128 = vpop.f32.mrb[0].mxu0
        %v7129 = vadd.f32 %v7032, %v7128
        %v7130 = vpop.f32.mrb[0].mxu0
        %v7131 = vpop.f32.mrb[0].mxu0
        %v7132 = vadd.f32 %v7035, %v7131
        %v7133 = vpop.f32.mrb[0].mxu0
        %7134 = vmatprep.mubr.bf16.mxu0 %v6271
        %7135 = vmatmul.mubr.bf16.gmra.mrb[0].mxu0 %v6270
        %v7136 = vpop.f32.mrb[0].mxu0
        %v7137 = vadd.f32 %v7040, %v7136
        %v7138 = vpop.f32.mrb[0].mxu0
        %v7139 = vpop.f32.mrb[0].mxu0
        %v7140 = vadd.f32 %v7043, %v7139
        %v7141 = vpop.f32.mrb[0].mxu0
        %7142 = vmatprep.mubr.bf16.mxu0 %v6280
        %7143 = vmatmul.mubr.bf16.gmra.mrb[0].mxu0 %v6279
        %v7144 = vpop.f32.mrb[0].mxu0
        %v7145 = vadd.f32 %v7048, %v7144
        %v7146 = vpop.f32.mrb[0].mxu0
        %v7147 = vpop.f32.mrb[0].mxu0
        %v7148 = vadd.f32 %v7051, %v7147
        %v7149 = vpop.f32.mrb[0].mxu0
        %7150 = vdwg.mxu0
        %7151 = vmatprep.subr.bf16.mxu0 0
        %7152 = vmatpush1.bf16.msra.mxu0 %v6764
        %7153 = vmatprep.subr.bf16.mxu0 0
        %7154 = vmatpush1.bf16.msra.mxu0 %v6765
        %7155 = vmatprep.subr.bf16.mxu0 0
        %7156 = vmatpush1.bf16.msra.mxu0 %v6766
        %7157 = vmatprep.subr.bf16.mxu0 0
        %7158 = vmatpush1.bf16.msra.mxu0 %v6767
        %7159 = vmatprep.subr.bf16.mxu0 0
        %7160 = vmatpush1.bf16.msra.mxu0 %v6768
        %7161 = vmatprep.subr.bf16.mxu0 0
        %7162 = vmatpush1.bf16.msra.mxu0 %v6769
        %7163 = vmatprep.subr.bf16.mxu0 0
        %7164 = vmatpush1.bf16.msra.mxu0 %v6770
        %7165 = vmatprep.subr.bf16.mxu0 0
        %7166 = vmatpush1.bf16.msra.mxu0 %v6771
        %7167 = vmatprep.subr.bf16.mxu0 0
        %7168 = vmatpush1.bf16.msra.mxu0 %v6772
        %7169 = vmatprep.subr.bf16.mxu0 0
        %7170 = vmatpush1.bf16.msra.mxu0 %v6773
        %7171 = vmatprep.subr.bf16.mxu0 0
        %7172 = vmatpush1.bf16.msra.mxu0 %v6774
        %7173 = vmatprep.subr.bf16.mxu0 0
        %7174 = vmatpush1.bf16.msra.mxu0 %v6775
        %7175 = vmatprep.subr.bf16.mxu0 0
        %7176 = vmatpush1.bf16.msra.mxu0 %v6776
        %7177 = vmatprep.subr.bf16.mxu0 0
        %7178 = vmatpush1.bf16.msra.mxu0 %v6777
        %7179 = vmatprep.subr.bf16.mxu0 0
        %7180 = vmatpush1.bf16.msra.mxu0 %v6778
        %7181 = vmatprep.subr.bf16.mxu0 0
        %7182 = vmatpush1.bf16.msra.mxu0 %v6779
        %7183 = vmatprep.mubr.bf16.mxu0 %v6219
        %7184 = vmatmul.mubr.bf16.gmra.mrb[0].mxu0 %v6218
        %v7185 = vpop.f32.mrb[0].mxu0
        %v7186 = vadd.f32 %v7089, %v7185
        %v7187 = vpop.f32.mrb[0].mxu0
        %v7188 = vpop.f32.mrb[0].mxu0
        %v7189 = vadd.f32 %v7092, %v7188
        %v7190 = vpop.f32.mrb[0].mxu0
        %7191 = vmatprep.mubr.bf16.mxu0 %v6228
        %7192 = vmatmul.mubr.bf16.gmra.mrb[0].mxu0 %v6227
        %v7193 = vpop.f32.mrb[0].mxu0
        %v7194 = vadd.f32 %v7097, %v7193
        %v7195 = vpop.f32.mrb[0].mxu0
        %v7196 = vpop.f32.mrb[0].mxu0
        %v7197 = vadd.f32 %v7100, %v7196
        %v7198 = vpop.f32.mrb[0].mxu0
        %7199 = vmatprep.mubr.bf16.mxu0 %v6237
        %7200 = vmatmul.mubr.bf16.gmra.mrb[0].mxu0 %v6236
        %v7201 = vpop.f32.mrb[0].mxu0
        %v7202 = vadd.f32 %v7105, %v7201
        %v7203 = vpop.f32.mrb[0].mxu0
        %v7204 = vpop.f32.mrb[0].mxu0
        %v7205 = vadd.f32 %v7108, %v7204
        %v7206 = vpop.f32.mrb[0].mxu0
        %7207 = vmatprep.mubr.bf16.mxu0 %v6246
        %7208 = vmatmul.mubr.bf16.gmra.mrb[0].mxu0 %v6245
        %v7209 = vpop.f32.mrb[0].mxu0
        %v7210 = vadd.f32 %v7113, %v7209
        %v7211 = vpop.f32.mrb[0].mxu0
        %v7212 = vpop.f32.mrb[0].mxu0
        %v7213 = vadd.f32 %v7116, %v7212
        %v7214 = vpop.f32.mrb[0].mxu0
        %7215 = vmatprep.mubr.bf16.mxu0 %v6255
        %7216 = vmatmul.mubr.bf16.gmra.mrb[0].mxu0 %v6254
        %v7217 = vpop.f32.mrb[0].mxu0
        %v7218 = vadd.f32 %v7121, %v7217
        %v7219 = vpop.f32.mrb[0].mxu0
        %v7220 = vpop.f32.mrb[0].mxu0
        %v7221 = vadd.f32 %v7124, %v7220
        %v7222 = vpop.f32.mrb[0].mxu0
        %7223 = vmatprep.mubr.bf16.mxu0 %v6264
        %7224 = vmatmul.mubr.bf16.gmra.mrb[0].mxu0 %v6263
        %v7225 = vpop.f32.mrb[0].mxu0
        %v7226 = vadd.f32 %v7129, %v7225
        %v7227 = vpop.f32.mrb[0].mxu0
        %v7228 = vpop.f32.mrb[0].mxu0
        %v7229 = vadd.f32 %v7132, %v7228
        %v7230 = vpop.f32.mrb[0].mxu0
        %7231 = vmatprep.mubr.bf16.mxu0 %v6273
        %7232 = vmatmul.mubr.bf16.gmra.mrb[0].mxu0 %v6272
        %v7233 = vpop.f32.mrb[0].mxu0
        %v7234 = vadd.f32 %v7137, %v7233
        %v7235 = vpop.f32.mrb[0].mxu0
        %v7236 = vpop.f32.mrb[0].mxu0
        %v7237 = vadd.f32 %v7140, %v7236
        %v7238 = vpop.f32.mrb[0].mxu0
        %7239 = vmatprep.mubr.bf16.mxu0 %v6282
        %7240 = vmatmul.mubr.bf16.gmra.mrb[0].mxu0 %v6281
        %v7241 = vpop.f32.mrb[0].mxu0
        %v7242 = vadd.f32 %v7145, %v7241
        %v7243 = vpop.f32.mrb[0].mxu0
        %v7244 = vpop.f32.mrb[0].mxu0
        %v7245 = vadd.f32 %v7148, %v7244
        %v7246 = vpop.f32.mrb[0].mxu0
        %7247 = vdwg.mxu0
        %7248 = vmatprep.subr.bf16.mxu0 0
        %7249 = vmatpush1.bf16.msra.mxu0 %v6780
        %7250 = vmatprep.subr.bf16.mxu0 0
        %7251 = vmatpush1.bf16.msra.mxu0 %v6781
        %7252 = vmatprep.subr.bf16.mxu0 0
        %7253 = vmatpush1.bf16.msra.mxu0 %v6782
        %7254 = vmatprep.subr.bf16.mxu0 0
        %7255 = vmatpush1.bf16.msra.mxu0 %v6783
        %7256 = vmatprep.subr.bf16.mxu0 0
        %7257 = vmatpush1.bf16.msra.mxu0 %v6784
        %7258 = vmatprep.subr.bf16.mxu0 0
        %7259 = vmatpush1.bf16.msra.mxu0 %v6785
        %7260 = vmatprep.subr.bf16.mxu0 0
        %7261 = vmatpush1.bf16.msra.mxu0 %v6786
        %7262 = vmatprep.subr.bf16.mxu0 0
        %7263 = vmatpush1.bf16.msra.mxu0 %v6787
        %7264 = vmatprep.subr.bf16.mxu0 0
        %7265 = vmatpush1.bf16.msra.mxu0 0
        %7266 = vmatprep.subr.bf16.mxu0 0
        %7267 = vmatpush1.bf16.msra.mxu0 0
        %7268 = vmatprep.subr.bf16.mxu0 0
        %7269 = vmatpush1.bf16.msra.mxu0 0
        %7270 = vmatprep.subr.bf16.mxu0 0
        %7271 = vmatpush1.bf16.msra.mxu0 0
        %7272 = vmatprep.subr.bf16.mxu0 0
        %7273 = vmatpush1.bf16.msra.mxu0 0
        %7274 = vmatprep.subr.bf16.mxu0 0
        %7275 = vmatpush1.bf16.msra.mxu0 0
        %7276 = vmatprep.subr.bf16.mxu0 0
        %7277 = vmatpush1.bf16.msra.mxu0 0
        %7278 = vmatprep.subr.bf16.mxu0 0
        %7279 = vmatpush1.bf16.msra.mxu0 0
        %7280 = vmatprep.mubr.bf16.mxu0 0
        %7281 = vmatmul.mubr.bf16.gmra.mrb[0].mxu0 %v6220
        %v7282 = vpop.f32.mrb[0].mxu0
        %v7283 = vadd.f32 %v7186, %v7282
        %v7284 = vpop.f32.mrb[0].mxu0
        %v7285 = vpop.f32.mrb[0].mxu0
        %v7286 = vadd.f32 %v7189, %v7285
        %v7287 = vpop.f32.mrb[0].mxu0
        %7288 = vmatprep.mubr.bf16.mxu0 0
        %7289 = vmatmul.mubr.bf16.gmra.mrb[0].mxu0 %v6229
        %v7290 = vpop.f32.mrb[0].mxu0
        %v7291 = vadd.f32 %v7194, %v7290
        %v7292 = vpop.f32.mrb[0].mxu0
        %v7293 = vpop.f32.mrb[0].mxu0
        %v7294 = vadd.f32 %v7197, %v7293
        %v7295 = vpop.f32.mrb[0].mxu0
        %7296 = vmatprep.mubr.bf16.mxu0 0
        %7297 = vmatmul.mubr.bf16.gmra.mrb[0].mxu0 %v6238
        %v7298 = vpop.f32.mrb[0].mxu0
        %v7299 = vadd.f32 %v7202, %v7298
        %v7300 = vpop.f32.mrb[0].mxu0
        %v7301 = vpop.f32.mrb[0].mxu0
        %v7302 = vadd.f32 %v7205, %v7301
        %v7303 = vpop.f32.mrb[0].mxu0
        %7304 = vmatprep.mubr.bf16.mxu0 0
        %7305 = vmatmul.mubr.bf16.gmra.mrb[0].mxu0 %v6247
        %v7306 = vpop.f32.mrb[0].mxu0
        %v7307 = vadd.f32 %v7210, %v7306
        %v7308 = vpop.f32.mrb[0].mxu0
        %v7309 = vpop.f32.mrb[0].mxu0
        %v7310 = vadd.f32 %v7213, %v7309
        %v7311 = vpop.f32.mrb[0].mxu0
        %7312 = vmatprep.mubr.bf16.mxu0 0
        %7313 = vmatmul.mubr.bf16.gmra.mrb[0].mxu0 %v6256
        %v7314 = vpop.f32.mrb[0].mxu0
        %v7315 = vadd.f32 %v7218, %v7314
        %v7316 = vpop.f32.mrb[0].mxu0
        %v7317 = vpop.f32.mrb[0].mxu0
        %v7318 = vadd.f32 %v7221, %v7317
        %v7319 = vpop.f32.mrb[0].mxu0
        %7320 = vmatprep.mubr.bf16.mxu0 0
        %7321 = vmatmul.mubr.bf16.gmra.mrb[0].mxu0 %v6265
        %v7322 = vpop.f32.mrb[0].mxu0
        %v7323 = vadd.f32 %v7226, %v7322
        %v7324 = vpop.f32.mrb[0].mxu0
        %v7325 = vpop.f32.mrb[0].mxu0
        %v7326 = vadd.f32 %v7229, %v7325
        %v7327 = vpop.f32.mrb[0].mxu0
        %7328 = vmatprep.mubr.bf16.mxu0 0
        %7329 = vmatmul.mubr.bf16.gmra.mrb[0].mxu0 %v6274
        %v7330 = vpop.f32.mrb[0].mxu0
        %v7331 = vadd.f32 %v7234, %v7330
        %v7332 = vpop.f32.mrb[0].mxu0
        %v7333 = vpop.f32.mrb[0].mxu0
        %v7334 = vadd.f32 %v7237, %v7333
        %v7335 = vpop.f32.mrb[0].mxu0
        %7336 = vmatprep.mubr.bf16.mxu0 0
        %7337 = vmatmul.mubr.bf16.gmra.mrb[0].mxu0 %v6283
        %v7338 = vpop.f32.mrb[0].mxu0
        %v7339 = vadd.f32 %v7242, %v7338
        %v7340 = vpop.f32.mrb[0].mxu0
        %v7341 = vpop.f32.mrb[0].mxu0
        %v7342 = vadd.f32 %v7245, %v7341
        %v7343 = vpop.f32.mrb[0].mxu0
        %7344 = vdwg.mxu0
        %v7345 = vmul.f32 %v7283, %v5807
        %v7346 = vmul.f32 %v7286, %v5807
        %v7347 = vmul.f32 %v7291, %v5807
        %v7348 = vmul.f32 %v7294, %v5807
        %v7349 = vmul.f32 %v7299, %v5807
        %v7350 = vmul.f32 %v7302, %v5807
        %v7351 = vmul.f32 %v7307, %v5807
        %v7352 = vmul.f32 %v7310, %v5807
        %v7353 = vmul.f32 %v7315, %v5807
        %v7354 = vmul.f32 %v7318, %v5807
        %v7355 = vmul.f32 %v7323, %v5807
        %v7356 = vmul.f32 %v7326, %v5807
        %v7357 = vmul.f32 %v7331, %v5807
        %v7358 = vmul.f32 %v7334, %v5807
        %v7359 = vmul.f32 %v7339, %v5807
        %v7360 = vmul.f32 %v7342, %v5807
        %v7361 = vadd.f32 %v7345, %v5829
        %v7362 = vadd.f32 %v7346, %v5829
        %v7363 = vadd.f32 %v7347, %v5829
        %v7364 = vadd.f32 %v7348, %v5829
        %v7365 = vadd.f32 %v7349, %v5829
        %v7366 = vadd.f32 %v7350, %v5829
        %v7367 = vadd.f32 %v7351, %v5829
        %v7368 = vadd.f32 %v7352, %v5829
        %v7369 = vadd.f32 %v7353, %v5829
        %v7370 = vadd.f32 %v7354, %v5829
        %v7371 = vadd.f32 %v7355, %v5829
        %v7372 = vadd.f32 %v7356, %v5829
        %v7373 = vadd.f32 %v7357, %v5829
        %v7374 = vadd.f32 %v7358, %v5829
        %v7375 = vadd.f32 %v7359, %v5829
        %v7376 = vadd.f32 %v7360, %v5829
        %v7377 = vmax.f32 %v7361, 0.0
        %v7378 = vmax.f32 %v7362, 0.0
        %v7379 = vmax.f32 %v7363, 0.0
        %v7380 = vmax.f32 %v7364, 0.0
        %v7381 = vmax.f32 %v7365, 0.0
        %v7382 = vmax.f32 %v7366, 0.0
        %v7383 = vmax.f32 %v7367, 0.0
        %v7384 = vmax.f32 %v7368, 0.0
        %v7385 = vmax.f32 %v7369, 0.0
        %v7386 = vmax.f32 %v7370, 0.0
        %v7387 = vmax.f32 %v7371, 0.0
        %v7388 = vmax.f32 %v7372, 0.0
        %v7389 = vmax.f32 %v7373, 0.0
        %v7390 = vmax.f32 %v7374, 0.0
        %v7391 = vmax.f32 %v7375, 0.0
        %v7392 = vmax.f32 %v7376, 0.0
        %v7393 = vpack.c.bf16 %v7378, %v7377
        %v7394 = vpack.c.bf16 %v7380, %v7379
        %v7395 = vpack.c.bf16 %v7382, %v7381
        %v7396 = vpack.c.bf16 %v7384, %v7383
        %v7397 = vpack.c.bf16 %v7386, %v7385
        %v7398 = vpack.c.bf16 %v7388, %v7387
        %v7399 = vpack.c.bf16 %v7390, %v7389
        %v7400 = vpack.c.bf16 %v7392, %v7391
        %v7401 = vld [vmem:[#allocation11] sm:$0xf]
        %v7402 = vld [vmem:[#allocation11 + $0x4] sm:$0xf]
        %v7403 = vld [vmem:[#allocation11 + $0x8] sm:$0xf]
        %v7404 = vld [vmem:[#allocation11 + $0xc] sm:$0xf]
        %v7405 = vld [vmem:[#allocation11 + $0x10] sm:$0xf]
        %v7406 = vld [vmem:[#allocation11 + $0x14] sm:$0xf]
        %v7407 = vld [vmem:[#allocation11 + $0x18] sm:$0xf]
        %v7408 = vld [vmem:[#allocation11 + $0x1c] sm:$0xf]
        %v7409 = vld [vmem:[#allocation11 + $0x20] sm:$0xf]
        %v7410 = vld [vmem:[#allocation11 + $0x24] sm:$0xf]
        %v7411 = vld [vmem:[#allocation11 + $0x28] sm:$0xf]
        %v7412 = vld [vmem:[#allocation11 + $0x2c] sm:$0xf]
        %v7413 = vld [vmem:[#allocation11 + $0x30] sm:$0xf]
        %v7414 = vld [vmem:[#allocation11 + $0x34] sm:$0xf]
        %v7415 = vld [vmem:[#allocation11 + $0x38] sm:$0xf]
        %v7416 = vld [vmem:[#allocation11 + $0x3c] sm:$0xf]
        %v7433 = vunpack.c.l.b16 %v7401
        %v7434 = vunpack.c.l.b16 %v7402
        %v7435 = vunpack.c.l.b16 %v7403
        %v7436 = vunpack.c.l.b16 %v7404
        %v7437 = vunpack.c.l.b16 %v7405
        %v7438 = vunpack.c.l.b16 %v7406
        %v7439 = vunpack.c.l.b16 %v7407
        %v7440 = vunpack.c.l.b16 %v7408
        %v7441 = vunpack.c.l.b16 %v7409
        %v7442 = vunpack.c.l.b16 %v7410
        %v7443 = vunpack.c.l.b16 %v7411
        %v7444 = vunpack.c.l.b16 %v7412
        %v7445 = vunpack.c.l.b16 %v7413
        %v7446 = vunpack.c.l.b16 %v7414
        %v7447 = vunpack.c.l.b16 %v7415
        %v7448 = vunpack.c.l.b16 %v7416
        %v7449 = vpack.c.b16 %v7434, %v7433
        %v7450 = vpack.c.b16 %v7436, %v7435
        %v7451 = vpack.c.b16 %v7438, %v7437
        %v7452 = vpack.c.b16 %v7440, %v7439
        %v7453 = vpack.c.b16 %v7442, %v7441
        %v7454 = vpack.c.b16 %v7444, %v7443
        %v7455 = vpack.c.b16 %v7446, %v7445
        %v7456 = vpack.c.b16 %v7448, %v7447
        %7465 = vmatprep.subr.bf16.mxu0 0
        %7466 = vmatpush1.bf16.msra.mxu0 %v7449
        %7467 = vmatprep.subr.bf16.mxu0 0
        %7468 = vmatpush1.bf16.msra.mxu0 %v7450
        %7469 = vmatprep.subr.bf16.mxu0 0
        %7470 = vmatpush1.bf16.msra.mxu0 %v7451
        %7471 = vmatprep.subr.bf16.mxu0 0
        %7472 = vmatpush1.bf16.msra.mxu0 %v7452
        %7473 = vmatprep.subr.bf16.mxu0 0
        %7474 = vmatpush1.bf16.msra.mxu0 %v7453
        %7475 = vmatprep.subr.bf16.mxu0 0
        %7476 = vmatpush1.bf16.msra.mxu0 %v7454
        %7477 = vmatprep.subr.bf16.mxu0 0
        %7478 = vmatpush1.bf16.msra.mxu0 %v7455
        %7479 = vmatprep.subr.bf16.mxu0 0
        %7480 = vmatpush1.bf16.msra.mxu0 %v7456
        %7481 = vmatprep.subr.bf16.mxu0 0
        %7482 = vmatpush1.bf16.msra.mxu0 0
        %7483 = vmatprep.subr.bf16.mxu0 0
        %7484 = vmatpush1.bf16.msra.mxu0 0
        %7485 = vmatprep.subr.bf16.mxu0 0
        %7486 = vmatpush1.bf16.msra.mxu0 0
        %7487 = vmatprep.subr.bf16.mxu0 0
        %7488 = vmatpush1.bf16.msra.mxu0 0
        %7489 = vmatprep.subr.bf16.mxu0 0
        %7490 = vmatpush1.bf16.msra.mxu0 0
        %7491 = vmatprep.subr.bf16.mxu0 0
        %7492 = vmatpush1.bf16.msra.mxu0 0
        %7493 = vmatprep.subr.bf16.mxu0 0
        %7494 = vmatpush1.bf16.msra.mxu0 0
        %7495 = vmatprep.subr.bf16.mxu0 0
        %7496 = vmatpush1.bf16.msra.mxu0 0
        %7497 = vmatprep.mubr.bf16.mxu0 0
        %7498 = vmatmul.mubr.bf16.gmra.mrb[0].mxu0 %v7393
        %v7499 = vpop.f32.mrb[0].mxu0
        %v7500 = vadd.f32 0.0, %v7499
        %v7501 = vpop.f32.mrb[0].mxu0
        %v7502 = vpop.f32.mrb[0].mxu0
        %v7503 = vadd.f32 0.0, %v7502
        %v7504 = vpop.f32.mrb[0].mxu0
        %7505 = vmatprep.mubr.bf16.mxu0 0
        %7506 = vmatmul.mubr.bf16.gmra.mrb[0].mxu0 %v7394
        %v7507 = vpop.f32.mrb[0].mxu0
        %v7508 = vadd.f32 0.0, %v7507
        %v7509 = vpop.f32.mrb[0].mxu0
        %v7510 = vpop.f32.mrb[0].mxu0
        %v7511 = vadd.f32 0.0, %v7510
        %v7512 = vpop.f32.mrb[0].mxu0
        %7513 = vmatprep.mubr.bf16.mxu0 0
        %7514 = vmatmul.mubr.bf16.gmra.mrb[0].mxu0 %v7395
        %v7515 = vpop.f32.mrb[0].mxu0
        %v7516 = vadd.f32 0.0, %v7515
        %v7517 = vpop.f32.mrb[0].mxu0
        %v7518 = vpop.f32.mrb[0].mxu0
        %v7519 = vadd.f32 0.0, %v7518
        %v7520 = vpop.f32.mrb[0].mxu0
        %7521 = vmatprep.mubr.bf16.mxu0 0
        %7522 = vmatmul.mubr.bf16.gmra.mrb[0].mxu0 %v7396
        %v7523 = vpop.f32.mrb[0].mxu0
        %v7524 = vadd.f32 0.0, %v7523
        %v7525 = vpop.f32.mrb[0].mxu0
        %v7526 = vpop.f32.mrb[0].mxu0
        %v7527 = vadd.f32 0.0, %v7526
        %v7528 = vpop.f32.mrb[0].mxu0
        %7529 = vmatprep.mubr.bf16.mxu0 0
        %7530 = vmatmul.mubr.bf16.gmra.mrb[0].mxu0 %v7397
        %v7531 = vpop.f32.mrb[0].mxu0
        %v7532 = vadd.f32 0.0, %v7531
        %v7533 = vpop.f32.mrb[0].mxu0
        %v7534 = vpop.f32.mrb[0].mxu0
        %v7535 = vadd.f32 0.0, %v7534
        %v7536 = vpop.f32.mrb[0].mxu0
        %7537 = vmatprep.mubr.bf16.mxu0 0
        %7538 = vmatmul.mubr.bf16.gmra.mrb[0].mxu0 %v7398
        %v7539 = vpop.f32.mrb[0].mxu0
        %v7540 = vadd.f32 0.0, %v7539
        %v7541 = vpop.f32.mrb[0].mxu0
        %v7542 = vpop.f32.mrb[0].mxu0
        %v7543 = vadd.f32 0.0, %v7542
        %v7544 = vpop.f32.mrb[0].mxu0
        %7545 = vmatprep.mubr.bf16.mxu0 0
        %7546 = vmatmul.mubr.bf16.gmra.mrb[0].mxu0 %v7399
        %v7547 = vpop.f32.mrb[0].mxu0
        %v7548 = vadd.f32 0.0, %v7547
        %v7549 = vpop.f32.mrb[0].mxu0
        %v7550 = vpop.f32.mrb[0].mxu0
        %v7551 = vadd.f32 0.0, %v7550
        %v7552 = vpop.f32.mrb[0].mxu0
        %7553 = vmatprep.mubr.bf16.mxu0 0
        %7554 = vmatmul.mubr.bf16.gmra.mrb[0].mxu0 %v7400
        %v7555 = vpop.f32.mrb[0].mxu0
        %v7556 = vadd.f32 0.0, %v7555
        %v7557 = vpop.f32.mrb[0].mxu0
        %v7558 = vpop.f32.mrb[0].mxu0
        %v7559 = vadd.f32 0.0, %v7558
        %v7560 = vpop.f32.mrb[0].mxu0
        %7561 = vdwg.mxu0
        %v7562 = vld [vmem:[#allocation4 + $0x40] sm:$0xff]
        %v7563 = vld [vmem:[#allocation4 + $0x48] sm:$0xff]
        %v7564 = vld [vmem:[#allocation4 + $0x50] sm:$0xff]
        %v7565 = vld [vmem:[#allocation4 + $0x58] sm:$0xff]
        %v7566 = vld [vmem:[#allocation4 + $0x60] sm:$0xff]
        %v7567 = vld [vmem:[#allocation4 + $0x68] sm:$0xff]
        %v7568 = vld [vmem:[#allocation4 + $0x70] sm:$0xff]
        %v7569 = vld [vmem:[#allocation4 + $0x78] sm:$0xff]
        %v7570 = vunpack.c.l.bf16 %v7562
        %v7571 = vunpack.c.h.bf16 %v7562
        %v7572 = vunpack.c.l.bf16 %v7563
        %v7573 = vunpack.c.h.bf16 %v7563
        %v7574 = vunpack.c.l.bf16 %v7564
        %v7575 = vunpack.c.h.bf16 %v7564
        %v7576 = vunpack.c.l.bf16 %v7565
        %v7577 = vunpack.c.h.bf16 %v7565
        %v7578 = vunpack.c.l.bf16 %v7566
        %v7579 = vunpack.c.h.bf16 %v7566
        %v7580 = vunpack.c.l.bf16 %v7567
        %v7581 = vunpack.c.h.bf16 %v7567
        %v7582 = vunpack.c.l.bf16 %v7568
        %v7583 = vunpack.c.h.bf16 %v7568
        %v7584 = vunpack.c.l.bf16 %v7569
        %v7585 = vunpack.c.h.bf16 %v7569
        %v7586 = vmul.f32 %v7500, %v6060
        %v7587 = vmul.f32 %v7503, %v6060
        %v7588 = vmul.f32 %v7508, %v6060
        %v7589 = vmul.f32 %v7511, %v6060
        %v7590 = vmul.f32 %v7516, %v6060
        %v7591 = vmul.f32 %v7519, %v6060
        %v7592 = vmul.f32 %v7524, %v6060
        %v7593 = vmul.f32 %v7527, %v6060
        %v7594 = vmul.f32 %v7532, %v6060
        %v7595 = vmul.f32 %v7535, %v6060
        %v7596 = vmul.f32 %v7540, %v6060
        %v7597 = vmul.f32 %v7543, %v6060
        %v7598 = vmul.f32 %v7548, %v6060
        %v7599 = vmul.f32 %v7551, %v6060
        %v7600 = vmul.f32 %v7556, %v6060
        %v7601 = vmul.f32 %v7559, %v6060
        %v7602 = vadd.f32 %v7586, %v6082
        %v7603 = vadd.f32 %v7587, %v6082
        %v7604 = vadd.f32 %v7588, %v6082
        %v7605 = vadd.f32 %v7589, %v6082
        %v7606 = vadd.f32 %v7590, %v6082
        %v7607 = vadd.f32 %v7591, %v6082
        %v7608 = vadd.f32 %v7592, %v6082
        %v7609 = vadd.f32 %v7593, %v6082
        %v7610 = vadd.f32 %v7594, %v6082
        %v7611 = vadd.f32 %v7595, %v6082
        %v7612 = vadd.f32 %v7596, %v6082
        %v7613 = vadd.f32 %v7597, %v6082
        %v7614 = vadd.f32 %v7598, %v6082
        %v7615 = vadd.f32 %v7599, %v6082
        %v7616 = vadd.f32 %v7600, %v6082
        %v7617 = vadd.f32 %v7601, %v6082
        %v7618 = vadd.f32 %v7602, %v7570
        %v7619 = vadd.f32 %v7603, %v7571
        %v7620 = vadd.f32 %v7604, %v7572
        %v7621 = vadd.f32 %v7605, %v7573
        %v7622 = vadd.f32 %v7606, %v7574
        %v7623 = vadd.f32 %v7607, %v7575
        %v7624 = vadd.f32 %v7608, %v7576
        %v7625 = vadd.f32 %v7609, %v7577
        %v7626 = vadd.f32 %v7610, %v7578
        %v7627 = vadd.f32 %v7611, %v7579
        %v7628 = vadd.f32 %v7612, %v7580
        %v7629 = vadd.f32 %v7613, %v7581
        %v7630 = vadd.f32 %v7614, %v7582
        %v7631 = vadd.f32 %v7615, %v7583
        %v7632 = vadd.f32 %v7616, %v7584
        %v7633 = vadd.f32 %v7617, %v7585
        %v7634 = vmax.f32 %v7618, 0.0
        %v7635 = vmax.f32 %v7619, 0.0
        %v7636 = vmax.f32 %v7620, 0.0
        %v7637 = vmax.f32 %v7621, 0.0
        %v7638 = vmax.f32 %v7622, 0.0
        %v7639 = vmax.f32 %v7623, 0.0
        %v7640 = vmax.f32 %v7624, 0.0
        %v7641 = vmax.f32 %v7625, 0.0
        %v7642 = vmax.f32 %v7626, 0.0
        %v7643 = vmax.f32 %v7627, 0.0
        %v7644 = vmax.f32 %v7628, 0.0
        %v7645 = vmax.f32 %v7629, 0.0
        %v7646 = vmax.f32 %v7630, 0.0
        %v7647 = vmax.f32 %v7631, 0.0
        %v7648 = vmax.f32 %v7632, 0.0
        %v7649 = vmax.f32 %v7633, 0.0
        %v7650 = vpack.c.bf16 %v7635, %v7634
        %v7651 = vpack.c.bf16 %v7637, %v7636
        %v7652 = vpack.c.bf16 %v7639, %v7638
        %v7653 = vpack.c.bf16 %v7641, %v7640
        %v7654 = vpack.c.bf16 %v7643, %v7642
        %v7655 = vpack.c.bf16 %v7645, %v7644
        %v7656 = vpack.c.bf16 %v7647, %v7646
        %v7657 = vpack.c.bf16 %v7649, %v7648
        %v7666 = vunpack.c.l.b16 %v7650
        %v7667 = vunpack.c.h.b16 %v7650
        %v7668 = vunpack.c.l.b16 %v7651
        %v7669 = vunpack.c.h.b16 %v7651
        %v7670 = vunpack.c.l.b16 %v7652
        %v7671 = vunpack.c.h.b16 %v7652
        %v7672 = vunpack.c.l.b16 %v7653
        %v7673 = vunpack.c.h.b16 %v7653
        %v7674 = vunpack.c.l.b16 %v7654
        %v7675 = vunpack.c.h.b16 %v7654
        %v7676 = vunpack.c.l.b16 %v7655
        %v7677 = vunpack.c.h.b16 %v7655
        %v7678 = vunpack.c.l.b16 %v7656
        %v7679 = vunpack.c.h.b16 %v7656
        %v7680 = vunpack.c.l.b16 %v7657
        %v7681 = vunpack.c.h.b16 %v7657
        %v7682 = vpack.c.b16 %v7666, %v7666
        %v7683 = vpack.c.b16 %v7667, %v7667
        %v7684 = vpack.c.b16 %v7668, %v7668
        %v7685 = vpack.c.b16 %v7669, %v7669
        %v7686 = vpack.c.b16 %v7670, %v7670
        %v7687 = vpack.c.b16 %v7671, %v7671
        %v7688 = vpack.c.b16 %v7672, %v7672
        %v7689 = vpack.c.b16 %v7673, %v7673
        %v7690 = vpack.c.b16 %v7674, %v7674
        %v7691 = vpack.c.b16 %v7675, %v7675
        %v7692 = vpack.c.b16 %v7676, %v7676
        %v7693 = vpack.c.b16 %v7677, %v7677
        %v7694 = vpack.c.b16 %v7678, %v7678
        %v7695 = vpack.c.b16 %v7679, %v7679
        %v7696 = vpack.c.b16 %v7680, %v7680
        %v7697 = vpack.c.b16 %v7681, %v7681
        %7714 = vst [vmem:[%s421 + $0x40] sm:$0xf] %v7682
        %7715 = vst [vmem:[%s421 + $0x44] sm:$0xf] %v7683
        %7716 = vst [vmem:[%s421 + $0x48] sm:$0xf] %v7684
        %7717 = vst [vmem:[%s421 + $0x4c] sm:$0xf] %v7685
        %7718 = vst [vmem:[%s421 + $0x50] sm:$0xf] %v7686
        %7719 = vst [vmem:[%s421 + $0x54] sm:$0xf] %v7687
        %7720 = vst [vmem:[%s421 + $0x58] sm:$0xf] %v7688
        %7721 = vst [vmem:[%s421 + $0x5c] sm:$0xf] %v7689
        %7722 = vst [vmem:[%s421 + $0x60] sm:$0xf] %v7690
        %7723 = vst [vmem:[%s421 + $0x64] sm:$0xf] %v7691
        %7724 = vst [vmem:[%s421 + $0x68] sm:$0xf] %v7692
        %7725 = vst [vmem:[%s421 + $0x6c] sm:$0xf] %v7693
        %7726 = vst [vmem:[%s421 + $0x70] sm:$0xf] %v7694
        %7727 = vst [vmem:[%s421 + $0x74] sm:$0xf] %v7695
        %7728 = vst [vmem:[%s421 + $0x78] sm:$0xf] %v7696
        %7729 = vst [vmem:[%s421 + $0x7c] sm:$0xf] %v7697
        %s7730 = sand.u32 %s252, 1
        %s7731 = scalar_lea.sflag [#allocation7], %s7730
        %s7732 = sand.u32 %s252, 1
        %s7733 = smul.addr %s7732, 128
        %s7734 = scalar_lea.vmem [#allocation13], %s7733
        // Predicated region
        $region77: #{tpu_custom_call.1} parent=59 // pred_check
          %p7735 = pneg %p262
        $region78: #{tpu_custom_call.1} parent=59 // pred_check_branch
          %7737 = sbr.rel (%p7735) target = $region80
        $region79: #{tpu_custom_call.1} parent=59 // pred_region
          %s7739 = ssub.s32 2048, 2048
          %7740 = vsyncadd %s7731, %s7739
          %s7741 = smul.addr %s29, 32
          %s7742 = smul.addr %s7741, 64
          %s7743 = scalar_lea.hbm %s10, %s7742
          %s7744 = sshll.u32 %s7734, 4
          %s7745 = int_to_ptr.vmem [resolvable:$true] %s7744
          %7750 = dma.vmem_to_hbm [thread:$0]  %s7745, 2048, %s7743, %s7731, 64, 64, 4
        $region80: #{tpu_custom_call.1} parent=59 // pred_fallthru
          _
      $region60: #{tpu_custom_call.1} parent=5 // pred_fallthru
        _
      %p7751 = scmp.le.s32.totalorder 2, %s24
      // Predicated region
      $region81: #{tpu_custom_call.1} parent=5 // pred_check
        %p7752 = pneg %p7751
      $region82: #{tpu_custom_call.1} parent=5 // pred_check_branch
        %7754 = sbr.rel (%p7752) target = $region84
      $region83: #{tpu_custom_call.1} parent=5 // pred_region
        %s7755 = ssub.s32 %s24, 2
        // Predicated region
        $region85: #{tpu_custom_call.1} parent=83 // pred_check
          %p7756 = pneg %p268
        $region86: #{tpu_custom_call.1} parent=83 // pred_check_branch
          %7758 = sbr.rel (%p7756) target = $region88
        $region87: #{tpu_custom_call.1} parent=83 // pred_region
          %s7759 = sand.u32 %s253, 1
          %s7760 = scalar_lea.sflag [#allocation7], %s7759
          %s7761 = sand.u32 %s253, 1
          %s7762 = smul.addr %s7761, 128
          %s7763 = scalar_lea.vmem [#allocation13], %s7762
          %7764 = dma.done %s7760, 2048
        $region88: #{tpu_custom_call.1} parent=83 // pred_fallthru
          _
      $region84: #{tpu_custom_call.1} parent=5 // pred_fallthru
        _
    $region6: #{tpu_custom_call.1} parent=1 // loop_footer
      %s28 = sadd.s32 1, %s24
    $region7: #{tpu_custom_call.1} parent=1 // loop_footer_branch
      %23 = sbr.rel target = $region3
    $region8: #{tpu_custom_call.1} parent=1 // loop_exit
      _
    %7765 = vsyncpa [#allocation6], 1
    %s7766 = scalar_lea.sflag [#allocation6], 1
    %7767 = vsyncpa %s7766, 1
    %7768 = vsyncpa [#allocation9], 1
    %7769 = vsyncpa [#allocation12], 1
    %7770 = vsyncpa [#allocation7], 1
    %s7771 = scalar_lea.sflag [#allocation7], 1
    %7772 = vsyncpa %s7771, 1

</llo_original>
